<compile_context>
chip_gen: v7x
topology: tpu7x:2x2x1
jax: 0.10.0
libtpu: 0.0.40
codegen_flags: <defaults>
</compile_context>

<pallas_src>
import math
import functools

import jax
import jax.numpy as jnp
from jax.experimental import pallas as pl
from jax.experimental.pallas import tpu as pltpu


# ----------------------------------------------------------------------------
# Fused whole-network kernel (per batch element, whole T resident in VMEM).
# ----------------------------------------------------------------------------
def _fused_tcn_ae_kernel(*refs, enc_cfg, dec_cfg, C, T, K1, K2, use_skip):
    # ---- unpack refs (order fixed by the wrapper) --------------------------
    pos = [0]

    def nxt():
        r = refs[pos[0]]
        pos[0] += 1
        return r

    x_ref = nxt()
    enc_w = [[nxt() for _ in range(5 if c["has_res"] else 4)] for c in enc_cfg]
    w_mid = nxt()
    b_mid = nxt()
    dec_w = [[nxt() for _ in range(5 if c["has_res"] else 4)] for c in dec_cfg]
    w_out = nxt()
    b_out = nxt()
    out_ref = nxt()
    im1_ref = nxt()           # (K1*C, T) f32 scratch
    im2_ref = nxt()           # (K2*C, T) f32 scratch

    # Lane index, hoisted once (used for the 'same' padding halo masks).
    lane = jax.lax.broadcasted_iota(jnp.int32, (C, T), 1)

    def fill_im2col(im_ref, x, K, dil):
        """im[k*C + c, t] = x[c, t + k*dil - pad]  with zero 'same' padding.

        Each tap strip starts at a sublane-aligned offset (C multiple of 8)
        and is written exactly once (roll + masked select), so no zero-fill
        of the scratch is needed.
        """
        pad = dil * (K - 1) // 2
        for k in range(K):
            s = k * dil - pad                      # time shift of tap k
            lo = k * C
            if s == 0:
                im_ref[lo:lo + C, :] = x
            elif abs(s) >= T:
                im_ref[lo:lo + C, :] = jnp.zeros((C, T), jnp.float32)
            else:
                rolled = pltpu.roll(x, (-s) % T, 1)     # XLU lane rotate
                if s > 0:
                    valid = lane < (T - s)
                else:
                    valid = lane >= (-s)
                im_ref[lo:lo + C, :] = jnp.where(valid, rolled, 0.0)

    def res_block(x, wlist, cfg):
        d = cfg["d"]
        fill_im2col(im1_ref, x, K1, d)
        if cfg["has_res"]:
            # conv1 and the 1x1 residual projection share one stacked matmul:
            # wres sits in the center-tap columns (that tap of im1 is x).
            w1s, b1, w2, b2, bres = wlist
            yz = jnp.dot(w1s[...], im1_ref[...],
                         preferred_element_type=jnp.float32)
            y = jnp.maximum(yz[:C, :] + b1[...], 0.0)
            res = yz[C:, :] + bres[...]
        else:
            w1, b1, w2, b2 = wlist
            y = jnp.maximum(
                jnp.dot(w1[...], im1_ref[...],
                        preferred_element_type=jnp.float32) + b1[...], 0.0)
            res = x
        fill_im2col(im2_ref, y, K2, d)
        y2 = jnp.maximum(
            jnp.dot(w2[...], im2_ref[...],
                    preferred_element_type=jnp.float32) + b2[...], 0.0)
        out = jnp.maximum(res + y2, 0.0)
        return out, y2

    def run_tcn(h, wblocks, cfgs):
        skip = None
        for wl, c in zip(wblocks, cfgs):
            h, y2 = res_block(h, wl, c)
            if use_skip:
                skip = y2 if skip is None else skip + y2
        return skip if use_skip else h

    h = x_ref[0]                                        # (C, T)
    h = run_tcn(h, enc_w, enc_cfg)                      # encoder TCN
    h = jnp.dot(w_mid[...], h,                          # conv1d, 'linear' act
                preferred_element_type=jnp.float32) + b_mid[...]
    h = run_tcn(h, dec_w, dec_cfg)                      # decoder TCN
    out_ref[0] = (jnp.dot(w_out[...], h,                # final 1x1 linear
                          preferred_element_type=jnp.float32) + b_out[...])


# ----------------------------------------------------------------------------
# Parameter construction (PyTorch-Conv1d-style uniform init, padded layout).
# ----------------------------------------------------------------------------
C_PAD = 24        # nb_filters=20 / input channels padded to a sublane multiple
D_OUT_PAD = 8     # output channels (3) padded to a sublane multiple


def _init_conv_padded(key, K, cin, cout, cin_pad, cout_pad):
    """Weight in the kernel's (cout_pad, K*cin_pad) matmul layout with
    w2d[co, k*cin_pad + ci] == w_torch[co, ci, k]; padded rows/cols are zero.
    Bias is (cout_pad, 1) with padded rows zero."""
    k1, k2 = jax.random.split(key)
    bound = 1.0 / math.sqrt(cin * K)
    w_real = jax.random.uniform(k1, (cout, cin, K), jnp.float32, -bound, bound)
    b_real = jax.random.uniform(k2, (cout,), jnp.float32, -bound, bound)
    w = jnp.zeros((cout_pad, K * cin_pad), jnp.float32)
    for k in range(K):
        w = w.at[:cout, k * cin_pad:k * cin_pad + cin].set(w_real[:, :, k])
    b = jnp.zeros((cout_pad, 1), jnp.float32).at[:cout, 0].set(b_real)
    return w, b


def init_tcn_ae(key, input_dim=3, dilations=(1, 2, 4, 8), nb_filters=20,
                kernel_size=(3, 9), nb_stacks=1, filters_conv1d=20):
    K1, K2 = int(kernel_size[0]), int(kernel_size[1])
    assert K1 % 2 == 1 and K2 % 2 == 1, "'same' dilated conv needs odd kernels"
    C = C_PAD
    assert nb_filters <= C and input_dim <= C and filters_conv1d <= C
    params = {"enc": [], "dec": []}
    enc_cfg, dec_cfg = [], []

    def make_tcn(key, cin_real, cfg_list, plist):
        cin = cin_real
        for _ in range(nb_stacks):
            for d in dilations:
                key, k1, k2, k3 = jax.random.split(key, 4)
                has_res = (cin != nb_filters)
                w1, b1 = _init_conv_padded(k1, K1, cin, nb_filters, C, C)
                w2, b2 = _init_conv_padded(k2, K2, nb_filters, nb_filters, C, C)
                if has_res:
                    wres, bres = _init_conv_padded(k3, 1, cin, nb_filters, C, C)
                    center = (K1 - 1) // 2
                    w1s = jnp.zeros((2 * C, K1 * C), jnp.float32)
                    w1s = w1s.at[:C].set(w1)
                    w1s = w1s.at[C:, center * C:(center + 1) * C].set(wres)
                    plist.append([w1s, b1, w2, b2, bres])
                else:
                    plist.append([w1, b1, w2, b2])
                cfg_list.append(dict(d=int(d), has_res=bool(has_res)))
                cin = nb_filters
        return key

    key = make_tcn(key, input_dim, enc_cfg, params["enc"])
    key, k_mid, k_out = jax.random.split(key, 3)
    params["mid"] = list(_init_conv_padded(k_mid, 1, nb_filters,
                                           filters_conv1d, C, C))
    key = make_tcn(key, filters_conv1d, dec_cfg, params["dec"])
    params["out"] = list(_init_conv_padded(k_out, 1, nb_filters,
                                           input_dim, C, D_OUT_PAD))
    cfg = {"enc": enc_cfg, "dec": dec_cfg, "K1": K1, "K2": K2,
           "C": C, "Dp": D_OUT_PAD, "Din": int(input_dim),
           "F": int(nb_filters)}
    return params, cfg


# ----------------------------------------------------------------------------
# Forward pass wrapper (same (B,T,D) -> (B,T,D) contract as TCN_AE.forward).
# ----------------------------------------------------------------------------
def tcn_ae_forward(params, x, *, cfg, use_skip_connections=True):
    B, T, D = x.shape
    C, Dp = cfg["C"], cfg["Dp"]
    K1, K2 = cfg["K1"], cfg["K2"]
    enc_cfg, dec_cfg = cfg["enc"], cfg["dec"]

    h = jnp.transpose(x, (0, 2, 1)).astype(jnp.float32)     # (B, D, T), NCT
    h = jnp.pad(h, ((0, 0), (0, C - D), (0, 0)))             # channel pad -> C

    inputs = [h]
    in_specs = [pl.BlockSpec((1, C, T), lambda b: (b, 0, 0))]

    def add_weights(ws):
        for w in ws:
            inputs.append(w)
            in_specs.append(pl.BlockSpec(w.shape, lambda b: (0, 0)))

    for bp in params["enc"]:
        add_weights(bp)
    add_weights(params["mid"])
    for bp in params["dec"]:
        add_weights(bp)
    add_weights(params["out"])

    kernel = functools.partial(
        _fused_tcn_ae_kernel, enc_cfg=enc_cfg, dec_cfg=dec_cfg,
        C=C, T=T, K1=K1, K2=K2, use_skip=bool(use_skip_connections))

    out = pl.pallas_call(
        kernel,
        grid=(B,),
        in_specs=in_specs,
        out_specs=pl.BlockSpec((1, Dp, T), lambda b: (b, 0, 0)),
        out_shape=jax.ShapeDtypeStruct((B, Dp, T), jnp.float32),
        scratch_shapes=[pltpu.VMEM((K1 * C, T), jnp.float32),
                        pltpu.VMEM((K2 * C, T), jnp.float32)],
        compiler_params=pltpu.CompilerParams(
            dimension_semantics=("parallel",)),
    )(*inputs)

    out = out[:, :D, :]                                       # drop channel pad
    return jnp.transpose(out, (0, 2, 1))                      # (B, T, D)


# ----------------------------------------------------------------------------
# Independent pure-JAX reference (lax.conv_general_dilated) for verification.
# ----------------------------------------------------------------------------
def _ref_forward(params, x, cfg, use_skip_connections=True):
    C, K1, K2 = cfg["C"], cfg["K1"], cfg["K2"]
    D, F = cfg["Din"], cfg["F"]

    def conv(h, w_pad, b_pad, K, d, cin, cout):
        w = jnp.stack([w_pad[:cout, k * C:k * C + cin] for k in range(K)],
                      axis=-1)                                # (cout, cin, K)
        y = jax.lax.conv_general_dilated(
            h, w, window_strides=(1,), padding="SAME", rhs_dilation=(d,),
            dimension_numbers=("NCH", "OIH", "NCH"),
            precision=jax.lax.Precision.HIGHEST)
        return y + b_pad[:cout, 0][None, :, None]

    def tcn(h, plist, cfgs, cin0):
        cin, skip = cin0, None
        for wl, c in zip(plist, cfgs):
            d = c["d"]
            if c["has_res"]:
                w1s, b1, w2, b2, bres = wl
                center = (K1 - 1) // 2
                w1 = w1s[:C]
                wres = w1s[C:, center * C:(center + 1) * C]
                y = jnp.maximum(conv(h, w1, b1, K1, d, cin, F), 0.0)
                y2 = jnp.maximum(conv(y, w2, b2, K2, d, F, F), 0.0)
                res = conv(h, wres, bres, 1, 1, cin, F)
            else:
                w1, b1, w2, b2 = wl
                y = jnp.maximum(conv(h, w1, b1, K1, d, cin, F), 0.0)
                y2 = jnp.maximum(conv(y, w2, b2, K2, d, F, F), 0.0)
                res = h
            h = jnp.maximum(res + y2, 0.0)
            skip = y2 if skip is None else skip + y2
            cin = F
        return skip if use_skip_connections else h

    h = jnp.transpose(x, (0, 2, 1))
    h = tcn(h, params["enc"], cfg["enc"], D)
    h = conv(h, params["mid"][0], params["mid"][1], 1, 1, F, F)
    h = tcn(h, params["dec"], cfg["dec"], F)
    h = conv(h, params["out"][0], params["out"][1], 1, 1, F, D)
    return jnp.transpose(h, (0, 2, 1))


# ----------------------------------------------------------------------------
# Driver
# ----------------------------------------------------------------------------
if __name__ == "__main__":
    # T = 128 so the time (lane) dim is fully dense; D = 3 input features.
    B, T, D = 2, 128, 3
    key = jax.random.PRNGKey(0)
    k_param, k_x = jax.random.split(key)

    params, cfg = init_tcn_ae(
        k_param,
        input_dim=D,
        dilations=(1, 2, 4, 8),
        nb_filters=20,
        kernel_size=(3, 9),
        nb_stacks=1,
        filters_conv1d=20,
    )
    x = jax.random.normal(k_x, (B, T, D), dtype=jnp.float32)

    # Static config (dilations, kernel sizes, has-residual flags) is bound via
    # functools.partial so it is never traced -> no concretization errors.
    fwd = jax.jit(functools.partial(tcn_ae_forward, cfg=cfg))

    y = fwd(params, x)
    jax.block_until_ready(y)

    assert y.shape == (B, T, D), y.shape
    assert y.dtype == jnp.float32
    assert bool(jnp.all(jnp.isfinite(y)))

    y_ref = _ref_forward(params, x, cfg)
    assert bool(jnp.allclose(y, y_ref, rtol=1e-3, atol=1e-3)), (
        float(jnp.max(jnp.abs(y - y_ref))))

    print("KERNEL_OK")
</pallas_src>

<mosaic_0001>
module attributes {stable_mosaic.version = 11 : i64} {
  func.func @_fused_tcn_ae_kernel(%arg0: i32, %arg1: memref<1x24x128xf32, #tpu.memory_space<vmem>>, %arg2: memref<48x72xf32, #tpu.memory_space<vmem>>, %arg3: memref<24x1xf32, #tpu.memory_space<vmem>>, %arg4: memref<24x216xf32, #tpu.memory_space<vmem>>, %arg5: memref<24x1xf32, #tpu.memory_space<vmem>>, %arg6: memref<24x1xf32, #tpu.memory_space<vmem>>, %arg7: memref<24x72xf32, #tpu.memory_space<vmem>>, %arg8: memref<24x1xf32, #tpu.memory_space<vmem>>, %arg9: memref<24x216xf32, #tpu.memory_space<vmem>>, %arg10: memref<24x1xf32, #tpu.memory_space<vmem>>, %arg11: memref<24x72xf32, #tpu.memory_space<vmem>>, %arg12: memref<24x1xf32, #tpu.memory_space<vmem>>, %arg13: memref<24x216xf32, #tpu.memory_space<vmem>>, %arg14: memref<24x1xf32, #tpu.memory_space<vmem>>, %arg15: memref<24x72xf32, #tpu.memory_space<vmem>>, %arg16: memref<24x1xf32, #tpu.memory_space<vmem>>, %arg17: memref<24x216xf32, #tpu.memory_space<vmem>>, %arg18: memref<24x1xf32, #tpu.memory_space<vmem>>, %arg19: memref<24x24xf32, #tpu.memory_space<vmem>>, %arg20: memref<24x1xf32, #tpu.memory_space<vmem>>, %arg21: memref<24x72xf32, #tpu.memory_space<vmem>>, %arg22: memref<24x1xf32, #tpu.memory_space<vmem>>, %arg23: memref<24x216xf32, #tpu.memory_space<vmem>>, %arg24: memref<24x1xf32, #tpu.memory_space<vmem>>, %arg25: memref<24x72xf32, #tpu.memory_space<vmem>>, %arg26: memref<24x1xf32, #tpu.memory_space<vmem>>, %arg27: memref<24x216xf32, #tpu.memory_space<vmem>>, %arg28: memref<24x1xf32, #tpu.memory_space<vmem>>, %arg29: memref<24x72xf32, #tpu.memory_space<vmem>>, %arg30: memref<24x1xf32, #tpu.memory_space<vmem>>, %arg31: memref<24x216xf32, #tpu.memory_space<vmem>>, %arg32: memref<24x1xf32, #tpu.memory_space<vmem>>, %arg33: memref<24x72xf32, #tpu.memory_space<vmem>>, %arg34: memref<24x1xf32, #tpu.memory_space<vmem>>, %arg35: memref<24x216xf32, #tpu.memory_space<vmem>>, %arg36: memref<24x1xf32, #tpu.memory_space<vmem>>, %arg37: memref<8x24xf32, #tpu.memory_space<vmem>>, %arg38: memref<8x1xf32, #tpu.memory_space<vmem>>, %arg39: memref<1x8x128xf32, #tpu.memory_space<vmem>>, %arg40: memref<72x128xf32, #tpu.memory_space<vmem>>, %arg41: memref<216x128xf32, #tpu.memory_space<vmem>>) attributes {dimension_semantics = [#tpu.dimension_semantics<parallel>], iteration_bounds = array<i64: 2>, scalar_prefetch = 0 : i64, scratch_operands = 2 : i64, tpu.core_type = #tpu.core_type<tc>, window_params = [{transform_indices = @transform_0, window_bounds = array<i64: 1, 24, 128>}, {pipeline_mode = #tpu.pipeline_mode<synchronous>, transform_indices = @transform_1, window_bounds = array<i64: 48, 72>}, {pipeline_mode = #tpu.pipeline_mode<synchronous>, transform_indices = @transform_2, window_bounds = array<i64: 24, 1>}, {pipeline_mode = #tpu.pipeline_mode<synchronous>, transform_indices = @transform_3, window_bounds = array<i64: 24, 216>}, {pipeline_mode = #tpu.pipeline_mode<synchronous>, transform_indices = @transform_4, window_bounds = array<i64: 24, 1>}, {pipeline_mode = #tpu.pipeline_mode<synchronous>, transform_indices = @transform_5, window_bounds = array<i64: 24, 1>}, {pipeline_mode = #tpu.pipeline_mode<synchronous>, transform_indices = @transform_6, window_bounds = array<i64: 24, 72>}, {pipeline_mode = #tpu.pipeline_mode<synchronous>, transform_indices = @transform_7, window_bounds = array<i64: 24, 1>}, {pipeline_mode = #tpu.pipeline_mode<synchronous>, transform_indices = @transform_8, window_bounds = array<i64: 24, 216>}, {pipeline_mode = #tpu.pipeline_mode<synchronous>, transform_indices = @transform_9, window_bounds = array<i64: 24, 1>}, {pipeline_mode = #tpu.pipeline_mode<synchronous>, transform_indices = @transform_10, window_bounds = array<i64: 24, 72>}, {pipeline_mode = #tpu.pipeline_mode<synchronous>, transform_indices = @transform_11, window_bounds = array<i64: 24, 1>}, {pipeline_mode = #tpu.pipeline_mode<synchronous>, transform_indices = @transform_12, window_bounds = array<i64: 24, 216>}, {pipeline_mode = #tpu.pipeline_mode<synchronous>, transform_indices = @transform_13, window_bounds = array<i64: 24, 1>}, {pipeline_mode = #tpu.pipeline_mode<synchronous>, transform_indices = @transform_14, window_bounds = array<i64: 24, 72>}, {pipeline_mode = #tpu.pipeline_mode<synchronous>, transform_indices = @transform_15, window_bounds = array<i64: 24, 1>}, {pipeline_mode = #tpu.pipeline_mode<synchronous>, transform_indices = @transform_16, window_bounds = array<i64: 24, 216>}, {pipeline_mode = #tpu.pipeline_mode<synchronous>, transform_indices = @transform_17, window_bounds = array<i64: 24, 1>}, {pipeline_mode = #tpu.pipeline_mode<synchronous>, transform_indices = @transform_18, window_bounds = array<i64: 24, 24>}, {pipeline_mode = #tpu.pipeline_mode<synchronous>, transform_indices = @transform_19, window_bounds = array<i64: 24, 1>}, {pipeline_mode = #tpu.pipeline_mode<synchronous>, transform_indices = @transform_20, window_bounds = array<i64: 24, 72>}, {pipeline_mode = #tpu.pipeline_mode<synchronous>, transform_indices = @transform_21, window_bounds = array<i64: 24, 1>}, {pipeline_mode = #tpu.pipeline_mode<synchronous>, transform_indices = @transform_22, window_bounds = array<i64: 24, 216>}, {pipeline_mode = #tpu.pipeline_mode<synchronous>, transform_indices = @transform_23, window_bounds = array<i64: 24, 1>}, {pipeline_mode = #tpu.pipeline_mode<synchronous>, transform_indices = @transform_24, window_bounds = array<i64: 24, 72>}, {pipeline_mode = #tpu.pipeline_mode<synchronous>, transform_indices = @transform_25, window_bounds = array<i64: 24, 1>}, {pipeline_mode = #tpu.pipeline_mode<synchronous>, transform_indices = @transform_26, window_bounds = array<i64: 24, 216>}, {pipeline_mode = #tpu.pipeline_mode<synchronous>, transform_indices = @transform_27, window_bounds = array<i64: 24, 1>}, {pipeline_mode = #tpu.pipeline_mode<synchronous>, transform_indices = @transform_28, window_bounds = array<i64: 24, 72>}, {pipeline_mode = #tpu.pipeline_mode<synchronous>, transform_indices = @transform_29, window_bounds = array<i64: 24, 1>}, {pipeline_mode = #tpu.pipeline_mode<synchronous>, transform_indices = @transform_30, window_bounds = array<i64: 24, 216>}, {pipeline_mode = #tpu.pipeline_mode<synchronous>, transform_indices = @transform_31, window_bounds = array<i64: 24, 1>}, {pipeline_mode = #tpu.pipeline_mode<synchronous>, transform_indices = @transform_32, window_bounds = array<i64: 24, 72>}, {pipeline_mode = #tpu.pipeline_mode<synchronous>, transform_indices = @transform_33, window_bounds = array<i64: 24, 1>}, {pipeline_mode = #tpu.pipeline_mode<synchronous>, transform_indices = @transform_34, window_bounds = array<i64: 24, 216>}, {pipeline_mode = #tpu.pipeline_mode<synchronous>, transform_indices = @transform_35, window_bounds = array<i64: 24, 1>}, {pipeline_mode = #tpu.pipeline_mode<synchronous>, transform_indices = @transform_36, window_bounds = array<i64: 8, 24>}, {pipeline_mode = #tpu.pipeline_mode<synchronous>, transform_indices = @transform_37, window_bounds = array<i64: 8, 1>}, {transform_indices = @transform_38, window_bounds = array<i64: 1, 8, 128>}]} {
    %0 = tpu.iota {dimensions = array<i32: 1>} : vector<24x128xi32>
    %c0 = arith.constant 0 : index
    %c0_0 = arith.constant 0 : index
    %c0_1 = arith.constant 0 : index
    %1 = vector.load %arg1[%c0, %c0_0, %c0_1] : memref<1x24x128xf32, #tpu.memory_space<vmem>>, vector<1x24x128xf32>
    %2 = vector.shape_cast %1 : vector<1x24x128xf32> to vector<24x128xf32>
    %c1_i32 = arith.constant 1 : i32
    %3 = tpu.dynamic_rotate %2 by %c1_i32 dim 1 : vector<24x128xf32>, i32 -> vector<24x128xf32>
    %c1_i32_2 = arith.constant 1 : i32
    %4 = vector.broadcast %c1_i32_2 : i32 to vector<24x128xi32>
    %5 = arith.cmpi sge, %0, %4 : vector<24x128xi32>
    %cst = arith.constant 0.000000e+00 : f32
    %6 = vector.broadcast %cst : f32 to vector<24x128xf32>
    %7 = arith.select %5, %3, %6 : vector<24x128xi1>, vector<24x128xf32>
    %c0_3 = arith.constant 0 : index
    %c0_4 = arith.constant 0 : index
    %8 = vector.load %arg40[%c0_3, %c0_4] : memref<72x128xf32, #tpu.memory_space<vmem>>, vector<24x128xf32>
    tpu.vector_store %arg40[%c0_3, %c0_4], %7 {strides = array<i32>} : memref<72x128xf32, #tpu.memory_space<vmem>>, vector<24x128xf32>,
    %c24 = arith.constant 24 : index
    %c0_5 = arith.constant 0 : index
    %9 = vector.load %arg40[%c24, %c0_5] : memref<72x128xf32, #tpu.memory_space<vmem>>, vector<24x128xf32>
    tpu.vector_store %arg40[%c24, %c0_5], %2 {strides = array<i32>} : memref<72x128xf32, #tpu.memory_space<vmem>>, vector<24x128xf32>,
    %c127_i32 = arith.constant 127 : i32
    %10 = tpu.dynamic_rotate %2 by %c127_i32 dim 1 : vector<24x128xf32>, i32 -> vector<24x128xf32>
    %c127_i32_6 = arith.constant 127 : i32
    %11 = vector.broadcast %c127_i32_6 : i32 to vector<24x128xi32>
    %12 = arith.cmpi slt, %0, %11 : vector<24x128xi32>
    %cst_7 = arith.constant 0.000000e+00 : f32
    %13 = vector.broadcast %cst_7 : f32 to vector<24x128xf32>
    %14 = arith.select %12, %10, %13 : vector<24x128xi1>, vector<24x128xf32>
    %c48 = arith.constant 48 : index
    %c0_8 = arith.constant 0 : index
    %15 = vector.load %arg40[%c48, %c0_8] : memref<72x128xf32, #tpu.memory_space<vmem>>, vector<24x128xf32>
    tpu.vector_store %arg40[%c48, %c0_8], %14 {strides = array<i32>} : memref<72x128xf32, #tpu.memory_space<vmem>>, vector<24x128xf32>,
    %c0_9 = arith.constant 0 : index
    %c0_10 = arith.constant 0 : index
    %16 = vector.load %arg2[%c0_9, %c0_10] : memref<48x72xf32, #tpu.memory_space<vmem>>, vector<48x72xf32>
    %c0_11 = arith.constant 0 : index
    %c0_12 = arith.constant 0 : index
    %17 = vector.load %arg40[%c0_11, %c0_12] : memref<72x128xf32, #tpu.memory_space<vmem>>, vector<72x128xf32>
    %cst_13 = arith.constant dense<0.000000e+00> : vector<48x128xf32>
    %18 = tpu.matmul %16, %17, %cst_13 {dimension_numbers = #tpu.dot_dimension_numbers<[1], [0], [0], [1], [0, 0, 1, 1], [], []>} : vector<48x72xf32>, vector<72x128xf32>, vector<48x128xf32> -> vector<48x128xf32>
    %19 = vector.extract_strided_slice %18 {offsets = [0, 0], sizes = [24, 128], strides = [1, 1]} : vector<48x128xf32> to vector<24x128xf32>
    %c0_14 = arith.constant 0 : index
    %c0_15 = arith.constant 0 : index
    %20 = vector.load %arg3[%c0_14, %c0_15] : memref<24x1xf32, #tpu.memory_space<vmem>>, vector<24x1xf32>
    %21 = vector.broadcast %20 : vector<24x1xf32> to vector<24x128xf32>
    %22 = arith.addf %19, %21 : vector<24x128xf32>
    %cst_16 = arith.constant 0.000000e+00 : f32
    %23 = vector.broadcast %cst_16 : f32 to vector<24x128xf32>
    %24 = arith.maximumf %22, %23 : vector<24x128xf32>
    %25 = vector.extract_strided_slice %18 {offsets = [24, 0], sizes = [24, 128], strides = [1, 1]} : vector<48x128xf32> to vector<24x128xf32>
    %c0_17 = arith.constant 0 : index
    %c0_18 = arith.constant 0 : index
    %26 = vector.load %arg6[%c0_17, %c0_18] : memref<24x1xf32, #tpu.memory_space<vmem>>, vector<24x1xf32>
    %27 = vector.broadcast %26 : vector<24x1xf32> to vector<24x128xf32>
    %28 = arith.addf %25, %27 : vector<24x128xf32>
    %c4_i32 = arith.constant 4 : i32
    %29 = tpu.dynamic_rotate %24 by %c4_i32 dim 1 : vector<24x128xf32>, i32 -> vector<24x128xf32>
    %c4_i32_19 = arith.constant 4 : i32
    %30 = vector.broadcast %c4_i32_19 : i32 to vector<24x128xi32>
    %31 = arith.cmpi sge, %0, %30 : vector<24x128xi32>
    %cst_20 = arith.constant 0.000000e+00 : f32
    %32 = vector.broadcast %cst_20 : f32 to vector<24x128xf32>
    %33 = arith.select %31, %29, %32 : vector<24x128xi1>, vector<24x128xf32>
    %c0_21 = arith.constant 0 : index
    %c0_22 = arith.constant 0 : index
    %34 = vector.load %arg41[%c0_21, %c0_22] : memref<216x128xf32, #tpu.memory_space<vmem>>, vector<24x128xf32>
    tpu.vector_store %arg41[%c0_21, %c0_22], %33 {strides = array<i32>} : memref<216x128xf32, #tpu.memory_space<vmem>>, vector<24x128xf32>,
    %c3_i32 = arith.constant 3 : i32
    %35 = tpu.dynamic_rotate %24 by %c3_i32 dim 1 : vector<24x128xf32>, i32 -> vector<24x128xf32>
    %c3_i32_23 = arith.constant 3 : i32
    %36 = vector.broadcast %c3_i32_23 : i32 to vector<24x128xi32>
    %37 = arith.cmpi sge, %0, %36 : vector<24x128xi32>
    %cst_24 = arith.constant 0.000000e+00 : f32
    %38 = vector.broadcast %cst_24 : f32 to vector<24x128xf32>
    %39 = arith.select %37, %35, %38 : vector<24x128xi1>, vector<24x128xf32>
    %c24_25 = arith.constant 24 : index
    %c0_26 = arith.constant 0 : index
    %40 = vector.load %arg41[%c24_25, %c0_26] : memref<216x128xf32, #tpu.memory_space<vmem>>, vector<24x128xf32>
    tpu.vector_store %arg41[%c24_25, %c0_26], %39 {strides = array<i32>} : memref<216x128xf32, #tpu.memory_space<vmem>>, vector<24x128xf32>,
    %c2_i32 = arith.constant 2 : i32
    %41 = tpu.dynamic_rotate %24 by %c2_i32 dim 1 : vector<24x128xf32>, i32 -> vector<24x128xf32>
    %c2_i32_27 = arith.constant 2 : i32
    %42 = vector.broadcast %c2_i32_27 : i32 to vector<24x128xi32>
    %43 = arith.cmpi sge, %0, %42 : vector<24x128xi32>
    %cst_28 = arith.constant 0.000000e+00 : f32
    %44 = vector.broadcast %cst_28 : f32 to vector<24x128xf32>
    %45 = arith.select %43, %41, %44 : vector<24x128xi1>, vector<24x128xf32>
    %c48_29 = arith.constant 48 : index
    %c0_30 = arith.constant 0 : index
    %46 = vector.load %arg41[%c48_29, %c0_30] : memref<216x128xf32, #tpu.memory_space<vmem>>, vector<24x128xf32>
    tpu.vector_store %arg41[%c48_29, %c0_30], %45 {strides = array<i32>} : memref<216x128xf32, #tpu.memory_space<vmem>>, vector<24x128xf32>,
    %c1_i32_31 = arith.constant 1 : i32
    %47 = tpu.dynamic_rotate %24 by %c1_i32_31 dim 1 : vector<24x128xf32>, i32 -> vector<24x128xf32>
    %c1_i32_32 = arith.constant 1 : i32
    %48 = vector.broadcast %c1_i32_32 : i32 to vector<24x128xi32>
    %49 = arith.cmpi sge, %0, %48 : vector<24x128xi32>
    %cst_33 = arith.constant 0.000000e+00 : f32
    %50 = vector.broadcast %cst_33 : f32 to vector<24x128xf32>
    %51 = arith.select %49, %47, %50 : vector<24x128xi1>, vector<24x128xf32>
    %c72 = arith.constant 72 : index
    %c0_34 = arith.constant 0 : index
    %52 = vector.load %arg41[%c72, %c0_34] : memref<216x128xf32, #tpu.memory_space<vmem>>, vector<24x128xf32>
    tpu.vector_store %arg41[%c72, %c0_34], %51 {strides = array<i32>} : memref<216x128xf32, #tpu.memory_space<vmem>>, vector<24x128xf32>,
    %c96 = arith.constant 96 : index
    %c0_35 = arith.constant 0 : index
    %53 = vector.load %arg41[%c96, %c0_35] : memref<216x128xf32, #tpu.memory_space<vmem>>, vector<24x128xf32>
    tpu.vector_store %arg41[%c96, %c0_35], %24 {strides = array<i32>} : memref<216x128xf32, #tpu.memory_space<vmem>>, vector<24x128xf32>,
    %c127_i32_36 = arith.constant 127 : i32
    %54 = tpu.dynamic_rotate %24 by %c127_i32_36 dim 1 : vector<24x128xf32>, i32 -> vector<24x128xf32>
    %c127_i32_37 = arith.constant 127 : i32
    %55 = vector.broadcast %c127_i32_37 : i32 to vector<24x128xi32>
    %56 = arith.cmpi slt, %0, %55 : vector<24x128xi32>
    %cst_38 = arith.constant 0.000000e+00 : f32
    %57 = vector.broadcast %cst_38 : f32 to vector<24x128xf32>
    %58 = arith.select %56, %54, %57 : vector<24x128xi1>, vector<24x128xf32>
    %c120 = arith.constant 120 : index
    %c0_39 = arith.constant 0 : index
    %59 = vector.load %arg41[%c120, %c0_39] : memref<216x128xf32, #tpu.memory_space<vmem>>, vector<24x128xf32>
    tpu.vector_store %arg41[%c120, %c0_39], %58 {strides = array<i32>} : memref<216x128xf32, #tpu.memory_space<vmem>>, vector<24x128xf32>,
    %c126_i32 = arith.constant 126 : i32
    %60 = tpu.dynamic_rotate %24 by %c126_i32 dim 1 : vector<24x128xf32>, i32 -> vector<24x128xf32>
    %c126_i32_40 = arith.constant 126 : i32
    %61 = vector.broadcast %c126_i32_40 : i32 to vector<24x128xi32>
    %62 = arith.cmpi slt, %0, %61 : vector<24x128xi32>
    %cst_41 = arith.constant 0.000000e+00 : f32
    %63 = vector.broadcast %cst_41 : f32 to vector<24x128xf32>
    %64 = arith.select %62, %60, %63 : vector<24x128xi1>, vector<24x128xf32>
    %c144 = arith.constant 144 : index
    %c0_42 = arith.constant 0 : index
    %65 = vector.load %arg41[%c144, %c0_42] : memref<216x128xf32, #tpu.memory_space<vmem>>, vector<24x128xf32>
    tpu.vector_store %arg41[%c144, %c0_42], %64 {strides = array<i32>} : memref<216x128xf32, #tpu.memory_space<vmem>>, vector<24x128xf32>,
    %c125_i32 = arith.constant 125 : i32
    %66 = tpu.dynamic_rotate %24 by %c125_i32 dim 1 : vector<24x128xf32>, i32 -> vector<24x128xf32>
    %c125_i32_43 = arith.constant 125 : i32
    %67 = vector.broadcast %c125_i32_43 : i32 to vector<24x128xi32>
    %68 = arith.cmpi slt, %0, %67 : vector<24x128xi32>
    %cst_44 = arith.constant 0.000000e+00 : f32
    %69 = vector.broadcast %cst_44 : f32 to vector<24x128xf32>
    %70 = arith.select %68, %66, %69 : vector<24x128xi1>, vector<24x128xf32>
    %c168 = arith.constant 168 : index
    %c0_45 = arith.constant 0 : index
    %71 = vector.load %arg41[%c168, %c0_45] : memref<216x128xf32, #tpu.memory_space<vmem>>, vector<24x128xf32>
    tpu.vector_store %arg41[%c168, %c0_45], %70 {strides = array<i32>} : memref<216x128xf32, #tpu.memory_space<vmem>>, vector<24x128xf32>,
    %c124_i32 = arith.constant 124 : i32
    %72 = tpu.dynamic_rotate %24 by %c124_i32 dim 1 : vector<24x128xf32>, i32 -> vector<24x128xf32>
    %c124_i32_46 = arith.constant 124 : i32
    %73 = vector.broadcast %c124_i32_46 : i32 to vector<24x128xi32>
    %74 = arith.cmpi slt, %0, %73 : vector<24x128xi32>
    %cst_47 = arith.constant 0.000000e+00 : f32
    %75 = vector.broadcast %cst_47 : f32 to vector<24x128xf32>
    %76 = arith.select %74, %72, %75 : vector<24x128xi1>, vector<24x128xf32>
    %c192 = arith.constant 192 : index
    %c0_48 = arith.constant 0 : index
    %77 = vector.load %arg41[%c192, %c0_48] : memref<216x128xf32, #tpu.memory_space<vmem>>, vector<24x128xf32>
    tpu.vector_store %arg41[%c192, %c0_48], %76 {strides = array<i32>} : memref<216x128xf32, #tpu.memory_space<vmem>>, vector<24x128xf32>,
    %c0_49 = arith.constant 0 : index
    %c0_50 = arith.constant 0 : index
    %78 = vector.load %arg4[%c0_49, %c0_50] : memref<24x216xf32, #tpu.memory_space<vmem>>, vector<24x216xf32>
    %c0_51 = arith.constant 0 : index
    %c0_52 = arith.constant 0 : index
    %79 = vector.load %arg41[%c0_51, %c0_52] : memref<216x128xf32, #tpu.memory_space<vmem>>, vector<216x128xf32>
    %cst_53 = arith.constant dense<0.000000e+00> : vector<24x128xf32>
    %80 = tpu.matmul %78, %79, %cst_53 {dimension_numbers = #tpu.dot_dimension_numbers<[1], [0], [0], [1], [0, 0, 1, 1], [], []>} : vector<24x216xf32>, vector<216x128xf32>, vector<24x128xf32> -> vector<24x128xf32>
    %c0_54 = arith.constant 0 : index
    %c0_55 = arith.constant 0 : index
    %81 = vector.load %arg5[%c0_54, %c0_55] : memref<24x1xf32, #tpu.memory_space<vmem>>, vector<24x1xf32>
    %82 = vector.broadcast %81 : vector<24x1xf32> to vector<24x128xf32>
    %83 = arith.addf %80, %82 : vector<24x128xf32>
    %cst_56 = arith.constant 0.000000e+00 : f32
    %84 = vector.broadcast %cst_56 : f32 to vector<24x128xf32>
    %85 = arith.maximumf %83, %84 : vector<24x128xf32>
    %86 = arith.addf %28, %85 : vector<24x128xf32>
    %cst_57 = arith.constant 0.000000e+00 : f32
    %87 = vector.broadcast %cst_57 : f32 to vector<24x128xf32>
    %88 = arith.maximumf %86, %87 : vector<24x128xf32>
    %c2_i32_58 = arith.constant 2 : i32
    %89 = tpu.dynamic_rotate %88 by %c2_i32_58 dim 1 : vector<24x128xf32>, i32 -> vector<24x128xf32>
    %c2_i32_59 = arith.constant 2 : i32
    %90 = vector.broadcast %c2_i32_59 : i32 to vector<24x128xi32>
    %91 = arith.cmpi sge, %0, %90 : vector<24x128xi32>
    %cst_60 = arith.constant 0.000000e+00 : f32
    %92 = vector.broadcast %cst_60 : f32 to vector<24x128xf32>
    %93 = arith.select %91, %89, %92 : vector<24x128xi1>, vector<24x128xf32>
    %c0_61 = arith.constant 0 : index
    %c0_62 = arith.constant 0 : index
    %94 = vector.load %arg40[%c0_61, %c0_62] : memref<72x128xf32, #tpu.memory_space<vmem>>, vector<24x128xf32>
    tpu.vector_store %arg40[%c0_61, %c0_62], %93 {strides = array<i32>} : memref<72x128xf32, #tpu.memory_space<vmem>>, vector<24x128xf32>,
    %c24_63 = arith.constant 24 : index
    %c0_64 = arith.constant 0 : index
    %95 = vector.load %arg40[%c24_63, %c0_64] : memref<72x128xf32, #tpu.memory_space<vmem>>, vector<24x128xf32>
    tpu.vector_store %arg40[%c24_63, %c0_64], %88 {strides = array<i32>} : memref<72x128xf32, #tpu.memory_space<vmem>>, vector<24x128xf32>,
    %c126_i32_65 = arith.constant 126 : i32
    %96 = tpu.dynamic_rotate %88 by %c126_i32_65 dim 1 : vector<24x128xf32>, i32 -> vector<24x128xf32>
    %c126_i32_66 = arith.constant 126 : i32
    %97 = vector.broadcast %c126_i32_66 : i32 to vector<24x128xi32>
    %98 = arith.cmpi slt, %0, %97 : vector<24x128xi32>
    %cst_67 = arith.constant 0.000000e+00 : f32
    %99 = vector.broadcast %cst_67 : f32 to vector<24x128xf32>
    %100 = arith.select %98, %96, %99 : vector<24x128xi1>, vector<24x128xf32>
    %c48_68 = arith.constant 48 : index
    %c0_69 = arith.constant 0 : index
    %101 = vector.load %arg40[%c48_68, %c0_69] : memref<72x128xf32, #tpu.memory_space<vmem>>, vector<24x128xf32>
    tpu.vector_store %arg40[%c48_68, %c0_69], %100 {strides = array<i32>} : memref<72x128xf32, #tpu.memory_space<vmem>>, vector<24x128xf32>,
    %c0_70 = arith.constant 0 : index
    %c0_71 = arith.constant 0 : index
    %102 = vector.load %arg7[%c0_70, %c0_71] : memref<24x72xf32, #tpu.memory_space<vmem>>, vector<24x72xf32>
    %c0_72 = arith.constant 0 : index
    %c0_73 = arith.constant 0 : index
    %103 = vector.load %arg40[%c0_72, %c0_73] : memref<72x128xf32, #tpu.memory_space<vmem>>, vector<72x128xf32>
    %cst_74 = arith.constant dense<0.000000e+00> : vector<24x128xf32>
    %104 = tpu.matmul %102, %103, %cst_74 {dimension_numbers = #tpu.dot_dimension_numbers<[1], [0], [0], [1], [0, 0, 1, 1], [], []>} : vector<24x72xf32>, vector<72x128xf32>, vector<24x128xf32> -> vector<24x128xf32>
    %c0_75 = arith.constant 0 : index
    %c0_76 = arith.constant 0 : index
    %105 = vector.load %arg8[%c0_75, %c0_76] : memref<24x1xf32, #tpu.memory_space<vmem>>, vector<24x1xf32>
    %106 = vector.broadcast %105 : vector<24x1xf32> to vector<24x128xf32>
    %107 = arith.addf %104, %106 : vector<24x128xf32>
    %cst_77 = arith.constant 0.000000e+00 : f32
    %108 = vector.broadcast %cst_77 : f32 to vector<24x128xf32>
    %109 = arith.maximumf %107, %108 : vector<24x128xf32>
    %c8_i32 = arith.constant 8 : i32
    %110 = tpu.dynamic_rotate %109 by %c8_i32 dim 1 : vector<24x128xf32>, i32 -> vector<24x128xf32>
    %c8_i32_78 = arith.constant 8 : i32
    %111 = vector.broadcast %c8_i32_78 : i32 to vector<24x128xi32>
    %112 = arith.cmpi sge, %0, %111 : vector<24x128xi32>
    %cst_79 = arith.constant 0.000000e+00 : f32
    %113 = vector.broadcast %cst_79 : f32 to vector<24x128xf32>
    %114 = arith.select %112, %110, %113 : vector<24x128xi1>, vector<24x128xf32>
    %c0_80 = arith.constant 0 : index
    %c0_81 = arith.constant 0 : index
    %115 = vector.load %arg41[%c0_80, %c0_81] : memref<216x128xf32, #tpu.memory_space<vmem>>, vector<24x128xf32>
    tpu.vector_store %arg41[%c0_80, %c0_81], %114 {strides = array<i32>} : memref<216x128xf32, #tpu.memory_space<vmem>>, vector<24x128xf32>,
    %c6_i32 = arith.constant 6 : i32
    %116 = tpu.dynamic_rotate %109 by %c6_i32 dim 1 : vector<24x128xf32>, i32 -> vector<24x128xf32>
    %c6_i32_82 = arith.constant 6 : i32
    %117 = vector.broadcast %c6_i32_82 : i32 to vector<24x128xi32>
    %118 = arith.cmpi sge, %0, %117 : vector<24x128xi32>
    %cst_83 = arith.constant 0.000000e+00 : f32
    %119 = vector.broadcast %cst_83 : f32 to vector<24x128xf32>
    %120 = arith.select %118, %116, %119 : vector<24x128xi1>, vector<24x128xf32>
    %c24_84 = arith.constant 24 : index
    %c0_85 = arith.constant 0 : index
    %121 = vector.load %arg41[%c24_84, %c0_85] : memref<216x128xf32, #tpu.memory_space<vmem>>, vector<24x128xf32>
    tpu.vector_store %arg41[%c24_84, %c0_85], %120 {strides = array<i32>} : memref<216x128xf32, #tpu.memory_space<vmem>>, vector<24x128xf32>,
    %c4_i32_86 = arith.constant 4 : i32
    %122 = tpu.dynamic_rotate %109 by %c4_i32_86 dim 1 : vector<24x128xf32>, i32 -> vector<24x128xf32>
    %c4_i32_87 = arith.constant 4 : i32
    %123 = vector.broadcast %c4_i32_87 : i32 to vector<24x128xi32>
    %124 = arith.cmpi sge, %0, %123 : vector<24x128xi32>
    %cst_88 = arith.constant 0.000000e+00 : f32
    %125 = vector.broadcast %cst_88 : f32 to vector<24x128xf32>
    %126 = arith.select %124, %122, %125 : vector<24x128xi1>, vector<24x128xf32>
    %c48_89 = arith.constant 48 : index
    %c0_90 = arith.constant 0 : index
    %127 = vector.load %arg41[%c48_89, %c0_90] : memref<216x128xf32, #tpu.memory_space<vmem>>, vector<24x128xf32>
    tpu.vector_store %arg41[%c48_89, %c0_90], %126 {strides = array<i32>} : memref<216x128xf32, #tpu.memory_space<vmem>>, vector<24x128xf32>,
    %c2_i32_91 = arith.constant 2 : i32
    %128 = tpu.dynamic_rotate %109 by %c2_i32_91 dim 1 : vector<24x128xf32>, i32 -> vector<24x128xf32>
    %c2_i32_92 = arith.constant 2 : i32
    %129 = vector.broadcast %c2_i32_92 : i32 to vector<24x128xi32>
    %130 = arith.cmpi sge, %0, %129 : vector<24x128xi32>
    %cst_93 = arith.constant 0.000000e+00 : f32
    %131 = vector.broadcast %cst_93 : f32 to vector<24x128xf32>
    %132 = arith.select %130, %128, %131 : vector<24x128xi1>, vector<24x128xf32>
    %c72_94 = arith.constant 72 : index
    %c0_95 = arith.constant 0 : index
    %133 = vector.load %arg41[%c72_94, %c0_95] : memref<216x128xf32, #tpu.memory_space<vmem>>, vector<24x128xf32>
    tpu.vector_store %arg41[%c72_94, %c0_95], %132 {strides = array<i32>} : memref<216x128xf32, #tpu.memory_space<vmem>>, vector<24x128xf32>,
    %c96_96 = arith.constant 96 : index
    %c0_97 = arith.constant 0 : index
    %134 = vector.load %arg41[%c96_96, %c0_97] : memref<216x128xf32, #tpu.memory_space<vmem>>, vector<24x128xf32>
    tpu.vector_store %arg41[%c96_96, %c0_97], %109 {strides = array<i32>} : memref<216x128xf32, #tpu.memory_space<vmem>>, vector<24x128xf32>,
    %c126_i32_98 = arith.constant 126 : i32
    %135 = tpu.dynamic_rotate %109 by %c126_i32_98 dim 1 : vector<24x128xf32>, i32 -> vector<24x128xf32>
    %c126_i32_99 = arith.constant 126 : i32
    %136 = vector.broadcast %c126_i32_99 : i32 to vector<24x128xi32>
    %137 = arith.cmpi slt, %0, %136 : vector<24x128xi32>
    %cst_100 = arith.constant 0.000000e+00 : f32
    %138 = vector.broadcast %cst_100 : f32 to vector<24x128xf32>
    %139 = arith.select %137, %135, %138 : vector<24x128xi1>, vector<24x128xf32>
    %c120_101 = arith.constant 120 : index
    %c0_102 = arith.constant 0 : index
    %140 = vector.load %arg41[%c120_101, %c0_102] : memref<216x128xf32, #tpu.memory_space<vmem>>, vector<24x128xf32>
    tpu.vector_store %arg41[%c120_101, %c0_102], %139 {strides = array<i32>} : memref<216x128xf32, #tpu.memory_space<vmem>>, vector<24x128xf32>,
    %c124_i32_103 = arith.constant 124 : i32
    %141 = tpu.dynamic_rotate %109 by %c124_i32_103 dim 1 : vector<24x128xf32>, i32 -> vector<24x128xf32>
    %c124_i32_104 = arith.constant 124 : i32
    %142 = vector.broadcast %c124_i32_104 : i32 to vector<24x128xi32>
    %143 = arith.cmpi slt, %0, %142 : vector<24x128xi32>
    %cst_105 = arith.constant 0.000000e+00 : f32
    %144 = vector.broadcast %cst_105 : f32 to vector<24x128xf32>
    %145 = arith.select %143, %141, %144 : vector<24x128xi1>, vector<24x128xf32>
    %c144_106 = arith.constant 144 : index
    %c0_107 = arith.constant 0 : index
    %146 = vector.load %arg41[%c144_106, %c0_107] : memref<216x128xf32, #tpu.memory_space<vmem>>, vector<24x128xf32>
    tpu.vector_store %arg41[%c144_106, %c0_107], %145 {strides = array<i32>} : memref<216x128xf32, #tpu.memory_space<vmem>>, vector<24x128xf32>,
    %c122_i32 = arith.constant 122 : i32
    %147 = tpu.dynamic_rotate %109 by %c122_i32 dim 1 : vector<24x128xf32>, i32 -> vector<24x128xf32>
    %c122_i32_108 = arith.constant 122 : i32
    %148 = vector.broadcast %c122_i32_108 : i32 to vector<24x128xi32>
    %149 = arith.cmpi slt, %0, %148 : vector<24x128xi32>
    %cst_109 = arith.constant 0.000000e+00 : f32
    %150 = vector.broadcast %cst_109 : f32 to vector<24x128xf32>
    %151 = arith.select %149, %147, %150 : vector<24x128xi1>, vector<24x128xf32>
    %c168_110 = arith.constant 168 : index
    %c0_111 = arith.constant 0 : index
    %152 = vector.load %arg41[%c168_110, %c0_111] : memref<216x128xf32, #tpu.memory_space<vmem>>, vector<24x128xf32>
    tpu.vector_store %arg41[%c168_110, %c0_111], %151 {strides = array<i32>} : memref<216x128xf32, #tpu.memory_space<vmem>>, vector<24x128xf32>,
    %c120_i32 = arith.constant 120 : i32
    %153 = tpu.dynamic_rotate %109 by %c120_i32 dim 1 : vector<24x128xf32>, i32 -> vector<24x128xf32>
    %c120_i32_112 = arith.constant 120 : i32
    %154 = vector.broadcast %c120_i32_112 : i32 to vector<24x128xi32>
    %155 = arith.cmpi slt, %0, %154 : vector<24x128xi32>
    %cst_113 = arith.constant 0.000000e+00 : f32
    %156 = vector.broadcast %cst_113 : f32 to vector<24x128xf32>
    %157 = arith.select %155, %153, %156 : vector<24x128xi1>, vector<24x128xf32>
    %c192_114 = arith.constant 192 : index
    %c0_115 = arith.constant 0 : index
    %158 = vector.load %arg41[%c192_114, %c0_115] : memref<216x128xf32, #tpu.memory_space<vmem>>, vector<24x128xf32>
    tpu.vector_store %arg41[%c192_114, %c0_115], %157 {strides = array<i32>} : memref<216x128xf32, #tpu.memory_space<vmem>>, vector<24x128xf32>,
    %c0_116 = arith.constant 0 : index
    %c0_117 = arith.constant 0 : index
    %159 = vector.load %arg9[%c0_116, %c0_117] : memref<24x216xf32, #tpu.memory_space<vmem>>, vector<24x216xf32>
    %c0_118 = arith.constant 0 : index
    %c0_119 = arith.constant 0 : index
    %160 = vector.load %arg41[%c0_118, %c0_119] : memref<216x128xf32, #tpu.memory_space<vmem>>, vector<216x128xf32>
    %cst_120 = arith.constant dense<0.000000e+00> : vector<24x128xf32>
    %161 = tpu.matmul %159, %160, %cst_120 {dimension_numbers = #tpu.dot_dimension_numbers<[1], [0], [0], [1], [0, 0, 1, 1], [], []>} : vector<24x216xf32>, vector<216x128xf32>, vector<24x128xf32> -> vector<24x128xf32>
    %c0_121 = arith.constant 0 : index
    %c0_122 = arith.constant 0 : index
    %162 = vector.load %arg10[%c0_121, %c0_122] : memref<24x1xf32, #tpu.memory_space<vmem>>, vector<24x1xf32>
    %163 = vector.broadcast %162 : vector<24x1xf32> to vector<24x128xf32>
    %164 = arith.addf %161, %163 : vector<24x128xf32>
    %cst_123 = arith.constant 0.000000e+00 : f32
    %165 = vector.broadcast %cst_123 : f32 to vector<24x128xf32>
    %166 = arith.maximumf %164, %165 : vector<24x128xf32>
    %167 = arith.addf %88, %166 : vector<24x128xf32>
    %cst_124 = arith.constant 0.000000e+00 : f32
    %168 = vector.broadcast %cst_124 : f32 to vector<24x128xf32>
    %169 = arith.maximumf %167, %168 : vector<24x128xf32>
    %170 = arith.addf %85, %166 : vector<24x128xf32>
    %c4_i32_125 = arith.constant 4 : i32
    %171 = tpu.dynamic_rotate %169 by %c4_i32_125 dim 1 : vector<24x128xf32>, i32 -> vector<24x128xf32>
    %c4_i32_126 = arith.constant 4 : i32
    %172 = vector.broadcast %c4_i32_126 : i32 to vector<24x128xi32>
    %173 = arith.cmpi sge, %0, %172 : vector<24x128xi32>
    %cst_127 = arith.constant 0.000000e+00 : f32
    %174 = vector.broadcast %cst_127 : f32 to vector<24x128xf32>
    %175 = arith.select %173, %171, %174 : vector<24x128xi1>, vector<24x128xf32>
    %c0_128 = arith.constant 0 : index
    %c0_129 = arith.constant 0 : index
    %176 = vector.load %arg40[%c0_128, %c0_129] : memref<72x128xf32, #tpu.memory_space<vmem>>, vector<24x128xf32>
    tpu.vector_store %arg40[%c0_128, %c0_129], %175 {strides = array<i32>} : memref<72x128xf32, #tpu.memory_space<vmem>>, vector<24x128xf32>,
    %c24_130 = arith.constant 24 : index
    %c0_131 = arith.constant 0 : index
    %177 = vector.load %arg40[%c24_130, %c0_131] : memref<72x128xf32, #tpu.memory_space<vmem>>, vector<24x128xf32>
    tpu.vector_store %arg40[%c24_130, %c0_131], %169 {strides = array<i32>} : memref<72x128xf32, #tpu.memory_space<vmem>>, vector<24x128xf32>,
    %c124_i32_132 = arith.constant 124 : i32
    %178 = tpu.dynamic_rotate %169 by %c124_i32_132 dim 1 : vector<24x128xf32>, i32 -> vector<24x128xf32>
    %c124_i32_133 = arith.constant 124 : i32
    %179 = vector.broadcast %c124_i32_133 : i32 to vector<24x128xi32>
    %180 = arith.cmpi slt, %0, %179 : vector<24x128xi32>
    %cst_134 = arith.constant 0.000000e+00 : f32
    %181 = vector.broadcast %cst_134 : f32 to vector<24x128xf32>
    %182 = arith.select %180, %178, %181 : vector<24x128xi1>, vector<24x128xf32>
    %c48_135 = arith.constant 48 : index
    %c0_136 = arith.constant 0 : index
    %183 = vector.load %arg40[%c48_135, %c0_136] : memref<72x128xf32, #tpu.memory_space<vmem>>, vector<24x128xf32>
    tpu.vector_store %arg40[%c48_135, %c0_136], %182 {strides = array<i32>} : memref<72x128xf32, #tpu.memory_space<vmem>>, vector<24x128xf32>,
    %c0_137 = arith.constant 0 : index
    %c0_138 = arith.constant 0 : index
    %184 = vector.load %arg11[%c0_137, %c0_138] : memref<24x72xf32, #tpu.memory_space<vmem>>, vector<24x72xf32>
    %c0_139 = arith.constant 0 : index
    %c0_140 = arith.constant 0 : index
    %185 = vector.load %arg40[%c0_139, %c0_140] : memref<72x128xf32, #tpu.memory_space<vmem>>, vector<72x128xf32>
    %cst_141 = arith.constant dense<0.000000e+00> : vector<24x128xf32>
    %186 = tpu.matmul %184, %185, %cst_141 {dimension_numbers = #tpu.dot_dimension_numbers<[1], [0], [0], [1], [0, 0, 1, 1], [], []>} : vector<24x72xf32>, vector<72x128xf32>, vector<24x128xf32> -> vector<24x128xf32>
    %c0_142 = arith.constant 0 : index
    %c0_143 = arith.constant 0 : index
    %187 = vector.load %arg12[%c0_142, %c0_143] : memref<24x1xf32, #tpu.memory_space<vmem>>, vector<24x1xf32>
    %188 = vector.broadcast %187 : vector<24x1xf32> to vector<24x128xf32>
    %189 = arith.addf %186, %188 : vector<24x128xf32>
    %cst_144 = arith.constant 0.000000e+00 : f32
    %190 = vector.broadcast %cst_144 : f32 to vector<24x128xf32>
    %191 = arith.maximumf %189, %190 : vector<24x128xf32>
    %c16_i32 = arith.constant 16 : i32
    %192 = tpu.dynamic_rotate %191 by %c16_i32 dim 1 : vector<24x128xf32>, i32 -> vector<24x128xf32>
    %c16_i32_145 = arith.constant 16 : i32
    %193 = vector.broadcast %c16_i32_145 : i32 to vector<24x128xi32>
    %194 = arith.cmpi sge, %0, %193 : vector<24x128xi32>
    %cst_146 = arith.constant 0.000000e+00 : f32
    %195 = vector.broadcast %cst_146 : f32 to vector<24x128xf32>
    %196 = arith.select %194, %192, %195 : vector<24x128xi1>, vector<24x128xf32>
    %c0_147 = arith.constant 0 : index
    %c0_148 = arith.constant 0 : index
    %197 = vector.load %arg41[%c0_147, %c0_148] : memref<216x128xf32, #tpu.memory_space<vmem>>, vector<24x128xf32>
    tpu.vector_store %arg41[%c0_147, %c0_148], %196 {strides = array<i32>} : memref<216x128xf32, #tpu.memory_space<vmem>>, vector<24x128xf32>,
    %c12_i32 = arith.constant 12 : i32
    %198 = tpu.dynamic_rotate %191 by %c12_i32 dim 1 : vector<24x128xf32>, i32 -> vector<24x128xf32>
    %c12_i32_149 = arith.constant 12 : i32
    %199 = vector.broadcast %c12_i32_149 : i32 to vector<24x128xi32>
    %200 = arith.cmpi sge, %0, %199 : vector<24x128xi32>
    %cst_150 = arith.constant 0.000000e+00 : f32
    %201 = vector.broadcast %cst_150 : f32 to vector<24x128xf32>
    %202 = arith.select %200, %198, %201 : vector<24x128xi1>, vector<24x128xf32>
    %c24_151 = arith.constant 24 : index
    %c0_152 = arith.constant 0 : index
    %203 = vector.load %arg41[%c24_151, %c0_152] : memref<216x128xf32, #tpu.memory_space<vmem>>, vector<24x128xf32>
    tpu.vector_store %arg41[%c24_151, %c0_152], %202 {strides = array<i32>} : memref<216x128xf32, #tpu.memory_space<vmem>>, vector<24x128xf32>,
    %c8_i32_153 = arith.constant 8 : i32
    %204 = tpu.dynamic_rotate %191 by %c8_i32_153 dim 1 : vector<24x128xf32>, i32 -> vector<24x128xf32>
    %c8_i32_154 = arith.constant 8 : i32
    %205 = vector.broadcast %c8_i32_154 : i32 to vector<24x128xi32>
    %206 = arith.cmpi sge, %0, %205 : vector<24x128xi32>
    %cst_155 = arith.constant 0.000000e+00 : f32
    %207 = vector.broadcast %cst_155 : f32 to vector<24x128xf32>
    %208 = arith.select %206, %204, %207 : vector<24x128xi1>, vector<24x128xf32>
    %c48_156 = arith.constant 48 : index
    %c0_157 = arith.constant 0 : index
    %209 = vector.load %arg41[%c48_156, %c0_157] : memref<216x128xf32, #tpu.memory_space<vmem>>, vector<24x128xf32>
    tpu.vector_store %arg41[%c48_156, %c0_157], %208 {strides = array<i32>} : memref<216x128xf32, #tpu.memory_space<vmem>>, vector<24x128xf32>,
    %c4_i32_158 = arith.constant 4 : i32
    %210 = tpu.dynamic_rotate %191 by %c4_i32_158 dim 1 : vector<24x128xf32>, i32 -> vector<24x128xf32>
    %c4_i32_159 = arith.constant 4 : i32
    %211 = vector.broadcast %c4_i32_159 : i32 to vector<24x128xi32>
    %212 = arith.cmpi sge, %0, %211 : vector<24x128xi32>
    %cst_160 = arith.constant 0.000000e+00 : f32
    %213 = vector.broadcast %cst_160 : f32 to vector<24x128xf32>
    %214 = arith.select %212, %210, %213 : vector<24x128xi1>, vector<24x128xf32>
    %c72_161 = arith.constant 72 : index
    %c0_162 = arith.constant 0 : index
    %215 = vector.load %arg41[%c72_161, %c0_162] : memref<216x128xf32, #tpu.memory_space<vmem>>, vector<24x128xf32>
    tpu.vector_store %arg41[%c72_161, %c0_162], %214 {strides = array<i32>} : memref<216x128xf32, #tpu.memory_space<vmem>>, vector<24x128xf32>,
    %c96_163 = arith.constant 96 : index
    %c0_164 = arith.constant 0 : index
    %216 = vector.load %arg41[%c96_163, %c0_164] : memref<216x128xf32, #tpu.memory_space<vmem>>, vector<24x128xf32>
    tpu.vector_store %arg41[%c96_163, %c0_164], %191 {strides = array<i32>} : memref<216x128xf32, #tpu.memory_space<vmem>>, vector<24x128xf32>,
    %c124_i32_165 = arith.constant 124 : i32
    %217 = tpu.dynamic_rotate %191 by %c124_i32_165 dim 1 : vector<24x128xf32>, i32 -> vector<24x128xf32>
    %c124_i32_166 = arith.constant 124 : i32
    %218 = vector.broadcast %c124_i32_166 : i32 to vector<24x128xi32>
    %219 = arith.cmpi slt, %0, %218 : vector<24x128xi32>
    %cst_167 = arith.constant 0.000000e+00 : f32
    %220 = vector.broadcast %cst_167 : f32 to vector<24x128xf32>
    %221 = arith.select %219, %217, %220 : vector<24x128xi1>, vector<24x128xf32>
    %c120_168 = arith.constant 120 : index
    %c0_169 = arith.constant 0 : index
    %222 = vector.load %arg41[%c120_168, %c0_169] : memref<216x128xf32, #tpu.memory_space<vmem>>, vector<24x128xf32>
    tpu.vector_store %arg41[%c120_168, %c0_169], %221 {strides = array<i32>} : memref<216x128xf32, #tpu.memory_space<vmem>>, vector<24x128xf32>,
    %c120_i32_170 = arith.constant 120 : i32
    %223 = tpu.dynamic_rotate %191 by %c120_i32_170 dim 1 : vector<24x128xf32>, i32 -> vector<24x128xf32>
    %c120_i32_171 = arith.constant 120 : i32
    %224 = vector.broadcast %c120_i32_171 : i32 to vector<24x128xi32>
    %225 = arith.cmpi slt, %0, %224 : vector<24x128xi32>
    %cst_172 = arith.constant 0.000000e+00 : f32
    %226 = vector.broadcast %cst_172 : f32 to vector<24x128xf32>
    %227 = arith.select %225, %223, %226 : vector<24x128xi1>, vector<24x128xf32>
    %c144_173 = arith.constant 144 : index
    %c0_174 = arith.constant 0 : index
    %228 = vector.load %arg41[%c144_173, %c0_174] : memref<216x128xf32, #tpu.memory_space<vmem>>, vector<24x128xf32>
    tpu.vector_store %arg41[%c144_173, %c0_174], %227 {strides = array<i32>} : memref<216x128xf32, #tpu.memory_space<vmem>>, vector<24x128xf32>,
    %c116_i32 = arith.constant 116 : i32
    %229 = tpu.dynamic_rotate %191 by %c116_i32 dim 1 : vector<24x128xf32>, i32 -> vector<24x128xf32>
    %c116_i32_175 = arith.constant 116 : i32
    %230 = vector.broadcast %c116_i32_175 : i32 to vector<24x128xi32>
    %231 = arith.cmpi slt, %0, %230 : vector<24x128xi32>
    %cst_176 = arith.constant 0.000000e+00 : f32
    %232 = vector.broadcast %cst_176 : f32 to vector<24x128xf32>
    %233 = arith.select %231, %229, %232 : vector<24x128xi1>, vector<24x128xf32>
    %c168_177 = arith.constant 168 : index
    %c0_178 = arith.constant 0 : index
    %234 = vector.load %arg41[%c168_177, %c0_178] : memref<216x128xf32, #tpu.memory_space<vmem>>, vector<24x128xf32>
    tpu.vector_store %arg41[%c168_177, %c0_178], %233 {strides = array<i32>} : memref<216x128xf32, #tpu.memory_space<vmem>>, vector<24x128xf32>,
    %c112_i32 = arith.constant 112 : i32
    %235 = tpu.dynamic_rotate %191 by %c112_i32 dim 1 : vector<24x128xf32>, i32 -> vector<24x128xf32>
    %c112_i32_179 = arith.constant 112 : i32
    %236 = vector.broadcast %c112_i32_179 : i32 to vector<24x128xi32>
    %237 = arith.cmpi slt, %0, %236 : vector<24x128xi32>
    %cst_180 = arith.constant 0.000000e+00 : f32
    %238 = vector.broadcast %cst_180 : f32 to vector<24x128xf32>
    %239 = arith.select %237, %235, %238 : vector<24x128xi1>, vector<24x128xf32>
    %c192_181 = arith.constant 192 : index
    %c0_182 = arith.constant 0 : index
    %240 = vector.load %arg41[%c192_181, %c0_182] : memref<216x128xf32, #tpu.memory_space<vmem>>, vector<24x128xf32>
    tpu.vector_store %arg41[%c192_181, %c0_182], %239 {strides = array<i32>} : memref<216x128xf32, #tpu.memory_space<vmem>>, vector<24x128xf32>,
    %c0_183 = arith.constant 0 : index
    %c0_184 = arith.constant 0 : index
    %241 = vector.load %arg13[%c0_183, %c0_184] : memref<24x216xf32, #tpu.memory_space<vmem>>, vector<24x216xf32>
    %c0_185 = arith.constant 0 : index
    %c0_186 = arith.constant 0 : index
    %242 = vector.load %arg41[%c0_185, %c0_186] : memref<216x128xf32, #tpu.memory_space<vmem>>, vector<216x128xf32>
    %cst_187 = arith.constant dense<0.000000e+00> : vector<24x128xf32>
    %243 = tpu.matmul %241, %242, %cst_187 {dimension_numbers = #tpu.dot_dimension_numbers<[1], [0], [0], [1], [0, 0, 1, 1], [], []>} : vector<24x216xf32>, vector<216x128xf32>, vector<24x128xf32> -> vector<24x128xf32>
    %c0_188 = arith.constant 0 : index
    %c0_189 = arith.constant 0 : index
    %244 = vector.load %arg14[%c0_188, %c0_189] : memref<24x1xf32, #tpu.memory_space<vmem>>, vector<24x1xf32>
    %245 = vector.broadcast %244 : vector<24x1xf32> to vector<24x128xf32>
    %246 = arith.addf %243, %245 : vector<24x128xf32>
    %cst_190 = arith.constant 0.000000e+00 : f32
    %247 = vector.broadcast %cst_190 : f32 to vector<24x128xf32>
    %248 = arith.maximumf %246, %247 : vector<24x128xf32>
    %249 = arith.addf %169, %248 : vector<24x128xf32>
    %cst_191 = arith.constant 0.000000e+00 : f32
    %250 = vector.broadcast %cst_191 : f32 to vector<24x128xf32>
    %251 = arith.maximumf %249, %250 : vector<24x128xf32>
    %252 = arith.addf %170, %248 : vector<24x128xf32>
    %c8_i32_192 = arith.constant 8 : i32
    %253 = tpu.dynamic_rotate %251 by %c8_i32_192 dim 1 : vector<24x128xf32>, i32 -> vector<24x128xf32>
    %c8_i32_193 = arith.constant 8 : i32
    %254 = vector.broadcast %c8_i32_193 : i32 to vector<24x128xi32>
    %255 = arith.cmpi sge, %0, %254 : vector<24x128xi32>
    %cst_194 = arith.constant 0.000000e+00 : f32
    %256 = vector.broadcast %cst_194 : f32 to vector<24x128xf32>
    %257 = arith.select %255, %253, %256 : vector<24x128xi1>, vector<24x128xf32>
    %c0_195 = arith.constant 0 : index
    %c0_196 = arith.constant 0 : index
    %258 = vector.load %arg40[%c0_195, %c0_196] : memref<72x128xf32, #tpu.memory_space<vmem>>, vector<24x128xf32>
    tpu.vector_store %arg40[%c0_195, %c0_196], %257 {strides = array<i32>} : memref<72x128xf32, #tpu.memory_space<vmem>>, vector<24x128xf32>,
    %c24_197 = arith.constant 24 : index
    %c0_198 = arith.constant 0 : index
    %259 = vector.load %arg40[%c24_197, %c0_198] : memref<72x128xf32, #tpu.memory_space<vmem>>, vector<24x128xf32>
    tpu.vector_store %arg40[%c24_197, %c0_198], %251 {strides = array<i32>} : memref<72x128xf32, #tpu.memory_space<vmem>>, vector<24x128xf32>,
    %c120_i32_199 = arith.constant 120 : i32
    %260 = tpu.dynamic_rotate %251 by %c120_i32_199 dim 1 : vector<24x128xf32>, i32 -> vector<24x128xf32>
    %c120_i32_200 = arith.constant 120 : i32
    %261 = vector.broadcast %c120_i32_200 : i32 to vector<24x128xi32>
    %262 = arith.cmpi slt, %0, %261 : vector<24x128xi32>
    %cst_201 = arith.constant 0.000000e+00 : f32
    %263 = vector.broadcast %cst_201 : f32 to vector<24x128xf32>
    %264 = arith.select %262, %260, %263 : vector<24x128xi1>, vector<24x128xf32>
    %c48_202 = arith.constant 48 : index
    %c0_203 = arith.constant 0 : index
    %265 = vector.load %arg40[%c48_202, %c0_203] : memref<72x128xf32, #tpu.memory_space<vmem>>, vector<24x128xf32>
    tpu.vector_store %arg40[%c48_202, %c0_203], %264 {strides = array<i32>} : memref<72x128xf32, #tpu.memory_space<vmem>>, vector<24x128xf32>,
    %c0_204 = arith.constant 0 : index
    %c0_205 = arith.constant 0 : index
    %266 = vector.load %arg15[%c0_204, %c0_205] : memref<24x72xf32, #tpu.memory_space<vmem>>, vector<24x72xf32>
    %c0_206 = arith.constant 0 : index
    %c0_207 = arith.constant 0 : index
    %267 = vector.load %arg40[%c0_206, %c0_207] : memref<72x128xf32, #tpu.memory_space<vmem>>, vector<72x128xf32>
    %cst_208 = arith.constant dense<0.000000e+00> : vector<24x128xf32>
    %268 = tpu.matmul %266, %267, %cst_208 {dimension_numbers = #tpu.dot_dimension_numbers<[1], [0], [0], [1], [0, 0, 1, 1], [], []>} : vector<24x72xf32>, vector<72x128xf32>, vector<24x128xf32> -> vector<24x128xf32>
    %c0_209 = arith.constant 0 : index
    %c0_210 = arith.constant 0 : index
    %269 = vector.load %arg16[%c0_209, %c0_210] : memref<24x1xf32, #tpu.memory_space<vmem>>, vector<24x1xf32>
    %270 = vector.broadcast %269 : vector<24x1xf32> to vector<24x128xf32>
    %271 = arith.addf %268, %270 : vector<24x128xf32>
    %cst_211 = arith.constant 0.000000e+00 : f32
    %272 = vector.broadcast %cst_211 : f32 to vector<24x128xf32>
    %273 = arith.maximumf %271, %272 : vector<24x128xf32>
    %c32_i32 = arith.constant 32 : i32
    %274 = tpu.dynamic_rotate %273 by %c32_i32 dim 1 : vector<24x128xf32>, i32 -> vector<24x128xf32>
    %c32_i32_212 = arith.constant 32 : i32
    %275 = vector.broadcast %c32_i32_212 : i32 to vector<24x128xi32>
    %276 = arith.cmpi sge, %0, %275 : vector<24x128xi32>
    %cst_213 = arith.constant 0.000000e+00 : f32
    %277 = vector.broadcast %cst_213 : f32 to vector<24x128xf32>
    %278 = arith.select %276, %274, %277 : vector<24x128xi1>, vector<24x128xf32>
    %c0_214 = arith.constant 0 : index
    %c0_215 = arith.constant 0 : index
    %279 = vector.load %arg41[%c0_214, %c0_215] : memref<216x128xf32, #tpu.memory_space<vmem>>, vector<24x128xf32>
    tpu.vector_store %arg41[%c0_214, %c0_215], %278 {strides = array<i32>} : memref<216x128xf32, #tpu.memory_space<vmem>>, vector<24x128xf32>,
    %c24_i32 = arith.constant 24 : i32
    %280 = tpu.dynamic_rotate %273 by %c24_i32 dim 1 : vector<24x128xf32>, i32 -> vector<24x128xf32>
    %c24_i32_216 = arith.constant 24 : i32
    %281 = vector.broadcast %c24_i32_216 : i32 to vector<24x128xi32>
    %282 = arith.cmpi sge, %0, %281 : vector<24x128xi32>
    %cst_217 = arith.constant 0.000000e+00 : f32
    %283 = vector.broadcast %cst_217 : f32 to vector<24x128xf32>
    %284 = arith.select %282, %280, %283 : vector<24x128xi1>, vector<24x128xf32>
    %c24_218 = arith.constant 24 : index
    %c0_219 = arith.constant 0 : index
    %285 = vector.load %arg41[%c24_218, %c0_219] : memref<216x128xf32, #tpu.memory_space<vmem>>, vector<24x128xf32>
    tpu.vector_store %arg41[%c24_218, %c0_219], %284 {strides = array<i32>} : memref<216x128xf32, #tpu.memory_space<vmem>>, vector<24x128xf32>,
    %c16_i32_220 = arith.constant 16 : i32
    %286 = tpu.dynamic_rotate %273 by %c16_i32_220 dim 1 : vector<24x128xf32>, i32 -> vector<24x128xf32>
    %c16_i32_221 = arith.constant 16 : i32
    %287 = vector.broadcast %c16_i32_221 : i32 to vector<24x128xi32>
    %288 = arith.cmpi sge, %0, %287 : vector<24x128xi32>
    %cst_222 = arith.constant 0.000000e+00 : f32
    %289 = vector.broadcast %cst_222 : f32 to vector<24x128xf32>
    %290 = arith.select %288, %286, %289 : vector<24x128xi1>, vector<24x128xf32>
    %c48_223 = arith.constant 48 : index
    %c0_224 = arith.constant 0 : index
    %291 = vector.load %arg41[%c48_223, %c0_224] : memref<216x128xf32, #tpu.memory_space<vmem>>, vector<24x128xf32>
    tpu.vector_store %arg41[%c48_223, %c0_224], %290 {strides = array<i32>} : memref<216x128xf32, #tpu.memory_space<vmem>>, vector<24x128xf32>,
    %c8_i32_225 = arith.constant 8 : i32
    %292 = tpu.dynamic_rotate %273 by %c8_i32_225 dim 1 : vector<24x128xf32>, i32 -> vector<24x128xf32>
    %c8_i32_226 = arith.constant 8 : i32
    %293 = vector.broadcast %c8_i32_226 : i32 to vector<24x128xi32>
    %294 = arith.cmpi sge, %0, %293 : vector<24x128xi32>
    %cst_227 = arith.constant 0.000000e+00 : f32
    %295 = vector.broadcast %cst_227 : f32 to vector<24x128xf32>
    %296 = arith.select %294, %292, %295 : vector<24x128xi1>, vector<24x128xf32>
    %c72_228 = arith.constant 72 : index
    %c0_229 = arith.constant 0 : index
    %297 = vector.load %arg41[%c72_228, %c0_229] : memref<216x128xf32, #tpu.memory_space<vmem>>, vector<24x128xf32>
    tpu.vector_store %arg41[%c72_228, %c0_229], %296 {strides = array<i32>} : memref<216x128xf32, #tpu.memory_space<vmem>>, vector<24x128xf32>,
    %c96_230 = arith.constant 96 : index
    %c0_231 = arith.constant 0 : index
    %298 = vector.load %arg41[%c96_230, %c0_231] : memref<216x128xf32, #tpu.memory_space<vmem>>, vector<24x128xf32>
    tpu.vector_store %arg41[%c96_230, %c0_231], %273 {strides = array<i32>} : memref<216x128xf32, #tpu.memory_space<vmem>>, vector<24x128xf32>,
    %c120_i32_232 = arith.constant 120 : i32
    %299 = tpu.dynamic_rotate %273 by %c120_i32_232 dim 1 : vector<24x128xf32>, i32 -> vector<24x128xf32>
    %c120_i32_233 = arith.constant 120 : i32
    %300 = vector.broadcast %c120_i32_233 : i32 to vector<24x128xi32>
    %301 = arith.cmpi slt, %0, %300 : vector<24x128xi32>
    %cst_234 = arith.constant 0.000000e+00 : f32
    %302 = vector.broadcast %cst_234 : f32 to vector<24x128xf32>
    %303 = arith.select %301, %299, %302 : vector<24x128xi1>, vector<24x128xf32>
    %c120_235 = arith.constant 120 : index
    %c0_236 = arith.constant 0 : index
    %304 = vector.load %arg41[%c120_235, %c0_236] : memref<216x128xf32, #tpu.memory_space<vmem>>, vector<24x128xf32>
    tpu.vector_store %arg41[%c120_235, %c0_236], %303 {strides = array<i32>} : memref<216x128xf32, #tpu.memory_space<vmem>>, vector<24x128xf32>,
    %c112_i32_237 = arith.constant 112 : i32
    %305 = tpu.dynamic_rotate %273 by %c112_i32_237 dim 1 : vector<24x128xf32>, i32 -> vector<24x128xf32>
    %c112_i32_238 = arith.constant 112 : i32
    %306 = vector.broadcast %c112_i32_238 : i32 to vector<24x128xi32>
    %307 = arith.cmpi slt, %0, %306 : vector<24x128xi32>
    %cst_239 = arith.constant 0.000000e+00 : f32
    %308 = vector.broadcast %cst_239 : f32 to vector<24x128xf32>
    %309 = arith.select %307, %305, %308 : vector<24x128xi1>, vector<24x128xf32>
    %c144_240 = arith.constant 144 : index
    %c0_241 = arith.constant 0 : index
    %310 = vector.load %arg41[%c144_240, %c0_241] : memref<216x128xf32, #tpu.memory_space<vmem>>, vector<24x128xf32>
    tpu.vector_store %arg41[%c144_240, %c0_241], %309 {strides = array<i32>} : memref<216x128xf32, #tpu.memory_space<vmem>>, vector<24x128xf32>,
    %c104_i32 = arith.constant 104 : i32
    %311 = tpu.dynamic_rotate %273 by %c104_i32 dim 1 : vector<24x128xf32>, i32 -> vector<24x128xf32>
    %c104_i32_242 = arith.constant 104 : i32
    %312 = vector.broadcast %c104_i32_242 : i32 to vector<24x128xi32>
    %313 = arith.cmpi slt, %0, %312 : vector<24x128xi32>
    %cst_243 = arith.constant 0.000000e+00 : f32
    %314 = vector.broadcast %cst_243 : f32 to vector<24x128xf32>
    %315 = arith.select %313, %311, %314 : vector<24x128xi1>, vector<24x128xf32>
    %c168_244 = arith.constant 168 : index
    %c0_245 = arith.constant 0 : index
    %316 = vector.load %arg41[%c168_244, %c0_245] : memref<216x128xf32, #tpu.memory_space<vmem>>, vector<24x128xf32>
    tpu.vector_store %arg41[%c168_244, %c0_245], %315 {strides = array<i32>} : memref<216x128xf32, #tpu.memory_space<vmem>>, vector<24x128xf32>,
    %c96_i32 = arith.constant 96 : i32
    %317 = tpu.dynamic_rotate %273 by %c96_i32 dim 1 : vector<24x128xf32>, i32 -> vector<24x128xf32>
    %c96_i32_246 = arith.constant 96 : i32
    %318 = vector.broadcast %c96_i32_246 : i32 to vector<24x128xi32>
    %319 = arith.cmpi slt, %0, %318 : vector<24x128xi32>
    %cst_247 = arith.constant 0.000000e+00 : f32
    %320 = vector.broadcast %cst_247 : f32 to vector<24x128xf32>
    %321 = arith.select %319, %317, %320 : vector<24x128xi1>, vector<24x128xf32>
    %c192_248 = arith.constant 192 : index
    %c0_249 = arith.constant 0 : index
    %322 = vector.load %arg41[%c192_248, %c0_249] : memref<216x128xf32, #tpu.memory_space<vmem>>, vector<24x128xf32>
    tpu.vector_store %arg41[%c192_248, %c0_249], %321 {strides = array<i32>} : memref<216x128xf32, #tpu.memory_space<vmem>>, vector<24x128xf32>,
    %c0_250 = arith.constant 0 : index
    %c0_251 = arith.constant 0 : index
    %323 = vector.load %arg17[%c0_250, %c0_251] : memref<24x216xf32, #tpu.memory_space<vmem>>, vector<24x216xf32>
    %c0_252 = arith.constant 0 : index
    %c0_253 = arith.constant 0 : index
    %324 = vector.load %arg41[%c0_252, %c0_253] : memref<216x128xf32, #tpu.memory_space<vmem>>, vector<216x128xf32>
    %cst_254 = arith.constant dense<0.000000e+00> : vector<24x128xf32>
    %325 = tpu.matmul %323, %324, %cst_254 {dimension_numbers = #tpu.dot_dimension_numbers<[1], [0], [0], [1], [0, 0, 1, 1], [], []>} : vector<24x216xf32>, vector<216x128xf32>, vector<24x128xf32> -> vector<24x128xf32>
    %c0_255 = arith.constant 0 : index
    %c0_256 = arith.constant 0 : index
    %326 = vector.load %arg18[%c0_255, %c0_256] : memref<24x1xf32, #tpu.memory_space<vmem>>, vector<24x1xf32>
    %327 = vector.broadcast %326 : vector<24x1xf32> to vector<24x128xf32>
    %328 = arith.addf %325, %327 : vector<24x128xf32>
    %cst_257 = arith.constant 0.000000e+00 : f32
    %329 = vector.broadcast %cst_257 : f32 to vector<24x128xf32>
    %330 = arith.maximumf %328, %329 : vector<24x128xf32>
    %331 = arith.addf %252, %330 : vector<24x128xf32>
    %c0_258 = arith.constant 0 : index
    %c0_259 = arith.constant 0 : index
    %332 = vector.load %arg19[%c0_258, %c0_259] : memref<24x24xf32, #tpu.memory_space<vmem>>, vector<24x24xf32>
    %cst_260 = arith.constant dense<0.000000e+00> : vector<24x128xf32>
    %333 = tpu.matmul %332, %331, %cst_260 {dimension_numbers = #tpu.dot_dimension_numbers<[1], [0], [0], [1], [0, 0, 1, 1], [], []>} : vector<24x24xf32>, vector<24x128xf32>, vector<24x128xf32> -> vector<24x128xf32>
    %c0_261 = arith.constant 0 : index
    %c0_262 = arith.constant 0 : index
    %334 = vector.load %arg20[%c0_261, %c0_262] : memref<24x1xf32, #tpu.memory_space<vmem>>, vector<24x1xf32>
    %335 = vector.broadcast %334 : vector<24x1xf32> to vector<24x128xf32>
    %336 = arith.addf %333, %335 : vector<24x128xf32>
    %c1_i32_263 = arith.constant 1 : i32
    %337 = tpu.dynamic_rotate %336 by %c1_i32_263 dim 1 : vector<24x128xf32>, i32 -> vector<24x128xf32>
    %c1_i32_264 = arith.constant 1 : i32
    %338 = vector.broadcast %c1_i32_264 : i32 to vector<24x128xi32>
    %339 = arith.cmpi sge, %0, %338 : vector<24x128xi32>
    %cst_265 = arith.constant 0.000000e+00 : f32
    %340 = vector.broadcast %cst_265 : f32 to vector<24x128xf32>
    %341 = arith.select %339, %337, %340 : vector<24x128xi1>, vector<24x128xf32>
    %c0_266 = arith.constant 0 : index
    %c0_267 = arith.constant 0 : index
    %342 = vector.load %arg40[%c0_266, %c0_267] : memref<72x128xf32, #tpu.memory_space<vmem>>, vector<24x128xf32>
    tpu.vector_store %arg40[%c0_266, %c0_267], %341 {strides = array<i32>} : memref<72x128xf32, #tpu.memory_space<vmem>>, vector<24x128xf32>,
    %c24_268 = arith.constant 24 : index
    %c0_269 = arith.constant 0 : index
    %343 = vector.load %arg40[%c24_268, %c0_269] : memref<72x128xf32, #tpu.memory_space<vmem>>, vector<24x128xf32>
    tpu.vector_store %arg40[%c24_268, %c0_269], %336 {strides = array<i32>} : memref<72x128xf32, #tpu.memory_space<vmem>>, vector<24x128xf32>,
    %c127_i32_270 = arith.constant 127 : i32
    %344 = tpu.dynamic_rotate %336 by %c127_i32_270 dim 1 : vector<24x128xf32>, i32 -> vector<24x128xf32>
    %c127_i32_271 = arith.constant 127 : i32
    %345 = vector.broadcast %c127_i32_271 : i32 to vector<24x128xi32>
    %346 = arith.cmpi slt, %0, %345 : vector<24x128xi32>
    %cst_272 = arith.constant 0.000000e+00 : f32
    %347 = vector.broadcast %cst_272 : f32 to vector<24x128xf32>
    %348 = arith.select %346, %344, %347 : vector<24x128xi1>, vector<24x128xf32>
    %c48_273 = arith.constant 48 : index
    %c0_274 = arith.constant 0 : index
    %349 = vector.load %arg40[%c48_273, %c0_274] : memref<72x128xf32, #tpu.memory_space<vmem>>, vector<24x128xf32>
    tpu.vector_store %arg40[%c48_273, %c0_274], %348 {strides = array<i32>} : memref<72x128xf32, #tpu.memory_space<vmem>>, vector<24x128xf32>,
    %c0_275 = arith.constant 0 : index
    %c0_276 = arith.constant 0 : index
    %350 = vector.load %arg21[%c0_275, %c0_276] : memref<24x72xf32, #tpu.memory_space<vmem>>, vector<24x72xf32>
    %c0_277 = arith.constant 0 : index
    %c0_278 = arith.constant 0 : index
    %351 = vector.load %arg40[%c0_277, %c0_278] : memref<72x128xf32, #tpu.memory_space<vmem>>, vector<72x128xf32>
    %cst_279 = arith.constant dense<0.000000e+00> : vector<24x128xf32>
    %352 = tpu.matmul %350, %351, %cst_279 {dimension_numbers = #tpu.dot_dimension_numbers<[1], [0], [0], [1], [0, 0, 1, 1], [], []>} : vector<24x72xf32>, vector<72x128xf32>, vector<24x128xf32> -> vector<24x128xf32>
    %c0_280 = arith.constant 0 : index
    %c0_281 = arith.constant 0 : index
    %353 = vector.load %arg22[%c0_280, %c0_281] : memref<24x1xf32, #tpu.memory_space<vmem>>, vector<24x1xf32>
    %354 = vector.broadcast %353 : vector<24x1xf32> to vector<24x128xf32>
    %355 = arith.addf %352, %354 : vector<24x128xf32>
    %cst_282 = arith.constant 0.000000e+00 : f32
    %356 = vector.broadcast %cst_282 : f32 to vector<24x128xf32>
    %357 = arith.maximumf %355, %356 : vector<24x128xf32>
    %c4_i32_283 = arith.constant 4 : i32
    %358 = tpu.dynamic_rotate %357 by %c4_i32_283 dim 1 : vector<24x128xf32>, i32 -> vector<24x128xf32>
    %c4_i32_284 = arith.constant 4 : i32
    %359 = vector.broadcast %c4_i32_284 : i32 to vector<24x128xi32>
    %360 = arith.cmpi sge, %0, %359 : vector<24x128xi32>
    %cst_285 = arith.constant 0.000000e+00 : f32
    %361 = vector.broadcast %cst_285 : f32 to vector<24x128xf32>
    %362 = arith.select %360, %358, %361 : vector<24x128xi1>, vector<24x128xf32>
    %c0_286 = arith.constant 0 : index
    %c0_287 = arith.constant 0 : index
    %363 = vector.load %arg41[%c0_286, %c0_287] : memref<216x128xf32, #tpu.memory_space<vmem>>, vector<24x128xf32>
    tpu.vector_store %arg41[%c0_286, %c0_287], %362 {strides = array<i32>} : memref<216x128xf32, #tpu.memory_space<vmem>>, vector<24x128xf32>,
    %c3_i32_288 = arith.constant 3 : i32
    %364 = tpu.dynamic_rotate %357 by %c3_i32_288 dim 1 : vector<24x128xf32>, i32 -> vector<24x128xf32>
    %c3_i32_289 = arith.constant 3 : i32
    %365 = vector.broadcast %c3_i32_289 : i32 to vector<24x128xi32>
    %366 = arith.cmpi sge, %0, %365 : vector<24x128xi32>
    %cst_290 = arith.constant 0.000000e+00 : f32
    %367 = vector.broadcast %cst_290 : f32 to vector<24x128xf32>
    %368 = arith.select %366, %364, %367 : vector<24x128xi1>, vector<24x128xf32>
    %c24_291 = arith.constant 24 : index
    %c0_292 = arith.constant 0 : index
    %369 = vector.load %arg41[%c24_291, %c0_292] : memref<216x128xf32, #tpu.memory_space<vmem>>, vector<24x128xf32>
    tpu.vector_store %arg41[%c24_291, %c0_292], %368 {strides = array<i32>} : memref<216x128xf32, #tpu.memory_space<vmem>>, vector<24x128xf32>,
    %c2_i32_293 = arith.constant 2 : i32
    %370 = tpu.dynamic_rotate %357 by %c2_i32_293 dim 1 : vector<24x128xf32>, i32 -> vector<24x128xf32>
    %c2_i32_294 = arith.constant 2 : i32
    %371 = vector.broadcast %c2_i32_294 : i32 to vector<24x128xi32>
    %372 = arith.cmpi sge, %0, %371 : vector<24x128xi32>
    %cst_295 = arith.constant 0.000000e+00 : f32
    %373 = vector.broadcast %cst_295 : f32 to vector<24x128xf32>
    %374 = arith.select %372, %370, %373 : vector<24x128xi1>, vector<24x128xf32>
    %c48_296 = arith.constant 48 : index
    %c0_297 = arith.constant 0 : index
    %375 = vector.load %arg41[%c48_296, %c0_297] : memref<216x128xf32, #tpu.memory_space<vmem>>, vector<24x128xf32>
    tpu.vector_store %arg41[%c48_296, %c0_297], %374 {strides = array<i32>} : memref<216x128xf32, #tpu.memory_space<vmem>>, vector<24x128xf32>,
    %c1_i32_298 = arith.constant 1 : i32
    %376 = tpu.dynamic_rotate %357 by %c1_i32_298 dim 1 : vector<24x128xf32>, i32 -> vector<24x128xf32>
    %c1_i32_299 = arith.constant 1 : i32
    %377 = vector.broadcast %c1_i32_299 : i32 to vector<24x128xi32>
    %378 = arith.cmpi sge, %0, %377 : vector<24x128xi32>
    %cst_300 = arith.constant 0.000000e+00 : f32
    %379 = vector.broadcast %cst_300 : f32 to vector<24x128xf32>
    %380 = arith.select %378, %376, %379 : vector<24x128xi1>, vector<24x128xf32>
    %c72_301 = arith.constant 72 : index
    %c0_302 = arith.constant 0 : index
    %381 = vector.load %arg41[%c72_301, %c0_302] : memref<216x128xf32, #tpu.memory_space<vmem>>, vector<24x128xf32>
    tpu.vector_store %arg41[%c72_301, %c0_302], %380 {strides = array<i32>} : memref<216x128xf32, #tpu.memory_space<vmem>>, vector<24x128xf32>,
    %c96_303 = arith.constant 96 : index
    %c0_304 = arith.constant 0 : index
    %382 = vector.load %arg41[%c96_303, %c0_304] : memref<216x128xf32, #tpu.memory_space<vmem>>, vector<24x128xf32>
    tpu.vector_store %arg41[%c96_303, %c0_304], %357 {strides = array<i32>} : memref<216x128xf32, #tpu.memory_space<vmem>>, vector<24x128xf32>,
    %c127_i32_305 = arith.constant 127 : i32
    %383 = tpu.dynamic_rotate %357 by %c127_i32_305 dim 1 : vector<24x128xf32>, i32 -> vector<24x128xf32>
    %c127_i32_306 = arith.constant 127 : i32
    %384 = vector.broadcast %c127_i32_306 : i32 to vector<24x128xi32>
    %385 = arith.cmpi slt, %0, %384 : vector<24x128xi32>
    %cst_307 = arith.constant 0.000000e+00 : f32
    %386 = vector.broadcast %cst_307 : f32 to vector<24x128xf32>
    %387 = arith.select %385, %383, %386 : vector<24x128xi1>, vector<24x128xf32>
    %c120_308 = arith.constant 120 : index
    %c0_309 = arith.constant 0 : index
    %388 = vector.load %arg41[%c120_308, %c0_309] : memref<216x128xf32, #tpu.memory_space<vmem>>, vector<24x128xf32>
    tpu.vector_store %arg41[%c120_308, %c0_309], %387 {strides = array<i32>} : memref<216x128xf32, #tpu.memory_space<vmem>>, vector<24x128xf32>,
    %c126_i32_310 = arith.constant 126 : i32
    %389 = tpu.dynamic_rotate %357 by %c126_i32_310 dim 1 : vector<24x128xf32>, i32 -> vector<24x128xf32>
    %c126_i32_311 = arith.constant 126 : i32
    %390 = vector.broadcast %c126_i32_311 : i32 to vector<24x128xi32>
    %391 = arith.cmpi slt, %0, %390 : vector<24x128xi32>
    %cst_312 = arith.constant 0.000000e+00 : f32
    %392 = vector.broadcast %cst_312 : f32 to vector<24x128xf32>
    %393 = arith.select %391, %389, %392 : vector<24x128xi1>, vector<24x128xf32>
    %c144_313 = arith.constant 144 : index
    %c0_314 = arith.constant 0 : index
    %394 = vector.load %arg41[%c144_313, %c0_314] : memref<216x128xf32, #tpu.memory_space<vmem>>, vector<24x128xf32>
    tpu.vector_store %arg41[%c144_313, %c0_314], %393 {strides = array<i32>} : memref<216x128xf32, #tpu.memory_space<vmem>>, vector<24x128xf32>,
    %c125_i32_315 = arith.constant 125 : i32
    %395 = tpu.dynamic_rotate %357 by %c125_i32_315 dim 1 : vector<24x128xf32>, i32 -> vector<24x128xf32>
    %c125_i32_316 = arith.constant 125 : i32
    %396 = vector.broadcast %c125_i32_316 : i32 to vector<24x128xi32>
    %397 = arith.cmpi slt, %0, %396 : vector<24x128xi32>
    %cst_317 = arith.constant 0.000000e+00 : f32
    %398 = vector.broadcast %cst_317 : f32 to vector<24x128xf32>
    %399 = arith.select %397, %395, %398 : vector<24x128xi1>, vector<24x128xf32>
    %c168_318 = arith.constant 168 : index
    %c0_319 = arith.constant 0 : index
    %400 = vector.load %arg41[%c168_318, %c0_319] : memref<216x128xf32, #tpu.memory_space<vmem>>, vector<24x128xf32>
    tpu.vector_store %arg41[%c168_318, %c0_319], %399 {strides = array<i32>} : memref<216x128xf32, #tpu.memory_space<vmem>>, vector<24x128xf32>,
    %c124_i32_320 = arith.constant 124 : i32
    %401 = tpu.dynamic_rotate %357 by %c124_i32_320 dim 1 : vector<24x128xf32>, i32 -> vector<24x128xf32>
    %c124_i32_321 = arith.constant 124 : i32
    %402 = vector.broadcast %c124_i32_321 : i32 to vector<24x128xi32>
    %403 = arith.cmpi slt, %0, %402 : vector<24x128xi32>
    %cst_322 = arith.constant 0.000000e+00 : f32
    %404 = vector.broadcast %cst_322 : f32 to vector<24x128xf32>
    %405 = arith.select %403, %401, %404 : vector<24x128xi1>, vector<24x128xf32>
    %c192_323 = arith.constant 192 : index
    %c0_324 = arith.constant 0 : index
    %406 = vector.load %arg41[%c192_323, %c0_324] : memref<216x128xf32, #tpu.memory_space<vmem>>, vector<24x128xf32>
    tpu.vector_store %arg41[%c192_323, %c0_324], %405 {strides = array<i32>} : memref<216x128xf32, #tpu.memory_space<vmem>>, vector<24x128xf32>,
    %c0_325 = arith.constant 0 : index
    %c0_326 = arith.constant 0 : index
    %407 = vector.load %arg23[%c0_325, %c0_326] : memref<24x216xf32, #tpu.memory_space<vmem>>, vector<24x216xf32>
    %c0_327 = arith.constant 0 : index
    %c0_328 = arith.constant 0 : index
    %408 = vector.load %arg41[%c0_327, %c0_328] : memref<216x128xf32, #tpu.memory_space<vmem>>, vector<216x128xf32>
    %cst_329 = arith.constant dense<0.000000e+00> : vector<24x128xf32>
    %409 = tpu.matmul %407, %408, %cst_329 {dimension_numbers = #tpu.dot_dimension_numbers<[1], [0], [0], [1], [0, 0, 1, 1], [], []>} : vector<24x216xf32>, vector<216x128xf32>, vector<24x128xf32> -> vector<24x128xf32>
    %c0_330 = arith.constant 0 : index
    %c0_331 = arith.constant 0 : index
    %410 = vector.load %arg24[%c0_330, %c0_331] : memref<24x1xf32, #tpu.memory_space<vmem>>, vector<24x1xf32>
    %411 = vector.broadcast %410 : vector<24x1xf32> to vector<24x128xf32>
    %412 = arith.addf %409, %411 : vector<24x128xf32>
    %cst_332 = arith.constant 0.000000e+00 : f32
    %413 = vector.broadcast %cst_332 : f32 to vector<24x128xf32>
    %414 = arith.maximumf %412, %413 : vector<24x128xf32>
    %415 = arith.addf %336, %414 : vector<24x128xf32>
    %cst_333 = arith.constant 0.000000e+00 : f32
    %416 = vector.broadcast %cst_333 : f32 to vector<24x128xf32>
    %417 = arith.maximumf %415, %416 : vector<24x128xf32>
    %c2_i32_334 = arith.constant 2 : i32
    %418 = tpu.dynamic_rotate %417 by %c2_i32_334 dim 1 : vector<24x128xf32>, i32 -> vector<24x128xf32>
    %c2_i32_335 = arith.constant 2 : i32
    %419 = vector.broadcast %c2_i32_335 : i32 to vector<24x128xi32>
    %420 = arith.cmpi sge, %0, %419 : vector<24x128xi32>
    %cst_336 = arith.constant 0.000000e+00 : f32
    %421 = vector.broadcast %cst_336 : f32 to vector<24x128xf32>
    %422 = arith.select %420, %418, %421 : vector<24x128xi1>, vector<24x128xf32>
    %c0_337 = arith.constant 0 : index
    %c0_338 = arith.constant 0 : index
    %423 = vector.load %arg40[%c0_337, %c0_338] : memref<72x128xf32, #tpu.memory_space<vmem>>, vector<24x128xf32>
    tpu.vector_store %arg40[%c0_337, %c0_338], %422 {strides = array<i32>} : memref<72x128xf32, #tpu.memory_space<vmem>>, vector<24x128xf32>,
    %c24_339 = arith.constant 24 : index
    %c0_340 = arith.constant 0 : index
    %424 = vector.load %arg40[%c24_339, %c0_340] : memref<72x128xf32, #tpu.memory_space<vmem>>, vector<24x128xf32>
    tpu.vector_store %arg40[%c24_339, %c0_340], %417 {strides = array<i32>} : memref<72x128xf32, #tpu.memory_space<vmem>>, vector<24x128xf32>,
    %c126_i32_341 = arith.constant 126 : i32
    %425 = tpu.dynamic_rotate %417 by %c126_i32_341 dim 1 : vector<24x128xf32>, i32 -> vector<24x128xf32>
    %c126_i32_342 = arith.constant 126 : i32
    %426 = vector.broadcast %c126_i32_342 : i32 to vector<24x128xi32>
    %427 = arith.cmpi slt, %0, %426 : vector<24x128xi32>
    %cst_343 = arith.constant 0.000000e+00 : f32
    %428 = vector.broadcast %cst_343 : f32 to vector<24x128xf32>
    %429 = arith.select %427, %425, %428 : vector<24x128xi1>, vector<24x128xf32>
    %c48_344 = arith.constant 48 : index
    %c0_345 = arith.constant 0 : index
    %430 = vector.load %arg40[%c48_344, %c0_345] : memref<72x128xf32, #tpu.memory_space<vmem>>, vector<24x128xf32>
    tpu.vector_store %arg40[%c48_344, %c0_345], %429 {strides = array<i32>} : memref<72x128xf32, #tpu.memory_space<vmem>>, vector<24x128xf32>,
    %c0_346 = arith.constant 0 : index
    %c0_347 = arith.constant 0 : index
    %431 = vector.load %arg25[%c0_346, %c0_347] : memref<24x72xf32, #tpu.memory_space<vmem>>, vector<24x72xf32>
    %c0_348 = arith.constant 0 : index
    %c0_349 = arith.constant 0 : index
    %432 = vector.load %arg40[%c0_348, %c0_349] : memref<72x128xf32, #tpu.memory_space<vmem>>, vector<72x128xf32>
    %cst_350 = arith.constant dense<0.000000e+00> : vector<24x128xf32>
    %433 = tpu.matmul %431, %432, %cst_350 {dimension_numbers = #tpu.dot_dimension_numbers<[1], [0], [0], [1], [0, 0, 1, 1], [], []>} : vector<24x72xf32>, vector<72x128xf32>, vector<24x128xf32> -> vector<24x128xf32>
    %c0_351 = arith.constant 0 : index
    %c0_352 = arith.constant 0 : index
    %434 = vector.load %arg26[%c0_351, %c0_352] : memref<24x1xf32, #tpu.memory_space<vmem>>, vector<24x1xf32>
    %435 = vector.broadcast %434 : vector<24x1xf32> to vector<24x128xf32>
    %436 = arith.addf %433, %435 : vector<24x128xf32>
    %cst_353 = arith.constant 0.000000e+00 : f32
    %437 = vector.broadcast %cst_353 : f32 to vector<24x128xf32>
    %438 = arith.maximumf %436, %437 : vector<24x128xf32>
    %c8_i32_354 = arith.constant 8 : i32
    %439 = tpu.dynamic_rotate %438 by %c8_i32_354 dim 1 : vector<24x128xf32>, i32 -> vector<24x128xf32>
    %c8_i32_355 = arith.constant 8 : i32
    %440 = vector.broadcast %c8_i32_355 : i32 to vector<24x128xi32>
    %441 = arith.cmpi sge, %0, %440 : vector<24x128xi32>
    %cst_356 = arith.constant 0.000000e+00 : f32
    %442 = vector.broadcast %cst_356 : f32 to vector<24x128xf32>
    %443 = arith.select %441, %439, %442 : vector<24x128xi1>, vector<24x128xf32>
    %c0_357 = arith.constant 0 : index
    %c0_358 = arith.constant 0 : index
    %444 = vector.load %arg41[%c0_357, %c0_358] : memref<216x128xf32, #tpu.memory_space<vmem>>, vector<24x128xf32>
    tpu.vector_store %arg41[%c0_357, %c0_358], %443 {strides = array<i32>} : memref<216x128xf32, #tpu.memory_space<vmem>>, vector<24x128xf32>,
    %c6_i32_359 = arith.constant 6 : i32
    %445 = tpu.dynamic_rotate %438 by %c6_i32_359 dim 1 : vector<24x128xf32>, i32 -> vector<24x128xf32>
    %c6_i32_360 = arith.constant 6 : i32
    %446 = vector.broadcast %c6_i32_360 : i32 to vector<24x128xi32>
    %447 = arith.cmpi sge, %0, %446 : vector<24x128xi32>
    %cst_361 = arith.constant 0.000000e+00 : f32
    %448 = vector.broadcast %cst_361 : f32 to vector<24x128xf32>
    %449 = arith.select %447, %445, %448 : vector<24x128xi1>, vector<24x128xf32>
    %c24_362 = arith.constant 24 : index
    %c0_363 = arith.constant 0 : index
    %450 = vector.load %arg41[%c24_362, %c0_363] : memref<216x128xf32, #tpu.memory_space<vmem>>, vector<24x128xf32>
    tpu.vector_store %arg41[%c24_362, %c0_363], %449 {strides = array<i32>} : memref<216x128xf32, #tpu.memory_space<vmem>>, vector<24x128xf32>,
    %c4_i32_364 = arith.constant 4 : i32
    %451 = tpu.dynamic_rotate %438 by %c4_i32_364 dim 1 : vector<24x128xf32>, i32 -> vector<24x128xf32>
    %c4_i32_365 = arith.constant 4 : i32
    %452 = vector.broadcast %c4_i32_365 : i32 to vector<24x128xi32>
    %453 = arith.cmpi sge, %0, %452 : vector<24x128xi32>
    %cst_366 = arith.constant 0.000000e+00 : f32
    %454 = vector.broadcast %cst_366 : f32 to vector<24x128xf32>
    %455 = arith.select %453, %451, %454 : vector<24x128xi1>, vector<24x128xf32>
    %c48_367 = arith.constant 48 : index
    %c0_368 = arith.constant 0 : index
    %456 = vector.load %arg41[%c48_367, %c0_368] : memref<216x128xf32, #tpu.memory_space<vmem>>, vector<24x128xf32>
    tpu.vector_store %arg41[%c48_367, %c0_368], %455 {strides = array<i32>} : memref<216x128xf32, #tpu.memory_space<vmem>>, vector<24x128xf32>,
    %c2_i32_369 = arith.constant 2 : i32
    %457 = tpu.dynamic_rotate %438 by %c2_i32_369 dim 1 : vector<24x128xf32>, i32 -> vector<24x128xf32>
    %c2_i32_370 = arith.constant 2 : i32
    %458 = vector.broadcast %c2_i32_370 : i32 to vector<24x128xi32>
    %459 = arith.cmpi sge, %0, %458 : vector<24x128xi32>
    %cst_371 = arith.constant 0.000000e+00 : f32
    %460 = vector.broadcast %cst_371 : f32 to vector<24x128xf32>
    %461 = arith.select %459, %457, %460 : vector<24x128xi1>, vector<24x128xf32>
    %c72_372 = arith.constant 72 : index
    %c0_373 = arith.constant 0 : index
    %462 = vector.load %arg41[%c72_372, %c0_373] : memref<216x128xf32, #tpu.memory_space<vmem>>, vector<24x128xf32>
    tpu.vector_store %arg41[%c72_372, %c0_373], %461 {strides = array<i32>} : memref<216x128xf32, #tpu.memory_space<vmem>>, vector<24x128xf32>,
    %c96_374 = arith.constant 96 : index
    %c0_375 = arith.constant 0 : index
    %463 = vector.load %arg41[%c96_374, %c0_375] : memref<216x128xf32, #tpu.memory_space<vmem>>, vector<24x128xf32>
    tpu.vector_store %arg41[%c96_374, %c0_375], %438 {strides = array<i32>} : memref<216x128xf32, #tpu.memory_space<vmem>>, vector<24x128xf32>,
    %c126_i32_376 = arith.constant 126 : i32
    %464 = tpu.dynamic_rotate %438 by %c126_i32_376 dim 1 : vector<24x128xf32>, i32 -> vector<24x128xf32>
    %c126_i32_377 = arith.constant 126 : i32
    %465 = vector.broadcast %c126_i32_377 : i32 to vector<24x128xi32>
    %466 = arith.cmpi slt, %0, %465 : vector<24x128xi32>
    %cst_378 = arith.constant 0.000000e+00 : f32
    %467 = vector.broadcast %cst_378 : f32 to vector<24x128xf32>
    %468 = arith.select %466, %464, %467 : vector<24x128xi1>, vector<24x128xf32>
    %c120_379 = arith.constant 120 : index
    %c0_380 = arith.constant 0 : index
    %469 = vector.load %arg41[%c120_379, %c0_380] : memref<216x128xf32, #tpu.memory_space<vmem>>, vector<24x128xf32>
    tpu.vector_store %arg41[%c120_379, %c0_380], %468 {strides = array<i32>} : memref<216x128xf32, #tpu.memory_space<vmem>>, vector<24x128xf32>,
    %c124_i32_381 = arith.constant 124 : i32
    %470 = tpu.dynamic_rotate %438 by %c124_i32_381 dim 1 : vector<24x128xf32>, i32 -> vector<24x128xf32>
    %c124_i32_382 = arith.constant 124 : i32
    %471 = vector.broadcast %c124_i32_382 : i32 to vector<24x128xi32>
    %472 = arith.cmpi slt, %0, %471 : vector<24x128xi32>
    %cst_383 = arith.constant 0.000000e+00 : f32
    %473 = vector.broadcast %cst_383 : f32 to vector<24x128xf32>
    %474 = arith.select %472, %470, %473 : vector<24x128xi1>, vector<24x128xf32>
    %c144_384 = arith.constant 144 : index
    %c0_385 = arith.constant 0 : index
    %475 = vector.load %arg41[%c144_384, %c0_385] : memref<216x128xf32, #tpu.memory_space<vmem>>, vector<24x128xf32>
    tpu.vector_store %arg41[%c144_384, %c0_385], %474 {strides = array<i32>} : memref<216x128xf32, #tpu.memory_space<vmem>>, vector<24x128xf32>,
    %c122_i32_386 = arith.constant 122 : i32
    %476 = tpu.dynamic_rotate %438 by %c122_i32_386 dim 1 : vector<24x128xf32>, i32 -> vector<24x128xf32>
    %c122_i32_387 = arith.constant 122 : i32
    %477 = vector.broadcast %c122_i32_387 : i32 to vector<24x128xi32>
    %478 = arith.cmpi slt, %0, %477 : vector<24x128xi32>
    %cst_388 = arith.constant 0.000000e+00 : f32
    %479 = vector.broadcast %cst_388 : f32 to vector<24x128xf32>
    %480 = arith.select %478, %476, %479 : vector<24x128xi1>, vector<24x128xf32>
    %c168_389 = arith.constant 168 : index
    %c0_390 = arith.constant 0 : index
    %481 = vector.load %arg41[%c168_389, %c0_390] : memref<216x128xf32, #tpu.memory_space<vmem>>, vector<24x128xf32>
    tpu.vector_store %arg41[%c168_389, %c0_390], %480 {strides = array<i32>} : memref<216x128xf32, #tpu.memory_space<vmem>>, vector<24x128xf32>,
    %c120_i32_391 = arith.constant 120 : i32
    %482 = tpu.dynamic_rotate %438 by %c120_i32_391 dim 1 : vector<24x128xf32>, i32 -> vector<24x128xf32>
    %c120_i32_392 = arith.constant 120 : i32
    %483 = vector.broadcast %c120_i32_392 : i32 to vector<24x128xi32>
    %484 = arith.cmpi slt, %0, %483 : vector<24x128xi32>
    %cst_393 = arith.constant 0.000000e+00 : f32
    %485 = vector.broadcast %cst_393 : f32 to vector<24x128xf32>
    %486 = arith.select %484, %482, %485 : vector<24x128xi1>, vector<24x128xf32>
    %c192_394 = arith.constant 192 : index
    %c0_395 = arith.constant 0 : index
    %487 = vector.load %arg41[%c192_394, %c0_395] : memref<216x128xf32, #tpu.memory_space<vmem>>, vector<24x128xf32>
    tpu.vector_store %arg41[%c192_394, %c0_395], %486 {strides = array<i32>} : memref<216x128xf32, #tpu.memory_space<vmem>>, vector<24x128xf32>,
    %c0_396 = arith.constant 0 : index
    %c0_397 = arith.constant 0 : index
    %488 = vector.load %arg27[%c0_396, %c0_397] : memref<24x216xf32, #tpu.memory_space<vmem>>, vector<24x216xf32>
    %c0_398 = arith.constant 0 : index
    %c0_399 = arith.constant 0 : index
    %489 = vector.load %arg41[%c0_398, %c0_399] : memref<216x128xf32, #tpu.memory_space<vmem>>, vector<216x128xf32>
    %cst_400 = arith.constant dense<0.000000e+00> : vector<24x128xf32>
    %490 = tpu.matmul %488, %489, %cst_400 {dimension_numbers = #tpu.dot_dimension_numbers<[1], [0], [0], [1], [0, 0, 1, 1], [], []>} : vector<24x216xf32>, vector<216x128xf32>, vector<24x128xf32> -> vector<24x128xf32>
    %c0_401 = arith.constant 0 : index
    %c0_402 = arith.constant 0 : index
    %491 = vector.load %arg28[%c0_401, %c0_402] : memref<24x1xf32, #tpu.memory_space<vmem>>, vector<24x1xf32>
    %492 = vector.broadcast %491 : vector<24x1xf32> to vector<24x128xf32>
    %493 = arith.addf %490, %492 : vector<24x128xf32>
    %cst_403 = arith.constant 0.000000e+00 : f32
    %494 = vector.broadcast %cst_403 : f32 to vector<24x128xf32>
    %495 = arith.maximumf %493, %494 : vector<24x128xf32>
    %496 = arith.addf %417, %495 : vector<24x128xf32>
    %cst_404 = arith.constant 0.000000e+00 : f32
    %497 = vector.broadcast %cst_404 : f32 to vector<24x128xf32>
    %498 = arith.maximumf %496, %497 : vector<24x128xf32>
    %499 = arith.addf %414, %495 : vector<24x128xf32>
    %c4_i32_405 = arith.constant 4 : i32
    %500 = tpu.dynamic_rotate %498 by %c4_i32_405 dim 1 : vector<24x128xf32>, i32 -> vector<24x128xf32>
    %c4_i32_406 = arith.constant 4 : i32
    %501 = vector.broadcast %c4_i32_406 : i32 to vector<24x128xi32>
    %502 = arith.cmpi sge, %0, %501 : vector<24x128xi32>
    %cst_407 = arith.constant 0.000000e+00 : f32
    %503 = vector.broadcast %cst_407 : f32 to vector<24x128xf32>
    %504 = arith.select %502, %500, %503 : vector<24x128xi1>, vector<24x128xf32>
    %c0_408 = arith.constant 0 : index
    %c0_409 = arith.constant 0 : index
    %505 = vector.load %arg40[%c0_408, %c0_409] : memref<72x128xf32, #tpu.memory_space<vmem>>, vector<24x128xf32>
    tpu.vector_store %arg40[%c0_408, %c0_409], %504 {strides = array<i32>} : memref<72x128xf32, #tpu.memory_space<vmem>>, vector<24x128xf32>,
    %c24_410 = arith.constant 24 : index
    %c0_411 = arith.constant 0 : index
    %506 = vector.load %arg40[%c24_410, %c0_411] : memref<72x128xf32, #tpu.memory_space<vmem>>, vector<24x128xf32>
    tpu.vector_store %arg40[%c24_410, %c0_411], %498 {strides = array<i32>} : memref<72x128xf32, #tpu.memory_space<vmem>>, vector<24x128xf32>,
    %c124_i32_412 = arith.constant 124 : i32
    %507 = tpu.dynamic_rotate %498 by %c124_i32_412 dim 1 : vector<24x128xf32>, i32 -> vector<24x128xf32>
    %c124_i32_413 = arith.constant 124 : i32
    %508 = vector.broadcast %c124_i32_413 : i32 to vector<24x128xi32>
    %509 = arith.cmpi slt, %0, %508 : vector<24x128xi32>
    %cst_414 = arith.constant 0.000000e+00 : f32
    %510 = vector.broadcast %cst_414 : f32 to vector<24x128xf32>
    %511 = arith.select %509, %507, %510 : vector<24x128xi1>, vector<24x128xf32>
    %c48_415 = arith.constant 48 : index
    %c0_416 = arith.constant 0 : index
    %512 = vector.load %arg40[%c48_415, %c0_416] : memref<72x128xf32, #tpu.memory_space<vmem>>, vector<24x128xf32>
    tpu.vector_store %arg40[%c48_415, %c0_416], %511 {strides = array<i32>} : memref<72x128xf32, #tpu.memory_space<vmem>>, vector<24x128xf32>,
    %c0_417 = arith.constant 0 : index
    %c0_418 = arith.constant 0 : index
    %513 = vector.load %arg29[%c0_417, %c0_418] : memref<24x72xf32, #tpu.memory_space<vmem>>, vector<24x72xf32>
    %c0_419 = arith.constant 0 : index
    %c0_420 = arith.constant 0 : index
    %514 = vector.load %arg40[%c0_419, %c0_420] : memref<72x128xf32, #tpu.memory_space<vmem>>, vector<72x128xf32>
    %cst_421 = arith.constant dense<0.000000e+00> : vector<24x128xf32>
    %515 = tpu.matmul %513, %514, %cst_421 {dimension_numbers = #tpu.dot_dimension_numbers<[1], [0], [0], [1], [0, 0, 1, 1], [], []>} : vector<24x72xf32>, vector<72x128xf32>, vector<24x128xf32> -> vector<24x128xf32>
    %c0_422 = arith.constant 0 : index
    %c0_423 = arith.constant 0 : index
    %516 = vector.load %arg30[%c0_422, %c0_423] : memref<24x1xf32, #tpu.memory_space<vmem>>, vector<24x1xf32>
    %517 = vector.broadcast %516 : vector<24x1xf32> to vector<24x128xf32>
    %518 = arith.addf %515, %517 : vector<24x128xf32>
    %cst_424 = arith.constant 0.000000e+00 : f32
    %519 = vector.broadcast %cst_424 : f32 to vector<24x128xf32>
    %520 = arith.maximumf %518, %519 : vector<24x128xf32>
    %c16_i32_425 = arith.constant 16 : i32
    %521 = tpu.dynamic_rotate %520 by %c16_i32_425 dim 1 : vector<24x128xf32>, i32 -> vector<24x128xf32>
    %c16_i32_426 = arith.constant 16 : i32
    %522 = vector.broadcast %c16_i32_426 : i32 to vector<24x128xi32>
    %523 = arith.cmpi sge, %0, %522 : vector<24x128xi32>
    %cst_427 = arith.constant 0.000000e+00 : f32
    %524 = vector.broadcast %cst_427 : f32 to vector<24x128xf32>
    %525 = arith.select %523, %521, %524 : vector<24x128xi1>, vector<24x128xf32>
    %c0_428 = arith.constant 0 : index
    %c0_429 = arith.constant 0 : index
    %526 = vector.load %arg41[%c0_428, %c0_429] : memref<216x128xf32, #tpu.memory_space<vmem>>, vector<24x128xf32>
    tpu.vector_store %arg41[%c0_428, %c0_429], %525 {strides = array<i32>} : memref<216x128xf32, #tpu.memory_space<vmem>>, vector<24x128xf32>,
    %c12_i32_430 = arith.constant 12 : i32
    %527 = tpu.dynamic_rotate %520 by %c12_i32_430 dim 1 : vector<24x128xf32>, i32 -> vector<24x128xf32>
    %c12_i32_431 = arith.constant 12 : i32
    %528 = vector.broadcast %c12_i32_431 : i32 to vector<24x128xi32>
    %529 = arith.cmpi sge, %0, %528 : vector<24x128xi32>
    %cst_432 = arith.constant 0.000000e+00 : f32
    %530 = vector.broadcast %cst_432 : f32 to vector<24x128xf32>
    %531 = arith.select %529, %527, %530 : vector<24x128xi1>, vector<24x128xf32>
    %c24_433 = arith.constant 24 : index
    %c0_434 = arith.constant 0 : index
    %532 = vector.load %arg41[%c24_433, %c0_434] : memref<216x128xf32, #tpu.memory_space<vmem>>, vector<24x128xf32>
    tpu.vector_store %arg41[%c24_433, %c0_434], %531 {strides = array<i32>} : memref<216x128xf32, #tpu.memory_space<vmem>>, vector<24x128xf32>,
    %c8_i32_435 = arith.constant 8 : i32
    %533 = tpu.dynamic_rotate %520 by %c8_i32_435 dim 1 : vector<24x128xf32>, i32 -> vector<24x128xf32>
    %c8_i32_436 = arith.constant 8 : i32
    %534 = vector.broadcast %c8_i32_436 : i32 to vector<24x128xi32>
    %535 = arith.cmpi sge, %0, %534 : vector<24x128xi32>
    %cst_437 = arith.constant 0.000000e+00 : f32
    %536 = vector.broadcast %cst_437 : f32 to vector<24x128xf32>
    %537 = arith.select %535, %533, %536 : vector<24x128xi1>, vector<24x128xf32>
    %c48_438 = arith.constant 48 : index
    %c0_439 = arith.constant 0 : index
    %538 = vector.load %arg41[%c48_438, %c0_439] : memref<216x128xf32, #tpu.memory_space<vmem>>, vector<24x128xf32>
    tpu.vector_store %arg41[%c48_438, %c0_439], %537 {strides = array<i32>} : memref<216x128xf32, #tpu.memory_space<vmem>>, vector<24x128xf32>,
    %c4_i32_440 = arith.constant 4 : i32
    %539 = tpu.dynamic_rotate %520 by %c4_i32_440 dim 1 : vector<24x128xf32>, i32 -> vector<24x128xf32>
    %c4_i32_441 = arith.constant 4 : i32
    %540 = vector.broadcast %c4_i32_441 : i32 to vector<24x128xi32>
    %541 = arith.cmpi sge, %0, %540 : vector<24x128xi32>
    %cst_442 = arith.constant 0.000000e+00 : f32
    %542 = vector.broadcast %cst_442 : f32 to vector<24x128xf32>
    %543 = arith.select %541, %539, %542 : vector<24x128xi1>, vector<24x128xf32>
    %c72_443 = arith.constant 72 : index
    %c0_444 = arith.constant 0 : index
    %544 = vector.load %arg41[%c72_443, %c0_444] : memref<216x128xf32, #tpu.memory_space<vmem>>, vector<24x128xf32>
    tpu.vector_store %arg41[%c72_443, %c0_444], %543 {strides = array<i32>} : memref<216x128xf32, #tpu.memory_space<vmem>>, vector<24x128xf32>,
    %c96_445 = arith.constant 96 : index
    %c0_446 = arith.constant 0 : index
    %545 = vector.load %arg41[%c96_445, %c0_446] : memref<216x128xf32, #tpu.memory_space<vmem>>, vector<24x128xf32>
    tpu.vector_store %arg41[%c96_445, %c0_446], %520 {strides = array<i32>} : memref<216x128xf32, #tpu.memory_space<vmem>>, vector<24x128xf32>,
    %c124_i32_447 = arith.constant 124 : i32
    %546 = tpu.dynamic_rotate %520 by %c124_i32_447 dim 1 : vector<24x128xf32>, i32 -> vector<24x128xf32>
    %c124_i32_448 = arith.constant 124 : i32
    %547 = vector.broadcast %c124_i32_448 : i32 to vector<24x128xi32>
    %548 = arith.cmpi slt, %0, %547 : vector<24x128xi32>
    %cst_449 = arith.constant 0.000000e+00 : f32
    %549 = vector.broadcast %cst_449 : f32 to vector<24x128xf32>
    %550 = arith.select %548, %546, %549 : vector<24x128xi1>, vector<24x128xf32>
    %c120_450 = arith.constant 120 : index
    %c0_451 = arith.constant 0 : index
    %551 = vector.load %arg41[%c120_450, %c0_451] : memref<216x128xf32, #tpu.memory_space<vmem>>, vector<24x128xf32>
    tpu.vector_store %arg41[%c120_450, %c0_451], %550 {strides = array<i32>} : memref<216x128xf32, #tpu.memory_space<vmem>>, vector<24x128xf32>,
    %c120_i32_452 = arith.constant 120 : i32
    %552 = tpu.dynamic_rotate %520 by %c120_i32_452 dim 1 : vector<24x128xf32>, i32 -> vector<24x128xf32>
    %c120_i32_453 = arith.constant 120 : i32
    %553 = vector.broadcast %c120_i32_453 : i32 to vector<24x128xi32>
    %554 = arith.cmpi slt, %0, %553 : vector<24x128xi32>
    %cst_454 = arith.constant 0.000000e+00 : f32
    %555 = vector.broadcast %cst_454 : f32 to vector<24x128xf32>
    %556 = arith.select %554, %552, %555 : vector<24x128xi1>, vector<24x128xf32>
    %c144_455 = arith.constant 144 : index
    %c0_456 = arith.constant 0 : index
    %557 = vector.load %arg41[%c144_455, %c0_456] : memref<216x128xf32, #tpu.memory_space<vmem>>, vector<24x128xf32>
    tpu.vector_store %arg41[%c144_455, %c0_456], %556 {strides = array<i32>} : memref<216x128xf32, #tpu.memory_space<vmem>>, vector<24x128xf32>,
    %c116_i32_457 = arith.constant 116 : i32
    %558 = tpu.dynamic_rotate %520 by %c116_i32_457 dim 1 : vector<24x128xf32>, i32 -> vector<24x128xf32>
    %c116_i32_458 = arith.constant 116 : i32
    %559 = vector.broadcast %c116_i32_458 : i32 to vector<24x128xi32>
    %560 = arith.cmpi slt, %0, %559 : vector<24x128xi32>
    %cst_459 = arith.constant 0.000000e+00 : f32
    %561 = vector.broadcast %cst_459 : f32 to vector<24x128xf32>
    %562 = arith.select %560, %558, %561 : vector<24x128xi1>, vector<24x128xf32>
    %c168_460 = arith.constant 168 : index
    %c0_461 = arith.constant 0 : index
    %563 = vector.load %arg41[%c168_460, %c0_461] : memref<216x128xf32, #tpu.memory_space<vmem>>, vector<24x128xf32>
    tpu.vector_store %arg41[%c168_460, %c0_461], %562 {strides = array<i32>} : memref<216x128xf32, #tpu.memory_space<vmem>>, vector<24x128xf32>,
    %c112_i32_462 = arith.constant 112 : i32
    %564 = tpu.dynamic_rotate %520 by %c112_i32_462 dim 1 : vector<24x128xf32>, i32 -> vector<24x128xf32>
    %c112_i32_463 = arith.constant 112 : i32
    %565 = vector.broadcast %c112_i32_463 : i32 to vector<24x128xi32>
    %566 = arith.cmpi slt, %0, %565 : vector<24x128xi32>
    %cst_464 = arith.constant 0.000000e+00 : f32
    %567 = vector.broadcast %cst_464 : f32 to vector<24x128xf32>
    %568 = arith.select %566, %564, %567 : vector<24x128xi1>, vector<24x128xf32>
    %c192_465 = arith.constant 192 : index
    %c0_466 = arith.constant 0 : index
    %569 = vector.load %arg41[%c192_465, %c0_466] : memref<216x128xf32, #tpu.memory_space<vmem>>, vector<24x128xf32>
    tpu.vector_store %arg41[%c192_465, %c0_466], %568 {strides = array<i32>} : memref<216x128xf32, #tpu.memory_space<vmem>>, vector<24x128xf32>,
    %c0_467 = arith.constant 0 : index
    %c0_468 = arith.constant 0 : index
    %570 = vector.load %arg31[%c0_467, %c0_468] : memref<24x216xf32, #tpu.memory_space<vmem>>, vector<24x216xf32>
    %c0_469 = arith.constant 0 : index
    %c0_470 = arith.constant 0 : index
    %571 = vector.load %arg41[%c0_469, %c0_470] : memref<216x128xf32, #tpu.memory_space<vmem>>, vector<216x128xf32>
    %cst_471 = arith.constant dense<0.000000e+00> : vector<24x128xf32>
    %572 = tpu.matmul %570, %571, %cst_471 {dimension_numbers = #tpu.dot_dimension_numbers<[1], [0], [0], [1], [0, 0, 1, 1], [], []>} : vector<24x216xf32>, vector<216x128xf32>, vector<24x128xf32> -> vector<24x128xf32>
    %c0_472 = arith.constant 0 : index
    %c0_473 = arith.constant 0 : index
    %573 = vector.load %arg32[%c0_472, %c0_473] : memref<24x1xf32, #tpu.memory_space<vmem>>, vector<24x1xf32>
    %574 = vector.broadcast %573 : vector<24x1xf32> to vector<24x128xf32>
    %575 = arith.addf %572, %574 : vector<24x128xf32>
    %cst_474 = arith.constant 0.000000e+00 : f32
    %576 = vector.broadcast %cst_474 : f32 to vector<24x128xf32>
    %577 = arith.maximumf %575, %576 : vector<24x128xf32>
    %578 = arith.addf %498, %577 : vector<24x128xf32>
    %cst_475 = arith.constant 0.000000e+00 : f32
    %579 = vector.broadcast %cst_475 : f32 to vector<24x128xf32>
    %580 = arith.maximumf %578, %579 : vector<24x128xf32>
    %581 = arith.addf %499, %577 : vector<24x128xf32>
    %c8_i32_476 = arith.constant 8 : i32
    %582 = tpu.dynamic_rotate %580 by %c8_i32_476 dim 1 : vector<24x128xf32>, i32 -> vector<24x128xf32>
    %c8_i32_477 = arith.constant 8 : i32
    %583 = vector.broadcast %c8_i32_477 : i32 to vector<24x128xi32>
    %584 = arith.cmpi sge, %0, %583 : vector<24x128xi32>
    %cst_478 = arith.constant 0.000000e+00 : f32
    %585 = vector.broadcast %cst_478 : f32 to vector<24x128xf32>
    %586 = arith.select %584, %582, %585 : vector<24x128xi1>, vector<24x128xf32>
    %c0_479 = arith.constant 0 : index
    %c0_480 = arith.constant 0 : index
    %587 = vector.load %arg40[%c0_479, %c0_480] : memref<72x128xf32, #tpu.memory_space<vmem>>, vector<24x128xf32>
    tpu.vector_store %arg40[%c0_479, %c0_480], %586 {strides = array<i32>} : memref<72x128xf32, #tpu.memory_space<vmem>>, vector<24x128xf32>,
    %c24_481 = arith.constant 24 : index
    %c0_482 = arith.constant 0 : index
    %588 = vector.load %arg40[%c24_481, %c0_482] : memref<72x128xf32, #tpu.memory_space<vmem>>, vector<24x128xf32>
    tpu.vector_store %arg40[%c24_481, %c0_482], %580 {strides = array<i32>} : memref<72x128xf32, #tpu.memory_space<vmem>>, vector<24x128xf32>,
    %c120_i32_483 = arith.constant 120 : i32
    %589 = tpu.dynamic_rotate %580 by %c120_i32_483 dim 1 : vector<24x128xf32>, i32 -> vector<24x128xf32>
    %c120_i32_484 = arith.constant 120 : i32
    %590 = vector.broadcast %c120_i32_484 : i32 to vector<24x128xi32>
    %591 = arith.cmpi slt, %0, %590 : vector<24x128xi32>
    %cst_485 = arith.constant 0.000000e+00 : f32
    %592 = vector.broadcast %cst_485 : f32 to vector<24x128xf32>
    %593 = arith.select %591, %589, %592 : vector<24x128xi1>, vector<24x128xf32>
    %c48_486 = arith.constant 48 : index
    %c0_487 = arith.constant 0 : index
    %594 = vector.load %arg40[%c48_486, %c0_487] : memref<72x128xf32, #tpu.memory_space<vmem>>, vector<24x128xf32>
    tpu.vector_store %arg40[%c48_486, %c0_487], %593 {strides = array<i32>} : memref<72x128xf32, #tpu.memory_space<vmem>>, vector<24x128xf32>,
    %c0_488 = arith.constant 0 : index
    %c0_489 = arith.constant 0 : index
    %595 = vector.load %arg33[%c0_488, %c0_489] : memref<24x72xf32, #tpu.memory_space<vmem>>, vector<24x72xf32>
    %c0_490 = arith.constant 0 : index
    %c0_491 = arith.constant 0 : index
    %596 = vector.load %arg40[%c0_490, %c0_491] : memref<72x128xf32, #tpu.memory_space<vmem>>, vector<72x128xf32>
    %cst_492 = arith.constant dense<0.000000e+00> : vector<24x128xf32>
    %597 = tpu.matmul %595, %596, %cst_492 {dimension_numbers = #tpu.dot_dimension_numbers<[1], [0], [0], [1], [0, 0, 1, 1], [], []>} : vector<24x72xf32>, vector<72x128xf32>, vector<24x128xf32> -> vector<24x128xf32>
    %c0_493 = arith.constant 0 : index
    %c0_494 = arith.constant 0 : index
    %598 = vector.load %arg34[%c0_493, %c0_494] : memref<24x1xf32, #tpu.memory_space<vmem>>, vector<24x1xf32>
    %599 = vector.broadcast %598 : vector<24x1xf32> to vector<24x128xf32>
    %600 = arith.addf %597, %599 : vector<24x128xf32>
    %cst_495 = arith.constant 0.000000e+00 : f32
    %601 = vector.broadcast %cst_495 : f32 to vector<24x128xf32>
    %602 = arith.maximumf %600, %601 : vector<24x128xf32>
    %c32_i32_496 = arith.constant 32 : i32
    %603 = tpu.dynamic_rotate %602 by %c32_i32_496 dim 1 : vector<24x128xf32>, i32 -> vector<24x128xf32>
    %c32_i32_497 = arith.constant 32 : i32
    %604 = vector.broadcast %c32_i32_497 : i32 to vector<24x128xi32>
    %605 = arith.cmpi sge, %0, %604 : vector<24x128xi32>
    %cst_498 = arith.constant 0.000000e+00 : f32
    %606 = vector.broadcast %cst_498 : f32 to vector<24x128xf32>
    %607 = arith.select %605, %603, %606 : vector<24x128xi1>, vector<24x128xf32>
    %c0_499 = arith.constant 0 : index
    %c0_500 = arith.constant 0 : index
    %608 = vector.load %arg41[%c0_499, %c0_500] : memref<216x128xf32, #tpu.memory_space<vmem>>, vector<24x128xf32>
    tpu.vector_store %arg41[%c0_499, %c0_500], %607 {strides = array<i32>} : memref<216x128xf32, #tpu.memory_space<vmem>>, vector<24x128xf32>,
    %c24_i32_501 = arith.constant 24 : i32
    %609 = tpu.dynamic_rotate %602 by %c24_i32_501 dim 1 : vector<24x128xf32>, i32 -> vector<24x128xf32>
    %c24_i32_502 = arith.constant 24 : i32
    %610 = vector.broadcast %c24_i32_502 : i32 to vector<24x128xi32>
    %611 = arith.cmpi sge, %0, %610 : vector<24x128xi32>
    %cst_503 = arith.constant 0.000000e+00 : f32
    %612 = vector.broadcast %cst_503 : f32 to vector<24x128xf32>
    %613 = arith.select %611, %609, %612 : vector<24x128xi1>, vector<24x128xf32>
    %c24_504 = arith.constant 24 : index
    %c0_505 = arith.constant 0 : index
    %614 = vector.load %arg41[%c24_504, %c0_505] : memref<216x128xf32, #tpu.memory_space<vmem>>, vector<24x128xf32>
    tpu.vector_store %arg41[%c24_504, %c0_505], %613 {strides = array<i32>} : memref<216x128xf32, #tpu.memory_space<vmem>>, vector<24x128xf32>,
    %c16_i32_506 = arith.constant 16 : i32
    %615 = tpu.dynamic_rotate %602 by %c16_i32_506 dim 1 : vector<24x128xf32>, i32 -> vector<24x128xf32>
    %c16_i32_507 = arith.constant 16 : i32
    %616 = vector.broadcast %c16_i32_507 : i32 to vector<24x128xi32>
    %617 = arith.cmpi sge, %0, %616 : vector<24x128xi32>
    %cst_508 = arith.constant 0.000000e+00 : f32
    %618 = vector.broadcast %cst_508 : f32 to vector<24x128xf32>
    %619 = arith.select %617, %615, %618 : vector<24x128xi1>, vector<24x128xf32>
    %c48_509 = arith.constant 48 : index
    %c0_510 = arith.constant 0 : index
    %620 = vector.load %arg41[%c48_509, %c0_510] : memref<216x128xf32, #tpu.memory_space<vmem>>, vector<24x128xf32>
    tpu.vector_store %arg41[%c48_509, %c0_510], %619 {strides = array<i32>} : memref<216x128xf32, #tpu.memory_space<vmem>>, vector<24x128xf32>,
    %c8_i32_511 = arith.constant 8 : i32
    %621 = tpu.dynamic_rotate %602 by %c8_i32_511 dim 1 : vector<24x128xf32>, i32 -> vector<24x128xf32>
    %c8_i32_512 = arith.constant 8 : i32
    %622 = vector.broadcast %c8_i32_512 : i32 to vector<24x128xi32>
    %623 = arith.cmpi sge, %0, %622 : vector<24x128xi32>
    %cst_513 = arith.constant 0.000000e+00 : f32
    %624 = vector.broadcast %cst_513 : f32 to vector<24x128xf32>
    %625 = arith.select %623, %621, %624 : vector<24x128xi1>, vector<24x128xf32>
    %c72_514 = arith.constant 72 : index
    %c0_515 = arith.constant 0 : index
    %626 = vector.load %arg41[%c72_514, %c0_515] : memref<216x128xf32, #tpu.memory_space<vmem>>, vector<24x128xf32>
    tpu.vector_store %arg41[%c72_514, %c0_515], %625 {strides = array<i32>} : memref<216x128xf32, #tpu.memory_space<vmem>>, vector<24x128xf32>,
    %c96_516 = arith.constant 96 : index
    %c0_517 = arith.constant 0 : index
    %627 = vector.load %arg41[%c96_516, %c0_517] : memref<216x128xf32, #tpu.memory_space<vmem>>, vector<24x128xf32>
    tpu.vector_store %arg41[%c96_516, %c0_517], %602 {strides = array<i32>} : memref<216x128xf32, #tpu.memory_space<vmem>>, vector<24x128xf32>,
    %c120_i32_518 = arith.constant 120 : i32
    %628 = tpu.dynamic_rotate %602 by %c120_i32_518 dim 1 : vector<24x128xf32>, i32 -> vector<24x128xf32>
    %c120_i32_519 = arith.constant 120 : i32
    %629 = vector.broadcast %c120_i32_519 : i32 to vector<24x128xi32>
    %630 = arith.cmpi slt, %0, %629 : vector<24x128xi32>
    %cst_520 = arith.constant 0.000000e+00 : f32
    %631 = vector.broadcast %cst_520 : f32 to vector<24x128xf32>
    %632 = arith.select %630, %628, %631 : vector<24x128xi1>, vector<24x128xf32>
    %c120_521 = arith.constant 120 : index
    %c0_522 = arith.constant 0 : index
    %633 = vector.load %arg41[%c120_521, %c0_522] : memref<216x128xf32, #tpu.memory_space<vmem>>, vector<24x128xf32>
    tpu.vector_store %arg41[%c120_521, %c0_522], %632 {strides = array<i32>} : memref<216x128xf32, #tpu.memory_space<vmem>>, vector<24x128xf32>,
    %c112_i32_523 = arith.constant 112 : i32
    %634 = tpu.dynamic_rotate %602 by %c112_i32_523 dim 1 : vector<24x128xf32>, i32 -> vector<24x128xf32>
    %c112_i32_524 = arith.constant 112 : i32
    %635 = vector.broadcast %c112_i32_524 : i32 to vector<24x128xi32>
    %636 = arith.cmpi slt, %0, %635 : vector<24x128xi32>
    %cst_525 = arith.constant 0.000000e+00 : f32
    %637 = vector.broadcast %cst_525 : f32 to vector<24x128xf32>
    %638 = arith.select %636, %634, %637 : vector<24x128xi1>, vector<24x128xf32>
    %c144_526 = arith.constant 144 : index
    %c0_527 = arith.constant 0 : index
    %639 = vector.load %arg41[%c144_526, %c0_527] : memref<216x128xf32, #tpu.memory_space<vmem>>, vector<24x128xf32>
    tpu.vector_store %arg41[%c144_526, %c0_527], %638 {strides = array<i32>} : memref<216x128xf32, #tpu.memory_space<vmem>>, vector<24x128xf32>,
    %c104_i32_528 = arith.constant 104 : i32
    %640 = tpu.dynamic_rotate %602 by %c104_i32_528 dim 1 : vector<24x128xf32>, i32 -> vector<24x128xf32>
    %c104_i32_529 = arith.constant 104 : i32
    %641 = vector.broadcast %c104_i32_529 : i32 to vector<24x128xi32>
    %642 = arith.cmpi slt, %0, %641 : vector<24x128xi32>
    %cst_530 = arith.constant 0.000000e+00 : f32
    %643 = vector.broadcast %cst_530 : f32 to vector<24x128xf32>
    %644 = arith.select %642, %640, %643 : vector<24x128xi1>, vector<24x128xf32>
    %c168_531 = arith.constant 168 : index
    %c0_532 = arith.constant 0 : index
    %645 = vector.load %arg41[%c168_531, %c0_532] : memref<216x128xf32, #tpu.memory_space<vmem>>, vector<24x128xf32>
    tpu.vector_store %arg41[%c168_531, %c0_532], %644 {strides = array<i32>} : memref<216x128xf32, #tpu.memory_space<vmem>>, vector<24x128xf32>,
    %c96_i32_533 = arith.constant 96 : i32
    %646 = tpu.dynamic_rotate %602 by %c96_i32_533 dim 1 : vector<24x128xf32>, i32 -> vector<24x128xf32>
    %c96_i32_534 = arith.constant 96 : i32
    %647 = vector.broadcast %c96_i32_534 : i32 to vector<24x128xi32>
    %648 = arith.cmpi slt, %0, %647 : vector<24x128xi32>
    %cst_535 = arith.constant 0.000000e+00 : f32
    %649 = vector.broadcast %cst_535 : f32 to vector<24x128xf32>
    %650 = arith.select %648, %646, %649 : vector<24x128xi1>, vector<24x128xf32>
    %c192_536 = arith.constant 192 : index
    %c0_537 = arith.constant 0 : index
    %651 = vector.load %arg41[%c192_536, %c0_537] : memref<216x128xf32, #tpu.memory_space<vmem>>, vector<24x128xf32>
    tpu.vector_store %arg41[%c192_536, %c0_537], %650 {strides = array<i32>} : memref<216x128xf32, #tpu.memory_space<vmem>>, vector<24x128xf32>,
    %c0_538 = arith.constant 0 : index
    %c0_539 = arith.constant 0 : index
    %652 = vector.load %arg35[%c0_538, %c0_539] : memref<24x216xf32, #tpu.memory_space<vmem>>, vector<24x216xf32>
    %c0_540 = arith.constant 0 : index
    %c0_541 = arith.constant 0 : index
    %653 = vector.load %arg41[%c0_540, %c0_541] : memref<216x128xf32, #tpu.memory_space<vmem>>, vector<216x128xf32>
    %cst_542 = arith.constant dense<0.000000e+00> : vector<24x128xf32>
    %654 = tpu.matmul %652, %653, %cst_542 {dimension_numbers = #tpu.dot_dimension_numbers<[1], [0], [0], [1], [0, 0, 1, 1], [], []>} : vector<24x216xf32>, vector<216x128xf32>, vector<24x128xf32> -> vector<24x128xf32>
    %c0_543 = arith.constant 0 : index
    %c0_544 = arith.constant 0 : index
    %655 = vector.load %arg36[%c0_543, %c0_544] : memref<24x1xf32, #tpu.memory_space<vmem>>, vector<24x1xf32>
    %656 = vector.broadcast %655 : vector<24x1xf32> to vector<24x128xf32>
    %657 = arith.addf %654, %656 : vector<24x128xf32>
    %cst_545 = arith.constant 0.000000e+00 : f32
    %658 = vector.broadcast %cst_545 : f32 to vector<24x128xf32>
    %659 = arith.maximumf %657, %658 : vector<24x128xf32>
    %660 = arith.addf %581, %659 : vector<24x128xf32>
    %c0_546 = arith.constant 0 : index
    %c0_547 = arith.constant 0 : index
    %661 = vector.load %arg37[%c0_546, %c0_547] : memref<8x24xf32, #tpu.memory_space<vmem>>, vector<8x24xf32>
    %cst_548 = arith.constant dense<0.000000e+00> : vector<8x128xf32>
    %662 = tpu.matmul %661, %660, %cst_548 {dimension_numbers = #tpu.dot_dimension_numbers<[1], [0], [0], [1], [0, 0, 1, 1], [], []>} : vector<8x24xf32>, vector<24x128xf32>, vector<8x128xf32> -> vector<8x128xf32>
    %c0_549 = arith.constant 0 : index
    %c0_550 = arith.constant 0 : index
    %663 = vector.load %arg38[%c0_549, %c0_550] : memref<8x1xf32, #tpu.memory_space<vmem>>, vector<8x1xf32>
    %664 = vector.broadcast %663 : vector<8x1xf32> to vector<8x128xf32>
    %665 = arith.addf %662, %664 : vector<8x128xf32>
    %c0_551 = arith.constant 0 : index
    %c0_552 = arith.constant 0 : index
    %c0_553 = arith.constant 0 : index
    %666 = vector.load %arg39[%c0_551, %c0_552, %c0_553] : memref<1x8x128xf32, #tpu.memory_space<vmem>>, vector<1x8x128xf32>
    %667 = vector.shape_cast %666 : vector<1x8x128xf32> to vector<8x128xf32>
    %668 = vector.shape_cast %665 : vector<8x128xf32> to vector<1x8x128xf32>
    tpu.vector_store %arg39[%c0_551, %c0_552, %c0_553], %668 {strides = array<i32>} : memref<1x8x128xf32, #tpu.memory_space<vmem>>, vector<1x8x128xf32>,
    return
  }
  func.func @transform_0(%arg0: i32) -> (i32, i32, i32) {
    %c0_i32 = arith.constant 0 : i32
    %c0_i32_0 = arith.constant 0 : i32
    %c0_i32_1 = arith.constant 0 : i32
    return %arg0, %c0_i32, %c0_i32_0 : i32, i32, i32
  }
  func.func @transform_1(%arg0: i32) -> (i32, i32) {
    %c0_i32 = arith.constant 0 : i32
    %c0_i32_0 = arith.constant 0 : i32
    %c0_i32_1 = arith.constant 0 : i32
    return %c0_i32, %c0_i32_0 : i32, i32
  }
  func.func @transform_2(%arg0: i32) -> (i32, i32) {
    %c0_i32 = arith.constant 0 : i32
    %c0_i32_0 = arith.constant 0 : i32
    %c0_i32_1 = arith.constant 0 : i32
    return %c0_i32, %c0_i32_0 : i32, i32
  }
  func.func @transform_3(%arg0: i32) -> (i32, i32) {
    %c0_i32 = arith.constant 0 : i32
    %c0_i32_0 = arith.constant 0 : i32
    %c0_i32_1 = arith.constant 0 : i32
    return %c0_i32, %c0_i32_0 : i32, i32
  }
  func.func @transform_4(%arg0: i32) -> (i32, i32) {
    %c0_i32 = arith.constant 0 : i32
    %c0_i32_0 = arith.constant 0 : i32
    %c0_i32_1 = arith.constant 0 : i32
    return %c0_i32, %c0_i32_0 : i32, i32
  }
  func.func @transform_5(%arg0: i32) -> (i32, i32) {
    %c0_i32 = arith.constant 0 : i32
    %c0_i32_0 = arith.constant 0 : i32
    %c0_i32_1 = arith.constant 0 : i32
    return %c0_i32, %c0_i32_0 : i32, i32
  }
  func.func @transform_6(%arg0: i32) -> (i32, i32) {
    %c0_i32 = arith.constant 0 : i32
    %c0_i32_0 = arith.constant 0 : i32
    %c0_i32_1 = arith.constant 0 : i32
    return %c0_i32, %c0_i32_0 : i32, i32
  }
  func.func @transform_7(%arg0: i32) -> (i32, i32) {
    %c0_i32 = arith.constant 0 : i32
    %c0_i32_0 = arith.constant 0 : i32
    %c0_i32_1 = arith.constant 0 : i32
    return %c0_i32, %c0_i32_0 : i32, i32
  }
  func.func @transform_8(%arg0: i32) -> (i32, i32) {
    %c0_i32 = arith.constant 0 : i32
    %c0_i32_0 = arith.constant 0 : i32
    %c0_i32_1 = arith.constant 0 : i32
    return %c0_i32, %c0_i32_0 : i32, i32
  }
  func.func @transform_9(%arg0: i32) -> (i32, i32) {
    %c0_i32 = arith.constant 0 : i32
    %c0_i32_0 = arith.constant 0 : i32
    %c0_i32_1 = arith.constant 0 : i32
    return %c0_i32, %c0_i32_0 : i32, i32
  }
  func.func @transform_10(%arg0: i32) -> (i32, i32) {
    %c0_i32 = arith.constant 0 : i32
    %c0_i32_0 = arith.constant 0 : i32
    %c0_i32_1 = arith.constant 0 : i32
    return %c0_i32, %c0_i32_0 : i32, i32
  }
  func.func @transform_11(%arg0: i32) -> (i32, i32) {
    %c0_i32 = arith.constant 0 : i32
    %c0_i32_0 = arith.constant 0 : i32
    %c0_i32_1 = arith.constant 0 : i32
    return %c0_i32, %c0_i32_0 : i32, i32
  }
  func.func @transform_12(%arg0: i32) -> (i32, i32) {
    %c0_i32 = arith.constant 0 : i32
    %c0_i32_0 = arith.constant 0 : i32
    %c0_i32_1 = arith.constant 0 : i32
    return %c0_i32, %c0_i32_0 : i32, i32
  }
  func.func @transform_13(%arg0: i32) -> (i32, i32) {
    %c0_i32 = arith.constant 0 : i32
    %c0_i32_0 = arith.constant 0 : i32
    %c0_i32_1 = arith.constant 0 : i32
    return %c0_i32, %c0_i32_0 : i32, i32
  }
  func.func @transform_14(%arg0: i32) -> (i32, i32) {
    %c0_i32 = arith.constant 0 : i32
    %c0_i32_0 = arith.constant 0 : i32
    %c0_i32_1 = arith.constant 0 : i32
    return %c0_i32, %c0_i32_0 : i32, i32
  }
  func.func @transform_15(%arg0: i32) -> (i32, i32) {
    %c0_i32 = arith.constant 0 : i32
    %c0_i32_0 = arith.constant 0 : i32
    %c0_i32_1 = arith.constant 0 : i32
    return %c0_i32, %c0_i32_0 : i32, i32
  }
  func.func @transform_16(%arg0: i32) -> (i32, i32) {
    %c0_i32 = arith.constant 0 : i32
    %c0_i32_0 = arith.constant 0 : i32
    %c0_i32_1 = arith.constant 0 : i32
    return %c0_i32, %c0_i32_0 : i32, i32
  }
  func.func @transform_17(%arg0: i32) -> (i32, i32) {
    %c0_i32 = arith.constant 0 : i32
    %c0_i32_0 = arith.constant 0 : i32
    %c0_i32_1 = arith.constant 0 : i32
    return %c0_i32, %c0_i32_0 : i32, i32
  }
  func.func @transform_18(%arg0: i32) -> (i32, i32) {
    %c0_i32 = arith.constant 0 : i32
    %c0_i32_0 = arith.constant 0 : i32
    %c0_i32_1 = arith.constant 0 : i32
    return %c0_i32, %c0_i32_0 : i32, i32
  }
  func.func @transform_19(%arg0: i32) -> (i32, i32) {
    %c0_i32 = arith.constant 0 : i32
    %c0_i32_0 = arith.constant 0 : i32
    %c0_i32_1 = arith.constant 0 : i32
    return %c0_i32, %c0_i32_0 : i32, i32
  }
  func.func @transform_20(%arg0: i32) -> (i32, i32) {
    %c0_i32 = arith.constant 0 : i32
    %c0_i32_0 = arith.constant 0 : i32
    %c0_i32_1 = arith.constant 0 : i32
    return %c0_i32, %c0_i32_0 : i32, i32
  }
  func.func @transform_21(%arg0: i32) -> (i32, i32) {
    %c0_i32 = arith.constant 0 : i32
    %c0_i32_0 = arith.constant 0 : i32
    %c0_i32_1 = arith.constant 0 : i32
    return %c0_i32, %c0_i32_0 : i32, i32
  }
  func.func @transform_22(%arg0: i32) -> (i32, i32) {
    %c0_i32 = arith.constant 0 : i32
    %c0_i32_0 = arith.constant 0 : i32
    %c0_i32_1 = arith.constant 0 : i32
    return %c0_i32, %c0_i32_0 : i32, i32
  }
  func.func @transform_23(%arg0: i32) -> (i32, i32) {
    %c0_i32 = arith.constant 0 : i32
    %c0_i32_0 = arith.constant 0 : i32
    %c0_i32_1 = arith.constant 0 : i32
    return %c0_i32, %c0_i32_0 : i32, i32
  }
  func.func @transform_24(%arg0: i32) -> (i32, i32) {
    %c0_i32 = arith.constant 0 : i32
    %c0_i32_0 = arith.constant 0 : i32
    %c0_i32_1 = arith.constant 0 : i32
    return %c0_i32, %c0_i32_0 : i32, i32
  }
  func.func @transform_25(%arg0: i32) -> (i32, i32) {
    %c0_i32 = arith.constant 0 : i32
    %c0_i32_0 = arith.constant 0 : i32
    %c0_i32_1 = arith.constant 0 : i32
    return %c0_i32, %c0_i32_0 : i32, i32
  }
  func.func @transform_26(%arg0: i32) -> (i32, i32) {
    %c0_i32 = arith.constant 0 : i32
    %c0_i32_0 = arith.constant 0 : i32
    %c0_i32_1 = arith.constant 0 : i32
    return %c0_i32, %c0_i32_0 : i32, i32
  }
  func.func @transform_27(%arg0: i32) -> (i32, i32) {
    %c0_i32 = arith.constant 0 : i32
    %c0_i32_0 = arith.constant 0 : i32
    %c0_i32_1 = arith.constant 0 : i32
    return %c0_i32, %c0_i32_0 : i32, i32
  }
  func.func @transform_28(%arg0: i32) -> (i32, i32) {
    %c0_i32 = arith.constant 0 : i32
    %c0_i32_0 = arith.constant 0 : i32
    %c0_i32_1 = arith.constant 0 : i32
    return %c0_i32, %c0_i32_0 : i32, i32
  }
  func.func @transform_29(%arg0: i32) -> (i32, i32) {
    %c0_i32 = arith.constant 0 : i32
    %c0_i32_0 = arith.constant 0 : i32
    %c0_i32_1 = arith.constant 0 : i32
    return %c0_i32, %c0_i32_0 : i32, i32
  }
  func.func @transform_30(%arg0: i32) -> (i32, i32) {
    %c0_i32 = arith.constant 0 : i32
    %c0_i32_0 = arith.constant 0 : i32
    %c0_i32_1 = arith.constant 0 : i32
    return %c0_i32, %c0_i32_0 : i32, i32
  }
  func.func @transform_31(%arg0: i32) -> (i32, i32) {
    %c0_i32 = arith.constant 0 : i32
    %c0_i32_0 = arith.constant 0 : i32
    %c0_i32_1 = arith.constant 0 : i32
    return %c0_i32, %c0_i32_0 : i32, i32
  }
  func.func @transform_32(%arg0: i32) -> (i32, i32) {
    %c0_i32 = arith.constant 0 : i32
    %c0_i32_0 = arith.constant 0 : i32
    %c0_i32_1 = arith.constant 0 : i32
    return %c0_i32, %c0_i32_0 : i32, i32
  }
  func.func @transform_33(%arg0: i32) -> (i32, i32) {
    %c0_i32 = arith.constant 0 : i32
    %c0_i32_0 = arith.constant 0 : i32
    %c0_i32_1 = arith.constant 0 : i32
    return %c0_i32, %c0_i32_0 : i32, i32
  }
  func.func @transform_34(%arg0: i32) -> (i32, i32) {
    %c0_i32 = arith.constant 0 : i32
    %c0_i32_0 = arith.constant 0 : i32
    %c0_i32_1 = arith.constant 0 : i32
    return %c0_i32, %c0_i32_0 : i32, i32
  }
  func.func @transform_35(%arg0: i32) -> (i32, i32) {
    %c0_i32 = arith.constant 0 : i32
    %c0_i32_0 = arith.constant 0 : i32
    %c0_i32_1 = arith.constant 0 : i32
    return %c0_i32, %c0_i32_0 : i32, i32
  }
  func.func @transform_36(%arg0: i32) -> (i32, i32) {
    %c0_i32 = arith.constant 0 : i32
    %c0_i32_0 = arith.constant 0 : i32
    %c0_i32_1 = arith.constant 0 : i32
    return %c0_i32, %c0_i32_0 : i32, i32
  }
  func.func @transform_37(%arg0: i32) -> (i32, i32) {
    %c0_i32 = arith.constant 0 : i32
    %c0_i32_0 = arith.constant 0 : i32
    %c0_i32_1 = arith.constant 0 : i32
    return %c0_i32, %c0_i32_0 : i32, i32
  }
  func.func @transform_38(%arg0: i32) -> (i32, i32, i32) {
    %c0_i32 = arith.constant 0 : i32
    %c0_i32_0 = arith.constant 0 : i32
    %c0_i32_1 = arith.constant 0 : i32
    return %arg0, %c0_i32, %c0_i32_0 : i32, i32, i32
  }
}

</mosaic_0001>

<llo_original>
// kernel: tcn_ae_forward.1
$region0: #{tcn_ae_forward.1}
  #allocation0 [shape = 'u32[]', space=smem, size = 0x4, offset = 0x4, fixed_abs, tag = 'smem constant byte address 0x4 - core index']
  #allocation1 [shape = 'u32[144,128]{1,0:T(1,128)}', space=vmem, size = 0x12000, scoped, tag = 'internal scratch']
  #allocation2 [shape = 'f32[72,128]{1,0:T(8,128)}', space=vmem, size = 0x9000, scoped, tag = 'scratch operand']
  #allocation3 [shape = 'f32[216,128]{1,0:T(8,128)}', space=vmem, size = 0x1b000, scoped, tag = 'scratch operand']
  %s0 = inlined_call_operand.smem [shape: u32[39], index: -1, kind: input, shape index: {}]
  %s1 = sld [smem:[%s0]]
  %s2 = scalar_lea.smem %s0, 1
  %s3 = sld [smem:[%s2]]
  %s4 = scalar_lea.smem %s0, 2
  %s5 = sld [smem:[%s4]]
  %s6 = scalar_lea.smem %s0, 3
  %s7 = sld [smem:[%s6]]
  %s8 = scalar_lea.smem %s0, 4
  %s9 = sld [smem:[%s8]]
  %s10 = scalar_lea.smem %s0, 5
  %s11 = sld [smem:[%s10]]
  %s12 = scalar_lea.smem %s0, 6
  %s13 = sld [smem:[%s12]]
  %s14 = scalar_lea.smem %s0, 7
  %s15 = sld [smem:[%s14]]
  %s16 = scalar_lea.smem %s0, 8
  %s17 = sld [smem:[%s16]]
  %s18 = scalar_lea.smem %s0, 9
  %s19 = sld [smem:[%s18]]
  %s20 = scalar_lea.smem %s0, 10
  %s21 = sld [smem:[%s20]]
  %s22 = scalar_lea.smem %s0, 11
  %s23 = sld [smem:[%s22]]
  %s24 = scalar_lea.smem %s0, 12
  %s25 = sld [smem:[%s24]]
  %s26 = scalar_lea.smem %s0, 13
  %s27 = sld [smem:[%s26]]
  %s28 = scalar_lea.smem %s0, 14
  %s29 = sld [smem:[%s28]]
  %s30 = scalar_lea.smem %s0, 15
  %s31 = sld [smem:[%s30]]
  %s32 = scalar_lea.smem %s0, 16
  %s33 = sld [smem:[%s32]]
  %s34 = scalar_lea.smem %s0, 17
  %s35 = sld [smem:[%s34]]
  %s36 = scalar_lea.smem %s0, 18
  %s37 = sld [smem:[%s36]]
  %s38 = scalar_lea.smem %s0, 19
  %s39 = sld [smem:[%s38]]
  %s40 = scalar_lea.smem %s0, 20
  %s41 = sld [smem:[%s40]]
  %s42 = scalar_lea.smem %s0, 21
  %s43 = sld [smem:[%s42]]
  %s44 = scalar_lea.smem %s0, 22
  %s45 = sld [smem:[%s44]]
  %s46 = scalar_lea.smem %s0, 23
  %s47 = sld [smem:[%s46]]
  %s48 = scalar_lea.smem %s0, 24
  %s49 = sld [smem:[%s48]]
  %s50 = scalar_lea.smem %s0, 25
  %s51 = sld [smem:[%s50]]
  %s52 = scalar_lea.smem %s0, 26
  %s53 = sld [smem:[%s52]]
  %s54 = scalar_lea.smem %s0, 27
  %s55 = sld [smem:[%s54]]
  %s56 = scalar_lea.smem %s0, 28
  %s57 = sld [smem:[%s56]]
  %s58 = scalar_lea.smem %s0, 29
  %s59 = sld [smem:[%s58]]
  %s60 = scalar_lea.smem %s0, 30
  %s61 = sld [smem:[%s60]]
  %s62 = scalar_lea.smem %s0, 31
  %s63 = sld [smem:[%s62]]
  %s64 = scalar_lea.smem %s0, 32
  %s65 = sld [smem:[%s64]]
  %s66 = scalar_lea.smem %s0, 33
  %s67 = sld [smem:[%s66]]
  %s68 = scalar_lea.smem %s0, 34
  %s69 = sld [smem:[%s68]]
  %s70 = scalar_lea.smem %s0, 35
  %s71 = sld [smem:[%s70]]
  %s72 = scalar_lea.smem %s0, 36
  %s73 = sld [smem:[%s72]]
  %s74 = scalar_lea.smem %s0, 37
  %s75 = sld [smem:[%s74]]
  %s76 = scalar_lea.smem %s0, 38
  %s77 = sld [smem:[%s76]]
  %s78 = sld [smem:[#allocation0]]
  $region197: #{tcn_ae_forward.1} parent=0
    _
  %s80 = ssub.s32 1, %s78
  %s81 = scalar_select 0, %s80, %s78
  $region1: #{tcn_ae_forward.1} parent=0
    #allocation4 [shape = 'u8[12288]{0}', space=vmem, size = 0x3000, scoped, tag = 'input window, operand 20, single buffered']
    #allocation5 [shape = 's32[2]{0}', space=sflag, size = 0x8, scoped, tag = 'scoped memory for tcn_ae_forward.1']
    #allocation6 [shape = 'u8[12288]{0}', space=vmem, size = 0x3000, scoped, tag = 'input window, operand 24, single buffered']
    #allocation7 [shape = 's32[1]{0}', space=sflag, size = 0x4, scoped, tag = 'scoped memory for tcn_ae_forward.1']
    #allocation8 [shape = 'u8[12288]{0}', space=vmem, size = 0x3000, scoped, tag = 'input window, operand 32, single buffered']
    %82 = vsyncpa [#allocation5], 0
    %83 = vsyncpa [#allocation7], 0
    loop: start=0, step=1, limit=4
    $region2: #{tcn_ae_forward.1} parent=1 // loop_pre_header
      _
    $region3: #{tcn_ae_forward.1} parent=1 // loop_header
      %s85 = sphi 0, %s89
      %p86 = scmp.ge.s32.totalorder %s85, 4
      %s95 = sphi 0, %s97
      %s98 = sphi 0, %s95
      %s99 = sphi 0, %s98
      %s115 = sphi 0, %s99
      %s119 = sphi 0, %s119
      %s121 = sphi 0, %s119
      %s122 = sphi 0, %s121
      %s136 = sphi 0, %s122
      %s140 = sphi 0, %s140
      %s142 = sphi 0, %s140
      %s143 = sphi 0, %s142
      %s157 = sphi 0, %s143
      %s161 = sphi 0, %s161
      %s163 = sphi 0, %s161
      %s164 = sphi 0, %s163
      %s178 = sphi 0, %s164
      %s182 = sphi 0, %s182
      %s184 = sphi 0, %s182
      %s185 = sphi 0, %s184
      %s199 = sphi 0, %s185
      %s203 = sphi 0, %s203
      %s205 = sphi 0, %s203
      %s206 = sphi 0, %s205
      %s220 = sphi 0, %s206
      %s224 = sphi 0, %s224
      %s226 = sphi 0, %s224
      %s227 = sphi 0, %s226
      %s241 = sphi 0, %s227
      %s245 = sphi 0, %s245
      %s247 = sphi 0, %s245
      %s248 = sphi 0, %s247
      %s262 = sphi 0, %s248
      %s266 = sphi 0, %s266
      %s268 = sphi 0, %s266
      %s269 = sphi 0, %s268
      %s283 = sphi 0, %s269
      %s287 = sphi 0, %s287
      %s289 = sphi 0, %s287
      %s290 = sphi 0, %s289
      %s304 = sphi 0, %s290
      %s308 = sphi 0, %s308
      %s310 = sphi 0, %s308
      %s311 = sphi 0, %s310
      %s325 = sphi 0, %s311
      %s329 = sphi 0, %s329
      %s331 = sphi 0, %s329
      %s332 = sphi 0, %s331
      %s346 = sphi 0, %s332
      %s350 = sphi 0, %s350
      %s352 = sphi 0, %s350
      %s353 = sphi 0, %s352
      %s367 = sphi 0, %s353
      %s371 = sphi 0, %s371
      %s373 = sphi 0, %s371
      %s374 = sphi 0, %s373
      %s388 = sphi 0, %s374
      %s392 = sphi 0, %s392
      %s394 = sphi 0, %s392
      %s395 = sphi 0, %s394
      %s409 = sphi 0, %s395
      %s413 = sphi 0, %s413
      %s415 = sphi 0, %s413
      %s416 = sphi 0, %s415
      %s430 = sphi 0, %s416
      %s434 = sphi 0, %s434
      %s436 = sphi 0, %s434
      %s437 = sphi 0, %s436
      %s451 = sphi 0, %s437
      %s455 = sphi 0, %s455
      %s457 = sphi 0, %s455
      %s458 = sphi 0, %s457
      %s472 = sphi 0, %s458
      %s476 = sphi 0, %s476
      %s478 = sphi 0, %s476
      %s479 = sphi 0, %s478
      %s493 = sphi 0, %s479
      %s497 = sphi 0, %s497
      %s499 = sphi 0, %s497
      %s500 = sphi 0, %s499
      %s514 = sphi 0, %s500
      %s518 = sphi 0, %s518
      %s520 = sphi 0, %s518
      %s521 = sphi 0, %s520
      %s535 = sphi 0, %s521
      %s539 = sphi 0, %s539
      %s541 = sphi 0, %s539
      %s542 = sphi 0, %s541
      %s556 = sphi 0, %s542
      %s560 = sphi 0, %s560
      %s562 = sphi 0, %s560
      %s563 = sphi 0, %s562
      %s577 = sphi 0, %s563
      %s581 = sphi 0, %s581
      %s583 = sphi 0, %s581
      %s584 = sphi 0, %s583
      %s598 = sphi 0, %s584
      %s602 = sphi 0, %s602
      %s604 = sphi 0, %s602
      %s605 = sphi 0, %s604
      %s619 = sphi 0, %s605
      %s623 = sphi 0, %s623
      %s625 = sphi 0, %s623
      %s626 = sphi 0, %s625
      %s640 = sphi 0, %s626
      %s644 = sphi 0, %s644
      %s646 = sphi 0, %s644
      %s647 = sphi 0, %s646
      %s661 = sphi 0, %s647
      %s665 = sphi 0, %s665
      %s667 = sphi 0, %s665
      %s668 = sphi 0, %s667
      %s682 = sphi 0, %s668
      %s686 = sphi 0, %s686
      %s688 = sphi 0, %s686
      %s689 = sphi 0, %s688
      %s703 = sphi 0, %s689
      %s707 = sphi 0, %s707
      %s709 = sphi 0, %s707
      %s710 = sphi 0, %s709
      %s724 = sphi 0, %s710
      %s728 = sphi 0, %s728
      %s730 = sphi 0, %s728
      %s731 = sphi 0, %s730
      %s745 = sphi 0, %s731
      %s749 = sphi 0, %s749
      %s751 = sphi 0, %s749
      %s752 = sphi 0, %s751
      %s766 = sphi 0, %s752
      %s770 = sphi 0, %s770
      %s772 = sphi 0, %s770
      %s773 = sphi 0, %s772
      %s787 = sphi 0, %s773
      %s791 = sphi 0, %s791
      %s793 = sphi 0, %s791
      %s794 = sphi 0, %s793
      %s808 = sphi 0, %s794
      %s812 = sphi 0, %s812
      %s814 = sphi 0, %s812
      %s815 = sphi 0, %s814
      %s829 = sphi 0, %s815
      %s833 = sphi 0, %s833
      %s835 = sphi 0, %s833
      %s836 = sphi 0, %s835
      %s850 = sphi 0, %s836
      %s854 = sphi 0, %s854
      %s856 = sphi 0, %s854
      %s857 = sphi 0, %s856
      %s871 = sphi 0, %s857
      %s875 = sphi 0, %s875
      %s877 = sphi 0, %s875
      %s878 = sphi 0, %s877
      %s892 = sphi 0, %s878
      %s898 = sphi 0, %s900
      %s901 = sphi 0, %s898
      %s902 = sphi 0, %s901
      %s918 = sphi 0, %s902
    $region4: #{tcn_ae_forward.1} parent=1 // loop_header_branch
      %88 = sbr.rel (%p86) target = $region8
    $region5: #{tcn_ae_forward.1} parent=1 // loop_body
      %s90 = ssub.s32 %s85, 1
      %s91 = ssub.s32 %s85, 2
      %s92 = sadd.s32 %s85, 1
      %s93 = ssub.s32 %s85, %s92
      %p94 = scmp.eq.s32.totalorder %s93, 0
      %s96 = sadd.s32 %s95, 1
      %s97 = scalar_select %p94, %s95, %s96
      %p100 = pneg %p94
      %p101 = scmp.eq.s32.totalorder %s85, 1
      %p102 = por %p100, %p101
      %p103 = scmp.ne.s32.totalorder %s95, %s98
      %p104 = scmp.eq.s32.totalorder %s85, 0
      %p105 = por %p103, %p104
      %p106 = scmp.ne.s32.totalorder %s95, %s98
      %p107 = scmp.eq.s32.totalorder %s90, 1
      %p108 = por %p106, %p107
      %p109 = scmp.ne.s32.totalorder %s98, %s99
      %p110 = scmp.eq.s32.totalorder %s90, 0
      %p111 = por %p109, %p110
      %p112 = scmp.ne.s32.totalorder %s98, %s99
      %p113 = scmp.eq.s32.totalorder %s91, 1
      %p114 = por %p112, %p113
      %p116 = scmp.ne.s32.totalorder %s99, %s115
      %p117 = scmp.eq.s32.totalorder %s91, 0
      %p118 = por %p116, %p117
      %s120 = sadd.s32 %s119, 1
      %p123 = scmp.eq.s32.totalorder %s85, 1
      %p124 = scmp.ne.s32.totalorder %s119, %s121
      %p125 = scmp.eq.s32.totalorder %s85, 0
      %p126 = por %p124, %p125
      %p127 = scmp.ne.s32.totalorder %s119, %s121
      %p128 = scmp.eq.s32.totalorder %s90, 1
      %p129 = por %p127, %p128
      %p130 = scmp.ne.s32.totalorder %s121, %s122
      %p131 = scmp.eq.s32.totalorder %s90, 0
      %p132 = por %p130, %p131
      %p133 = scmp.ne.s32.totalorder %s121, %s122
      %p134 = scmp.eq.s32.totalorder %s91, 1
      %p135 = por %p133, %p134
      %p137 = scmp.ne.s32.totalorder %s122, %s136
      %p138 = scmp.eq.s32.totalorder %s91, 0
      %p139 = por %p137, %p138
      %s141 = sadd.s32 %s140, 1
      %p144 = scmp.eq.s32.totalorder %s85, 1
      %p145 = scmp.ne.s32.totalorder %s140, %s142
      %p146 = scmp.eq.s32.totalorder %s85, 0
      %p147 = por %p145, %p146
      %p148 = scmp.ne.s32.totalorder %s140, %s142
      %p149 = scmp.eq.s32.totalorder %s90, 1
      %p150 = por %p148, %p149
      %p151 = scmp.ne.s32.totalorder %s142, %s143
      %p152 = scmp.eq.s32.totalorder %s90, 0
      %p153 = por %p151, %p152
      %p154 = scmp.ne.s32.totalorder %s142, %s143
      %p155 = scmp.eq.s32.totalorder %s91, 1
      %p156 = por %p154, %p155
      %p158 = scmp.ne.s32.totalorder %s143, %s157
      %p159 = scmp.eq.s32.totalorder %s91, 0
      %p160 = por %p158, %p159
      %s162 = sadd.s32 %s161, 1
      %p165 = scmp.eq.s32.totalorder %s85, 1
      %p166 = scmp.ne.s32.totalorder %s161, %s163
      %p167 = scmp.eq.s32.totalorder %s85, 0
      %p168 = por %p166, %p167
      %p169 = scmp.ne.s32.totalorder %s161, %s163
      %p170 = scmp.eq.s32.totalorder %s90, 1
      %p171 = por %p169, %p170
      %p172 = scmp.ne.s32.totalorder %s163, %s164
      %p173 = scmp.eq.s32.totalorder %s90, 0
      %p174 = por %p172, %p173
      %p175 = scmp.ne.s32.totalorder %s163, %s164
      %p176 = scmp.eq.s32.totalorder %s91, 1
      %p177 = por %p175, %p176
      %p179 = scmp.ne.s32.totalorder %s164, %s178
      %p180 = scmp.eq.s32.totalorder %s91, 0
      %p181 = por %p179, %p180
      %s183 = sadd.s32 %s182, 1
      %p186 = scmp.eq.s32.totalorder %s85, 1
      %p187 = scmp.ne.s32.totalorder %s182, %s184
      %p188 = scmp.eq.s32.totalorder %s85, 0
      %p189 = por %p187, %p188
      %p190 = scmp.ne.s32.totalorder %s182, %s184
      %p191 = scmp.eq.s32.totalorder %s90, 1
      %p192 = por %p190, %p191
      %p193 = scmp.ne.s32.totalorder %s184, %s185
      %p194 = scmp.eq.s32.totalorder %s90, 0
      %p195 = por %p193, %p194
      %p196 = scmp.ne.s32.totalorder %s184, %s185
      %p197 = scmp.eq.s32.totalorder %s91, 1
      %p198 = por %p196, %p197
      %p200 = scmp.ne.s32.totalorder %s185, %s199
      %p201 = scmp.eq.s32.totalorder %s91, 0
      %p202 = por %p200, %p201
      %s204 = sadd.s32 %s203, 1
      %p207 = scmp.eq.s32.totalorder %s85, 1
      %p208 = scmp.ne.s32.totalorder %s203, %s205
      %p209 = scmp.eq.s32.totalorder %s85, 0
      %p210 = por %p208, %p209
      %p211 = scmp.ne.s32.totalorder %s203, %s205
      %p212 = scmp.eq.s32.totalorder %s90, 1
      %p213 = por %p211, %p212
      %p214 = scmp.ne.s32.totalorder %s205, %s206
      %p215 = scmp.eq.s32.totalorder %s90, 0
      %p216 = por %p214, %p215
      %p217 = scmp.ne.s32.totalorder %s205, %s206
      %p218 = scmp.eq.s32.totalorder %s91, 1
      %p219 = por %p217, %p218
      %p221 = scmp.ne.s32.totalorder %s206, %s220
      %p222 = scmp.eq.s32.totalorder %s91, 0
      %p223 = por %p221, %p222
      %s225 = sadd.s32 %s224, 1
      %p228 = scmp.eq.s32.totalorder %s85, 1
      %p229 = scmp.ne.s32.totalorder %s224, %s226
      %p230 = scmp.eq.s32.totalorder %s85, 0
      %p231 = por %p229, %p230
      %p232 = scmp.ne.s32.totalorder %s224, %s226
      %p233 = scmp.eq.s32.totalorder %s90, 1
      %p234 = por %p232, %p233
      %p235 = scmp.ne.s32.totalorder %s226, %s227
      %p236 = scmp.eq.s32.totalorder %s90, 0
      %p237 = por %p235, %p236
      %p238 = scmp.ne.s32.totalorder %s226, %s227
      %p239 = scmp.eq.s32.totalorder %s91, 1
      %p240 = por %p238, %p239
      %p242 = scmp.ne.s32.totalorder %s227, %s241
      %p243 = scmp.eq.s32.totalorder %s91, 0
      %p244 = por %p242, %p243
      %s246 = sadd.s32 %s245, 1
      %p249 = scmp.eq.s32.totalorder %s85, 1
      %p250 = scmp.ne.s32.totalorder %s245, %s247
      %p251 = scmp.eq.s32.totalorder %s85, 0
      %p252 = por %p250, %p251
      %p253 = scmp.ne.s32.totalorder %s245, %s247
      %p254 = scmp.eq.s32.totalorder %s90, 1
      %p255 = por %p253, %p254
      %p256 = scmp.ne.s32.totalorder %s247, %s248
      %p257 = scmp.eq.s32.totalorder %s90, 0
      %p258 = por %p256, %p257
      %p259 = scmp.ne.s32.totalorder %s247, %s248
      %p260 = scmp.eq.s32.totalorder %s91, 1
      %p261 = por %p259, %p260
      %p263 = scmp.ne.s32.totalorder %s248, %s262
      %p264 = scmp.eq.s32.totalorder %s91, 0
      %p265 = por %p263, %p264
      %s267 = sadd.s32 %s266, 1
      %p270 = scmp.eq.s32.totalorder %s85, 1
      %p271 = scmp.ne.s32.totalorder %s266, %s268
      %p272 = scmp.eq.s32.totalorder %s85, 0
      %p273 = por %p271, %p272
      %p274 = scmp.ne.s32.totalorder %s266, %s268
      %p275 = scmp.eq.s32.totalorder %s90, 1
      %p276 = por %p274, %p275
      %p277 = scmp.ne.s32.totalorder %s268, %s269
      %p278 = scmp.eq.s32.totalorder %s90, 0
      %p279 = por %p277, %p278
      %p280 = scmp.ne.s32.totalorder %s268, %s269
      %p281 = scmp.eq.s32.totalorder %s91, 1
      %p282 = por %p280, %p281
      %p284 = scmp.ne.s32.totalorder %s269, %s283
      %p285 = scmp.eq.s32.totalorder %s91, 0
      %p286 = por %p284, %p285
      %s288 = sadd.s32 %s287, 1
      %p291 = scmp.eq.s32.totalorder %s85, 1
      %p292 = scmp.ne.s32.totalorder %s287, %s289
      %p293 = scmp.eq.s32.totalorder %s85, 0
      %p294 = por %p292, %p293
      %p295 = scmp.ne.s32.totalorder %s287, %s289
      %p296 = scmp.eq.s32.totalorder %s90, 1
      %p297 = por %p295, %p296
      %p298 = scmp.ne.s32.totalorder %s289, %s290
      %p299 = scmp.eq.s32.totalorder %s90, 0
      %p300 = por %p298, %p299
      %p301 = scmp.ne.s32.totalorder %s289, %s290
      %p302 = scmp.eq.s32.totalorder %s91, 1
      %p303 = por %p301, %p302
      %p305 = scmp.ne.s32.totalorder %s290, %s304
      %p306 = scmp.eq.s32.totalorder %s91, 0
      %p307 = por %p305, %p306
      %s309 = sadd.s32 %s308, 1
      %p312 = scmp.eq.s32.totalorder %s85, 1
      %p313 = scmp.ne.s32.totalorder %s308, %s310
      %p314 = scmp.eq.s32.totalorder %s85, 0
      %p315 = por %p313, %p314
      %p316 = scmp.ne.s32.totalorder %s308, %s310
      %p317 = scmp.eq.s32.totalorder %s90, 1
      %p318 = por %p316, %p317
      %p319 = scmp.ne.s32.totalorder %s310, %s311
      %p320 = scmp.eq.s32.totalorder %s90, 0
      %p321 = por %p319, %p320
      %p322 = scmp.ne.s32.totalorder %s310, %s311
      %p323 = scmp.eq.s32.totalorder %s91, 1
      %p324 = por %p322, %p323
      %p326 = scmp.ne.s32.totalorder %s311, %s325
      %p327 = scmp.eq.s32.totalorder %s91, 0
      %p328 = por %p326, %p327
      %s330 = sadd.s32 %s329, 1
      %p333 = scmp.eq.s32.totalorder %s85, 1
      %p334 = scmp.ne.s32.totalorder %s329, %s331
      %p335 = scmp.eq.s32.totalorder %s85, 0
      %p336 = por %p334, %p335
      %p337 = scmp.ne.s32.totalorder %s329, %s331
      %p338 = scmp.eq.s32.totalorder %s90, 1
      %p339 = por %p337, %p338
      %p340 = scmp.ne.s32.totalorder %s331, %s332
      %p341 = scmp.eq.s32.totalorder %s90, 0
      %p342 = por %p340, %p341
      %p343 = scmp.ne.s32.totalorder %s331, %s332
      %p344 = scmp.eq.s32.totalorder %s91, 1
      %p345 = por %p343, %p344
      %p347 = scmp.ne.s32.totalorder %s332, %s346
      %p348 = scmp.eq.s32.totalorder %s91, 0
      %p349 = por %p347, %p348
      %s351 = sadd.s32 %s350, 1
      %p354 = scmp.eq.s32.totalorder %s85, 1
      %p355 = scmp.ne.s32.totalorder %s350, %s352
      %p356 = scmp.eq.s32.totalorder %s85, 0
      %p357 = por %p355, %p356
      %p358 = scmp.ne.s32.totalorder %s350, %s352
      %p359 = scmp.eq.s32.totalorder %s90, 1
      %p360 = por %p358, %p359
      %p361 = scmp.ne.s32.totalorder %s352, %s353
      %p362 = scmp.eq.s32.totalorder %s90, 0
      %p363 = por %p361, %p362
      %p364 = scmp.ne.s32.totalorder %s352, %s353
      %p365 = scmp.eq.s32.totalorder %s91, 1
      %p366 = por %p364, %p365
      %p368 = scmp.ne.s32.totalorder %s353, %s367
      %p369 = scmp.eq.s32.totalorder %s91, 0
      %p370 = por %p368, %p369
      %s372 = sadd.s32 %s371, 1
      %p375 = scmp.eq.s32.totalorder %s85, 1
      %p376 = scmp.ne.s32.totalorder %s371, %s373
      %p377 = scmp.eq.s32.totalorder %s85, 0
      %p378 = por %p376, %p377
      %p379 = scmp.ne.s32.totalorder %s371, %s373
      %p380 = scmp.eq.s32.totalorder %s90, 1
      %p381 = por %p379, %p380
      %p382 = scmp.ne.s32.totalorder %s373, %s374
      %p383 = scmp.eq.s32.totalorder %s90, 0
      %p384 = por %p382, %p383
      %p385 = scmp.ne.s32.totalorder %s373, %s374
      %p386 = scmp.eq.s32.totalorder %s91, 1
      %p387 = por %p385, %p386
      %p389 = scmp.ne.s32.totalorder %s374, %s388
      %p390 = scmp.eq.s32.totalorder %s91, 0
      %p391 = por %p389, %p390
      %s393 = sadd.s32 %s392, 1
      %p396 = scmp.eq.s32.totalorder %s85, 1
      %p397 = scmp.ne.s32.totalorder %s392, %s394
      %p398 = scmp.eq.s32.totalorder %s85, 0
      %p399 = por %p397, %p398
      %p400 = scmp.ne.s32.totalorder %s392, %s394
      %p401 = scmp.eq.s32.totalorder %s90, 1
      %p402 = por %p400, %p401
      %p403 = scmp.ne.s32.totalorder %s394, %s395
      %p404 = scmp.eq.s32.totalorder %s90, 0
      %p405 = por %p403, %p404
      %p406 = scmp.ne.s32.totalorder %s394, %s395
      %p407 = scmp.eq.s32.totalorder %s91, 1
      %p408 = por %p406, %p407
      %p410 = scmp.ne.s32.totalorder %s395, %s409
      %p411 = scmp.eq.s32.totalorder %s91, 0
      %p412 = por %p410, %p411
      %s414 = sadd.s32 %s413, 1
      %p417 = scmp.eq.s32.totalorder %s85, 1
      %p418 = scmp.ne.s32.totalorder %s413, %s415
      %p419 = scmp.eq.s32.totalorder %s85, 0
      %p420 = por %p418, %p419
      %p421 = scmp.ne.s32.totalorder %s413, %s415
      %p422 = scmp.eq.s32.totalorder %s90, 1
      %p423 = por %p421, %p422
      %p424 = scmp.ne.s32.totalorder %s415, %s416
      %p425 = scmp.eq.s32.totalorder %s90, 0
      %p426 = por %p424, %p425
      %p427 = scmp.ne.s32.totalorder %s415, %s416
      %p428 = scmp.eq.s32.totalorder %s91, 1
      %p429 = por %p427, %p428
      %p431 = scmp.ne.s32.totalorder %s416, %s430
      %p432 = scmp.eq.s32.totalorder %s91, 0
      %p433 = por %p431, %p432
      %s435 = sadd.s32 %s434, 1
      %p438 = scmp.eq.s32.totalorder %s85, 1
      %p439 = scmp.ne.s32.totalorder %s434, %s436
      %p440 = scmp.eq.s32.totalorder %s85, 0
      %p441 = por %p439, %p440
      %p442 = scmp.ne.s32.totalorder %s434, %s436
      %p443 = scmp.eq.s32.totalorder %s90, 1
      %p444 = por %p442, %p443
      %p445 = scmp.ne.s32.totalorder %s436, %s437
      %p446 = scmp.eq.s32.totalorder %s90, 0
      %p447 = por %p445, %p446
      %p448 = scmp.ne.s32.totalorder %s436, %s437
      %p449 = scmp.eq.s32.totalorder %s91, 1
      %p450 = por %p448, %p449
      %p452 = scmp.ne.s32.totalorder %s437, %s451
      %p453 = scmp.eq.s32.totalorder %s91, 0
      %p454 = por %p452, %p453
      %s456 = sadd.s32 %s455, 1
      %p459 = scmp.eq.s32.totalorder %s85, 1
      %p460 = scmp.ne.s32.totalorder %s455, %s457
      %p461 = scmp.eq.s32.totalorder %s85, 0
      %p462 = por %p460, %p461
      %p463 = scmp.ne.s32.totalorder %s455, %s457
      %p464 = scmp.eq.s32.totalorder %s90, 1
      %p465 = por %p463, %p464
      %p466 = scmp.ne.s32.totalorder %s457, %s458
      %p467 = scmp.eq.s32.totalorder %s90, 0
      %p468 = por %p466, %p467
      %p469 = scmp.ne.s32.totalorder %s457, %s458
      %p470 = scmp.eq.s32.totalorder %s91, 1
      %p471 = por %p469, %p470
      %p473 = scmp.ne.s32.totalorder %s458, %s472
      %p474 = scmp.eq.s32.totalorder %s91, 0
      %p475 = por %p473, %p474
      %s477 = sadd.s32 %s476, 1
      %p480 = scmp.eq.s32.totalorder %s85, 1
      %p481 = scmp.ne.s32.totalorder %s476, %s478
      %p482 = scmp.eq.s32.totalorder %s85, 0
      %p483 = por %p481, %p482
      %p484 = scmp.ne.s32.totalorder %s476, %s478
      %p485 = scmp.eq.s32.totalorder %s90, 1
      %p486 = por %p484, %p485
      %p487 = scmp.ne.s32.totalorder %s478, %s479
      %p488 = scmp.eq.s32.totalorder %s90, 0
      %p489 = por %p487, %p488
      %p490 = scmp.ne.s32.totalorder %s478, %s479
      %p491 = scmp.eq.s32.totalorder %s91, 1
      %p492 = por %p490, %p491
      %p494 = scmp.ne.s32.totalorder %s479, %s493
      %p495 = scmp.eq.s32.totalorder %s91, 0
      %p496 = por %p494, %p495
      %s498 = sadd.s32 %s497, 1
      %p501 = scmp.eq.s32.totalorder %s85, 1
      %p502 = scmp.ne.s32.totalorder %s497, %s499
      %p503 = scmp.eq.s32.totalorder %s85, 0
      %p504 = por %p502, %p503
      %p505 = scmp.ne.s32.totalorder %s497, %s499
      %p506 = scmp.eq.s32.totalorder %s90, 1
      %p507 = por %p505, %p506
      %p508 = scmp.ne.s32.totalorder %s499, %s500
      %p509 = scmp.eq.s32.totalorder %s90, 0
      %p510 = por %p508, %p509
      %p511 = scmp.ne.s32.totalorder %s499, %s500
      %p512 = scmp.eq.s32.totalorder %s91, 1
      %p513 = por %p511, %p512
      %p515 = scmp.ne.s32.totalorder %s500, %s514
      %p516 = scmp.eq.s32.totalorder %s91, 0
      %p517 = por %p515, %p516
      %s519 = sadd.s32 %s518, 1
      %p522 = scmp.eq.s32.totalorder %s85, 1
      %p523 = scmp.ne.s32.totalorder %s518, %s520
      %p524 = scmp.eq.s32.totalorder %s85, 0
      %p525 = por %p523, %p524
      %p526 = scmp.ne.s32.totalorder %s518, %s520
      %p527 = scmp.eq.s32.totalorder %s90, 1
      %p528 = por %p526, %p527
      %p529 = scmp.ne.s32.totalorder %s520, %s521
      %p530 = scmp.eq.s32.totalorder %s90, 0
      %p531 = por %p529, %p530
      %p532 = scmp.ne.s32.totalorder %s520, %s521
      %p533 = scmp.eq.s32.totalorder %s91, 1
      %p534 = por %p532, %p533
      %p536 = scmp.ne.s32.totalorder %s521, %s535
      %p537 = scmp.eq.s32.totalorder %s91, 0
      %p538 = por %p536, %p537
      %s540 = sadd.s32 %s539, 1
      %p543 = scmp.eq.s32.totalorder %s85, 1
      %p544 = scmp.ne.s32.totalorder %s539, %s541
      %p545 = scmp.eq.s32.totalorder %s85, 0
      %p546 = por %p544, %p545
      %p547 = scmp.ne.s32.totalorder %s539, %s541
      %p548 = scmp.eq.s32.totalorder %s90, 1
      %p549 = por %p547, %p548
      %p550 = scmp.ne.s32.totalorder %s541, %s542
      %p551 = scmp.eq.s32.totalorder %s90, 0
      %p552 = por %p550, %p551
      %p553 = scmp.ne.s32.totalorder %s541, %s542
      %p554 = scmp.eq.s32.totalorder %s91, 1
      %p555 = por %p553, %p554
      %p557 = scmp.ne.s32.totalorder %s542, %s556
      %p558 = scmp.eq.s32.totalorder %s91, 0
      %p559 = por %p557, %p558
      %s561 = sadd.s32 %s560, 1
      %p564 = scmp.eq.s32.totalorder %s85, 1
      %p565 = scmp.ne.s32.totalorder %s560, %s562
      %p566 = scmp.eq.s32.totalorder %s85, 0
      %p567 = por %p565, %p566
      %p568 = scmp.ne.s32.totalorder %s560, %s562
      %p569 = scmp.eq.s32.totalorder %s90, 1
      %p570 = por %p568, %p569
      %p571 = scmp.ne.s32.totalorder %s562, %s563
      %p572 = scmp.eq.s32.totalorder %s90, 0
      %p573 = por %p571, %p572
      %p574 = scmp.ne.s32.totalorder %s562, %s563
      %p575 = scmp.eq.s32.totalorder %s91, 1
      %p576 = por %p574, %p575
      %p578 = scmp.ne.s32.totalorder %s563, %s577
      %p579 = scmp.eq.s32.totalorder %s91, 0
      %p580 = por %p578, %p579
      %s582 = sadd.s32 %s581, 1
      %p585 = scmp.eq.s32.totalorder %s85, 1
      %p586 = scmp.ne.s32.totalorder %s581, %s583
      %p587 = scmp.eq.s32.totalorder %s85, 0
      %p588 = por %p586, %p587
      %p589 = scmp.ne.s32.totalorder %s581, %s583
      %p590 = scmp.eq.s32.totalorder %s90, 1
      %p591 = por %p589, %p590
      %p592 = scmp.ne.s32.totalorder %s583, %s584
      %p593 = scmp.eq.s32.totalorder %s90, 0
      %p594 = por %p592, %p593
      %p595 = scmp.ne.s32.totalorder %s583, %s584
      %p596 = scmp.eq.s32.totalorder %s91, 1
      %p597 = por %p595, %p596
      %p599 = scmp.ne.s32.totalorder %s584, %s598
      %p600 = scmp.eq.s32.totalorder %s91, 0
      %p601 = por %p599, %p600
      %s603 = sadd.s32 %s602, 1
      %p606 = scmp.eq.s32.totalorder %s85, 1
      %p607 = scmp.ne.s32.totalorder %s602, %s604
      %p608 = scmp.eq.s32.totalorder %s85, 0
      %p609 = por %p607, %p608
      %p610 = scmp.ne.s32.totalorder %s602, %s604
      %p611 = scmp.eq.s32.totalorder %s90, 1
      %p612 = por %p610, %p611
      %p613 = scmp.ne.s32.totalorder %s604, %s605
      %p614 = scmp.eq.s32.totalorder %s90, 0
      %p615 = por %p613, %p614
      %p616 = scmp.ne.s32.totalorder %s604, %s605
      %p617 = scmp.eq.s32.totalorder %s91, 1
      %p618 = por %p616, %p617
      %p620 = scmp.ne.s32.totalorder %s605, %s619
      %p621 = scmp.eq.s32.totalorder %s91, 0
      %p622 = por %p620, %p621
      %s624 = sadd.s32 %s623, 1
      %p627 = scmp.eq.s32.totalorder %s85, 1
      %p628 = scmp.ne.s32.totalorder %s623, %s625
      %p629 = scmp.eq.s32.totalorder %s85, 0
      %p630 = por %p628, %p629
      %p631 = scmp.ne.s32.totalorder %s623, %s625
      %p632 = scmp.eq.s32.totalorder %s90, 1
      %p633 = por %p631, %p632
      %p634 = scmp.ne.s32.totalorder %s625, %s626
      %p635 = scmp.eq.s32.totalorder %s90, 0
      %p636 = por %p634, %p635
      %p637 = scmp.ne.s32.totalorder %s625, %s626
      %p638 = scmp.eq.s32.totalorder %s91, 1
      %p639 = por %p637, %p638
      %p641 = scmp.ne.s32.totalorder %s626, %s640
      %p642 = scmp.eq.s32.totalorder %s91, 0
      %p643 = por %p641, %p642
      %s645 = sadd.s32 %s644, 1
      %p648 = scmp.eq.s32.totalorder %s85, 1
      %p649 = scmp.ne.s32.totalorder %s644, %s646
      %p650 = scmp.eq.s32.totalorder %s85, 0
      %p651 = por %p649, %p650
      %p652 = scmp.ne.s32.totalorder %s644, %s646
      %p653 = scmp.eq.s32.totalorder %s90, 1
      %p654 = por %p652, %p653
      %p655 = scmp.ne.s32.totalorder %s646, %s647
      %p656 = scmp.eq.s32.totalorder %s90, 0
      %p657 = por %p655, %p656
      %p658 = scmp.ne.s32.totalorder %s646, %s647
      %p659 = scmp.eq.s32.totalorder %s91, 1
      %p660 = por %p658, %p659
      %p662 = scmp.ne.s32.totalorder %s647, %s661
      %p663 = scmp.eq.s32.totalorder %s91, 0
      %p664 = por %p662, %p663
      %s666 = sadd.s32 %s665, 1
      %p669 = scmp.eq.s32.totalorder %s85, 1
      %p670 = scmp.ne.s32.totalorder %s665, %s667
      %p671 = scmp.eq.s32.totalorder %s85, 0
      %p672 = por %p670, %p671
      %p673 = scmp.ne.s32.totalorder %s665, %s667
      %p674 = scmp.eq.s32.totalorder %s90, 1
      %p675 = por %p673, %p674
      %p676 = scmp.ne.s32.totalorder %s667, %s668
      %p677 = scmp.eq.s32.totalorder %s90, 0
      %p678 = por %p676, %p677
      %p679 = scmp.ne.s32.totalorder %s667, %s668
      %p680 = scmp.eq.s32.totalorder %s91, 1
      %p681 = por %p679, %p680
      %p683 = scmp.ne.s32.totalorder %s668, %s682
      %p684 = scmp.eq.s32.totalorder %s91, 0
      %p685 = por %p683, %p684
      %s687 = sadd.s32 %s686, 1
      %p690 = scmp.eq.s32.totalorder %s85, 1
      %p691 = scmp.ne.s32.totalorder %s686, %s688
      %p692 = scmp.eq.s32.totalorder %s85, 0
      %p693 = por %p691, %p692
      %p694 = scmp.ne.s32.totalorder %s686, %s688
      %p695 = scmp.eq.s32.totalorder %s90, 1
      %p696 = por %p694, %p695
      %p697 = scmp.ne.s32.totalorder %s688, %s689
      %p698 = scmp.eq.s32.totalorder %s90, 0
      %p699 = por %p697, %p698
      %p700 = scmp.ne.s32.totalorder %s688, %s689
      %p701 = scmp.eq.s32.totalorder %s91, 1
      %p702 = por %p700, %p701
      %p704 = scmp.ne.s32.totalorder %s689, %s703
      %p705 = scmp.eq.s32.totalorder %s91, 0
      %p706 = por %p704, %p705
      %s708 = sadd.s32 %s707, 1
      %p711 = scmp.eq.s32.totalorder %s85, 1
      %p712 = scmp.ne.s32.totalorder %s707, %s709
      %p713 = scmp.eq.s32.totalorder %s85, 0
      %p714 = por %p712, %p713
      %p715 = scmp.ne.s32.totalorder %s707, %s709
      %p716 = scmp.eq.s32.totalorder %s90, 1
      %p717 = por %p715, %p716
      %p718 = scmp.ne.s32.totalorder %s709, %s710
      %p719 = scmp.eq.s32.totalorder %s90, 0
      %p720 = por %p718, %p719
      %p721 = scmp.ne.s32.totalorder %s709, %s710
      %p722 = scmp.eq.s32.totalorder %s91, 1
      %p723 = por %p721, %p722
      %p725 = scmp.ne.s32.totalorder %s710, %s724
      %p726 = scmp.eq.s32.totalorder %s91, 0
      %p727 = por %p725, %p726
      %s729 = sadd.s32 %s728, 1
      %p732 = scmp.eq.s32.totalorder %s85, 1
      %p733 = scmp.ne.s32.totalorder %s728, %s730
      %p734 = scmp.eq.s32.totalorder %s85, 0
      %p735 = por %p733, %p734
      %p736 = scmp.ne.s32.totalorder %s728, %s730
      %p737 = scmp.eq.s32.totalorder %s90, 1
      %p738 = por %p736, %p737
      %p739 = scmp.ne.s32.totalorder %s730, %s731
      %p740 = scmp.eq.s32.totalorder %s90, 0
      %p741 = por %p739, %p740
      %p742 = scmp.ne.s32.totalorder %s730, %s731
      %p743 = scmp.eq.s32.totalorder %s91, 1
      %p744 = por %p742, %p743
      %p746 = scmp.ne.s32.totalorder %s731, %s745
      %p747 = scmp.eq.s32.totalorder %s91, 0
      %p748 = por %p746, %p747
      %s750 = sadd.s32 %s749, 1
      %p753 = scmp.eq.s32.totalorder %s85, 1
      %p754 = scmp.ne.s32.totalorder %s749, %s751
      %p755 = scmp.eq.s32.totalorder %s85, 0
      %p756 = por %p754, %p755
      %p757 = scmp.ne.s32.totalorder %s749, %s751
      %p758 = scmp.eq.s32.totalorder %s90, 1
      %p759 = por %p757, %p758
      %p760 = scmp.ne.s32.totalorder %s751, %s752
      %p761 = scmp.eq.s32.totalorder %s90, 0
      %p762 = por %p760, %p761
      %p763 = scmp.ne.s32.totalorder %s751, %s752
      %p764 = scmp.eq.s32.totalorder %s91, 1
      %p765 = por %p763, %p764
      %p767 = scmp.ne.s32.totalorder %s752, %s766
      %p768 = scmp.eq.s32.totalorder %s91, 0
      %p769 = por %p767, %p768
      %s771 = sadd.s32 %s770, 1
      %p774 = scmp.eq.s32.totalorder %s85, 1
      %p775 = scmp.ne.s32.totalorder %s770, %s772
      %p776 = scmp.eq.s32.totalorder %s85, 0
      %p777 = por %p775, %p776
      %p778 = scmp.ne.s32.totalorder %s770, %s772
      %p779 = scmp.eq.s32.totalorder %s90, 1
      %p780 = por %p778, %p779
      %p781 = scmp.ne.s32.totalorder %s772, %s773
      %p782 = scmp.eq.s32.totalorder %s90, 0
      %p783 = por %p781, %p782
      %p784 = scmp.ne.s32.totalorder %s772, %s773
      %p785 = scmp.eq.s32.totalorder %s91, 1
      %p786 = por %p784, %p785
      %p788 = scmp.ne.s32.totalorder %s773, %s787
      %p789 = scmp.eq.s32.totalorder %s91, 0
      %p790 = por %p788, %p789
      %s792 = sadd.s32 %s791, 1
      %p795 = scmp.eq.s32.totalorder %s85, 1
      %p796 = scmp.ne.s32.totalorder %s791, %s793
      %p797 = scmp.eq.s32.totalorder %s85, 0
      %p798 = por %p796, %p797
      %p799 = scmp.ne.s32.totalorder %s791, %s793
      %p800 = scmp.eq.s32.totalorder %s90, 1
      %p801 = por %p799, %p800
      %p802 = scmp.ne.s32.totalorder %s793, %s794
      %p803 = scmp.eq.s32.totalorder %s90, 0
      %p804 = por %p802, %p803
      %p805 = scmp.ne.s32.totalorder %s793, %s794
      %p806 = scmp.eq.s32.totalorder %s91, 1
      %p807 = por %p805, %p806
      %p809 = scmp.ne.s32.totalorder %s794, %s808
      %p810 = scmp.eq.s32.totalorder %s91, 0
      %p811 = por %p809, %p810
      %s813 = sadd.s32 %s812, 1
      %p816 = scmp.eq.s32.totalorder %s85, 1
      %p817 = scmp.ne.s32.totalorder %s812, %s814
      %p818 = scmp.eq.s32.totalorder %s85, 0
      %p819 = por %p817, %p818
      %p820 = scmp.ne.s32.totalorder %s812, %s814
      %p821 = scmp.eq.s32.totalorder %s90, 1
      %p822 = por %p820, %p821
      %p823 = scmp.ne.s32.totalorder %s814, %s815
      %p824 = scmp.eq.s32.totalorder %s90, 0
      %p825 = por %p823, %p824
      %p826 = scmp.ne.s32.totalorder %s814, %s815
      %p827 = scmp.eq.s32.totalorder %s91, 1
      %p828 = por %p826, %p827
      %p830 = scmp.ne.s32.totalorder %s815, %s829
      %p831 = scmp.eq.s32.totalorder %s91, 0
      %p832 = por %p830, %p831
      %s834 = sadd.s32 %s833, 1
      %p837 = scmp.eq.s32.totalorder %s85, 1
      %p838 = scmp.ne.s32.totalorder %s833, %s835
      %p839 = scmp.eq.s32.totalorder %s85, 0
      %p840 = por %p838, %p839
      %p841 = scmp.ne.s32.totalorder %s833, %s835
      %p842 = scmp.eq.s32.totalorder %s90, 1
      %p843 = por %p841, %p842
      %p844 = scmp.ne.s32.totalorder %s835, %s836
      %p845 = scmp.eq.s32.totalorder %s90, 0
      %p846 = por %p844, %p845
      %p847 = scmp.ne.s32.totalorder %s835, %s836
      %p848 = scmp.eq.s32.totalorder %s91, 1
      %p849 = por %p847, %p848
      %p851 = scmp.ne.s32.totalorder %s836, %s850
      %p852 = scmp.eq.s32.totalorder %s91, 0
      %p853 = por %p851, %p852
      %s855 = sadd.s32 %s854, 1
      %p858 = scmp.eq.s32.totalorder %s85, 1
      %p859 = scmp.ne.s32.totalorder %s854, %s856
      %p860 = scmp.eq.s32.totalorder %s85, 0
      %p861 = por %p859, %p860
      %p862 = scmp.ne.s32.totalorder %s854, %s856
      %p863 = scmp.eq.s32.totalorder %s90, 1
      %p864 = por %p862, %p863
      %p865 = scmp.ne.s32.totalorder %s856, %s857
      %p866 = scmp.eq.s32.totalorder %s90, 0
      %p867 = por %p865, %p866
      %p868 = scmp.ne.s32.totalorder %s856, %s857
      %p869 = scmp.eq.s32.totalorder %s91, 1
      %p870 = por %p868, %p869
      %p872 = scmp.ne.s32.totalorder %s857, %s871
      %p873 = scmp.eq.s32.totalorder %s91, 0
      %p874 = por %p872, %p873
      %s876 = sadd.s32 %s875, 1
      %p879 = scmp.eq.s32.totalorder %s85, 1
      %p880 = scmp.ne.s32.totalorder %s875, %s877
      %p881 = scmp.eq.s32.totalorder %s85, 0
      %p882 = por %p880, %p881
      %p883 = scmp.ne.s32.totalorder %s875, %s877
      %p884 = scmp.eq.s32.totalorder %s90, 1
      %p885 = por %p883, %p884
      %p886 = scmp.ne.s32.totalorder %s877, %s878
      %p887 = scmp.eq.s32.totalorder %s90, 0
      %p888 = por %p886, %p887
      %p889 = scmp.ne.s32.totalorder %s877, %s878
      %p890 = scmp.eq.s32.totalorder %s91, 1
      %p891 = por %p889, %p890
      %p893 = scmp.ne.s32.totalorder %s878, %s892
      %p894 = scmp.eq.s32.totalorder %s91, 0
      %p895 = por %p893, %p894
      %s896 = ssub.s32 %s85, %s92
      %p897 = scmp.eq.s32.totalorder %s896, 0
      %s899 = sadd.s32 %s898, 1
      %s900 = scalar_select %p897, %s898, %s899
      %p903 = pneg %p897
      %p904 = scmp.eq.s32.totalorder %s85, 1
      %p905 = por %p903, %p904
      %p906 = scmp.ne.s32.totalorder %s898, %s901
      %p907 = scmp.eq.s32.totalorder %s85, 0
      %p908 = por %p906, %p907
      %p909 = scmp.ne.s32.totalorder %s898, %s901
      %p910 = scmp.eq.s32.totalorder %s90, 1
      %p911 = por %p909, %p910
      %p912 = scmp.ne.s32.totalorder %s901, %s902
      %p913 = scmp.eq.s32.totalorder %s90, 0
      %p914 = por %p912, %p913
      %p915 = scmp.ne.s32.totalorder %s901, %s902
      %p916 = scmp.eq.s32.totalorder %s91, 1
      %p917 = por %p915, %p916
      %p919 = scmp.ne.s32.totalorder %s902, %s918
      %p920 = scmp.eq.s32.totalorder %s91, 0
      %p921 = por %p919, %p920
      %p922 = scmp.le.s32.totalorder 1, %s85
      %p923 = scmp.lt.s32.totalorder %s85, 3
      %p924 = pnand %p922, %p923
      %p925 = pneg %p924
      // Predicated region
      $region9: #{tcn_ae_forward.1} parent=5 // pred_check
        _
      $region10: #{tcn_ae_forward.1} parent=5 // pred_check_branch
        %927 = sbr.rel (%p924) target = $region12
      $region11: #{tcn_ae_forward.1} parent=5 // pred_region
        %s928 = ssub.s32 %s85, 1
        // Predicated region
        $region13: #{tcn_ae_forward.1} parent=11 // pred_check
          %p929 = pneg %p132
        $region14: #{tcn_ae_forward.1} parent=11 // pred_check_branch
          %931 = sbr.rel (%p929) target = $region16
        $region15: #{tcn_ae_forward.1} parent=11 // pred_region
          _
        $region16: #{tcn_ae_forward.1} parent=11 // pred_fallthru
          _
        // Predicated region
        $region17: #{tcn_ae_forward.1} parent=11 // pred_check
          %p932 = pneg %p153
        $region18: #{tcn_ae_forward.1} parent=11 // pred_check_branch
          %934 = sbr.rel (%p932) target = $region20
        $region19: #{tcn_ae_forward.1} parent=11 // pred_region
          _
        $region20: #{tcn_ae_forward.1} parent=11 // pred_fallthru
          _
        // Predicated region
        $region21: #{tcn_ae_forward.1} parent=11 // pred_check
          %p935 = pneg %p174
        $region22: #{tcn_ae_forward.1} parent=11 // pred_check_branch
          %937 = sbr.rel (%p935) target = $region24
        $region23: #{tcn_ae_forward.1} parent=11 // pred_region
          _
        $region24: #{tcn_ae_forward.1} parent=11 // pred_fallthru
          _
        // Predicated region
        $region25: #{tcn_ae_forward.1} parent=11 // pred_check
          %p938 = pneg %p195
        $region26: #{tcn_ae_forward.1} parent=11 // pred_check_branch
          %940 = sbr.rel (%p938) target = $region28
        $region27: #{tcn_ae_forward.1} parent=11 // pred_region
          _
        $region28: #{tcn_ae_forward.1} parent=11 // pred_fallthru
          _
        // Predicated region
        $region29: #{tcn_ae_forward.1} parent=11 // pred_check
          %p941 = pneg %p216
        $region30: #{tcn_ae_forward.1} parent=11 // pred_check_branch
          %943 = sbr.rel (%p941) target = $region32
        $region31: #{tcn_ae_forward.1} parent=11 // pred_region
          _
        $region32: #{tcn_ae_forward.1} parent=11 // pred_fallthru
          _
        // Predicated region
        $region33: #{tcn_ae_forward.1} parent=11 // pred_check
          %p944 = pneg %p237
        $region34: #{tcn_ae_forward.1} parent=11 // pred_check_branch
          %946 = sbr.rel (%p944) target = $region36
        $region35: #{tcn_ae_forward.1} parent=11 // pred_region
          _
        $region36: #{tcn_ae_forward.1} parent=11 // pred_fallthru
          _
        // Predicated region
        $region37: #{tcn_ae_forward.1} parent=11 // pred_check
          %p947 = pneg %p258
        $region38: #{tcn_ae_forward.1} parent=11 // pred_check_branch
          %949 = sbr.rel (%p947) target = $region40
        $region39: #{tcn_ae_forward.1} parent=11 // pred_region
          _
        $region40: #{tcn_ae_forward.1} parent=11 // pred_fallthru
          _
        // Predicated region
        $region41: #{tcn_ae_forward.1} parent=11 // pred_check
          %p950 = pneg %p279
        $region42: #{tcn_ae_forward.1} parent=11 // pred_check_branch
          %952 = sbr.rel (%p950) target = $region44
        $region43: #{tcn_ae_forward.1} parent=11 // pred_region
          _
        $region44: #{tcn_ae_forward.1} parent=11 // pred_fallthru
          _
        // Predicated region
        $region45: #{tcn_ae_forward.1} parent=11 // pred_check
          %p953 = pneg %p300
        $region46: #{tcn_ae_forward.1} parent=11 // pred_check_branch
          %955 = sbr.rel (%p953) target = $region48
        $region47: #{tcn_ae_forward.1} parent=11 // pred_region
          _
        $region48: #{tcn_ae_forward.1} parent=11 // pred_fallthru
          _
        // Predicated region
        $region49: #{tcn_ae_forward.1} parent=11 // pred_check
          %p956 = pneg %p321
        $region50: #{tcn_ae_forward.1} parent=11 // pred_check_branch
          %958 = sbr.rel (%p956) target = $region52
        $region51: #{tcn_ae_forward.1} parent=11 // pred_region
          _
        $region52: #{tcn_ae_forward.1} parent=11 // pred_fallthru
          _
        // Predicated region
        $region53: #{tcn_ae_forward.1} parent=11 // pred_check
          %p959 = pneg %p342
        $region54: #{tcn_ae_forward.1} parent=11 // pred_check_branch
          %961 = sbr.rel (%p959) target = $region56
        $region55: #{tcn_ae_forward.1} parent=11 // pred_region
          _
        $region56: #{tcn_ae_forward.1} parent=11 // pred_fallthru
          _
        // Predicated region
        $region57: #{tcn_ae_forward.1} parent=11 // pred_check
          %p962 = pneg %p363
        $region58: #{tcn_ae_forward.1} parent=11 // pred_check_branch
          %964 = sbr.rel (%p962) target = $region60
        $region59: #{tcn_ae_forward.1} parent=11 // pred_region
          _
        $region60: #{tcn_ae_forward.1} parent=11 // pred_fallthru
          _
        // Predicated region
        $region61: #{tcn_ae_forward.1} parent=11 // pred_check
          %p965 = pneg %p384
        $region62: #{tcn_ae_forward.1} parent=11 // pred_check_branch
          %967 = sbr.rel (%p965) target = $region64
        $region63: #{tcn_ae_forward.1} parent=11 // pred_region
          _
        $region64: #{tcn_ae_forward.1} parent=11 // pred_fallthru
          _
        // Predicated region
        $region65: #{tcn_ae_forward.1} parent=11 // pred_check
          %p968 = pneg %p405
        $region66: #{tcn_ae_forward.1} parent=11 // pred_check_branch
          %970 = sbr.rel (%p968) target = $region68
        $region67: #{tcn_ae_forward.1} parent=11 // pred_region
          _
        $region68: #{tcn_ae_forward.1} parent=11 // pred_fallthru
          _
        // Predicated region
        $region69: #{tcn_ae_forward.1} parent=11 // pred_check
          %p971 = pneg %p426
        $region70: #{tcn_ae_forward.1} parent=11 // pred_check_branch
          %973 = sbr.rel (%p971) target = $region72
        $region71: #{tcn_ae_forward.1} parent=11 // pred_region
          _
        $region72: #{tcn_ae_forward.1} parent=11 // pred_fallthru
          _
        // Predicated region
        $region73: #{tcn_ae_forward.1} parent=11 // pred_check
          %p974 = pneg %p447
        $region74: #{tcn_ae_forward.1} parent=11 // pred_check_branch
          %976 = sbr.rel (%p974) target = $region76
        $region75: #{tcn_ae_forward.1} parent=11 // pred_region
          _
        $region76: #{tcn_ae_forward.1} parent=11 // pred_fallthru
          _
        // Predicated region
        $region77: #{tcn_ae_forward.1} parent=11 // pred_check
          %p977 = pneg %p468
        $region78: #{tcn_ae_forward.1} parent=11 // pred_check_branch
          %979 = sbr.rel (%p977) target = $region80
        $region79: #{tcn_ae_forward.1} parent=11 // pred_region
          _
        $region80: #{tcn_ae_forward.1} parent=11 // pred_fallthru
          _
        // Predicated region
        $region81: #{tcn_ae_forward.1} parent=11 // pred_check
          %p980 = pneg %p489
        $region82: #{tcn_ae_forward.1} parent=11 // pred_check_branch
          %982 = sbr.rel (%p980) target = $region84
        $region83: #{tcn_ae_forward.1} parent=11 // pred_region
          _
        $region84: #{tcn_ae_forward.1} parent=11 // pred_fallthru
          _
        // Predicated region
        $region85: #{tcn_ae_forward.1} parent=11 // pred_check
          %p983 = pneg %p510
        $region86: #{tcn_ae_forward.1} parent=11 // pred_check_branch
          %985 = sbr.rel (%p983) target = $region88
        $region87: #{tcn_ae_forward.1} parent=11 // pred_region
          _
        $region88: #{tcn_ae_forward.1} parent=11 // pred_fallthru
          _
        // Predicated region
        $region89: #{tcn_ae_forward.1} parent=11 // pred_check
          %p986 = pneg %p531
        $region90: #{tcn_ae_forward.1} parent=11 // pred_check_branch
          %988 = sbr.rel (%p986) target = $region92
        $region91: #{tcn_ae_forward.1} parent=11 // pred_region
          %s990 = ssub.s32 384, 384
          %991 = vsyncadd [#allocation5], %s990
          %s992 = sshll.u32 [#allocation4], 4
          %s993 = int_to_ptr.vmem [resolvable:$true] %s992
          %998 = dma.hbm_to_vmem [thread:$0]  %s41, 384, %s993, [#allocation5], 128, 128, 8
        $region92: #{tcn_ae_forward.1} parent=11 // pred_fallthru
          _
        // Predicated region
        $region93: #{tcn_ae_forward.1} parent=11 // pred_check
          %p999 = pneg %p552
        $region94: #{tcn_ae_forward.1} parent=11 // pred_check_branch
          %1001 = sbr.rel (%p999) target = $region96
        $region95: #{tcn_ae_forward.1} parent=11 // pred_region
          _
        $region96: #{tcn_ae_forward.1} parent=11 // pred_fallthru
          _
        // Predicated region
        $region97: #{tcn_ae_forward.1} parent=11 // pred_check
          %p1002 = pneg %p573
        $region98: #{tcn_ae_forward.1} parent=11 // pred_check_branch
          %1004 = sbr.rel (%p1002) target = $region100
        $region99: #{tcn_ae_forward.1} parent=11 // pred_region
          _
        $region100: #{tcn_ae_forward.1} parent=11 // pred_fallthru
          _
        // Predicated region
        $region101: #{tcn_ae_forward.1} parent=11 // pred_check
          %p1005 = pneg %p594
        $region102: #{tcn_ae_forward.1} parent=11 // pred_check_branch
          %1007 = sbr.rel (%p1005) target = $region104
        $region103: #{tcn_ae_forward.1} parent=11 // pred_region
          _
        $region104: #{tcn_ae_forward.1} parent=11 // pred_fallthru
          _
        // Predicated region
        $region105: #{tcn_ae_forward.1} parent=11 // pred_check
          %p1008 = pneg %p615
        $region106: #{tcn_ae_forward.1} parent=11 // pred_check_branch
          %1010 = sbr.rel (%p1008) target = $region108
        $region107: #{tcn_ae_forward.1} parent=11 // pred_region
          %s1012 = ssub.s32 384, 384
          %1013 = vsyncadd [#allocation7], %s1012
          %s1014 = sshll.u32 [#allocation6], 4
          %s1015 = int_to_ptr.vmem [resolvable:$true] %s1014
          %1020 = dma.hbm_to_vmem [thread:$0]  %s49, 384, %s1015, [#allocation7], 128, 128, 8
        $region108: #{tcn_ae_forward.1} parent=11 // pred_fallthru
          _
        // Predicated region
        $region109: #{tcn_ae_forward.1} parent=11 // pred_check
          %p1021 = pneg %p636
        $region110: #{tcn_ae_forward.1} parent=11 // pred_check_branch
          %1023 = sbr.rel (%p1021) target = $region112
        $region111: #{tcn_ae_forward.1} parent=11 // pred_region
          _
        $region112: #{tcn_ae_forward.1} parent=11 // pred_fallthru
          _
        // Predicated region
        $region113: #{tcn_ae_forward.1} parent=11 // pred_check
          %p1024 = pneg %p657
        $region114: #{tcn_ae_forward.1} parent=11 // pred_check_branch
          %1026 = sbr.rel (%p1024) target = $region116
        $region115: #{tcn_ae_forward.1} parent=11 // pred_region
          _
        $region116: #{tcn_ae_forward.1} parent=11 // pred_fallthru
          _
        // Predicated region
        $region117: #{tcn_ae_forward.1} parent=11 // pred_check
          %p1027 = pneg %p678
        $region118: #{tcn_ae_forward.1} parent=11 // pred_check_branch
          %1029 = sbr.rel (%p1027) target = $region120
        $region119: #{tcn_ae_forward.1} parent=11 // pred_region
          _
        $region120: #{tcn_ae_forward.1} parent=11 // pred_fallthru
          _
        // Predicated region
        $region121: #{tcn_ae_forward.1} parent=11 // pred_check
          %p1030 = pneg %p699
        $region122: #{tcn_ae_forward.1} parent=11 // pred_check_branch
          %1032 = sbr.rel (%p1030) target = $region124
        $region123: #{tcn_ae_forward.1} parent=11 // pred_region
          _
        $region124: #{tcn_ae_forward.1} parent=11 // pred_fallthru
          _
        // Predicated region
        $region125: #{tcn_ae_forward.1} parent=11 // pred_check
          %p1033 = pneg %p720
        $region126: #{tcn_ae_forward.1} parent=11 // pred_check_branch
          %1035 = sbr.rel (%p1033) target = $region128
        $region127: #{tcn_ae_forward.1} parent=11 // pred_region
          _
        $region128: #{tcn_ae_forward.1} parent=11 // pred_fallthru
          _
        // Predicated region
        $region129: #{tcn_ae_forward.1} parent=11 // pred_check
          %p1036 = pneg %p741
        $region130: #{tcn_ae_forward.1} parent=11 // pred_check_branch
          %1038 = sbr.rel (%p1036) target = $region132
        $region131: #{tcn_ae_forward.1} parent=11 // pred_region
          _
        $region132: #{tcn_ae_forward.1} parent=11 // pred_fallthru
          _
        // Predicated region
        $region133: #{tcn_ae_forward.1} parent=11 // pred_check
          %p1039 = pneg %p762
        $region134: #{tcn_ae_forward.1} parent=11 // pred_check_branch
          %1041 = sbr.rel (%p1039) target = $region136
        $region135: #{tcn_ae_forward.1} parent=11 // pred_region
          _
        $region136: #{tcn_ae_forward.1} parent=11 // pred_fallthru
          _
        // Predicated region
        $region137: #{tcn_ae_forward.1} parent=11 // pred_check
          %p1042 = pneg %p783
        $region138: #{tcn_ae_forward.1} parent=11 // pred_check_branch
          %1044 = sbr.rel (%p1042) target = $region140
        $region139: #{tcn_ae_forward.1} parent=11 // pred_region
          %s1046 = ssub.s32 384, 384
          %1047 = vsyncadd [#allocation7], %s1046
          %s1048 = sshll.u32 [#allocation8], 4
          %s1049 = int_to_ptr.vmem [resolvable:$true] %s1048
          %1054 = dma.hbm_to_vmem [thread:$0]  %s65, 384, %s1049, [#allocation7], 128, 128, 8
        $region140: #{tcn_ae_forward.1} parent=11 // pred_fallthru
          _
        // Predicated region
        $region141: #{tcn_ae_forward.1} parent=11 // pred_check
          %p1055 = pneg %p804
        $region142: #{tcn_ae_forward.1} parent=11 // pred_check_branch
          %1057 = sbr.rel (%p1055) target = $region144
        $region143: #{tcn_ae_forward.1} parent=11 // pred_region
          _
        $region144: #{tcn_ae_forward.1} parent=11 // pred_fallthru
          _
        // Predicated region
        $region145: #{tcn_ae_forward.1} parent=11 // pred_check
          %p1058 = pneg %p825
        $region146: #{tcn_ae_forward.1} parent=11 // pred_check_branch
          %1060 = sbr.rel (%p1058) target = $region148
        $region147: #{tcn_ae_forward.1} parent=11 // pred_region
          _
        $region148: #{tcn_ae_forward.1} parent=11 // pred_fallthru
          _
        // Predicated region
        $region149: #{tcn_ae_forward.1} parent=11 // pred_check
          %p1061 = pneg %p846
        $region150: #{tcn_ae_forward.1} parent=11 // pred_check_branch
          %1063 = sbr.rel (%p1061) target = $region152
        $region151: #{tcn_ae_forward.1} parent=11 // pred_region
          _
        $region152: #{tcn_ae_forward.1} parent=11 // pred_fallthru
          _
        // Predicated region
        $region153: #{tcn_ae_forward.1} parent=11 // pred_check
          %p1064 = pneg %p867
        $region154: #{tcn_ae_forward.1} parent=11 // pred_check_branch
          %1066 = sbr.rel (%p1064) target = $region156
        $region155: #{tcn_ae_forward.1} parent=11 // pred_region
          _
        $region156: #{tcn_ae_forward.1} parent=11 // pred_fallthru
          _
        // Predicated region
        $region157: #{tcn_ae_forward.1} parent=11 // pred_check
          %p1067 = pneg %p888
        $region158: #{tcn_ae_forward.1} parent=11 // pred_check_branch
          %1069 = sbr.rel (%p1067) target = $region160
        $region159: #{tcn_ae_forward.1} parent=11 // pred_region
          _
        $region160: #{tcn_ae_forward.1} parent=11 // pred_fallthru
          _
      $region12: #{tcn_ae_forward.1} parent=5 // pred_fallthru
        _
      %p1070 = scmp.lt.s32.totalorder %s85, 2
      // Predicated region
      $region161: #{tcn_ae_forward.1} parent=5 // pred_check
        %p1071 = pneg %p1070
      $region162: #{tcn_ae_forward.1} parent=5 // pred_check_branch
        %1073 = sbr.rel (%p1071) target = $region164
      $region163: #{tcn_ae_forward.1} parent=5 // pred_region
        // Predicated region
        $region165: #{tcn_ae_forward.1} parent=163 // pred_check
          %p1074 = pneg %p105
        $region166: #{tcn_ae_forward.1} parent=163 // pred_check_branch
          %1076 = sbr.rel (%p1074) target = $region168
        $region167: #{tcn_ae_forward.1} parent=163 // pred_region
          %p1077 = scmp.lt.s32.totalorder %s85, 1
          %s1078 = scalar_select %p1077, %s85, 1
          %s1079 = smul.addr %s1078, 3
          %s1080 = smul.addr %s1079, 8
          %s1081 = scalar_lea.vmem %s1, %s1080
        $region168: #{tcn_ae_forward.1} parent=163 // pred_fallthru
          _
      $region164: #{tcn_ae_forward.1} parent=5 // pred_fallthru
        _
      %p1082 = scmp.le.s32.totalorder 1, %s85
      %p1083 = scmp.lt.s32.totalorder %s85, 3
      %p1084 = pnand %p1082, %p1083
      %p1085 = pneg %p1084
      // Predicated region
      $region169: #{tcn_ae_forward.1} parent=5 // pred_check
        _
      $region170: #{tcn_ae_forward.1} parent=5 // pred_check_branch
        %1087 = sbr.rel (%p1084) target = $region172
      $region171: #{tcn_ae_forward.1} parent=5 // pred_region
        %s1088 = ssub.s32 %s85, 1
        // Predicated region
        $region173: #{tcn_ae_forward.1} parent=171 // pred_check
          %p1089 = pneg %p531
        $region174: #{tcn_ae_forward.1} parent=171 // pred_check_branch
          %1091 = sbr.rel (%p1089) target = $region176
        $region175: #{tcn_ae_forward.1} parent=171 // pred_region
          %1092 = dma.done [#allocation5], 384
        $region176: #{tcn_ae_forward.1} parent=171 // pred_fallthru
          _
        // Predicated region
        $region177: #{tcn_ae_forward.1} parent=171 // pred_check
          %p1093 = pneg %p615
        $region178: #{tcn_ae_forward.1} parent=171 // pred_check_branch
          %1095 = sbr.rel (%p1093) target = $region180
        $region179: #{tcn_ae_forward.1} parent=171 // pred_region
          %1096 = dma.done [#allocation7], 384
        $region180: #{tcn_ae_forward.1} parent=171 // pred_fallthru
          _
        // Predicated region
        $region181: #{tcn_ae_forward.1} parent=171 // pred_check
          %p1097 = pneg %p783
        $region182: #{tcn_ae_forward.1} parent=171 // pred_check_branch
          %1099 = sbr.rel (%p1097) target = $region184
        $region183: #{tcn_ae_forward.1} parent=171 // pred_region
          %1100 = dma.done [#allocation7], 384
        $region184: #{tcn_ae_forward.1} parent=171 // pred_fallthru
          _
        %p1101 = scmp.lt.s32.totalorder %s90, 1
        %s1102 = scalar_select %p1101, %s90, 1
        %s1103 = smul.addr %s1102, 3
        %s1104 = smul.addr %s1103, 8
        %s1105 = scalar_lea.vmem %s1, %s1104
        %p1106 = pneg %p111
        %p1107 = pneg %p108
        %p1108 = pneg %p132
        %p1109 = pneg %p129
        %p1110 = pneg %p153
        %p1111 = pneg %p150
        %p1112 = pneg %p174
        %p1113 = pneg %p171
        %p1114 = pneg %p195
        %p1115 = pneg %p192
        %p1116 = pneg %p216
        %p1117 = pneg %p213
        %p1118 = pneg %p237
        %p1119 = pneg %p234
        %p1120 = pneg %p258
        %p1121 = pneg %p255
        %p1122 = pneg %p279
        %p1123 = pneg %p276
        %p1124 = pneg %p300
        %p1125 = pneg %p297
        %p1126 = pneg %p321
        %p1127 = pneg %p318
        %p1128 = pneg %p342
        %p1129 = pneg %p339
        %p1130 = pneg %p363
        %p1131 = pneg %p360
        %p1132 = pneg %p384
        %p1133 = pneg %p381
        %p1134 = pneg %p405
        %p1135 = pneg %p402
        %p1136 = pneg %p426
        %p1137 = pneg %p423
        %p1138 = pneg %p447
        %p1139 = pneg %p444
        %p1140 = pneg %p468
        %p1141 = pneg %p465
        %p1142 = pneg %p489
        %p1143 = pneg %p486
        %p1144 = pneg %p510
        %p1145 = pneg %p507
        %p1146 = pneg %p531
        %p1147 = pneg %p528
        %p1148 = pneg %p552
        %p1149 = pneg %p549
        %p1150 = pneg %p573
        %p1151 = pneg %p570
        %p1152 = pneg %p594
        %p1153 = pneg %p591
        %p1154 = pneg %p615
        %p1155 = pneg %p612
        %p1156 = pneg %p636
        %p1157 = pneg %p633
        %p1158 = pneg %p657
        %p1159 = pneg %p654
        %p1160 = pneg %p678
        %p1161 = pneg %p675
        %p1162 = pneg %p699
        %p1163 = pneg %p696
        %p1164 = pneg %p720
        %p1165 = pneg %p717
        %p1166 = pneg %p741
        %p1167 = pneg %p738
        %p1168 = pneg %p762
        %p1169 = pneg %p759
        %p1170 = pneg %p783
        %p1171 = pneg %p780
        %p1172 = pneg %p804
        %p1173 = pneg %p801
        %p1174 = pneg %p825
        %p1175 = pneg %p822
        %p1176 = pneg %p846
        %p1177 = pneg %p843
        %p1178 = pneg %p867
        %p1179 = pneg %p864
        %p1180 = pneg %p888
        %p1181 = pneg %p885
        %p1182 = pneg %p914
        %p1183 = pneg %p911
        %p1184 = scmp.lt.s32.totalorder %s90, 1
        %s1185 = scalar_select %p1184, %s90, 1
        %s1186 = smul.addr %s1185, 8
        %s1187 = scalar_lea.vmem %s77, %s1186
        %p1188 = scmp.lt.s32.totalorder %s90, 1
        %s1189 = scalar_select %p1188, %s90, 1
        %s1190 = smul.addr %s1189, 3
        %s1191 = smul.addr %s1190, 8
        %s1192 = scalar_lea.vmem %s1, %s1191
        %p1193 = scmp.lt.s32.totalorder %s90, 1
        %s1194 = scalar_select %p1193, %s90, 1
        %s1195 = smul.addr %s1194, 8
        %s1196 = scalar_lea.vmem %s77, %s1195
        %v1197 = vlaneseq
        %v1198 = vand.u32 %v1197, 127
        %v1199 = vld [vmem:[%s1192] sm:$0xff]
        %v1200 = vld [vmem:[%s1192 + $0x8] sm:$0xff]
        %v1201 = vld [vmem:[%s1192 + $0x10] sm:$0xff]
        %1202 = vrot.lane.b32.xlu0 %v1199, 1
        %v1203 = vpop.permute.xlu0 %1202
        %1204 = vrot.lane.b32.xlu0 %v1200, 1
        %v1205 = vpop.permute.xlu0 %1204
        %1206 = vrot.lane.b32.xlu0 %v1201, 1
        %v1207 = vpop.permute.xlu0 %1206
        %vm1208 = vcmp.ge.s32.totalorder %v1198, 1
        %v1209 = vsel %vm1208, %v1203, 0.0
        %v1210 = vsel %vm1208, %v1205, 0.0
        %v1211 = vsel %vm1208, %v1207, 0.0
        %1212 = vst [vmem:[#allocation2] sm:$0xff] %v1209
        %1213 = vst [vmem:[#allocation2 + $0x8] sm:$0xff] %v1210
        %1214 = vst [vmem:[#allocation2 + $0x10] sm:$0xff] %v1211
        %1215 = vst [vmem:[#allocation2 + $0x18] sm:$0xff] %v1199
        %1216 = vst [vmem:[#allocation2 + $0x20] sm:$0xff] %v1200
        %1217 = vst [vmem:[#allocation2 + $0x28] sm:$0xff] %v1201
        %1218 = vrot.lane.b32.xlu0 %v1199, 127
        %v1219 = vpop.permute.xlu0 %1218
        %1220 = vrot.lane.b32.xlu0 %v1200, 127
        %v1221 = vpop.permute.xlu0 %1220
        %1222 = vrot.lane.b32.xlu0 %v1201, 127
        %v1223 = vpop.permute.xlu0 %1222
        %vm1224 = vcmp.lt.s32.totalorder %v1198, 127
        %v1225 = vsel %vm1224, %v1219, 0.0
        %v1226 = vsel %vm1224, %v1221, 0.0
        %v1227 = vsel %vm1224, %v1223, 0.0
        %1228 = vst [vmem:[#allocation2 + $0x30] sm:$0xff] %v1225
        %1229 = vst [vmem:[#allocation2 + $0x38] sm:$0xff] %v1226
        %1230 = vst [vmem:[#allocation2 + $0x40] sm:$0xff] %v1227
        %v1231 = vld [vmem:[%s3] sm:$0xff]
        %v1232 = vld [vmem:[%s3 + $0x8] sm:$0xff]
        %v1233 = vld [vmem:[%s3 + $0x10] sm:$0xff]
        %v1234 = vld [vmem:[%s3 + $0x18] sm:$0xff]
        %v1235 = vld [vmem:[%s3 + $0x20] sm:$0xff]
        %v1236 = vld [vmem:[%s3 + $0x28] sm:$0xff]
        %v1237 = vld [vmem:[#allocation2] sm:$0xff]
        %v1238 = vld [vmem:[#allocation2 + $0x8] sm:$0xff]
        %v1239 = vld [vmem:[#allocation2 + $0x10] sm:$0xff]
        %v1240 = vld [vmem:[#allocation2 + $0x18] sm:$0xff]
        %v1241 = vld [vmem:[#allocation2 + $0x20] sm:$0xff]
        %v1242 = vld [vmem:[#allocation2 + $0x28] sm:$0xff]
        %v1243 = vld [vmem:[#allocation2 + $0x30] sm:$0xff]
        %v1244 = vld [vmem:[#allocation2 + $0x38] sm:$0xff]
        %v1245 = vld [vmem:[#allocation2 + $0x40] sm:$0xff]
        %vm1246 = vcmask 588800
        %v1248 = vsel %vm1246, %v1231, 0
        %v1251 = vsel %vm1246, %v1232, 0
        %v1254 = vsel %vm1246, %v1233, 0
        %v1257 = vsel %vm1246, %v1234, 0
        %v1260 = vsel %vm1246, %v1235, 0
        %v1263 = vsel %vm1246, %v1236, 0
        %1265 = vmatprep.subr.mxu0 0.0
        %1266 = vmatpush1.msra.mxu0 %v1237
        %1267 = vmatprep.subr.mxu0 0.0
        %1268 = vmatpush1.msra.mxu0 %v1238
        %1269 = vmatprep.subr.mxu0 0.0
        %1270 = vmatpush1.msra.mxu0 %v1239
        %1271 = vmatprep.subr.mxu0 0.0
        %1272 = vmatpush1.msra.mxu0 %v1240
        %1273 = vmatprep.subr.mxu0 0.0
        %1274 = vmatpush1.msra.mxu0 %v1241
        %1275 = vmatprep.subr.mxu0 0.0
        %1276 = vmatpush1.msra.mxu0 %v1242
        %1277 = vmatprep.subr.mxu0 0.0
        %1278 = vmatpush1.msra.mxu0 %v1243
        %1279 = vmatprep.subr.mxu0 0.0
        %1280 = vmatpush1.msra.mxu0 %v1244
        %1281 = vmatprep.subr.mxu0 0.0
        %1282 = vmatpush1.msra.mxu0 %v1245
        %1283 = vmatprep.subr.mxu0 0.0
        %1284 = vmatpush1.msra.mxu0 0.0
        %1285 = vmatprep.subr.mxu0 0.0
        %1286 = vmatpush1.msra.mxu0 0.0
        %1287 = vmatprep.subr.mxu0 0.0
        %1288 = vmatpush1.msra.mxu0 0.0
        %1289 = vmatprep.subr.mxu0 0.0
        %1290 = vmatpush1.msra.mxu0 0.0
        %1291 = vmatprep.subr.mxu0 0.0
        %1292 = vmatpush1.msra.mxu0 0.0
        %1293 = vmatprep.subr.mxu0 0.0
        %1294 = vmatpush1.msra.mxu0 0.0
        %1295 = vmatprep.subr.mxu0 0.0
        %1296 = vmatpush1.msra.mxu0 0.0
        %1297 = vmatprep.subr.mxu0 0.0
        %1298 = vmatpush1.msra.mxu0 0.0
        %1299 = vmatprep.subr.mxu0 0.0
        %1300 = vmatpush1.msra.mxu0 0.0
        %1301 = vmatprep.subr.mxu0 0.0
        %1302 = vmatpush1.msra.mxu0 0.0
        %1303 = vmatprep.subr.mxu0 0.0
        %1304 = vmatpush1.msra.mxu0 0.0
        %1305 = vmatprep.subr.mxu0 0.0
        %1306 = vmatpush1.msra.mxu0 0.0
        %1307 = vmatprep.subr.mxu0 0.0
        %1308 = vmatpush1.msra.mxu0 0.0
        %1309 = vmatprep.subr.mxu0 0.0
        %1310 = vmatpush1.msra.mxu0 0.0
        %1311 = vmatprep.subr.mxu0 0.0
        %1312 = vmatpush1.msra.mxu0 0.0
        %1313 = vmatprep.subr.mxu0 0.0
        %1314 = vmatpush1.msra.mxu0 0.0
        %1315 = vmatprep.subr.mxu0 0.0
        %1316 = vmatpush1.msra.mxu0 0.0
        %1317 = vmatprep.subr.mxu0 0.0
        %1318 = vmatpush1.msra.mxu0 0.0
        %1319 = vmatprep.subr.mxu0 0.0
        %1320 = vmatpush1.msra.mxu0 0.0
        %1321 = vmatprep.subr.mxu0 0.0
        %1322 = vmatpush1.msra.mxu0 0.0
        %1323 = vmatprep.subr.mxu0 0.0
        %1324 = vmatpush1.msra.mxu0 0.0
        %1325 = vmatprep.subr.mxu0 0.0
        %1326 = vmatpush1.msra.mxu0 0.0
        %1327 = vmatprep.subr.mxu0 0.0
        %1328 = vmatpush1.msra.mxu0 0.0
        %1329 = vmatprep.mubr.f32.mxu0 0.0
        %1330 = vmatmul.mubr.f32.gmra.mrb[0].mxu0 %v1248
        %v1331 = vpop.f32.mrb[0].mxu0
        %v1332 = vadd.f32 0.0, %v1331
        %v1333 = vpop.f32.mrb[0].mxu0
        %1334 = vmatprep.mubr.f32.mxu0 0.0
        %1335 = vmatmul.mubr.f32.gmra.mrb[0].mxu0 %v1251
        %v1336 = vpop.f32.mrb[0].mxu0
        %v1337 = vadd.f32 0.0, %v1336
        %v1338 = vpop.f32.mrb[0].mxu0
        %1339 = vmatprep.mubr.f32.mxu0 0.0
        %1340 = vmatmul.mubr.f32.gmra.mrb[0].mxu0 %v1254
        %v1341 = vpop.f32.mrb[0].mxu0
        %v1342 = vadd.f32 0.0, %v1341
        %v1343 = vpop.f32.mrb[0].mxu0
        %1344 = vmatprep.mubr.f32.mxu0 0.0
        %1345 = vmatmul.mubr.f32.gmra.mrb[0].mxu0 %v1257
        %v1346 = vpop.f32.mrb[0].mxu0
        %v1347 = vadd.f32 0.0, %v1346
        %v1348 = vpop.f32.mrb[0].mxu0
        %1349 = vmatprep.mubr.f32.mxu0 0.0
        %1350 = vmatmul.mubr.f32.gmra.mrb[0].mxu0 %v1260
        %v1351 = vpop.f32.mrb[0].mxu0
        %v1352 = vadd.f32 0.0, %v1351
        %v1353 = vpop.f32.mrb[0].mxu0
        %1354 = vmatprep.mubr.f32.mxu0 0.0
        %1355 = vmatmul.mubr.f32.gmra.mrb[0].mxu0 %v1263
        %v1356 = vpop.f32.mrb[0].mxu0
        %v1357 = vadd.f32 0.0, %v1356
        %v1358 = vpop.f32.mrb[0].mxu0
        %1359 = vdwg.mxu0
        %v1360 = vld [vmem:[%s5] sm:$0xff]
        %v1361 = vld [vmem:[%s5 + $0x8] sm:$0xff]
        %v1362 = vld [vmem:[%s5 + $0x10] sm:$0xff]
        %1364 = vset.pattern.permute.xlu0 0
        %1365 = vperm.xlu0 %1364, %v1360
        %v1366 = vpop.permute.xlu0 %1365
        %1369 = vset.pattern.permute.xlu0 0
        %1370 = vperm.xlu0 %1369, %v1361
        %v1371 = vpop.permute.xlu0 %1370
        %1374 = vset.pattern.permute.xlu0 0
        %1375 = vperm.xlu0 %1374, %v1362
        %v1376 = vpop.permute.xlu0 %1375
        %v1378 = vadd.f32 %v1332, %v1366
        %v1379 = vadd.f32 %v1337, %v1371
        %v1380 = vadd.f32 %v1342, %v1376
        %v1381 = vmax.f32 %v1378, 0.0
        %v1382 = vmax.f32 %v1379, 0.0
        %v1383 = vmax.f32 %v1380, 0.0
        %v1384 = vld [vmem:[%s11] sm:$0xff]
        %v1385 = vld [vmem:[%s11 + $0x8] sm:$0xff]
        %v1386 = vld [vmem:[%s11 + $0x10] sm:$0xff]
        %1388 = vset.pattern.permute.xlu0 0
        %1389 = vperm.xlu0 %1388, %v1384
        %v1390 = vpop.permute.xlu0 %1389
        %1393 = vset.pattern.permute.xlu0 0
        %1394 = vperm.xlu0 %1393, %v1385
        %v1395 = vpop.permute.xlu0 %1394
        %1398 = vset.pattern.permute.xlu0 0
        %1399 = vperm.xlu0 %1398, %v1386
        %v1400 = vpop.permute.xlu0 %1399
        %v1402 = vadd.f32 %v1347, %v1390
        %v1403 = vadd.f32 %v1352, %v1395
        %v1404 = vadd.f32 %v1357, %v1400
        %1405 = vrot.lane.b32.xlu0 %v1381, 4
        %v1406 = vpop.permute.xlu0 %1405
        %1407 = vrot.lane.b32.xlu0 %v1382, 4
        %v1408 = vpop.permute.xlu0 %1407
        %1409 = vrot.lane.b32.xlu0 %v1383, 4
        %v1410 = vpop.permute.xlu0 %1409
        %vm1411 = vcmp.ge.s32.totalorder %v1198, 4
        %v1412 = vsel %vm1411, %v1406, 0.0
        %v1413 = vsel %vm1411, %v1408, 0.0
        %v1414 = vsel %vm1411, %v1410, 0.0
        %1415 = vst [vmem:[#allocation3] sm:$0xff] %v1412
        %1416 = vst [vmem:[#allocation3 + $0x8] sm:$0xff] %v1413
        %1417 = vst [vmem:[#allocation3 + $0x10] sm:$0xff] %v1414
        %1418 = vrot.lane.b32.xlu0 %v1381, 3
        %v1419 = vpop.permute.xlu0 %1418
        %1420 = vrot.lane.b32.xlu0 %v1382, 3
        %v1421 = vpop.permute.xlu0 %1420
        %1422 = vrot.lane.b32.xlu0 %v1383, 3
        %v1423 = vpop.permute.xlu0 %1422
        %vm1424 = vcmp.ge.s32.totalorder %v1198, 3
        %v1425 = vsel %vm1424, %v1419, 0.0
        %v1426 = vsel %vm1424, %v1421, 0.0
        %v1427 = vsel %vm1424, %v1423, 0.0
        %1428 = vst [vmem:[#allocation3 + $0x18] sm:$0xff] %v1425
        %1429 = vst [vmem:[#allocation3 + $0x20] sm:$0xff] %v1426
        %1430 = vst [vmem:[#allocation3 + $0x28] sm:$0xff] %v1427
        %1431 = vrot.lane.b32.xlu0 %v1381, 2
        %v1432 = vpop.permute.xlu0 %1431
        %1433 = vrot.lane.b32.xlu0 %v1382, 2
        %v1434 = vpop.permute.xlu0 %1433
        %1435 = vrot.lane.b32.xlu0 %v1383, 2
        %v1436 = vpop.permute.xlu0 %1435
        %vm1437 = vcmp.ge.s32.totalorder %v1198, 2
        %v1438 = vsel %vm1437, %v1432, 0.0
        %v1439 = vsel %vm1437, %v1434, 0.0
        %v1440 = vsel %vm1437, %v1436, 0.0
        %1441 = vst [vmem:[#allocation3 + $0x30] sm:$0xff] %v1438
        %1442 = vst [vmem:[#allocation3 + $0x38] sm:$0xff] %v1439
        %1443 = vst [vmem:[#allocation3 + $0x40] sm:$0xff] %v1440
        %1444 = vrot.lane.b32.xlu0 %v1381, 1
        %v1445 = vpop.permute.xlu0 %1444
        %1446 = vrot.lane.b32.xlu0 %v1382, 1
        %v1447 = vpop.permute.xlu0 %1446
        %1448 = vrot.lane.b32.xlu0 %v1383, 1
        %v1449 = vpop.permute.xlu0 %1448
        %v1450 = vsel %vm1208, %v1445, 0.0
        %v1451 = vsel %vm1208, %v1447, 0.0
        %v1452 = vsel %vm1208, %v1449, 0.0
        %1453 = vst [vmem:[#allocation3 + $0x48] sm:$0xff] %v1450
        %1454 = vst [vmem:[#allocation3 + $0x50] sm:$0xff] %v1451
        %1455 = vst [vmem:[#allocation3 + $0x58] sm:$0xff] %v1452
        %1456 = vst [vmem:[#allocation3 + $0x60] sm:$0xff] %v1381
        %1457 = vst [vmem:[#allocation3 + $0x68] sm:$0xff] %v1382
        %1458 = vst [vmem:[#allocation3 + $0x70] sm:$0xff] %v1383
        %1459 = vrot.lane.b32.xlu0 %v1381, 127
        %v1460 = vpop.permute.xlu0 %1459
        %1461 = vrot.lane.b32.xlu0 %v1382, 127
        %v1462 = vpop.permute.xlu0 %1461
        %1463 = vrot.lane.b32.xlu0 %v1383, 127
        %v1464 = vpop.permute.xlu0 %1463
        %v1465 = vsel %vm1224, %v1460, 0.0
        %v1466 = vsel %vm1224, %v1462, 0.0
        %v1467 = vsel %vm1224, %v1464, 0.0
        %1468 = vst [vmem:[#allocation3 + $0x78] sm:$0xff] %v1465
        %1469 = vst [vmem:[#allocation3 + $0x80] sm:$0xff] %v1466
        %1470 = vst [vmem:[#allocation3 + $0x88] sm:$0xff] %v1467
        %1471 = vrot.lane.b32.xlu0 %v1381, 126
        %v1472 = vpop.permute.xlu0 %1471
        %1473 = vrot.lane.b32.xlu0 %v1382, 126
        %v1474 = vpop.permute.xlu0 %1473
        %1475 = vrot.lane.b32.xlu0 %v1383, 126
        %v1476 = vpop.permute.xlu0 %1475
        %vm1477 = vcmp.lt.s32.totalorder %v1198, 126
        %v1478 = vsel %vm1477, %v1472, 0.0
        %v1479 = vsel %vm1477, %v1474, 0.0
        %v1480 = vsel %vm1477, %v1476, 0.0
        %1481 = vst [vmem:[#allocation3 + $0x90] sm:$0xff] %v1478
        %1482 = vst [vmem:[#allocation3 + $0x98] sm:$0xff] %v1479
        %1483 = vst [vmem:[#allocation3 + $0xa0] sm:$0xff] %v1480
        %1484 = vrot.lane.b32.xlu0 %v1381, 125
        %v1485 = vpop.permute.xlu0 %1484
        %1486 = vrot.lane.b32.xlu0 %v1382, 125
        %v1487 = vpop.permute.xlu0 %1486
        %1488 = vrot.lane.b32.xlu0 %v1383, 125
        %v1489 = vpop.permute.xlu0 %1488
        %vm1490 = vcmp.lt.s32.totalorder %v1198, 125
        %v1491 = vsel %vm1490, %v1485, 0.0
        %v1492 = vsel %vm1490, %v1487, 0.0
        %v1493 = vsel %vm1490, %v1489, 0.0
        %1494 = vst [vmem:[#allocation3 + $0xa8] sm:$0xff] %v1491
        %1495 = vst [vmem:[#allocation3 + $0xb0] sm:$0xff] %v1492
        %1496 = vst [vmem:[#allocation3 + $0xb8] sm:$0xff] %v1493
        %1497 = vrot.lane.b32.xlu0 %v1381, 124
        %v1498 = vpop.permute.xlu0 %1497
        %1499 = vrot.lane.b32.xlu0 %v1382, 124
        %v1500 = vpop.permute.xlu0 %1499
        %1501 = vrot.lane.b32.xlu0 %v1383, 124
        %v1502 = vpop.permute.xlu0 %1501
        %vm1503 = vcmp.lt.s32.totalorder %v1198, 124
        %v1504 = vsel %vm1503, %v1498, 0.0
        %v1505 = vsel %vm1503, %v1500, 0.0
        %v1506 = vsel %vm1503, %v1502, 0.0
        %1507 = vst [vmem:[#allocation3 + $0xc0] sm:$0xff] %v1504
        %1508 = vst [vmem:[#allocation3 + $0xc8] sm:$0xff] %v1505
        %1509 = vst [vmem:[#allocation3 + $0xd0] sm:$0xff] %v1506
        %v1510 = vld [vmem:[%s7] sm:$0xff]
        %v1511 = vld [vmem:[%s7 + $0x8] sm:$0xff]
        %v1512 = vld [vmem:[%s7 + $0x10] sm:$0xff]
        %v1513 = vld [vmem:[%s7 + $0x18] sm:$0xff]
        %v1514 = vld [vmem:[%s7 + $0x20] sm:$0xff]
        %v1515 = vld [vmem:[%s7 + $0x28] sm:$0xff]
        %v1516 = vld [vmem:[#allocation3] sm:$0xff]
        %v1517 = vld [vmem:[#allocation3 + $0x8] sm:$0xff]
        %v1518 = vld [vmem:[#allocation3 + $0x10] sm:$0xff]
        %v1519 = vld [vmem:[#allocation3 + $0x18] sm:$0xff]
        %v1520 = vld [vmem:[#allocation3 + $0x20] sm:$0xff]
        %v1521 = vld [vmem:[#allocation3 + $0x28] sm:$0xff]
        %v1522 = vld [vmem:[#allocation3 + $0x30] sm:$0xff]
        %v1523 = vld [vmem:[#allocation3 + $0x38] sm:$0xff]
        %v1524 = vld [vmem:[#allocation3 + $0x40] sm:$0xff]
        %v1525 = vld [vmem:[#allocation3 + $0x48] sm:$0xff]
        %v1526 = vld [vmem:[#allocation3 + $0x50] sm:$0xff]
        %v1527 = vld [vmem:[#allocation3 + $0x58] sm:$0xff]
        %v1528 = vld [vmem:[#allocation3 + $0x60] sm:$0xff]
        %v1529 = vld [vmem:[#allocation3 + $0x68] sm:$0xff]
        %v1530 = vld [vmem:[#allocation3 + $0x70] sm:$0xff]
        %v1531 = vld [vmem:[#allocation3 + $0x78] sm:$0xff]
        %v1532 = vld [vmem:[#allocation3 + $0x80] sm:$0xff]
        %v1533 = vld [vmem:[#allocation3 + $0x88] sm:$0xff]
        %v1534 = vld [vmem:[#allocation3 + $0x90] sm:$0xff]
        %v1535 = vld [vmem:[#allocation3 + $0x98] sm:$0xff]
        %v1536 = vld [vmem:[#allocation3 + $0xa0] sm:$0xff]
        %v1537 = vld [vmem:[#allocation3 + $0xa8] sm:$0xff]
        %v1538 = vld [vmem:[#allocation3 + $0xb0] sm:$0xff]
        %v1539 = vld [vmem:[#allocation3 + $0xb8] sm:$0xff]
        %v1540 = vld [vmem:[#allocation3 + $0xc0] sm:$0xff]
        %v1541 = vld [vmem:[#allocation3 + $0xc8] sm:$0xff]
        %v1542 = vld [vmem:[#allocation3 + $0xd0] sm:$0xff]
        %v1543 = vld [vmem:[%s9] sm:$0xff]
        %v1544 = vld [vmem:[%s9 + $0x8] sm:$0xff]
        %v1545 = vld [vmem:[%s9 + $0x10] sm:$0xff]
        %1547 = vset.pattern.permute.xlu0 0
        %1548 = vperm.xlu0 %1547, %v1543
        %v1549 = vpop.permute.xlu0 %1548
        %1552 = vset.pattern.permute.xlu0 0
        %1553 = vperm.xlu0 %1552, %v1544
        %v1554 = vpop.permute.xlu0 %1553
        %1557 = vset.pattern.permute.xlu0 0
        %1558 = vperm.xlu0 %1557, %v1545
        %v1559 = vpop.permute.xlu0 %1558
        %vm1561 = vcmask 719872
        %v1563 = vsel %vm1561, %v1511, 0
        %v1566 = vsel %vm1561, %v1513, 0
        %v1569 = vsel %vm1561, %v1515, 0
        %1571 = vmatprep.subr.mxu0 0.0
        %1572 = vmatpush1.msra.mxu0 %v1516
        %1573 = vmatprep.subr.mxu0 0.0
        %1574 = vmatpush1.msra.mxu0 %v1517
        %1575 = vmatprep.subr.mxu0 0.0
        %1576 = vmatpush1.msra.mxu0 %v1518
        %1577 = vmatprep.subr.mxu0 0.0
        %1578 = vmatpush1.msra.mxu0 %v1519
        %1579 = vmatprep.subr.mxu0 0.0
        %1580 = vmatpush1.msra.mxu0 %v1520
        %1581 = vmatprep.subr.mxu0 0.0
        %1582 = vmatpush1.msra.mxu0 %v1521
        %1583 = vmatprep.subr.mxu0 0.0
        %1584 = vmatpush1.msra.mxu0 %v1522
        %1585 = vmatprep.subr.mxu0 0.0
        %1586 = vmatpush1.msra.mxu0 %v1523
        %1587 = vmatprep.subr.mxu0 0.0
        %1588 = vmatpush1.msra.mxu0 %v1524
        %1589 = vmatprep.subr.mxu0 0.0
        %1590 = vmatpush1.msra.mxu0 %v1525
        %1591 = vmatprep.subr.mxu0 0.0
        %1592 = vmatpush1.msra.mxu0 %v1526
        %1593 = vmatprep.subr.mxu0 0.0
        %1594 = vmatpush1.msra.mxu0 %v1527
        %1595 = vmatprep.subr.mxu0 0.0
        %1596 = vmatpush1.msra.mxu0 %v1528
        %1597 = vmatprep.subr.mxu0 0.0
        %1598 = vmatpush1.msra.mxu0 %v1529
        %1599 = vmatprep.subr.mxu0 0.0
        %1600 = vmatpush1.msra.mxu0 %v1530
        %1601 = vmatprep.subr.mxu0 0.0
        %1602 = vmatpush1.msra.mxu0 %v1531
        %1603 = vmatprep.subr.mxu0 0.0
        %1604 = vmatpush1.msra.mxu0 %v1532
        %1605 = vmatprep.subr.mxu0 0.0
        %1606 = vmatpush1.msra.mxu0 %v1533
        %1607 = vmatprep.subr.mxu0 0.0
        %1608 = vmatpush1.msra.mxu0 %v1534
        %1609 = vmatprep.subr.mxu0 0.0
        %1610 = vmatpush1.msra.mxu0 %v1535
        %1611 = vmatprep.subr.mxu0 0.0
        %1612 = vmatpush1.msra.mxu0 %v1536
        %1613 = vmatprep.subr.mxu0 0.0
        %1614 = vmatpush1.msra.mxu0 %v1537
        %1615 = vmatprep.subr.mxu0 0.0
        %1616 = vmatpush1.msra.mxu0 %v1538
        %1617 = vmatprep.subr.mxu0 0.0
        %1618 = vmatpush1.msra.mxu0 %v1539
        %1619 = vmatprep.subr.mxu0 0.0
        %1620 = vmatpush1.msra.mxu0 %v1540
        %1621 = vmatprep.subr.mxu0 0.0
        %1622 = vmatpush1.msra.mxu0 %v1541
        %1623 = vmatprep.subr.mxu0 0.0
        %1624 = vmatpush1.msra.mxu0 %v1542
        %1625 = vmatprep.subr.mxu0 0.0
        %1626 = vmatpush1.msra.mxu0 0.0
        %1627 = vmatprep.subr.mxu0 0.0
        %1628 = vmatpush1.msra.mxu0 0.0
        %1629 = vmatprep.subr.mxu0 0.0
        %1630 = vmatpush1.msra.mxu0 0.0
        %1631 = vmatprep.subr.mxu0 0.0
        %1632 = vmatpush1.msra.mxu0 0.0
        %1633 = vmatprep.subr.mxu0 0.0
        %1634 = vmatpush1.msra.mxu0 0.0
        %1635 = vmatprep.mubr.f32.mxu0 %v1563
        %1636 = vmatmul.mubr.f32.gmra.mrb[0].mxu0 %v1510
        %v1637 = vpop.f32.mrb[0].mxu0
        %v1638 = vadd.f32 %v1549, %v1637
        %v1639 = vpop.f32.mrb[0].mxu0
        %1640 = vmatprep.mubr.f32.mxu0 %v1566
        %1641 = vmatmul.mubr.f32.gmra.mrb[0].mxu0 %v1512
        %v1642 = vpop.f32.mrb[0].mxu0
        %v1643 = vadd.f32 %v1554, %v1642
        %v1644 = vpop.f32.mrb[0].mxu0
        %1645 = vmatprep.mubr.f32.mxu0 %v1569
        %1646 = vmatmul.mubr.f32.gmra.mrb[0].mxu0 %v1514
        %v1647 = vpop.f32.mrb[0].mxu0
        %v1648 = vadd.f32 %v1559, %v1647
        %v1649 = vpop.f32.mrb[0].mxu0
        %1650 = vdwg.mxu0
        %v1651 = vmax.f32 %v1638, 0.0
        %v1652 = vmax.f32 %v1643, 0.0
        %v1653 = vmax.f32 %v1648, 0.0
        %v1654 = vadd.f32 %v1402, %v1651
        %v1655 = vadd.f32 %v1403, %v1652
        %v1656 = vadd.f32 %v1404, %v1653
        %v1657 = vmax.f32 %v1654, 0.0
        %v1658 = vmax.f32 %v1655, 0.0
        %v1659 = vmax.f32 %v1656, 0.0
        %1660 = vrot.lane.b32.xlu0 %v1657, 2
        %v1661 = vpop.permute.xlu0 %1660
        %1662 = vrot.lane.b32.xlu0 %v1658, 2
        %v1663 = vpop.permute.xlu0 %1662
        %1664 = vrot.lane.b32.xlu0 %v1659, 2
        %v1665 = vpop.permute.xlu0 %1664
        %v1666 = vsel %vm1437, %v1661, 0.0
        %v1667 = vsel %vm1437, %v1663, 0.0
        %v1668 = vsel %vm1437, %v1665, 0.0
        %1669 = vst [vmem:[#allocation2] sm:$0xff] %v1666
        %1670 = vst [vmem:[#allocation2 + $0x8] sm:$0xff] %v1667
        %1671 = vst [vmem:[#allocation2 + $0x10] sm:$0xff] %v1668
        %1672 = vst [vmem:[#allocation2 + $0x18] sm:$0xff] %v1657
        %1673 = vst [vmem:[#allocation2 + $0x20] sm:$0xff] %v1658
        %1674 = vst [vmem:[#allocation2 + $0x28] sm:$0xff] %v1659
        %1675 = vrot.lane.b32.xlu0 %v1657, 126
        %v1676 = vpop.permute.xlu0 %1675
        %1677 = vrot.lane.b32.xlu0 %v1658, 126
        %v1678 = vpop.permute.xlu0 %1677
        %1679 = vrot.lane.b32.xlu0 %v1659, 126
        %v1680 = vpop.permute.xlu0 %1679
        %v1681 = vsel %vm1477, %v1676, 0.0
        %v1682 = vsel %vm1477, %v1678, 0.0
        %v1683 = vsel %vm1477, %v1680, 0.0
        %1684 = vst [vmem:[#allocation2 + $0x30] sm:$0xff] %v1681
        %1685 = vst [vmem:[#allocation2 + $0x38] sm:$0xff] %v1682
        %1686 = vst [vmem:[#allocation2 + $0x40] sm:$0xff] %v1683
        %v1687 = vld [vmem:[%s13] sm:$0xff]
        %v1688 = vld [vmem:[%s13 + $0x8] sm:$0xff]
        %v1689 = vld [vmem:[%s13 + $0x10] sm:$0xff]
        %v1690 = vld [vmem:[#allocation2] sm:$0xff]
        %v1691 = vld [vmem:[#allocation2 + $0x8] sm:$0xff]
        %v1692 = vld [vmem:[#allocation2 + $0x10] sm:$0xff]
        %v1693 = vld [vmem:[#allocation2 + $0x18] sm:$0xff]
        %v1694 = vld [vmem:[#allocation2 + $0x20] sm:$0xff]
        %v1695 = vld [vmem:[#allocation2 + $0x28] sm:$0xff]
        %v1696 = vld [vmem:[#allocation2 + $0x30] sm:$0xff]
        %v1697 = vld [vmem:[#allocation2 + $0x38] sm:$0xff]
        %v1698 = vld [vmem:[#allocation2 + $0x40] sm:$0xff]
        %v1699 = vld [vmem:[%s15] sm:$0xff]
        %v1700 = vld [vmem:[%s15 + $0x8] sm:$0xff]
        %v1701 = vld [vmem:[%s15 + $0x10] sm:$0xff]
        %1703 = vset.pattern.permute.xlu0 0
        %1704 = vperm.xlu0 %1703, %v1699
        %v1705 = vpop.permute.xlu0 %1704
        %1708 = vset.pattern.permute.xlu0 0
        %1709 = vperm.xlu0 %1708, %v1700
        %v1710 = vpop.permute.xlu0 %1709
        %1713 = vset.pattern.permute.xlu0 0
        %1714 = vperm.xlu0 %1713, %v1701
        %v1715 = vpop.permute.xlu0 %1714
        %v1718 = vsel %vm1246, %v1687, 0
        %v1721 = vsel %vm1246, %v1688, 0
        %v1724 = vsel %vm1246, %v1689, 0
        %1726 = vmatprep.subr.mxu0 0.0
        %1727 = vmatpush1.msra.mxu0 %v1690
        %1728 = vmatprep.subr.mxu0 0.0
        %1729 = vmatpush1.msra.mxu0 %v1691
        %1730 = vmatprep.subr.mxu0 0.0
        %1731 = vmatpush1.msra.mxu0 %v1692
        %1732 = vmatprep.subr.mxu0 0.0
        %1733 = vmatpush1.msra.mxu0 %v1693
        %1734 = vmatprep.subr.mxu0 0.0
        %1735 = vmatpush1.msra.mxu0 %v1694
        %1736 = vmatprep.subr.mxu0 0.0
        %1737 = vmatpush1.msra.mxu0 %v1695
        %1738 = vmatprep.subr.mxu0 0.0
        %1739 = vmatpush1.msra.mxu0 %v1696
        %1740 = vmatprep.subr.mxu0 0.0
        %1741 = vmatpush1.msra.mxu0 %v1697
        %1742 = vmatprep.subr.mxu0 0.0
        %1743 = vmatpush1.msra.mxu0 %v1698
        %1744 = vmatprep.subr.mxu0 0.0
        %1745 = vmatpush1.msra.mxu0 0.0
        %1746 = vmatprep.subr.mxu0 0.0
        %1747 = vmatpush1.msra.mxu0 0.0
        %1748 = vmatprep.subr.mxu0 0.0
        %1749 = vmatpush1.msra.mxu0 0.0
        %1750 = vmatprep.subr.mxu0 0.0
        %1751 = vmatpush1.msra.mxu0 0.0
        %1752 = vmatprep.subr.mxu0 0.0
        %1753 = vmatpush1.msra.mxu0 0.0
        %1754 = vmatprep.subr.mxu0 0.0
        %1755 = vmatpush1.msra.mxu0 0.0
        %1756 = vmatprep.subr.mxu0 0.0
        %1757 = vmatpush1.msra.mxu0 0.0
        %1758 = vmatprep.subr.mxu0 0.0
        %1759 = vmatpush1.msra.mxu0 0.0
        %1760 = vmatprep.subr.mxu0 0.0
        %1761 = vmatpush1.msra.mxu0 0.0
        %1762 = vmatprep.subr.mxu0 0.0
        %1763 = vmatpush1.msra.mxu0 0.0
        %1764 = vmatprep.subr.mxu0 0.0
        %1765 = vmatpush1.msra.mxu0 0.0
        %1766 = vmatprep.subr.mxu0 0.0
        %1767 = vmatpush1.msra.mxu0 0.0
        %1768 = vmatprep.subr.mxu0 0.0
        %1769 = vmatpush1.msra.mxu0 0.0
        %1770 = vmatprep.subr.mxu0 0.0
        %1771 = vmatpush1.msra.mxu0 0.0
        %1772 = vmatprep.subr.mxu0 0.0
        %1773 = vmatpush1.msra.mxu0 0.0
        %1774 = vmatprep.subr.mxu0 0.0
        %1775 = vmatpush1.msra.mxu0 0.0
        %1776 = vmatprep.subr.mxu0 0.0
        %1777 = vmatpush1.msra.mxu0 0.0
        %1778 = vmatprep.subr.mxu0 0.0
        %1779 = vmatpush1.msra.mxu0 0.0
        %1780 = vmatprep.subr.mxu0 0.0
        %1781 = vmatpush1.msra.mxu0 0.0
        %1782 = vmatprep.subr.mxu0 0.0
        %1783 = vmatpush1.msra.mxu0 0.0
        %1784 = vmatprep.subr.mxu0 0.0
        %1785 = vmatpush1.msra.mxu0 0.0
        %1786 = vmatprep.subr.mxu0 0.0
        %1787 = vmatpush1.msra.mxu0 0.0
        %1788 = vmatprep.subr.mxu0 0.0
        %1789 = vmatpush1.msra.mxu0 0.0
        %1790 = vmatprep.mubr.f32.mxu0 0.0
        %1791 = vmatmul.mubr.f32.gmra.mrb[0].mxu0 %v1718
        %v1792 = vpop.f32.mrb[0].mxu0
        %v1793 = vadd.f32 %v1705, %v1792
        %v1794 = vpop.f32.mrb[0].mxu0
        %1795 = vmatprep.mubr.f32.mxu0 0.0
        %1796 = vmatmul.mubr.f32.gmra.mrb[0].mxu0 %v1721
        %v1797 = vpop.f32.mrb[0].mxu0
        %v1798 = vadd.f32 %v1710, %v1797
        %v1799 = vpop.f32.mrb[0].mxu0
        %1800 = vmatprep.mubr.f32.mxu0 0.0
        %1801 = vmatmul.mubr.f32.gmra.mrb[0].mxu0 %v1724
        %v1802 = vpop.f32.mrb[0].mxu0
        %v1803 = vadd.f32 %v1715, %v1802
        %v1804 = vpop.f32.mrb[0].mxu0
        %1805 = vdwg.mxu0
        %v1806 = vmax.f32 %v1793, 0.0
        %v1807 = vmax.f32 %v1798, 0.0
        %v1808 = vmax.f32 %v1803, 0.0
        %1809 = vrot.lane.b32.xlu0 %v1806, 8
        %v1810 = vpop.permute.xlu0 %1809
        %1811 = vrot.lane.b32.xlu0 %v1807, 8
        %v1812 = vpop.permute.xlu0 %1811
        %1813 = vrot.lane.b32.xlu0 %v1808, 8
        %v1814 = vpop.permute.xlu0 %1813
        %vm1815 = vcmp.ge.s32.totalorder %v1198, 8
        %v1816 = vsel %vm1815, %v1810, 0.0
        %v1817 = vsel %vm1815, %v1812, 0.0
        %v1818 = vsel %vm1815, %v1814, 0.0
        %1819 = vst [vmem:[#allocation3] sm:$0xff] %v1816
        %1820 = vst [vmem:[#allocation3 + $0x8] sm:$0xff] %v1817
        %1821 = vst [vmem:[#allocation3 + $0x10] sm:$0xff] %v1818
        %1822 = vrot.lane.b32.xlu0 %v1806, 6
        %v1823 = vpop.permute.xlu0 %1822
        %1824 = vrot.lane.b32.xlu0 %v1807, 6
        %v1825 = vpop.permute.xlu0 %1824
        %1826 = vrot.lane.b32.xlu0 %v1808, 6
        %v1827 = vpop.permute.xlu0 %1826
        %vm1828 = vcmp.ge.s32.totalorder %v1198, 6
        %v1829 = vsel %vm1828, %v1823, 0.0
        %v1830 = vsel %vm1828, %v1825, 0.0
        %v1831 = vsel %vm1828, %v1827, 0.0
        %1832 = vst [vmem:[#allocation3 + $0x18] sm:$0xff] %v1829
        %1833 = vst [vmem:[#allocation3 + $0x20] sm:$0xff] %v1830
        %1834 = vst [vmem:[#allocation3 + $0x28] sm:$0xff] %v1831
        %1835 = vrot.lane.b32.xlu0 %v1806, 4
        %v1836 = vpop.permute.xlu0 %1835
        %1837 = vrot.lane.b32.xlu0 %v1807, 4
        %v1838 = vpop.permute.xlu0 %1837
        %1839 = vrot.lane.b32.xlu0 %v1808, 4
        %v1840 = vpop.permute.xlu0 %1839
        %v1841 = vsel %vm1411, %v1836, 0.0
        %v1842 = vsel %vm1411, %v1838, 0.0
        %v1843 = vsel %vm1411, %v1840, 0.0
        %1844 = vst [vmem:[#allocation3 + $0x30] sm:$0xff] %v1841
        %1845 = vst [vmem:[#allocation3 + $0x38] sm:$0xff] %v1842
        %1846 = vst [vmem:[#allocation3 + $0x40] sm:$0xff] %v1843
        %1847 = vrot.lane.b32.xlu0 %v1806, 2
        %v1848 = vpop.permute.xlu0 %1847
        %1849 = vrot.lane.b32.xlu0 %v1807, 2
        %v1850 = vpop.permute.xlu0 %1849
        %1851 = vrot.lane.b32.xlu0 %v1808, 2
        %v1852 = vpop.permute.xlu0 %1851
        %v1853 = vsel %vm1437, %v1848, 0.0
        %v1854 = vsel %vm1437, %v1850, 0.0
        %v1855 = vsel %vm1437, %v1852, 0.0
        %1856 = vst [vmem:[#allocation3 + $0x48] sm:$0xff] %v1853
        %1857 = vst [vmem:[#allocation3 + $0x50] sm:$0xff] %v1854
        %1858 = vst [vmem:[#allocation3 + $0x58] sm:$0xff] %v1855
        %1859 = vst [vmem:[#allocation3 + $0x60] sm:$0xff] %v1806
        %1860 = vst [vmem:[#allocation3 + $0x68] sm:$0xff] %v1807
        %1861 = vst [vmem:[#allocation3 + $0x70] sm:$0xff] %v1808
        %1862 = vrot.lane.b32.xlu0 %v1806, 126
        %v1863 = vpop.permute.xlu0 %1862
        %1864 = vrot.lane.b32.xlu0 %v1807, 126
        %v1865 = vpop.permute.xlu0 %1864
        %1866 = vrot.lane.b32.xlu0 %v1808, 126
        %v1867 = vpop.permute.xlu0 %1866
        %v1868 = vsel %vm1477, %v1863, 0.0
        %v1869 = vsel %vm1477, %v1865, 0.0
        %v1870 = vsel %vm1477, %v1867, 0.0
        %1871 = vst [vmem:[#allocation3 + $0x78] sm:$0xff] %v1868
        %1872 = vst [vmem:[#allocation3 + $0x80] sm:$0xff] %v1869
        %1873 = vst [vmem:[#allocation3 + $0x88] sm:$0xff] %v1870
        %1874 = vrot.lane.b32.xlu0 %v1806, 124
        %v1875 = vpop.permute.xlu0 %1874
        %1876 = vrot.lane.b32.xlu0 %v1807, 124
        %v1877 = vpop.permute.xlu0 %1876
        %1878 = vrot.lane.b32.xlu0 %v1808, 124
        %v1879 = vpop.permute.xlu0 %1878
        %v1880 = vsel %vm1503, %v1875, 0.0
        %v1881 = vsel %vm1503, %v1877, 0.0
        %v1882 = vsel %vm1503, %v1879, 0.0
        %1883 = vst [vmem:[#allocation3 + $0x90] sm:$0xff] %v1880
        %1884 = vst [vmem:[#allocation3 + $0x98] sm:$0xff] %v1881
        %1885 = vst [vmem:[#allocation3 + $0xa0] sm:$0xff] %v1882
        %1886 = vrot.lane.b32.xlu0 %v1806, 122
        %v1887 = vpop.permute.xlu0 %1886
        %1888 = vrot.lane.b32.xlu0 %v1807, 122
        %v1889 = vpop.permute.xlu0 %1888
        %1890 = vrot.lane.b32.xlu0 %v1808, 122
        %v1891 = vpop.permute.xlu0 %1890
        %vm1892 = vcmp.lt.s32.totalorder %v1198, 122
        %v1893 = vsel %vm1892, %v1887, 0.0
        %v1894 = vsel %vm1892, %v1889, 0.0
        %v1895 = vsel %vm1892, %v1891, 0.0
        %1896 = vst [vmem:[#allocation3 + $0xa8] sm:$0xff] %v1893
        %1897 = vst [vmem:[#allocation3 + $0xb0] sm:$0xff] %v1894
        %1898 = vst [vmem:[#allocation3 + $0xb8] sm:$0xff] %v1895
        %1899 = vrot.lane.b32.xlu0 %v1806, 120
        %v1900 = vpop.permute.xlu0 %1899
        %1901 = vrot.lane.b32.xlu0 %v1807, 120
        %v1902 = vpop.permute.xlu0 %1901
        %1903 = vrot.lane.b32.xlu0 %v1808, 120
        %v1904 = vpop.permute.xlu0 %1903
        %vm1905 = vcmp.lt.s32.totalorder %v1198, 120
        %v1906 = vsel %vm1905, %v1900, 0.0
        %v1907 = vsel %vm1905, %v1902, 0.0
        %v1908 = vsel %vm1905, %v1904, 0.0
        %1909 = vst [vmem:[#allocation3 + $0xc0] sm:$0xff] %v1906
        %1910 = vst [vmem:[#allocation3 + $0xc8] sm:$0xff] %v1907
        %1911 = vst [vmem:[#allocation3 + $0xd0] sm:$0xff] %v1908
        %v1912 = vld [vmem:[%s17] sm:$0xff]
        %v1913 = vld [vmem:[%s17 + $0x8] sm:$0xff]
        %v1914 = vld [vmem:[%s17 + $0x10] sm:$0xff]
        %v1915 = vld [vmem:[%s17 + $0x18] sm:$0xff]
        %v1916 = vld [vmem:[%s17 + $0x20] sm:$0xff]
        %v1917 = vld [vmem:[%s17 + $0x28] sm:$0xff]
        %v1918 = vld [vmem:[#allocation3] sm:$0xff]
        %v1919 = vld [vmem:[#allocation3 + $0x8] sm:$0xff]
        %v1920 = vld [vmem:[#allocation3 + $0x10] sm:$0xff]
        %v1921 = vld [vmem:[#allocation3 + $0x18] sm:$0xff]
        %v1922 = vld [vmem:[#allocation3 + $0x20] sm:$0xff]
        %v1923 = vld [vmem:[#allocation3 + $0x28] sm:$0xff]
        %v1924 = vld [vmem:[#allocation3 + $0x30] sm:$0xff]
        %v1925 = vld [vmem:[#allocation3 + $0x38] sm:$0xff]
        %v1926 = vld [vmem:[#allocation3 + $0x40] sm:$0xff]
        %v1927 = vld [vmem:[#allocation3 + $0x48] sm:$0xff]
        %v1928 = vld [vmem:[#allocation3 + $0x50] sm:$0xff]
        %v1929 = vld [vmem:[#allocation3 + $0x58] sm:$0xff]
        %v1930 = vld [vmem:[#allocation3 + $0x60] sm:$0xff]
        %v1931 = vld [vmem:[#allocation3 + $0x68] sm:$0xff]
        %v1932 = vld [vmem:[#allocation3 + $0x70] sm:$0xff]
        %v1933 = vld [vmem:[#allocation3 + $0x78] sm:$0xff]
        %v1934 = vld [vmem:[#allocation3 + $0x80] sm:$0xff]
        %v1935 = vld [vmem:[#allocation3 + $0x88] sm:$0xff]
        %v1936 = vld [vmem:[#allocation3 + $0x90] sm:$0xff]
        %v1937 = vld [vmem:[#allocation3 + $0x98] sm:$0xff]
        %v1938 = vld [vmem:[#allocation3 + $0xa0] sm:$0xff]
        %v1939 = vld [vmem:[#allocation3 + $0xa8] sm:$0xff]
        %v1940 = vld [vmem:[#allocation3 + $0xb0] sm:$0xff]
        %v1941 = vld [vmem:[#allocation3 + $0xb8] sm:$0xff]
        %v1942 = vld [vmem:[#allocation3 + $0xc0] sm:$0xff]
        %v1943 = vld [vmem:[#allocation3 + $0xc8] sm:$0xff]
        %v1944 = vld [vmem:[#allocation3 + $0xd0] sm:$0xff]
        %v1945 = vld [vmem:[%s19] sm:$0xff]
        %v1946 = vld [vmem:[%s19 + $0x8] sm:$0xff]
        %v1947 = vld [vmem:[%s19 + $0x10] sm:$0xff]
        %1949 = vset.pattern.permute.xlu0 0
        %1950 = vperm.xlu0 %1949, %v1945
        %v1951 = vpop.permute.xlu0 %1950
        %1954 = vset.pattern.permute.xlu0 0
        %1955 = vperm.xlu0 %1954, %v1946
        %v1956 = vpop.permute.xlu0 %1955
        %1959 = vset.pattern.permute.xlu0 0
        %1960 = vperm.xlu0 %1959, %v1947
        %v1961 = vpop.permute.xlu0 %1960
        %v1964 = vsel %vm1561, %v1913, 0
        %v1967 = vsel %vm1561, %v1915, 0
        %v1970 = vsel %vm1561, %v1917, 0
        %1972 = vmatprep.subr.mxu0 0.0
        %1973 = vmatpush1.msra.mxu0 %v1918
        %1974 = vmatprep.subr.mxu0 0.0
        %1975 = vmatpush1.msra.mxu0 %v1919
        %1976 = vmatprep.subr.mxu0 0.0
        %1977 = vmatpush1.msra.mxu0 %v1920
        %1978 = vmatprep.subr.mxu0 0.0
        %1979 = vmatpush1.msra.mxu0 %v1921
        %1980 = vmatprep.subr.mxu0 0.0
        %1981 = vmatpush1.msra.mxu0 %v1922
        %1982 = vmatprep.subr.mxu0 0.0
        %1983 = vmatpush1.msra.mxu0 %v1923
        %1984 = vmatprep.subr.mxu0 0.0
        %1985 = vmatpush1.msra.mxu0 %v1924
        %1986 = vmatprep.subr.mxu0 0.0
        %1987 = vmatpush1.msra.mxu0 %v1925
        %1988 = vmatprep.subr.mxu0 0.0
        %1989 = vmatpush1.msra.mxu0 %v1926
        %1990 = vmatprep.subr.mxu0 0.0
        %1991 = vmatpush1.msra.mxu0 %v1927
        %1992 = vmatprep.subr.mxu0 0.0
        %1993 = vmatpush1.msra.mxu0 %v1928
        %1994 = vmatprep.subr.mxu0 0.0
        %1995 = vmatpush1.msra.mxu0 %v1929
        %1996 = vmatprep.subr.mxu0 0.0
        %1997 = vmatpush1.msra.mxu0 %v1930
        %1998 = vmatprep.subr.mxu0 0.0
        %1999 = vmatpush1.msra.mxu0 %v1931
        %2000 = vmatprep.subr.mxu0 0.0
        %2001 = vmatpush1.msra.mxu0 %v1932
        %2002 = vmatprep.subr.mxu0 0.0
        %2003 = vmatpush1.msra.mxu0 %v1933
        %2004 = vmatprep.subr.mxu0 0.0
        %2005 = vmatpush1.msra.mxu0 %v1934
        %2006 = vmatprep.subr.mxu0 0.0
        %2007 = vmatpush1.msra.mxu0 %v1935
        %2008 = vmatprep.subr.mxu0 0.0
        %2009 = vmatpush1.msra.mxu0 %v1936
        %2010 = vmatprep.subr.mxu0 0.0
        %2011 = vmatpush1.msra.mxu0 %v1937
        %2012 = vmatprep.subr.mxu0 0.0
        %2013 = vmatpush1.msra.mxu0 %v1938
        %2014 = vmatprep.subr.mxu0 0.0
        %2015 = vmatpush1.msra.mxu0 %v1939
        %2016 = vmatprep.subr.mxu0 0.0
        %2017 = vmatpush1.msra.mxu0 %v1940
        %2018 = vmatprep.subr.mxu0 0.0
        %2019 = vmatpush1.msra.mxu0 %v1941
        %2020 = vmatprep.subr.mxu0 0.0
        %2021 = vmatpush1.msra.mxu0 %v1942
        %2022 = vmatprep.subr.mxu0 0.0
        %2023 = vmatpush1.msra.mxu0 %v1943
        %2024 = vmatprep.subr.mxu0 0.0
        %2025 = vmatpush1.msra.mxu0 %v1944
        %2026 = vmatprep.subr.mxu0 0.0
        %2027 = vmatpush1.msra.mxu0 0.0
        %2028 = vmatprep.subr.mxu0 0.0
        %2029 = vmatpush1.msra.mxu0 0.0
        %2030 = vmatprep.subr.mxu0 0.0
        %2031 = vmatpush1.msra.mxu0 0.0
        %2032 = vmatprep.subr.mxu0 0.0
        %2033 = vmatpush1.msra.mxu0 0.0
        %2034 = vmatprep.subr.mxu0 0.0
        %2035 = vmatpush1.msra.mxu0 0.0
        %2036 = vmatprep.mubr.f32.mxu0 %v1964
        %2037 = vmatmul.mubr.f32.gmra.mrb[0].mxu0 %v1912
        %v2038 = vpop.f32.mrb[0].mxu0
        %v2039 = vadd.f32 %v1951, %v2038
        %v2040 = vpop.f32.mrb[0].mxu0
        %2041 = vmatprep.mubr.f32.mxu0 %v1967
        %2042 = vmatmul.mubr.f32.gmra.mrb[0].mxu0 %v1914
        %v2043 = vpop.f32.mrb[0].mxu0
        %v2044 = vadd.f32 %v1956, %v2043
        %v2045 = vpop.f32.mrb[0].mxu0
        %2046 = vmatprep.mubr.f32.mxu0 %v1970
        %2047 = vmatmul.mubr.f32.gmra.mrb[0].mxu0 %v1916
        %v2048 = vpop.f32.mrb[0].mxu0
        %v2049 = vadd.f32 %v1961, %v2048
        %v2050 = vpop.f32.mrb[0].mxu0
        %2051 = vdwg.mxu0
        %v2052 = vmax.f32 %v2039, 0.0
        %v2053 = vmax.f32 %v2044, 0.0
        %v2054 = vmax.f32 %v2049, 0.0
        %v2055 = vadd.f32 %v1657, %v2052
        %v2056 = vadd.f32 %v1658, %v2053
        %v2057 = vadd.f32 %v1659, %v2054
        %v2058 = vmax.f32 %v2055, 0.0
        %v2059 = vmax.f32 %v2056, 0.0
        %v2060 = vmax.f32 %v2057, 0.0
        %v2061 = vadd.f32 %v1651, %v2052
        %v2062 = vadd.f32 %v1652, %v2053
        %v2063 = vadd.f32 %v1653, %v2054
        %2064 = vrot.lane.b32.xlu0 %v2058, 4
        %v2065 = vpop.permute.xlu0 %2064
        %2066 = vrot.lane.b32.xlu0 %v2059, 4
        %v2067 = vpop.permute.xlu0 %2066
        %2068 = vrot.lane.b32.xlu0 %v2060, 4
        %v2069 = vpop.permute.xlu0 %2068
        %v2070 = vsel %vm1411, %v2065, 0.0
        %v2071 = vsel %vm1411, %v2067, 0.0
        %v2072 = vsel %vm1411, %v2069, 0.0
        %2073 = vst [vmem:[#allocation2] sm:$0xff] %v2070
        %2074 = vst [vmem:[#allocation2 + $0x8] sm:$0xff] %v2071
        %2075 = vst [vmem:[#allocation2 + $0x10] sm:$0xff] %v2072
        %2076 = vst [vmem:[#allocation2 + $0x18] sm:$0xff] %v2058
        %2077 = vst [vmem:[#allocation2 + $0x20] sm:$0xff] %v2059
        %2078 = vst [vmem:[#allocation2 + $0x28] sm:$0xff] %v2060
        %2079 = vrot.lane.b32.xlu0 %v2058, 124
        %v2080 = vpop.permute.xlu0 %2079
        %2081 = vrot.lane.b32.xlu0 %v2059, 124
        %v2082 = vpop.permute.xlu0 %2081
        %2083 = vrot.lane.b32.xlu0 %v2060, 124
        %v2084 = vpop.permute.xlu0 %2083
        %v2085 = vsel %vm1503, %v2080, 0.0
        %v2086 = vsel %vm1503, %v2082, 0.0
        %v2087 = vsel %vm1503, %v2084, 0.0
        %2088 = vst [vmem:[#allocation2 + $0x30] sm:$0xff] %v2085
        %2089 = vst [vmem:[#allocation2 + $0x38] sm:$0xff] %v2086
        %2090 = vst [vmem:[#allocation2 + $0x40] sm:$0xff] %v2087
        %v2091 = vld [vmem:[%s21] sm:$0xff]
        %v2092 = vld [vmem:[%s21 + $0x8] sm:$0xff]
        %v2093 = vld [vmem:[%s21 + $0x10] sm:$0xff]
        %v2094 = vld [vmem:[#allocation2] sm:$0xff]
        %v2095 = vld [vmem:[#allocation2 + $0x8] sm:$0xff]
        %v2096 = vld [vmem:[#allocation2 + $0x10] sm:$0xff]
        %v2097 = vld [vmem:[#allocation2 + $0x18] sm:$0xff]
        %v2098 = vld [vmem:[#allocation2 + $0x20] sm:$0xff]
        %v2099 = vld [vmem:[#allocation2 + $0x28] sm:$0xff]
        %v2100 = vld [vmem:[#allocation2 + $0x30] sm:$0xff]
        %v2101 = vld [vmem:[#allocation2 + $0x38] sm:$0xff]
        %v2102 = vld [vmem:[#allocation2 + $0x40] sm:$0xff]
        %v2103 = vld [vmem:[%s23] sm:$0xff]
        %v2104 = vld [vmem:[%s23 + $0x8] sm:$0xff]
        %v2105 = vld [vmem:[%s23 + $0x10] sm:$0xff]
        %2107 = vset.pattern.permute.xlu0 0
        %2108 = vperm.xlu0 %2107, %v2103
        %v2109 = vpop.permute.xlu0 %2108
        %2112 = vset.pattern.permute.xlu0 0
        %2113 = vperm.xlu0 %2112, %v2104
        %v2114 = vpop.permute.xlu0 %2113
        %2117 = vset.pattern.permute.xlu0 0
        %2118 = vperm.xlu0 %2117, %v2105
        %v2119 = vpop.permute.xlu0 %2118
        %v2122 = vsel %vm1246, %v2091, 0
        %v2125 = vsel %vm1246, %v2092, 0
        %v2128 = vsel %vm1246, %v2093, 0
        %2130 = vmatprep.subr.mxu0 0.0
        %2131 = vmatpush1.msra.mxu0 %v2094
        %2132 = vmatprep.subr.mxu0 0.0
        %2133 = vmatpush1.msra.mxu0 %v2095
        %2134 = vmatprep.subr.mxu0 0.0
        %2135 = vmatpush1.msra.mxu0 %v2096
        %2136 = vmatprep.subr.mxu0 0.0
        %2137 = vmatpush1.msra.mxu0 %v2097
        %2138 = vmatprep.subr.mxu0 0.0
        %2139 = vmatpush1.msra.mxu0 %v2098
        %2140 = vmatprep.subr.mxu0 0.0
        %2141 = vmatpush1.msra.mxu0 %v2099
        %2142 = vmatprep.subr.mxu0 0.0
        %2143 = vmatpush1.msra.mxu0 %v2100
        %2144 = vmatprep.subr.mxu0 0.0
        %2145 = vmatpush1.msra.mxu0 %v2101
        %2146 = vmatprep.subr.mxu0 0.0
        %2147 = vmatpush1.msra.mxu0 %v2102
        %2148 = vmatprep.subr.mxu0 0.0
        %2149 = vmatpush1.msra.mxu0 0.0
        %2150 = vmatprep.subr.mxu0 0.0
        %2151 = vmatpush1.msra.mxu0 0.0
        %2152 = vmatprep.subr.mxu0 0.0
        %2153 = vmatpush1.msra.mxu0 0.0
        %2154 = vmatprep.subr.mxu0 0.0
        %2155 = vmatpush1.msra.mxu0 0.0
        %2156 = vmatprep.subr.mxu0 0.0
        %2157 = vmatpush1.msra.mxu0 0.0
        %2158 = vmatprep.subr.mxu0 0.0
        %2159 = vmatpush1.msra.mxu0 0.0
        %2160 = vmatprep.subr.mxu0 0.0
        %2161 = vmatpush1.msra.mxu0 0.0
        %2162 = vmatprep.subr.mxu0 0.0
        %2163 = vmatpush1.msra.mxu0 0.0
        %2164 = vmatprep.subr.mxu0 0.0
        %2165 = vmatpush1.msra.mxu0 0.0
        %2166 = vmatprep.subr.mxu0 0.0
        %2167 = vmatpush1.msra.mxu0 0.0
        %2168 = vmatprep.subr.mxu0 0.0
        %2169 = vmatpush1.msra.mxu0 0.0
        %2170 = vmatprep.subr.mxu0 0.0
        %2171 = vmatpush1.msra.mxu0 0.0
        %2172 = vmatprep.subr.mxu0 0.0
        %2173 = vmatpush1.msra.mxu0 0.0
        %2174 = vmatprep.subr.mxu0 0.0
        %2175 = vmatpush1.msra.mxu0 0.0
        %2176 = vmatprep.subr.mxu0 0.0
        %2177 = vmatpush1.msra.mxu0 0.0
        %2178 = vmatprep.subr.mxu0 0.0
        %2179 = vmatpush1.msra.mxu0 0.0
        %2180 = vmatprep.subr.mxu0 0.0
        %2181 = vmatpush1.msra.mxu0 0.0
        %2182 = vmatprep.subr.mxu0 0.0
        %2183 = vmatpush1.msra.mxu0 0.0
        %2184 = vmatprep.subr.mxu0 0.0
        %2185 = vmatpush1.msra.mxu0 0.0
        %2186 = vmatprep.subr.mxu0 0.0
        %2187 = vmatpush1.msra.mxu0 0.0
        %2188 = vmatprep.subr.mxu0 0.0
        %2189 = vmatpush1.msra.mxu0 0.0
        %2190 = vmatprep.subr.mxu0 0.0
        %2191 = vmatpush1.msra.mxu0 0.0
        %2192 = vmatprep.subr.mxu0 0.0
        %2193 = vmatpush1.msra.mxu0 0.0
        %2194 = vmatprep.mubr.f32.mxu0 0.0
        %2195 = vmatmul.mubr.f32.gmra.mrb[0].mxu0 %v2122
        %v2196 = vpop.f32.mrb[0].mxu0
        %v2197 = vadd.f32 %v2109, %v2196
        %v2198 = vpop.f32.mrb[0].mxu0
        %2199 = vmatprep.mubr.f32.mxu0 0.0
        %2200 = vmatmul.mubr.f32.gmra.mrb[0].mxu0 %v2125
        %v2201 = vpop.f32.mrb[0].mxu0
        %v2202 = vadd.f32 %v2114, %v2201
        %v2203 = vpop.f32.mrb[0].mxu0
        %2204 = vmatprep.mubr.f32.mxu0 0.0
        %2205 = vmatmul.mubr.f32.gmra.mrb[0].mxu0 %v2128
        %v2206 = vpop.f32.mrb[0].mxu0
        %v2207 = vadd.f32 %v2119, %v2206
        %v2208 = vpop.f32.mrb[0].mxu0
        %2209 = vdwg.mxu0
        %v2210 = vmax.f32 %v2197, 0.0
        %v2211 = vmax.f32 %v2202, 0.0
        %v2212 = vmax.f32 %v2207, 0.0
        %2213 = vrot.lane.b32.xlu0 %v2210, 16
        %v2214 = vpop.permute.xlu0 %2213
        %2215 = vrot.lane.b32.xlu0 %v2211, 16
        %v2216 = vpop.permute.xlu0 %2215
        %2217 = vrot.lane.b32.xlu0 %v2212, 16
        %v2218 = vpop.permute.xlu0 %2217
        %vm2219 = vcmp.ge.s32.totalorder %v1198, 16
        %v2220 = vsel %vm2219, %v2214, 0.0
        %v2221 = vsel %vm2219, %v2216, 0.0
        %v2222 = vsel %vm2219, %v2218, 0.0
        %2223 = vst [vmem:[#allocation3] sm:$0xff] %v2220
        %2224 = vst [vmem:[#allocation3 + $0x8] sm:$0xff] %v2221
        %2225 = vst [vmem:[#allocation3 + $0x10] sm:$0xff] %v2222
        %2226 = vrot.lane.b32.xlu0 %v2210, 12
        %v2227 = vpop.permute.xlu0 %2226
        %2228 = vrot.lane.b32.xlu0 %v2211, 12
        %v2229 = vpop.permute.xlu0 %2228
        %2230 = vrot.lane.b32.xlu0 %v2212, 12
        %v2231 = vpop.permute.xlu0 %2230
        %vm2232 = vcmp.ge.s32.totalorder %v1198, 12
        %v2233 = vsel %vm2232, %v2227, 0.0
        %v2234 = vsel %vm2232, %v2229, 0.0
        %v2235 = vsel %vm2232, %v2231, 0.0
        %2236 = vst [vmem:[#allocation3 + $0x18] sm:$0xff] %v2233
        %2237 = vst [vmem:[#allocation3 + $0x20] sm:$0xff] %v2234
        %2238 = vst [vmem:[#allocation3 + $0x28] sm:$0xff] %v2235
        %2239 = vrot.lane.b32.xlu0 %v2210, 8
        %v2240 = vpop.permute.xlu0 %2239
        %2241 = vrot.lane.b32.xlu0 %v2211, 8
        %v2242 = vpop.permute.xlu0 %2241
        %2243 = vrot.lane.b32.xlu0 %v2212, 8
        %v2244 = vpop.permute.xlu0 %2243
        %v2245 = vsel %vm1815, %v2240, 0.0
        %v2246 = vsel %vm1815, %v2242, 0.0
        %v2247 = vsel %vm1815, %v2244, 0.0
        %2248 = vst [vmem:[#allocation3 + $0x30] sm:$0xff] %v2245
        %2249 = vst [vmem:[#allocation3 + $0x38] sm:$0xff] %v2246
        %2250 = vst [vmem:[#allocation3 + $0x40] sm:$0xff] %v2247
        %2251 = vrot.lane.b32.xlu0 %v2210, 4
        %v2252 = vpop.permute.xlu0 %2251
        %2253 = vrot.lane.b32.xlu0 %v2211, 4
        %v2254 = vpop.permute.xlu0 %2253
        %2255 = vrot.lane.b32.xlu0 %v2212, 4
        %v2256 = vpop.permute.xlu0 %2255
        %v2257 = vsel %vm1411, %v2252, 0.0
        %v2258 = vsel %vm1411, %v2254, 0.0
        %v2259 = vsel %vm1411, %v2256, 0.0
        %2260 = vst [vmem:[#allocation3 + $0x48] sm:$0xff] %v2257
        %2261 = vst [vmem:[#allocation3 + $0x50] sm:$0xff] %v2258
        %2262 = vst [vmem:[#allocation3 + $0x58] sm:$0xff] %v2259
        %2263 = vst [vmem:[#allocation3 + $0x60] sm:$0xff] %v2210
        %2264 = vst [vmem:[#allocation3 + $0x68] sm:$0xff] %v2211
        %2265 = vst [vmem:[#allocation3 + $0x70] sm:$0xff] %v2212
        %2266 = vrot.lane.b32.xlu0 %v2210, 124
        %v2267 = vpop.permute.xlu0 %2266
        %2268 = vrot.lane.b32.xlu0 %v2211, 124
        %v2269 = vpop.permute.xlu0 %2268
        %2270 = vrot.lane.b32.xlu0 %v2212, 124
        %v2271 = vpop.permute.xlu0 %2270
        %v2272 = vsel %vm1503, %v2267, 0.0
        %v2273 = vsel %vm1503, %v2269, 0.0
        %v2274 = vsel %vm1503, %v2271, 0.0
        %2275 = vst [vmem:[#allocation3 + $0x78] sm:$0xff] %v2272
        %2276 = vst [vmem:[#allocation3 + $0x80] sm:$0xff] %v2273
        %2277 = vst [vmem:[#allocation3 + $0x88] sm:$0xff] %v2274
        %2278 = vrot.lane.b32.xlu0 %v2210, 120
        %v2279 = vpop.permute.xlu0 %2278
        %2280 = vrot.lane.b32.xlu0 %v2211, 120
        %v2281 = vpop.permute.xlu0 %2280
        %2282 = vrot.lane.b32.xlu0 %v2212, 120
        %v2283 = vpop.permute.xlu0 %2282
        %v2284 = vsel %vm1905, %v2279, 0.0
        %v2285 = vsel %vm1905, %v2281, 0.0
        %v2286 = vsel %vm1905, %v2283, 0.0
        %2287 = vst [vmem:[#allocation3 + $0x90] sm:$0xff] %v2284
        %2288 = vst [vmem:[#allocation3 + $0x98] sm:$0xff] %v2285
        %2289 = vst [vmem:[#allocation3 + $0xa0] sm:$0xff] %v2286
        %2290 = vrot.lane.b32.xlu0 %v2210, 116
        %v2291 = vpop.permute.xlu0 %2290
        %2292 = vrot.lane.b32.xlu0 %v2211, 116
        %v2293 = vpop.permute.xlu0 %2292
        %2294 = vrot.lane.b32.xlu0 %v2212, 116
        %v2295 = vpop.permute.xlu0 %2294
        %vm2296 = vcmp.lt.s32.totalorder %v1198, 116
        %v2297 = vsel %vm2296, %v2291, 0.0
        %v2298 = vsel %vm2296, %v2293, 0.0
        %v2299 = vsel %vm2296, %v2295, 0.0
        %2300 = vst [vmem:[#allocation3 + $0xa8] sm:$0xff] %v2297
        %2301 = vst [vmem:[#allocation3 + $0xb0] sm:$0xff] %v2298
        %2302 = vst [vmem:[#allocation3 + $0xb8] sm:$0xff] %v2299
        %2303 = vrot.lane.b32.xlu0 %v2210, 112
        %v2304 = vpop.permute.xlu0 %2303
        %2305 = vrot.lane.b32.xlu0 %v2211, 112
        %v2306 = vpop.permute.xlu0 %2305
        %2307 = vrot.lane.b32.xlu0 %v2212, 112
        %v2308 = vpop.permute.xlu0 %2307
        %vm2309 = vcmp.lt.s32.totalorder %v1198, 112
        %v2310 = vsel %vm2309, %v2304, 0.0
        %v2311 = vsel %vm2309, %v2306, 0.0
        %v2312 = vsel %vm2309, %v2308, 0.0
        %2313 = vst [vmem:[#allocation3 + $0xc0] sm:$0xff] %v2310
        %2314 = vst [vmem:[#allocation3 + $0xc8] sm:$0xff] %v2311
        %2315 = vst [vmem:[#allocation3 + $0xd0] sm:$0xff] %v2312
        %v2316 = vld [vmem:[%s25] sm:$0xff]
        %v2317 = vld [vmem:[%s25 + $0x8] sm:$0xff]
        %v2318 = vld [vmem:[%s25 + $0x10] sm:$0xff]
        %v2319 = vld [vmem:[%s25 + $0x18] sm:$0xff]
        %v2320 = vld [vmem:[%s25 + $0x20] sm:$0xff]
        %v2321 = vld [vmem:[%s25 + $0x28] sm:$0xff]
        %v2322 = vld [vmem:[#allocation3] sm:$0xff]
        %v2323 = vld [vmem:[#allocation3 + $0x8] sm:$0xff]
        %v2324 = vld [vmem:[#allocation3 + $0x10] sm:$0xff]
        %v2325 = vld [vmem:[#allocation3 + $0x18] sm:$0xff]
        %v2326 = vld [vmem:[#allocation3 + $0x20] sm:$0xff]
        %v2327 = vld [vmem:[#allocation3 + $0x28] sm:$0xff]
        %v2328 = vld [vmem:[#allocation3 + $0x30] sm:$0xff]
        %v2329 = vld [vmem:[#allocation3 + $0x38] sm:$0xff]
        %v2330 = vld [vmem:[#allocation3 + $0x40] sm:$0xff]
        %v2331 = vld [vmem:[#allocation3 + $0x48] sm:$0xff]
        %v2332 = vld [vmem:[#allocation3 + $0x50] sm:$0xff]
        %v2333 = vld [vmem:[#allocation3 + $0x58] sm:$0xff]
        %v2334 = vld [vmem:[#allocation3 + $0x60] sm:$0xff]
        %v2335 = vld [vmem:[#allocation3 + $0x68] sm:$0xff]
        %v2336 = vld [vmem:[#allocation3 + $0x70] sm:$0xff]
        %v2337 = vld [vmem:[#allocation3 + $0x78] sm:$0xff]
        %v2338 = vld [vmem:[#allocation3 + $0x80] sm:$0xff]
        %v2339 = vld [vmem:[#allocation3 + $0x88] sm:$0xff]
        %v2340 = vld [vmem:[#allocation3 + $0x90] sm:$0xff]
        %v2341 = vld [vmem:[#allocation3 + $0x98] sm:$0xff]
        %v2342 = vld [vmem:[#allocation3 + $0xa0] sm:$0xff]
        %v2343 = vld [vmem:[#allocation3 + $0xa8] sm:$0xff]
        %v2344 = vld [vmem:[#allocation3 + $0xb0] sm:$0xff]
        %v2345 = vld [vmem:[#allocation3 + $0xb8] sm:$0xff]
        %v2346 = vld [vmem:[#allocation3 + $0xc0] sm:$0xff]
        %v2347 = vld [vmem:[#allocation3 + $0xc8] sm:$0xff]
        %v2348 = vld [vmem:[#allocation3 + $0xd0] sm:$0xff]
        %v2349 = vld [vmem:[%s27] sm:$0xff]
        %v2350 = vld [vmem:[%s27 + $0x8] sm:$0xff]
        %v2351 = vld [vmem:[%s27 + $0x10] sm:$0xff]
        %2353 = vset.pattern.permute.xlu0 0
        %2354 = vperm.xlu0 %2353, %v2349
        %v2355 = vpop.permute.xlu0 %2354
        %2358 = vset.pattern.permute.xlu0 0
        %2359 = vperm.xlu0 %2358, %v2350
        %v2360 = vpop.permute.xlu0 %2359
        %2363 = vset.pattern.permute.xlu0 0
        %2364 = vperm.xlu0 %2363, %v2351
        %v2365 = vpop.permute.xlu0 %2364
        %v2368 = vsel %vm1561, %v2317, 0
        %v2371 = vsel %vm1561, %v2319, 0
        %v2374 = vsel %vm1561, %v2321, 0
        %2376 = vmatprep.subr.mxu0 0.0
        %2377 = vmatpush1.msra.mxu0 %v2322
        %2378 = vmatprep.subr.mxu0 0.0
        %2379 = vmatpush1.msra.mxu0 %v2323
        %2380 = vmatprep.subr.mxu0 0.0
        %2381 = vmatpush1.msra.mxu0 %v2324
        %2382 = vmatprep.subr.mxu0 0.0
        %2383 = vmatpush1.msra.mxu0 %v2325
        %2384 = vmatprep.subr.mxu0 0.0
        %2385 = vmatpush1.msra.mxu0 %v2326
        %2386 = vmatprep.subr.mxu0 0.0
        %2387 = vmatpush1.msra.mxu0 %v2327
        %2388 = vmatprep.subr.mxu0 0.0
        %2389 = vmatpush1.msra.mxu0 %v2328
        %2390 = vmatprep.subr.mxu0 0.0
        %2391 = vmatpush1.msra.mxu0 %v2329
        %2392 = vmatprep.subr.mxu0 0.0
        %2393 = vmatpush1.msra.mxu0 %v2330
        %2394 = vmatprep.subr.mxu0 0.0
        %2395 = vmatpush1.msra.mxu0 %v2331
        %2396 = vmatprep.subr.mxu0 0.0
        %2397 = vmatpush1.msra.mxu0 %v2332
        %2398 = vmatprep.subr.mxu0 0.0
        %2399 = vmatpush1.msra.mxu0 %v2333
        %2400 = vmatprep.subr.mxu0 0.0
        %2401 = vmatpush1.msra.mxu0 %v2334
        %2402 = vmatprep.subr.mxu0 0.0
        %2403 = vmatpush1.msra.mxu0 %v2335
        %2404 = vmatprep.subr.mxu0 0.0
        %2405 = vmatpush1.msra.mxu0 %v2336
        %2406 = vmatprep.subr.mxu0 0.0
        %2407 = vmatpush1.msra.mxu0 %v2337
        %2408 = vmatprep.subr.mxu0 0.0
        %2409 = vmatpush1.msra.mxu0 %v2338
        %2410 = vmatprep.subr.mxu0 0.0
        %2411 = vmatpush1.msra.mxu0 %v2339
        %2412 = vmatprep.subr.mxu0 0.0
        %2413 = vmatpush1.msra.mxu0 %v2340
        %2414 = vmatprep.subr.mxu0 0.0
        %2415 = vmatpush1.msra.mxu0 %v2341
        %2416 = vmatprep.subr.mxu0 0.0
        %2417 = vmatpush1.msra.mxu0 %v2342
        %2418 = vmatprep.subr.mxu0 0.0
        %2419 = vmatpush1.msra.mxu0 %v2343
        %2420 = vmatprep.subr.mxu0 0.0
        %2421 = vmatpush1.msra.mxu0 %v2344
        %2422 = vmatprep.subr.mxu0 0.0
        %2423 = vmatpush1.msra.mxu0 %v2345
        %2424 = vmatprep.subr.mxu0 0.0
        %2425 = vmatpush1.msra.mxu0 %v2346
        %2426 = vmatprep.subr.mxu0 0.0
        %2427 = vmatpush1.msra.mxu0 %v2347
        %2428 = vmatprep.subr.mxu0 0.0
        %2429 = vmatpush1.msra.mxu0 %v2348
        %2430 = vmatprep.subr.mxu0 0.0
        %2431 = vmatpush1.msra.mxu0 0.0
        %2432 = vmatprep.subr.mxu0 0.0
        %2433 = vmatpush1.msra.mxu0 0.0
        %2434 = vmatprep.subr.mxu0 0.0
        %2435 = vmatpush1.msra.mxu0 0.0
        %2436 = vmatprep.subr.mxu0 0.0
        %2437 = vmatpush1.msra.mxu0 0.0
        %2438 = vmatprep.subr.mxu0 0.0
        %2439 = vmatpush1.msra.mxu0 0.0
        %2440 = vmatprep.mubr.f32.mxu0 %v2368
        %2441 = vmatmul.mubr.f32.gmra.mrb[0].mxu0 %v2316
        %v2442 = vpop.f32.mrb[0].mxu0
        %v2443 = vadd.f32 %v2355, %v2442
        %v2444 = vpop.f32.mrb[0].mxu0
        %2445 = vmatprep.mubr.f32.mxu0 %v2371
        %2446 = vmatmul.mubr.f32.gmra.mrb[0].mxu0 %v2318
        %v2447 = vpop.f32.mrb[0].mxu0
        %v2448 = vadd.f32 %v2360, %v2447
        %v2449 = vpop.f32.mrb[0].mxu0
        %2450 = vmatprep.mubr.f32.mxu0 %v2374
        %2451 = vmatmul.mubr.f32.gmra.mrb[0].mxu0 %v2320
        %v2452 = vpop.f32.mrb[0].mxu0
        %v2453 = vadd.f32 %v2365, %v2452
        %v2454 = vpop.f32.mrb[0].mxu0
        %2455 = vdwg.mxu0
        %v2456 = vmax.f32 %v2443, 0.0
        %v2457 = vmax.f32 %v2448, 0.0
        %v2458 = vmax.f32 %v2453, 0.0
        %v2459 = vadd.f32 %v2058, %v2456
        %v2460 = vadd.f32 %v2059, %v2457
        %v2461 = vadd.f32 %v2060, %v2458
        %v2462 = vmax.f32 %v2459, 0.0
        %v2463 = vmax.f32 %v2460, 0.0
        %v2464 = vmax.f32 %v2461, 0.0
        %v2465 = vadd.f32 %v2061, %v2456
        %v2466 = vadd.f32 %v2062, %v2457
        %v2467 = vadd.f32 %v2063, %v2458
        %2468 = vrot.lane.b32.xlu0 %v2462, 8
        %v2469 = vpop.permute.xlu0 %2468
        %2470 = vrot.lane.b32.xlu0 %v2463, 8
        %v2471 = vpop.permute.xlu0 %2470
        %2472 = vrot.lane.b32.xlu0 %v2464, 8
        %v2473 = vpop.permute.xlu0 %2472
        %v2474 = vsel %vm1815, %v2469, 0.0
        %v2475 = vsel %vm1815, %v2471, 0.0
        %v2476 = vsel %vm1815, %v2473, 0.0
        %2477 = vst [vmem:[#allocation2] sm:$0xff] %v2474
        %2478 = vst [vmem:[#allocation2 + $0x8] sm:$0xff] %v2475
        %2479 = vst [vmem:[#allocation2 + $0x10] sm:$0xff] %v2476
        %2480 = vst [vmem:[#allocation2 + $0x18] sm:$0xff] %v2462
        %2481 = vst [vmem:[#allocation2 + $0x20] sm:$0xff] %v2463
        %2482 = vst [vmem:[#allocation2 + $0x28] sm:$0xff] %v2464
        %2483 = vrot.lane.b32.xlu0 %v2462, 120
        %v2484 = vpop.permute.xlu0 %2483
        %2485 = vrot.lane.b32.xlu0 %v2463, 120
        %v2486 = vpop.permute.xlu0 %2485
        %2487 = vrot.lane.b32.xlu0 %v2464, 120
        %v2488 = vpop.permute.xlu0 %2487
        %v2489 = vsel %vm1905, %v2484, 0.0
        %v2490 = vsel %vm1905, %v2486, 0.0
        %v2491 = vsel %vm1905, %v2488, 0.0
        %2492 = vst [vmem:[#allocation2 + $0x30] sm:$0xff] %v2489
        %2493 = vst [vmem:[#allocation2 + $0x38] sm:$0xff] %v2490
        %2494 = vst [vmem:[#allocation2 + $0x40] sm:$0xff] %v2491
        %v2495 = vld [vmem:[%s29] sm:$0xff]
        %v2496 = vld [vmem:[%s29 + $0x8] sm:$0xff]
        %v2497 = vld [vmem:[%s29 + $0x10] sm:$0xff]
        %v2498 = vld [vmem:[#allocation2] sm:$0xff]
        %v2499 = vld [vmem:[#allocation2 + $0x8] sm:$0xff]
        %v2500 = vld [vmem:[#allocation2 + $0x10] sm:$0xff]
        %v2501 = vld [vmem:[#allocation2 + $0x18] sm:$0xff]
        %v2502 = vld [vmem:[#allocation2 + $0x20] sm:$0xff]
        %v2503 = vld [vmem:[#allocation2 + $0x28] sm:$0xff]
        %v2504 = vld [vmem:[#allocation2 + $0x30] sm:$0xff]
        %v2505 = vld [vmem:[#allocation2 + $0x38] sm:$0xff]
        %v2506 = vld [vmem:[#allocation2 + $0x40] sm:$0xff]
        %v2507 = vld [vmem:[%s31] sm:$0xff]
        %v2508 = vld [vmem:[%s31 + $0x8] sm:$0xff]
        %v2509 = vld [vmem:[%s31 + $0x10] sm:$0xff]
        %2511 = vset.pattern.permute.xlu0 0
        %2512 = vperm.xlu0 %2511, %v2507
        %v2513 = vpop.permute.xlu0 %2512
        %2516 = vset.pattern.permute.xlu0 0
        %2517 = vperm.xlu0 %2516, %v2508
        %v2518 = vpop.permute.xlu0 %2517
        %2521 = vset.pattern.permute.xlu0 0
        %2522 = vperm.xlu0 %2521, %v2509
        %v2523 = vpop.permute.xlu0 %2522
        %v2526 = vsel %vm1246, %v2495, 0
        %v2529 = vsel %vm1246, %v2496, 0
        %v2532 = vsel %vm1246, %v2497, 0
        %2534 = vmatprep.subr.mxu0 0.0
        %2535 = vmatpush1.msra.mxu0 %v2498
        %2536 = vmatprep.subr.mxu0 0.0
        %2537 = vmatpush1.msra.mxu0 %v2499
        %2538 = vmatprep.subr.mxu0 0.0
        %2539 = vmatpush1.msra.mxu0 %v2500
        %2540 = vmatprep.subr.mxu0 0.0
        %2541 = vmatpush1.msra.mxu0 %v2501
        %2542 = vmatprep.subr.mxu0 0.0
        %2543 = vmatpush1.msra.mxu0 %v2502
        %2544 = vmatprep.subr.mxu0 0.0
        %2545 = vmatpush1.msra.mxu0 %v2503
        %2546 = vmatprep.subr.mxu0 0.0
        %2547 = vmatpush1.msra.mxu0 %v2504
        %2548 = vmatprep.subr.mxu0 0.0
        %2549 = vmatpush1.msra.mxu0 %v2505
        %2550 = vmatprep.subr.mxu0 0.0
        %2551 = vmatpush1.msra.mxu0 %v2506
        %2552 = vmatprep.subr.mxu0 0.0
        %2553 = vmatpush1.msra.mxu0 0.0
        %2554 = vmatprep.subr.mxu0 0.0
        %2555 = vmatpush1.msra.mxu0 0.0
        %2556 = vmatprep.subr.mxu0 0.0
        %2557 = vmatpush1.msra.mxu0 0.0
        %2558 = vmatprep.subr.mxu0 0.0
        %2559 = vmatpush1.msra.mxu0 0.0
        %2560 = vmatprep.subr.mxu0 0.0
        %2561 = vmatpush1.msra.mxu0 0.0
        %2562 = vmatprep.subr.mxu0 0.0
        %2563 = vmatpush1.msra.mxu0 0.0
        %2564 = vmatprep.subr.mxu0 0.0
        %2565 = vmatpush1.msra.mxu0 0.0
        %2566 = vmatprep.subr.mxu0 0.0
        %2567 = vmatpush1.msra.mxu0 0.0
        %2568 = vmatprep.subr.mxu0 0.0
        %2569 = vmatpush1.msra.mxu0 0.0
        %2570 = vmatprep.subr.mxu0 0.0
        %2571 = vmatpush1.msra.mxu0 0.0
        %2572 = vmatprep.subr.mxu0 0.0
        %2573 = vmatpush1.msra.mxu0 0.0
        %2574 = vmatprep.subr.mxu0 0.0
        %2575 = vmatpush1.msra.mxu0 0.0
        %2576 = vmatprep.subr.mxu0 0.0
        %2577 = vmatpush1.msra.mxu0 0.0
        %2578 = vmatprep.subr.mxu0 0.0
        %2579 = vmatpush1.msra.mxu0 0.0
        %2580 = vmatprep.subr.mxu0 0.0
        %2581 = vmatpush1.msra.mxu0 0.0
        %2582 = vmatprep.subr.mxu0 0.0
        %2583 = vmatpush1.msra.mxu0 0.0
        %2584 = vmatprep.subr.mxu0 0.0
        %2585 = vmatpush1.msra.mxu0 0.0
        %2586 = vmatprep.subr.mxu0 0.0
        %2587 = vmatpush1.msra.mxu0 0.0
        %2588 = vmatprep.subr.mxu0 0.0
        %2589 = vmatpush1.msra.mxu0 0.0
        %2590 = vmatprep.subr.mxu0 0.0
        %2591 = vmatpush1.msra.mxu0 0.0
        %2592 = vmatprep.subr.mxu0 0.0
        %2593 = vmatpush1.msra.mxu0 0.0
        %2594 = vmatprep.subr.mxu0 0.0
        %2595 = vmatpush1.msra.mxu0 0.0
        %2596 = vmatprep.subr.mxu0 0.0
        %2597 = vmatpush1.msra.mxu0 0.0
        %2598 = vmatprep.mubr.f32.mxu0 0.0
        %2599 = vmatmul.mubr.f32.gmra.mrb[0].mxu0 %v2526
        %v2600 = vpop.f32.mrb[0].mxu0
        %v2601 = vadd.f32 %v2513, %v2600
        %v2602 = vpop.f32.mrb[0].mxu0
        %2603 = vmatprep.mubr.f32.mxu0 0.0
        %2604 = vmatmul.mubr.f32.gmra.mrb[0].mxu0 %v2529
        %v2605 = vpop.f32.mrb[0].mxu0
        %v2606 = vadd.f32 %v2518, %v2605
        %v2607 = vpop.f32.mrb[0].mxu0
        %2608 = vmatprep.mubr.f32.mxu0 0.0
        %2609 = vmatmul.mubr.f32.gmra.mrb[0].mxu0 %v2532
        %v2610 = vpop.f32.mrb[0].mxu0
        %v2611 = vadd.f32 %v2523, %v2610
        %v2612 = vpop.f32.mrb[0].mxu0
        %2613 = vdwg.mxu0
        %v2614 = vmax.f32 %v2601, 0.0
        %v2615 = vmax.f32 %v2606, 0.0
        %v2616 = vmax.f32 %v2611, 0.0
        %2617 = vrot.lane.b32.xlu0 %v2614, 32
        %v2618 = vpop.permute.xlu0 %2617
        %2619 = vrot.lane.b32.xlu0 %v2615, 32
        %v2620 = vpop.permute.xlu0 %2619
        %2621 = vrot.lane.b32.xlu0 %v2616, 32
        %v2622 = vpop.permute.xlu0 %2621
        %vm2623 = vcmp.ge.s32.totalorder %v1198, 32
        %v2624 = vsel %vm2623, %v2618, 0.0
        %v2625 = vsel %vm2623, %v2620, 0.0
        %v2626 = vsel %vm2623, %v2622, 0.0
        %2627 = vst [vmem:[#allocation3] sm:$0xff] %v2624
        %2628 = vst [vmem:[#allocation3 + $0x8] sm:$0xff] %v2625
        %2629 = vst [vmem:[#allocation3 + $0x10] sm:$0xff] %v2626
        %2630 = vrot.lane.b32.xlu0 %v2614, 24
        %v2631 = vpop.permute.xlu0 %2630
        %2632 = vrot.lane.b32.xlu0 %v2615, 24
        %v2633 = vpop.permute.xlu0 %2632
        %2634 = vrot.lane.b32.xlu0 %v2616, 24
        %v2635 = vpop.permute.xlu0 %2634
        %vm2636 = vcmp.ge.s32.totalorder %v1198, 24
        %v2637 = vsel %vm2636, %v2631, 0.0
        %v2638 = vsel %vm2636, %v2633, 0.0
        %v2639 = vsel %vm2636, %v2635, 0.0
        %2640 = vst [vmem:[#allocation3 + $0x18] sm:$0xff] %v2637
        %2641 = vst [vmem:[#allocation3 + $0x20] sm:$0xff] %v2638
        %2642 = vst [vmem:[#allocation3 + $0x28] sm:$0xff] %v2639
        %2643 = vrot.lane.b32.xlu0 %v2614, 16
        %v2644 = vpop.permute.xlu0 %2643
        %2645 = vrot.lane.b32.xlu0 %v2615, 16
        %v2646 = vpop.permute.xlu0 %2645
        %2647 = vrot.lane.b32.xlu0 %v2616, 16
        %v2648 = vpop.permute.xlu0 %2647
        %v2649 = vsel %vm2219, %v2644, 0.0
        %v2650 = vsel %vm2219, %v2646, 0.0
        %v2651 = vsel %vm2219, %v2648, 0.0
        %2652 = vst [vmem:[#allocation3 + $0x30] sm:$0xff] %v2649
        %2653 = vst [vmem:[#allocation3 + $0x38] sm:$0xff] %v2650
        %2654 = vst [vmem:[#allocation3 + $0x40] sm:$0xff] %v2651
        %2655 = vrot.lane.b32.xlu0 %v2614, 8
        %v2656 = vpop.permute.xlu0 %2655
        %2657 = vrot.lane.b32.xlu0 %v2615, 8
        %v2658 = vpop.permute.xlu0 %2657
        %2659 = vrot.lane.b32.xlu0 %v2616, 8
        %v2660 = vpop.permute.xlu0 %2659
        %v2661 = vsel %vm1815, %v2656, 0.0
        %v2662 = vsel %vm1815, %v2658, 0.0
        %v2663 = vsel %vm1815, %v2660, 0.0
        %2664 = vst [vmem:[#allocation3 + $0x48] sm:$0xff] %v2661
        %2665 = vst [vmem:[#allocation3 + $0x50] sm:$0xff] %v2662
        %2666 = vst [vmem:[#allocation3 + $0x58] sm:$0xff] %v2663
        %2667 = vst [vmem:[#allocation3 + $0x60] sm:$0xff] %v2614
        %2668 = vst [vmem:[#allocation3 + $0x68] sm:$0xff] %v2615
        %2669 = vst [vmem:[#allocation3 + $0x70] sm:$0xff] %v2616
        %2670 = vrot.lane.b32.xlu0 %v2614, 120
        %v2671 = vpop.permute.xlu0 %2670
        %2672 = vrot.lane.b32.xlu0 %v2615, 120
        %v2673 = vpop.permute.xlu0 %2672
        %2674 = vrot.lane.b32.xlu0 %v2616, 120
        %v2675 = vpop.permute.xlu0 %2674
        %v2676 = vsel %vm1905, %v2671, 0.0
        %v2677 = vsel %vm1905, %v2673, 0.0
        %v2678 = vsel %vm1905, %v2675, 0.0
        %2679 = vst [vmem:[#allocation3 + $0x78] sm:$0xff] %v2676
        %2680 = vst [vmem:[#allocation3 + $0x80] sm:$0xff] %v2677
        %2681 = vst [vmem:[#allocation3 + $0x88] sm:$0xff] %v2678
        %2682 = vrot.lane.b32.xlu0 %v2614, 112
        %v2683 = vpop.permute.xlu0 %2682
        %2684 = vrot.lane.b32.xlu0 %v2615, 112
        %v2685 = vpop.permute.xlu0 %2684
        %2686 = vrot.lane.b32.xlu0 %v2616, 112
        %v2687 = vpop.permute.xlu0 %2686
        %v2688 = vsel %vm2309, %v2683, 0.0
        %v2689 = vsel %vm2309, %v2685, 0.0
        %v2690 = vsel %vm2309, %v2687, 0.0
        %2691 = vst [vmem:[#allocation3 + $0x90] sm:$0xff] %v2688
        %2692 = vst [vmem:[#allocation3 + $0x98] sm:$0xff] %v2689
        %2693 = vst [vmem:[#allocation3 + $0xa0] sm:$0xff] %v2690
        %2694 = vrot.lane.b32.xlu0 %v2614, 104
        %v2695 = vpop.permute.xlu0 %2694
        %2696 = vrot.lane.b32.xlu0 %v2615, 104
        %v2697 = vpop.permute.xlu0 %2696
        %2698 = vrot.lane.b32.xlu0 %v2616, 104
        %v2699 = vpop.permute.xlu0 %2698
        %vm2700 = vcmp.lt.s32.totalorder %v1198, 104
        %v2701 = vsel %vm2700, %v2695, 0.0
        %v2702 = vsel %vm2700, %v2697, 0.0
        %v2703 = vsel %vm2700, %v2699, 0.0
        %2704 = vst [vmem:[#allocation3 + $0xa8] sm:$0xff] %v2701
        %2705 = vst [vmem:[#allocation3 + $0xb0] sm:$0xff] %v2702
        %2706 = vst [vmem:[#allocation3 + $0xb8] sm:$0xff] %v2703
        %2707 = vrot.lane.b32.xlu0 %v2614, 96
        %v2708 = vpop.permute.xlu0 %2707
        %2709 = vrot.lane.b32.xlu0 %v2615, 96
        %v2710 = vpop.permute.xlu0 %2709
        %2711 = vrot.lane.b32.xlu0 %v2616, 96
        %v2712 = vpop.permute.xlu0 %2711
        %vm2713 = vcmp.lt.s32.totalorder %v1198, 96
        %v2714 = vsel %vm2713, %v2708, 0.0
        %v2715 = vsel %vm2713, %v2710, 0.0
        %v2716 = vsel %vm2713, %v2712, 0.0
        %2717 = vst [vmem:[#allocation3 + $0xc0] sm:$0xff] %v2714
        %2718 = vst [vmem:[#allocation3 + $0xc8] sm:$0xff] %v2715
        %2719 = vst [vmem:[#allocation3 + $0xd0] sm:$0xff] %v2716
        %v2720 = vld [vmem:[%s33] sm:$0xff]
        %v2721 = vld [vmem:[%s33 + $0x8] sm:$0xff]
        %v2722 = vld [vmem:[%s33 + $0x10] sm:$0xff]
        %v2723 = vld [vmem:[%s33 + $0x18] sm:$0xff]
        %v2724 = vld [vmem:[%s33 + $0x20] sm:$0xff]
        %v2725 = vld [vmem:[%s33 + $0x28] sm:$0xff]
        %v2726 = vld [vmem:[#allocation3] sm:$0xff]
        %v2727 = vld [vmem:[#allocation3 + $0x8] sm:$0xff]
        %v2728 = vld [vmem:[#allocation3 + $0x10] sm:$0xff]
        %v2729 = vld [vmem:[#allocation3 + $0x18] sm:$0xff]
        %v2730 = vld [vmem:[#allocation3 + $0x20] sm:$0xff]
        %v2731 = vld [vmem:[#allocation3 + $0x28] sm:$0xff]
        %v2732 = vld [vmem:[#allocation3 + $0x30] sm:$0xff]
        %v2733 = vld [vmem:[#allocation3 + $0x38] sm:$0xff]
        %v2734 = vld [vmem:[#allocation3 + $0x40] sm:$0xff]
        %v2735 = vld [vmem:[#allocation3 + $0x48] sm:$0xff]
        %v2736 = vld [vmem:[#allocation3 + $0x50] sm:$0xff]
        %v2737 = vld [vmem:[#allocation3 + $0x58] sm:$0xff]
        %v2738 = vld [vmem:[#allocation3 + $0x60] sm:$0xff]
        %v2739 = vld [vmem:[#allocation3 + $0x68] sm:$0xff]
        %v2740 = vld [vmem:[#allocation3 + $0x70] sm:$0xff]
        %v2741 = vld [vmem:[#allocation3 + $0x78] sm:$0xff]
        %v2742 = vld [vmem:[#allocation3 + $0x80] sm:$0xff]
        %v2743 = vld [vmem:[#allocation3 + $0x88] sm:$0xff]
        %v2744 = vld [vmem:[#allocation3 + $0x90] sm:$0xff]
        %v2745 = vld [vmem:[#allocation3 + $0x98] sm:$0xff]
        %v2746 = vld [vmem:[#allocation3 + $0xa0] sm:$0xff]
        %v2747 = vld [vmem:[#allocation3 + $0xa8] sm:$0xff]
        %v2748 = vld [vmem:[#allocation3 + $0xb0] sm:$0xff]
        %v2749 = vld [vmem:[#allocation3 + $0xb8] sm:$0xff]
        %v2750 = vld [vmem:[#allocation3 + $0xc0] sm:$0xff]
        %v2751 = vld [vmem:[#allocation3 + $0xc8] sm:$0xff]
        %v2752 = vld [vmem:[#allocation3 + $0xd0] sm:$0xff]
        %v2753 = vld [vmem:[%s35] sm:$0xff]
        %v2754 = vld [vmem:[%s35 + $0x8] sm:$0xff]
        %v2755 = vld [vmem:[%s35 + $0x10] sm:$0xff]
        %2757 = vset.pattern.permute.xlu0 0
        %2758 = vperm.xlu0 %2757, %v2753
        %v2759 = vpop.permute.xlu0 %2758
        %2762 = vset.pattern.permute.xlu0 0
        %2763 = vperm.xlu0 %2762, %v2754
        %v2764 = vpop.permute.xlu0 %2763
        %2767 = vset.pattern.permute.xlu0 0
        %2768 = vperm.xlu0 %2767, %v2755
        %v2769 = vpop.permute.xlu0 %2768
        %v2772 = vsel %vm1561, %v2721, 0
        %v2775 = vsel %vm1561, %v2723, 0
        %v2778 = vsel %vm1561, %v2725, 0
        %2780 = vmatprep.subr.mxu0 0.0
        %2781 = vmatpush1.msra.mxu0 %v2726
        %2782 = vmatprep.subr.mxu0 0.0
        %2783 = vmatpush1.msra.mxu0 %v2727
        %2784 = vmatprep.subr.mxu0 0.0
        %2785 = vmatpush1.msra.mxu0 %v2728
        %2786 = vmatprep.subr.mxu0 0.0
        %2787 = vmatpush1.msra.mxu0 %v2729
        %2788 = vmatprep.subr.mxu0 0.0
        %2789 = vmatpush1.msra.mxu0 %v2730
        %2790 = vmatprep.subr.mxu0 0.0
        %2791 = vmatpush1.msra.mxu0 %v2731
        %2792 = vmatprep.subr.mxu0 0.0
        %2793 = vmatpush1.msra.mxu0 %v2732
        %2794 = vmatprep.subr.mxu0 0.0
        %2795 = vmatpush1.msra.mxu0 %v2733
        %2796 = vmatprep.subr.mxu0 0.0
        %2797 = vmatpush1.msra.mxu0 %v2734
        %2798 = vmatprep.subr.mxu0 0.0
        %2799 = vmatpush1.msra.mxu0 %v2735
        %2800 = vmatprep.subr.mxu0 0.0
        %2801 = vmatpush1.msra.mxu0 %v2736
        %2802 = vmatprep.subr.mxu0 0.0
        %2803 = vmatpush1.msra.mxu0 %v2737
        %2804 = vmatprep.subr.mxu0 0.0
        %2805 = vmatpush1.msra.mxu0 %v2738
        %2806 = vmatprep.subr.mxu0 0.0
        %2807 = vmatpush1.msra.mxu0 %v2739
        %2808 = vmatprep.subr.mxu0 0.0
        %2809 = vmatpush1.msra.mxu0 %v2740
        %2810 = vmatprep.subr.mxu0 0.0
        %2811 = vmatpush1.msra.mxu0 %v2741
        %2812 = vmatprep.subr.mxu0 0.0
        %2813 = vmatpush1.msra.mxu0 %v2742
        %2814 = vmatprep.subr.mxu0 0.0
        %2815 = vmatpush1.msra.mxu0 %v2743
        %2816 = vmatprep.subr.mxu0 0.0
        %2817 = vmatpush1.msra.mxu0 %v2744
        %2818 = vmatprep.subr.mxu0 0.0
        %2819 = vmatpush1.msra.mxu0 %v2745
        %2820 = vmatprep.subr.mxu0 0.0
        %2821 = vmatpush1.msra.mxu0 %v2746
        %2822 = vmatprep.subr.mxu0 0.0
        %2823 = vmatpush1.msra.mxu0 %v2747
        %2824 = vmatprep.subr.mxu0 0.0
        %2825 = vmatpush1.msra.mxu0 %v2748
        %2826 = vmatprep.subr.mxu0 0.0
        %2827 = vmatpush1.msra.mxu0 %v2749
        %2828 = vmatprep.subr.mxu0 0.0
        %2829 = vmatpush1.msra.mxu0 %v2750
        %2830 = vmatprep.subr.mxu0 0.0
        %2831 = vmatpush1.msra.mxu0 %v2751
        %2832 = vmatprep.subr.mxu0 0.0
        %2833 = vmatpush1.msra.mxu0 %v2752
        %2834 = vmatprep.subr.mxu0 0.0
        %2835 = vmatpush1.msra.mxu0 0.0
        %2836 = vmatprep.subr.mxu0 0.0
        %2837 = vmatpush1.msra.mxu0 0.0
        %2838 = vmatprep.subr.mxu0 0.0
        %2839 = vmatpush1.msra.mxu0 0.0
        %2840 = vmatprep.subr.mxu0 0.0
        %2841 = vmatpush1.msra.mxu0 0.0
        %2842 = vmatprep.subr.mxu0 0.0
        %2843 = vmatpush1.msra.mxu0 0.0
        %2844 = vmatprep.mubr.f32.mxu0 %v2772
        %2845 = vmatmul.mubr.f32.gmra.mrb[0].mxu0 %v2720
        %v2846 = vpop.f32.mrb[0].mxu0
        %v2847 = vadd.f32 %v2759, %v2846
        %v2848 = vpop.f32.mrb[0].mxu0
        %2849 = vmatprep.mubr.f32.mxu0 %v2775
        %2850 = vmatmul.mubr.f32.gmra.mrb[0].mxu0 %v2722
        %v2851 = vpop.f32.mrb[0].mxu0
        %v2852 = vadd.f32 %v2764, %v2851
        %v2853 = vpop.f32.mrb[0].mxu0
        %2854 = vmatprep.mubr.f32.mxu0 %v2778
        %2855 = vmatmul.mubr.f32.gmra.mrb[0].mxu0 %v2724
        %v2856 = vpop.f32.mrb[0].mxu0
        %v2857 = vadd.f32 %v2769, %v2856
        %v2858 = vpop.f32.mrb[0].mxu0
        %2859 = vdwg.mxu0
        %v2860 = vmax.f32 %v2847, 0.0
        %v2861 = vmax.f32 %v2852, 0.0
        %v2862 = vmax.f32 %v2857, 0.0
        %v2863 = vadd.f32 %v2465, %v2860
        %v2864 = vadd.f32 %v2466, %v2861
        %v2865 = vadd.f32 %v2467, %v2862
        %v2866 = vld [vmem:[%s37] sm:$0xff]
        %v2867 = vld [vmem:[%s37 + $0x8] sm:$0xff]
        %v2868 = vld [vmem:[%s37 + $0x10] sm:$0xff]
        %v2869 = vld [vmem:[%s39] sm:$0xff]
        %v2870 = vld [vmem:[%s39 + $0x8] sm:$0xff]
        %v2871 = vld [vmem:[%s39 + $0x10] sm:$0xff]
        %2873 = vset.pattern.permute.xlu0 0
        %2874 = vperm.xlu0 %2873, %v2869
        %v2875 = vpop.permute.xlu0 %2874
        %2878 = vset.pattern.permute.xlu0 0
        %2879 = vperm.xlu0 %2878, %v2870
        %v2880 = vpop.permute.xlu0 %2879
        %2883 = vset.pattern.permute.xlu0 0
        %2884 = vperm.xlu0 %2883, %v2871
        %v2885 = vpop.permute.xlu0 %2884
        %vm2887 = vcmask 195584
        %v2889 = vsel %vm2887, %v2866, 0
        %v2892 = vsel %vm2887, %v2867, 0
        %v2895 = vsel %vm2887, %v2868, 0
        %2897 = vmatprep.subr.mxu0 0.0
        %2898 = vmatpush1.msra.mxu0 %v2863
        %2899 = vmatprep.subr.mxu0 0.0
        %2900 = vmatpush1.msra.mxu0 %v2864
        %2901 = vmatprep.subr.mxu0 0.0
        %2902 = vmatpush1.msra.mxu0 %v2865
        %2903 = vmatprep.subr.mxu0 0.0
        %2904 = vmatpush1.msra.mxu0 0.0
        %2905 = vmatprep.subr.mxu0 0.0
        %2906 = vmatpush1.msra.mxu0 0.0
        %2907 = vmatprep.subr.mxu0 0.0
        %2908 = vmatpush1.msra.mxu0 0.0
        %2909 = vmatprep.subr.mxu0 0.0
        %2910 = vmatpush1.msra.mxu0 0.0
        %2911 = vmatprep.subr.mxu0 0.0
        %2912 = vmatpush1.msra.mxu0 0.0
        %2913 = vmatprep.subr.mxu0 0.0
        %2914 = vmatpush1.msra.mxu0 0.0
        %2915 = vmatprep.subr.mxu0 0.0
        %2916 = vmatpush1.msra.mxu0 0.0
        %2917 = vmatprep.subr.mxu0 0.0
        %2918 = vmatpush1.msra.mxu0 0.0
        %2919 = vmatprep.subr.mxu0 0.0
        %2920 = vmatpush1.msra.mxu0 0.0
        %2921 = vmatprep.subr.mxu0 0.0
        %2922 = vmatpush1.msra.mxu0 0.0
        %2923 = vmatprep.subr.mxu0 0.0
        %2924 = vmatpush1.msra.mxu0 0.0
        %2925 = vmatprep.subr.mxu0 0.0
        %2926 = vmatpush1.msra.mxu0 0.0
        %2927 = vmatprep.subr.mxu0 0.0
        %2928 = vmatpush1.msra.mxu0 0.0
        %2929 = vmatprep.subr.mxu0 0.0
        %2930 = vmatpush1.msra.mxu0 0.0
        %2931 = vmatprep.subr.mxu0 0.0
        %2932 = vmatpush1.msra.mxu0 0.0
        %2933 = vmatprep.subr.mxu0 0.0
        %2934 = vmatpush1.msra.mxu0 0.0
        %2935 = vmatprep.subr.mxu0 0.0
        %2936 = vmatpush1.msra.mxu0 0.0
        %2937 = vmatprep.subr.mxu0 0.0
        %2938 = vmatpush1.msra.mxu0 0.0
        %2939 = vmatprep.subr.mxu0 0.0
        %2940 = vmatpush1.msra.mxu0 0.0
        %2941 = vmatprep.subr.mxu0 0.0
        %2942 = vmatpush1.msra.mxu0 0.0
        %2943 = vmatprep.subr.mxu0 0.0
        %2944 = vmatpush1.msra.mxu0 0.0
        %2945 = vmatprep.subr.mxu0 0.0
        %2946 = vmatpush1.msra.mxu0 0.0
        %2947 = vmatprep.subr.mxu0 0.0
        %2948 = vmatpush1.msra.mxu0 0.0
        %2949 = vmatprep.subr.mxu0 0.0
        %2950 = vmatpush1.msra.mxu0 0.0
        %2951 = vmatprep.subr.mxu0 0.0
        %2952 = vmatpush1.msra.mxu0 0.0
        %2953 = vmatprep.subr.mxu0 0.0
        %2954 = vmatpush1.msra.mxu0 0.0
        %2955 = vmatprep.subr.mxu0 0.0
        %2956 = vmatpush1.msra.mxu0 0.0
        %2957 = vmatprep.subr.mxu0 0.0
        %2958 = vmatpush1.msra.mxu0 0.0
        %2959 = vmatprep.subr.mxu0 0.0
        %2960 = vmatpush1.msra.mxu0 0.0
        %2961 = vmatprep.mubr.f32.mxu0 0.0
        %2962 = vmatmul.mubr.f32.gmra.mrb[0].mxu0 %v2889
        %v2963 = vpop.f32.mrb[0].mxu0
        %v2964 = vadd.f32 %v2875, %v2963
        %v2965 = vpop.f32.mrb[0].mxu0
        %2966 = vmatprep.mubr.f32.mxu0 0.0
        %2967 = vmatmul.mubr.f32.gmra.mrb[0].mxu0 %v2892
        %v2968 = vpop.f32.mrb[0].mxu0
        %v2969 = vadd.f32 %v2880, %v2968
        %v2970 = vpop.f32.mrb[0].mxu0
        %2971 = vmatprep.mubr.f32.mxu0 0.0
        %2972 = vmatmul.mubr.f32.gmra.mrb[0].mxu0 %v2895
        %v2973 = vpop.f32.mrb[0].mxu0
        %v2974 = vadd.f32 %v2885, %v2973
        %v2975 = vpop.f32.mrb[0].mxu0
        %2976 = vdwg.mxu0
        %2977 = vrot.lane.b32.xlu0 %v2964, 1
        %v2978 = vpop.permute.xlu0 %2977
        %2979 = vrot.lane.b32.xlu0 %v2969, 1
        %v2980 = vpop.permute.xlu0 %2979
        %2981 = vrot.lane.b32.xlu0 %v2974, 1
        %v2982 = vpop.permute.xlu0 %2981
        %v2983 = vsel %vm1208, %v2978, 0.0
        %v2984 = vsel %vm1208, %v2980, 0.0
        %v2985 = vsel %vm1208, %v2982, 0.0
        %2986 = vst [vmem:[#allocation2] sm:$0xff] %v2983
        %2987 = vst [vmem:[#allocation2 + $0x8] sm:$0xff] %v2984
        %2988 = vst [vmem:[#allocation2 + $0x10] sm:$0xff] %v2985
        %2989 = vst [vmem:[#allocation2 + $0x18] sm:$0xff] %v2964
        %2990 = vst [vmem:[#allocation2 + $0x20] sm:$0xff] %v2969
        %2991 = vst [vmem:[#allocation2 + $0x28] sm:$0xff] %v2974
        %2992 = vrot.lane.b32.xlu0 %v2964, 127
        %v2993 = vpop.permute.xlu0 %2992
        %2994 = vrot.lane.b32.xlu0 %v2969, 127
        %v2995 = vpop.permute.xlu0 %2994
        %2996 = vrot.lane.b32.xlu0 %v2974, 127
        %v2997 = vpop.permute.xlu0 %2996
        %v2998 = vsel %vm1224, %v2993, 0.0
        %v2999 = vsel %vm1224, %v2995, 0.0
        %v3000 = vsel %vm1224, %v2997, 0.0
        %3001 = vst [vmem:[#allocation2 + $0x30] sm:$0xff] %v2998
        %3002 = vst [vmem:[#allocation2 + $0x38] sm:$0xff] %v2999
        %3003 = vst [vmem:[#allocation2 + $0x40] sm:$0xff] %v3000
        %v3004 = vld [vmem:[#allocation4] sm:$0xff]
        %v3005 = vld [vmem:[#allocation4 + $0x8] sm:$0xff]
        %v3006 = vld [vmem:[#allocation4 + $0x10] sm:$0xff]
        %v3007 = vld [vmem:[#allocation2] sm:$0xff]
        %v3008 = vld [vmem:[#allocation2 + $0x8] sm:$0xff]
        %v3009 = vld [vmem:[#allocation2 + $0x10] sm:$0xff]
        %v3010 = vld [vmem:[#allocation2 + $0x18] sm:$0xff]
        %v3011 = vld [vmem:[#allocation2 + $0x20] sm:$0xff]
        %v3012 = vld [vmem:[#allocation2 + $0x28] sm:$0xff]
        %v3013 = vld [vmem:[#allocation2 + $0x30] sm:$0xff]
        %v3014 = vld [vmem:[#allocation2 + $0x38] sm:$0xff]
        %v3015 = vld [vmem:[#allocation2 + $0x40] sm:$0xff]
        %v3016 = vld [vmem:[%s43] sm:$0xff]
        %v3017 = vld [vmem:[%s43 + $0x8] sm:$0xff]
        %v3018 = vld [vmem:[%s43 + $0x10] sm:$0xff]
        %3020 = vset.pattern.permute.xlu0 0
        %3021 = vperm.xlu0 %3020, %v3016
        %v3022 = vpop.permute.xlu0 %3021
        %3025 = vset.pattern.permute.xlu0 0
        %3026 = vperm.xlu0 %3025, %v3017
        %v3027 = vpop.permute.xlu0 %3026
        %3030 = vset.pattern.permute.xlu0 0
        %3031 = vperm.xlu0 %3030, %v3018
        %v3032 = vpop.permute.xlu0 %3031
        %v3035 = vsel %vm1246, %v3004, 0
        %v3038 = vsel %vm1246, %v3005, 0
        %v3041 = vsel %vm1246, %v3006, 0
        %3043 = vmatprep.subr.mxu0 0.0
        %3044 = vmatpush1.msra.mxu0 %v3007
        %3045 = vmatprep.subr.mxu0 0.0
        %3046 = vmatpush1.msra.mxu0 %v3008
        %3047 = vmatprep.subr.mxu0 0.0
        %3048 = vmatpush1.msra.mxu0 %v3009
        %3049 = vmatprep.subr.mxu0 0.0
        %3050 = vmatpush1.msra.mxu0 %v3010
        %3051 = vmatprep.subr.mxu0 0.0
        %3052 = vmatpush1.msra.mxu0 %v3011
        %3053 = vmatprep.subr.mxu0 0.0
        %3054 = vmatpush1.msra.mxu0 %v3012
        %3055 = vmatprep.subr.mxu0 0.0
        %3056 = vmatpush1.msra.mxu0 %v3013
        %3057 = vmatprep.subr.mxu0 0.0
        %3058 = vmatpush1.msra.mxu0 %v3014
        %3059 = vmatprep.subr.mxu0 0.0
        %3060 = vmatpush1.msra.mxu0 %v3015
        %3061 = vmatprep.subr.mxu0 0.0
        %3062 = vmatpush1.msra.mxu0 0.0
        %3063 = vmatprep.subr.mxu0 0.0
        %3064 = vmatpush1.msra.mxu0 0.0
        %3065 = vmatprep.subr.mxu0 0.0
        %3066 = vmatpush1.msra.mxu0 0.0
        %3067 = vmatprep.subr.mxu0 0.0
        %3068 = vmatpush1.msra.mxu0 0.0
        %3069 = vmatprep.subr.mxu0 0.0
        %3070 = vmatpush1.msra.mxu0 0.0
        %3071 = vmatprep.subr.mxu0 0.0
        %3072 = vmatpush1.msra.mxu0 0.0
        %3073 = vmatprep.subr.mxu0 0.0
        %3074 = vmatpush1.msra.mxu0 0.0
        %3075 = vmatprep.subr.mxu0 0.0
        %3076 = vmatpush1.msra.mxu0 0.0
        %3077 = vmatprep.subr.mxu0 0.0
        %3078 = vmatpush1.msra.mxu0 0.0
        %3079 = vmatprep.subr.mxu0 0.0
        %3080 = vmatpush1.msra.mxu0 0.0
        %3081 = vmatprep.subr.mxu0 0.0
        %3082 = vmatpush1.msra.mxu0 0.0
        %3083 = vmatprep.subr.mxu0 0.0
        %3084 = vmatpush1.msra.mxu0 0.0
        %3085 = vmatprep.subr.mxu0 0.0
        %3086 = vmatpush1.msra.mxu0 0.0
        %3087 = vmatprep.subr.mxu0 0.0
        %3088 = vmatpush1.msra.mxu0 0.0
        %3089 = vmatprep.subr.mxu0 0.0
        %3090 = vmatpush1.msra.mxu0 0.0
        %3091 = vmatprep.subr.mxu0 0.0
        %3092 = vmatpush1.msra.mxu0 0.0
        %3093 = vmatprep.subr.mxu0 0.0
        %3094 = vmatpush1.msra.mxu0 0.0
        %3095 = vmatprep.subr.mxu0 0.0
        %3096 = vmatpush1.msra.mxu0 0.0
        %3097 = vmatprep.subr.mxu0 0.0
        %3098 = vmatpush1.msra.mxu0 0.0
        %3099 = vmatprep.subr.mxu0 0.0
        %3100 = vmatpush1.msra.mxu0 0.0
        %3101 = vmatprep.subr.mxu0 0.0
        %3102 = vmatpush1.msra.mxu0 0.0
        %3103 = vmatprep.subr.mxu0 0.0
        %3104 = vmatpush1.msra.mxu0 0.0
        %3105 = vmatprep.subr.mxu0 0.0
        %3106 = vmatpush1.msra.mxu0 0.0
        %3107 = vmatprep.mubr.f32.mxu0 0.0
        %3108 = vmatmul.mubr.f32.gmra.mrb[0].mxu0 %v3035
        %v3109 = vpop.f32.mrb[0].mxu0
        %v3110 = vadd.f32 %v3022, %v3109
        %v3111 = vpop.f32.mrb[0].mxu0
        %3112 = vmatprep.mubr.f32.mxu0 0.0
        %3113 = vmatmul.mubr.f32.gmra.mrb[0].mxu0 %v3038
        %v3114 = vpop.f32.mrb[0].mxu0
        %v3115 = vadd.f32 %v3027, %v3114
        %v3116 = vpop.f32.mrb[0].mxu0
        %3117 = vmatprep.mubr.f32.mxu0 0.0
        %3118 = vmatmul.mubr.f32.gmra.mrb[0].mxu0 %v3041
        %v3119 = vpop.f32.mrb[0].mxu0
        %v3120 = vadd.f32 %v3032, %v3119
        %v3121 = vpop.f32.mrb[0].mxu0
        %3122 = vdwg.mxu0
        %v3123 = vmax.f32 %v3110, 0.0
        %v3124 = vmax.f32 %v3115, 0.0
        %v3125 = vmax.f32 %v3120, 0.0
        %3126 = vrot.lane.b32.xlu0 %v3123, 4
        %v3127 = vpop.permute.xlu0 %3126
        %3128 = vrot.lane.b32.xlu0 %v3124, 4
        %v3129 = vpop.permute.xlu0 %3128
        %3130 = vrot.lane.b32.xlu0 %v3125, 4
        %v3131 = vpop.permute.xlu0 %3130
        %v3132 = vsel %vm1411, %v3127, 0.0
        %v3133 = vsel %vm1411, %v3129, 0.0
        %v3134 = vsel %vm1411, %v3131, 0.0
        %3135 = vst [vmem:[#allocation3] sm:$0xff] %v3132
        %3136 = vst [vmem:[#allocation3 + $0x8] sm:$0xff] %v3133
        %3137 = vst [vmem:[#allocation3 + $0x10] sm:$0xff] %v3134
        %3138 = vrot.lane.b32.xlu0 %v3123, 3
        %v3139 = vpop.permute.xlu0 %3138
        %3140 = vrot.lane.b32.xlu0 %v3124, 3
        %v3141 = vpop.permute.xlu0 %3140
        %3142 = vrot.lane.b32.xlu0 %v3125, 3
        %v3143 = vpop.permute.xlu0 %3142
        %v3144 = vsel %vm1424, %v3139, 0.0
        %v3145 = vsel %vm1424, %v3141, 0.0
        %v3146 = vsel %vm1424, %v3143, 0.0
        %3147 = vst [vmem:[#allocation3 + $0x18] sm:$0xff] %v3144
        %3148 = vst [vmem:[#allocation3 + $0x20] sm:$0xff] %v3145
        %3149 = vst [vmem:[#allocation3 + $0x28] sm:$0xff] %v3146
        %3150 = vrot.lane.b32.xlu0 %v3123, 2
        %v3151 = vpop.permute.xlu0 %3150
        %3152 = vrot.lane.b32.xlu0 %v3124, 2
        %v3153 = vpop.permute.xlu0 %3152
        %3154 = vrot.lane.b32.xlu0 %v3125, 2
        %v3155 = vpop.permute.xlu0 %3154
        %v3156 = vsel %vm1437, %v3151, 0.0
        %v3157 = vsel %vm1437, %v3153, 0.0
        %v3158 = vsel %vm1437, %v3155, 0.0
        %3159 = vst [vmem:[#allocation3 + $0x30] sm:$0xff] %v3156
        %3160 = vst [vmem:[#allocation3 + $0x38] sm:$0xff] %v3157
        %3161 = vst [vmem:[#allocation3 + $0x40] sm:$0xff] %v3158
        %3162 = vrot.lane.b32.xlu0 %v3123, 1
        %v3163 = vpop.permute.xlu0 %3162
        %3164 = vrot.lane.b32.xlu0 %v3124, 1
        %v3165 = vpop.permute.xlu0 %3164
        %3166 = vrot.lane.b32.xlu0 %v3125, 1
        %v3167 = vpop.permute.xlu0 %3166
        %v3168 = vsel %vm1208, %v3163, 0.0
        %v3169 = vsel %vm1208, %v3165, 0.0
        %v3170 = vsel %vm1208, %v3167, 0.0
        %3171 = vst [vmem:[#allocation3 + $0x48] sm:$0xff] %v3168
        %3172 = vst [vmem:[#allocation3 + $0x50] sm:$0xff] %v3169
        %3173 = vst [vmem:[#allocation3 + $0x58] sm:$0xff] %v3170
        %3174 = vst [vmem:[#allocation3 + $0x60] sm:$0xff] %v3123
        %3175 = vst [vmem:[#allocation3 + $0x68] sm:$0xff] %v3124
        %3176 = vst [vmem:[#allocation3 + $0x70] sm:$0xff] %v3125
        %3177 = vrot.lane.b32.xlu0 %v3123, 127
        %v3178 = vpop.permute.xlu0 %3177
        %3179 = vrot.lane.b32.xlu0 %v3124, 127
        %v3180 = vpop.permute.xlu0 %3179
        %3181 = vrot.lane.b32.xlu0 %v3125, 127
        %v3182 = vpop.permute.xlu0 %3181
        %v3183 = vsel %vm1224, %v3178, 0.0
        %v3184 = vsel %vm1224, %v3180, 0.0
        %v3185 = vsel %vm1224, %v3182, 0.0
        %3186 = vst [vmem:[#allocation3 + $0x78] sm:$0xff] %v3183
        %3187 = vst [vmem:[#allocation3 + $0x80] sm:$0xff] %v3184
        %3188 = vst [vmem:[#allocation3 + $0x88] sm:$0xff] %v3185
        %3189 = vrot.lane.b32.xlu0 %v3123, 126
        %v3190 = vpop.permute.xlu0 %3189
        %3191 = vrot.lane.b32.xlu0 %v3124, 126
        %v3192 = vpop.permute.xlu0 %3191
        %3193 = vrot.lane.b32.xlu0 %v3125, 126
        %v3194 = vpop.permute.xlu0 %3193
        %v3195 = vsel %vm1477, %v3190, 0.0
        %v3196 = vsel %vm1477, %v3192, 0.0
        %v3197 = vsel %vm1477, %v3194, 0.0
        %3198 = vst [vmem:[#allocation3 + $0x90] sm:$0xff] %v3195
        %3199 = vst [vmem:[#allocation3 + $0x98] sm:$0xff] %v3196
        %3200 = vst [vmem:[#allocation3 + $0xa0] sm:$0xff] %v3197
        %3201 = vrot.lane.b32.xlu0 %v3123, 125
        %v3202 = vpop.permute.xlu0 %3201
        %3203 = vrot.lane.b32.xlu0 %v3124, 125
        %v3204 = vpop.permute.xlu0 %3203
        %3205 = vrot.lane.b32.xlu0 %v3125, 125
        %v3206 = vpop.permute.xlu0 %3205
        %v3207 = vsel %vm1490, %v3202, 0.0
        %v3208 = vsel %vm1490, %v3204, 0.0
        %v3209 = vsel %vm1490, %v3206, 0.0
        %3210 = vst [vmem:[#allocation3 + $0xa8] sm:$0xff] %v3207
        %3211 = vst [vmem:[#allocation3 + $0xb0] sm:$0xff] %v3208
        %3212 = vst [vmem:[#allocation3 + $0xb8] sm:$0xff] %v3209
        %3213 = vrot.lane.b32.xlu0 %v3123, 124
        %v3214 = vpop.permute.xlu0 %3213
        %3215 = vrot.lane.b32.xlu0 %v3124, 124
        %v3216 = vpop.permute.xlu0 %3215
        %3217 = vrot.lane.b32.xlu0 %v3125, 124
        %v3218 = vpop.permute.xlu0 %3217
        %v3219 = vsel %vm1503, %v3214, 0.0
        %v3220 = vsel %vm1503, %v3216, 0.0
        %v3221 = vsel %vm1503, %v3218, 0.0
        %3222 = vst [vmem:[#allocation3 + $0xc0] sm:$0xff] %v3219
        %3223 = vst [vmem:[#allocation3 + $0xc8] sm:$0xff] %v3220
        %3224 = vst [vmem:[#allocation3 + $0xd0] sm:$0xff] %v3221
        %v3225 = vld [vmem:[%s45] sm:$0xff]
        %v3226 = vld [vmem:[%s45 + $0x8] sm:$0xff]
        %v3227 = vld [vmem:[%s45 + $0x10] sm:$0xff]
        %v3228 = vld [vmem:[%s45 + $0x18] sm:$0xff]
        %v3229 = vld [vmem:[%s45 + $0x20] sm:$0xff]
        %v3230 = vld [vmem:[%s45 + $0x28] sm:$0xff]
        %v3231 = vld [vmem:[#allocation3] sm:$0xff]
        %v3232 = vld [vmem:[#allocation3 + $0x8] sm:$0xff]
        %v3233 = vld [vmem:[#allocation3 + $0x10] sm:$0xff]
        %v3234 = vld [vmem:[#allocation3 + $0x18] sm:$0xff]
        %v3235 = vld [vmem:[#allocation3 + $0x20] sm:$0xff]
        %v3236 = vld [vmem:[#allocation3 + $0x28] sm:$0xff]
        %v3237 = vld [vmem:[#allocation3 + $0x30] sm:$0xff]
        %v3238 = vld [vmem:[#allocation3 + $0x38] sm:$0xff]
        %v3239 = vld [vmem:[#allocation3 + $0x40] sm:$0xff]
        %v3240 = vld [vmem:[#allocation3 + $0x48] sm:$0xff]
        %v3241 = vld [vmem:[#allocation3 + $0x50] sm:$0xff]
        %v3242 = vld [vmem:[#allocation3 + $0x58] sm:$0xff]
        %v3243 = vld [vmem:[#allocation3 + $0x60] sm:$0xff]
        %v3244 = vld [vmem:[#allocation3 + $0x68] sm:$0xff]
        %v3245 = vld [vmem:[#allocation3 + $0x70] sm:$0xff]
        %v3246 = vld [vmem:[#allocation3 + $0x78] sm:$0xff]
        %v3247 = vld [vmem:[#allocation3 + $0x80] sm:$0xff]
        %v3248 = vld [vmem:[#allocation3 + $0x88] sm:$0xff]
        %v3249 = vld [vmem:[#allocation3 + $0x90] sm:$0xff]
        %v3250 = vld [vmem:[#allocation3 + $0x98] sm:$0xff]
        %v3251 = vld [vmem:[#allocation3 + $0xa0] sm:$0xff]
        %v3252 = vld [vmem:[#allocation3 + $0xa8] sm:$0xff]
        %v3253 = vld [vmem:[#allocation3 + $0xb0] sm:$0xff]
        %v3254 = vld [vmem:[#allocation3 + $0xb8] sm:$0xff]
        %v3255 = vld [vmem:[#allocation3 + $0xc0] sm:$0xff]
        %v3256 = vld [vmem:[#allocation3 + $0xc8] sm:$0xff]
        %v3257 = vld [vmem:[#allocation3 + $0xd0] sm:$0xff]
        %v3258 = vld [vmem:[%s47] sm:$0xff]
        %v3259 = vld [vmem:[%s47 + $0x8] sm:$0xff]
        %v3260 = vld [vmem:[%s47 + $0x10] sm:$0xff]
        %3262 = vset.pattern.permute.xlu0 0
        %3263 = vperm.xlu0 %3262, %v3258
        %v3264 = vpop.permute.xlu0 %3263
        %3267 = vset.pattern.permute.xlu0 0
        %3268 = vperm.xlu0 %3267, %v3259
        %v3269 = vpop.permute.xlu0 %3268
        %3272 = vset.pattern.permute.xlu0 0
        %3273 = vperm.xlu0 %3272, %v3260
        %v3274 = vpop.permute.xlu0 %3273
        %v3277 = vsel %vm1561, %v3226, 0
        %v3280 = vsel %vm1561, %v3228, 0
        %v3283 = vsel %vm1561, %v3230, 0
        %3285 = vmatprep.subr.mxu0 0.0
        %3286 = vmatpush1.msra.mxu0 %v3231
        %3287 = vmatprep.subr.mxu0 0.0
        %3288 = vmatpush1.msra.mxu0 %v3232
        %3289 = vmatprep.subr.mxu0 0.0
        %3290 = vmatpush1.msra.mxu0 %v3233
        %3291 = vmatprep.subr.mxu0 0.0
        %3292 = vmatpush1.msra.mxu0 %v3234
        %3293 = vmatprep.subr.mxu0 0.0
        %3294 = vmatpush1.msra.mxu0 %v3235
        %3295 = vmatprep.subr.mxu0 0.0
        %3296 = vmatpush1.msra.mxu0 %v3236
        %3297 = vmatprep.subr.mxu0 0.0
        %3298 = vmatpush1.msra.mxu0 %v3237
        %3299 = vmatprep.subr.mxu0 0.0
        %3300 = vmatpush1.msra.mxu0 %v3238
        %3301 = vmatprep.subr.mxu0 0.0
        %3302 = vmatpush1.msra.mxu0 %v3239
        %3303 = vmatprep.subr.mxu0 0.0
        %3304 = vmatpush1.msra.mxu0 %v3240
        %3305 = vmatprep.subr.mxu0 0.0
        %3306 = vmatpush1.msra.mxu0 %v3241
        %3307 = vmatprep.subr.mxu0 0.0
        %3308 = vmatpush1.msra.mxu0 %v3242
        %3309 = vmatprep.subr.mxu0 0.0
        %3310 = vmatpush1.msra.mxu0 %v3243
        %3311 = vmatprep.subr.mxu0 0.0
        %3312 = vmatpush1.msra.mxu0 %v3244
        %3313 = vmatprep.subr.mxu0 0.0
        %3314 = vmatpush1.msra.mxu0 %v3245
        %3315 = vmatprep.subr.mxu0 0.0
        %3316 = vmatpush1.msra.mxu0 %v3246
        %3317 = vmatprep.subr.mxu0 0.0
        %3318 = vmatpush1.msra.mxu0 %v3247
        %3319 = vmatprep.subr.mxu0 0.0
        %3320 = vmatpush1.msra.mxu0 %v3248
        %3321 = vmatprep.subr.mxu0 0.0
        %3322 = vmatpush1.msra.mxu0 %v3249
        %3323 = vmatprep.subr.mxu0 0.0
        %3324 = vmatpush1.msra.mxu0 %v3250
        %3325 = vmatprep.subr.mxu0 0.0
        %3326 = vmatpush1.msra.mxu0 %v3251
        %3327 = vmatprep.subr.mxu0 0.0
        %3328 = vmatpush1.msra.mxu0 %v3252
        %3329 = vmatprep.subr.mxu0 0.0
        %3330 = vmatpush1.msra.mxu0 %v3253
        %3331 = vmatprep.subr.mxu0 0.0
        %3332 = vmatpush1.msra.mxu0 %v3254
        %3333 = vmatprep.subr.mxu0 0.0
        %3334 = vmatpush1.msra.mxu0 %v3255
        %3335 = vmatprep.subr.mxu0 0.0
        %3336 = vmatpush1.msra.mxu0 %v3256
        %3337 = vmatprep.subr.mxu0 0.0
        %3338 = vmatpush1.msra.mxu0 %v3257
        %3339 = vmatprep.subr.mxu0 0.0
        %3340 = vmatpush1.msra.mxu0 0.0
        %3341 = vmatprep.subr.mxu0 0.0
        %3342 = vmatpush1.msra.mxu0 0.0
        %3343 = vmatprep.subr.mxu0 0.0
        %3344 = vmatpush1.msra.mxu0 0.0
        %3345 = vmatprep.subr.mxu0 0.0
        %3346 = vmatpush1.msra.mxu0 0.0
        %3347 = vmatprep.subr.mxu0 0.0
        %3348 = vmatpush1.msra.mxu0 0.0
        %3349 = vmatprep.mubr.f32.mxu0 %v3277
        %3350 = vmatmul.mubr.f32.gmra.mrb[0].mxu0 %v3225
        %v3351 = vpop.f32.mrb[0].mxu0
        %v3352 = vadd.f32 %v3264, %v3351
        %v3353 = vpop.f32.mrb[0].mxu0
        %3354 = vmatprep.mubr.f32.mxu0 %v3280
        %3355 = vmatmul.mubr.f32.gmra.mrb[0].mxu0 %v3227
        %v3356 = vpop.f32.mrb[0].mxu0
        %v3357 = vadd.f32 %v3269, %v3356
        %v3358 = vpop.f32.mrb[0].mxu0
        %3359 = vmatprep.mubr.f32.mxu0 %v3283
        %3360 = vmatmul.mubr.f32.gmra.mrb[0].mxu0 %v3229
        %v3361 = vpop.f32.mrb[0].mxu0
        %v3362 = vadd.f32 %v3274, %v3361
        %v3363 = vpop.f32.mrb[0].mxu0
        %3364 = vdwg.mxu0
        %v3365 = vmax.f32 %v3352, 0.0
        %v3366 = vmax.f32 %v3357, 0.0
        %v3367 = vmax.f32 %v3362, 0.0
        %v3368 = vadd.f32 %v2964, %v3365
        %v3369 = vadd.f32 %v2969, %v3366
        %v3370 = vadd.f32 %v2974, %v3367
        %v3371 = vmax.f32 %v3368, 0.0
        %v3372 = vmax.f32 %v3369, 0.0
        %v3373 = vmax.f32 %v3370, 0.0
        %3374 = vrot.lane.b32.xlu0 %v3371, 2
        %v3375 = vpop.permute.xlu0 %3374
        %3376 = vrot.lane.b32.xlu0 %v3372, 2
        %v3377 = vpop.permute.xlu0 %3376
        %3378 = vrot.lane.b32.xlu0 %v3373, 2
        %v3379 = vpop.permute.xlu0 %3378
        %v3380 = vsel %vm1437, %v3375, 0.0
        %v3381 = vsel %vm1437, %v3377, 0.0
        %v3382 = vsel %vm1437, %v3379, 0.0
        %3383 = vst [vmem:[#allocation2] sm:$0xff] %v3380
        %3384 = vst [vmem:[#allocation2 + $0x8] sm:$0xff] %v3381
        %3385 = vst [vmem:[#allocation2 + $0x10] sm:$0xff] %v3382
        %3386 = vst [vmem:[#allocation2 + $0x18] sm:$0xff] %v3371
        %3387 = vst [vmem:[#allocation2 + $0x20] sm:$0xff] %v3372
        %3388 = vst [vmem:[#allocation2 + $0x28] sm:$0xff] %v3373
        %3389 = vrot.lane.b32.xlu0 %v3371, 126
        %v3390 = vpop.permute.xlu0 %3389
        %3391 = vrot.lane.b32.xlu0 %v3372, 126
        %v3392 = vpop.permute.xlu0 %3391
        %3393 = vrot.lane.b32.xlu0 %v3373, 126
        %v3394 = vpop.permute.xlu0 %3393
        %v3395 = vsel %vm1477, %v3390, 0.0
        %v3396 = vsel %vm1477, %v3392, 0.0
        %v3397 = vsel %vm1477, %v3394, 0.0
        %3398 = vst [vmem:[#allocation2 + $0x30] sm:$0xff] %v3395
        %3399 = vst [vmem:[#allocation2 + $0x38] sm:$0xff] %v3396
        %3400 = vst [vmem:[#allocation2 + $0x40] sm:$0xff] %v3397
        %v3401 = vld [vmem:[#allocation6] sm:$0xff]
        %v3402 = vld [vmem:[#allocation6 + $0x8] sm:$0xff]
        %v3403 = vld [vmem:[#allocation6 + $0x10] sm:$0xff]
        %v3404 = vld [vmem:[#allocation2] sm:$0xff]
        %v3405 = vld [vmem:[#allocation2 + $0x8] sm:$0xff]
        %v3406 = vld [vmem:[#allocation2 + $0x10] sm:$0xff]
        %v3407 = vld [vmem:[#allocation2 + $0x18] sm:$0xff]
        %v3408 = vld [vmem:[#allocation2 + $0x20] sm:$0xff]
        %v3409 = vld [vmem:[#allocation2 + $0x28] sm:$0xff]
        %v3410 = vld [vmem:[#allocation2 + $0x30] sm:$0xff]
        %v3411 = vld [vmem:[#allocation2 + $0x38] sm:$0xff]
        %v3412 = vld [vmem:[#allocation2 + $0x40] sm:$0xff]
        %v3413 = vld [vmem:[%s51] sm:$0xff]
        %v3414 = vld [vmem:[%s51 + $0x8] sm:$0xff]
        %v3415 = vld [vmem:[%s51 + $0x10] sm:$0xff]
        %3417 = vset.pattern.permute.xlu0 0
        %3418 = vperm.xlu0 %3417, %v3413
        %v3419 = vpop.permute.xlu0 %3418
        %3422 = vset.pattern.permute.xlu0 0
        %3423 = vperm.xlu0 %3422, %v3414
        %v3424 = vpop.permute.xlu0 %3423
        %3427 = vset.pattern.permute.xlu0 0
        %3428 = vperm.xlu0 %3427, %v3415
        %v3429 = vpop.permute.xlu0 %3428
        %v3432 = vsel %vm1246, %v3401, 0
        %v3435 = vsel %vm1246, %v3402, 0
        %v3438 = vsel %vm1246, %v3403, 0
        %3440 = vmatprep.subr.mxu0 0.0
        %3441 = vmatpush1.msra.mxu0 %v3404
        %3442 = vmatprep.subr.mxu0 0.0
        %3443 = vmatpush1.msra.mxu0 %v3405
        %3444 = vmatprep.subr.mxu0 0.0
        %3445 = vmatpush1.msra.mxu0 %v3406
        %3446 = vmatprep.subr.mxu0 0.0
        %3447 = vmatpush1.msra.mxu0 %v3407
        %3448 = vmatprep.subr.mxu0 0.0
        %3449 = vmatpush1.msra.mxu0 %v3408
        %3450 = vmatprep.subr.mxu0 0.0
        %3451 = vmatpush1.msra.mxu0 %v3409
        %3452 = vmatprep.subr.mxu0 0.0
        %3453 = vmatpush1.msra.mxu0 %v3410
        %3454 = vmatprep.subr.mxu0 0.0
        %3455 = vmatpush1.msra.mxu0 %v3411
        %3456 = vmatprep.subr.mxu0 0.0
        %3457 = vmatpush1.msra.mxu0 %v3412
        %3458 = vmatprep.subr.mxu0 0.0
        %3459 = vmatpush1.msra.mxu0 0.0
        %3460 = vmatprep.subr.mxu0 0.0
        %3461 = vmatpush1.msra.mxu0 0.0
        %3462 = vmatprep.subr.mxu0 0.0
        %3463 = vmatpush1.msra.mxu0 0.0
        %3464 = vmatprep.subr.mxu0 0.0
        %3465 = vmatpush1.msra.mxu0 0.0
        %3466 = vmatprep.subr.mxu0 0.0
        %3467 = vmatpush1.msra.mxu0 0.0
        %3468 = vmatprep.subr.mxu0 0.0
        %3469 = vmatpush1.msra.mxu0 0.0
        %3470 = vmatprep.subr.mxu0 0.0
        %3471 = vmatpush1.msra.mxu0 0.0
        %3472 = vmatprep.subr.mxu0 0.0
        %3473 = vmatpush1.msra.mxu0 0.0
        %3474 = vmatprep.subr.mxu0 0.0
        %3475 = vmatpush1.msra.mxu0 0.0
        %3476 = vmatprep.subr.mxu0 0.0
        %3477 = vmatpush1.msra.mxu0 0.0
        %3478 = vmatprep.subr.mxu0 0.0
        %3479 = vmatpush1.msra.mxu0 0.0
        %3480 = vmatprep.subr.mxu0 0.0
        %3481 = vmatpush1.msra.mxu0 0.0
        %3482 = vmatprep.subr.mxu0 0.0
        %3483 = vmatpush1.msra.mxu0 0.0
        %3484 = vmatprep.subr.mxu0 0.0
        %3485 = vmatpush1.msra.mxu0 0.0
        %3486 = vmatprep.subr.mxu0 0.0
        %3487 = vmatpush1.msra.mxu0 0.0
        %3488 = vmatprep.subr.mxu0 0.0
        %3489 = vmatpush1.msra.mxu0 0.0
        %3490 = vmatprep.subr.mxu0 0.0
        %3491 = vmatpush1.msra.mxu0 0.0
        %3492 = vmatprep.subr.mxu0 0.0
        %3493 = vmatpush1.msra.mxu0 0.0
        %3494 = vmatprep.subr.mxu0 0.0
        %3495 = vmatpush1.msra.mxu0 0.0
        %3496 = vmatprep.subr.mxu0 0.0
        %3497 = vmatpush1.msra.mxu0 0.0
        %3498 = vmatprep.subr.mxu0 0.0
        %3499 = vmatpush1.msra.mxu0 0.0
        %3500 = vmatprep.subr.mxu0 0.0
        %3501 = vmatpush1.msra.mxu0 0.0
        %3502 = vmatprep.subr.mxu0 0.0
        %3503 = vmatpush1.msra.mxu0 0.0
        %3504 = vmatprep.mubr.f32.mxu0 0.0
        %3505 = vmatmul.mubr.f32.gmra.mrb[0].mxu0 %v3432
        %v3506 = vpop.f32.mrb[0].mxu0
        %v3507 = vadd.f32 %v3419, %v3506
        %v3508 = vpop.f32.mrb[0].mxu0
        %3509 = vmatprep.mubr.f32.mxu0 0.0
        %3510 = vmatmul.mubr.f32.gmra.mrb[0].mxu0 %v3435
        %v3511 = vpop.f32.mrb[0].mxu0
        %v3512 = vadd.f32 %v3424, %v3511
        %v3513 = vpop.f32.mrb[0].mxu0
        %3514 = vmatprep.mubr.f32.mxu0 0.0
        %3515 = vmatmul.mubr.f32.gmra.mrb[0].mxu0 %v3438
        %v3516 = vpop.f32.mrb[0].mxu0
        %v3517 = vadd.f32 %v3429, %v3516
        %v3518 = vpop.f32.mrb[0].mxu0
        %3519 = vdwg.mxu0
        %v3520 = vmax.f32 %v3507, 0.0
        %v3521 = vmax.f32 %v3512, 0.0
        %v3522 = vmax.f32 %v3517, 0.0
        %3523 = vrot.lane.b32.xlu0 %v3520, 8
        %v3524 = vpop.permute.xlu0 %3523
        %3525 = vrot.lane.b32.xlu0 %v3521, 8
        %v3526 = vpop.permute.xlu0 %3525
        %3527 = vrot.lane.b32.xlu0 %v3522, 8
        %v3528 = vpop.permute.xlu0 %3527
        %v3529 = vsel %vm1815, %v3524, 0.0
        %v3530 = vsel %vm1815, %v3526, 0.0
        %v3531 = vsel %vm1815, %v3528, 0.0
        %3532 = vst [vmem:[#allocation3] sm:$0xff] %v3529
        %3533 = vst [vmem:[#allocation3 + $0x8] sm:$0xff] %v3530
        %3534 = vst [vmem:[#allocation3 + $0x10] sm:$0xff] %v3531
        %3535 = vrot.lane.b32.xlu0 %v3520, 6
        %v3536 = vpop.permute.xlu0 %3535
        %3537 = vrot.lane.b32.xlu0 %v3521, 6
        %v3538 = vpop.permute.xlu0 %3537
        %3539 = vrot.lane.b32.xlu0 %v3522, 6
        %v3540 = vpop.permute.xlu0 %3539
        %v3541 = vsel %vm1828, %v3536, 0.0
        %v3542 = vsel %vm1828, %v3538, 0.0
        %v3543 = vsel %vm1828, %v3540, 0.0
        %3544 = vst [vmem:[#allocation3 + $0x18] sm:$0xff] %v3541
        %3545 = vst [vmem:[#allocation3 + $0x20] sm:$0xff] %v3542
        %3546 = vst [vmem:[#allocation3 + $0x28] sm:$0xff] %v3543
        %3547 = vrot.lane.b32.xlu0 %v3520, 4
        %v3548 = vpop.permute.xlu0 %3547
        %3549 = vrot.lane.b32.xlu0 %v3521, 4
        %v3550 = vpop.permute.xlu0 %3549
        %3551 = vrot.lane.b32.xlu0 %v3522, 4
        %v3552 = vpop.permute.xlu0 %3551
        %v3553 = vsel %vm1411, %v3548, 0.0
        %v3554 = vsel %vm1411, %v3550, 0.0
        %v3555 = vsel %vm1411, %v3552, 0.0
        %3556 = vst [vmem:[#allocation3 + $0x30] sm:$0xff] %v3553
        %3557 = vst [vmem:[#allocation3 + $0x38] sm:$0xff] %v3554
        %3558 = vst [vmem:[#allocation3 + $0x40] sm:$0xff] %v3555
        %3559 = vrot.lane.b32.xlu0 %v3520, 2
        %v3560 = vpop.permute.xlu0 %3559
        %3561 = vrot.lane.b32.xlu0 %v3521, 2
        %v3562 = vpop.permute.xlu0 %3561
        %3563 = vrot.lane.b32.xlu0 %v3522, 2
        %v3564 = vpop.permute.xlu0 %3563
        %v3565 = vsel %vm1437, %v3560, 0.0
        %v3566 = vsel %vm1437, %v3562, 0.0
        %v3567 = vsel %vm1437, %v3564, 0.0
        %3568 = vst [vmem:[#allocation3 + $0x48] sm:$0xff] %v3565
        %3569 = vst [vmem:[#allocation3 + $0x50] sm:$0xff] %v3566
        %3570 = vst [vmem:[#allocation3 + $0x58] sm:$0xff] %v3567
        %3571 = vst [vmem:[#allocation3 + $0x60] sm:$0xff] %v3520
        %3572 = vst [vmem:[#allocation3 + $0x68] sm:$0xff] %v3521
        %3573 = vst [vmem:[#allocation3 + $0x70] sm:$0xff] %v3522
        %3574 = vrot.lane.b32.xlu0 %v3520, 126
        %v3575 = vpop.permute.xlu0 %3574
        %3576 = vrot.lane.b32.xlu0 %v3521, 126
        %v3577 = vpop.permute.xlu0 %3576
        %3578 = vrot.lane.b32.xlu0 %v3522, 126
        %v3579 = vpop.permute.xlu0 %3578
        %v3580 = vsel %vm1477, %v3575, 0.0
        %v3581 = vsel %vm1477, %v3577, 0.0
        %v3582 = vsel %vm1477, %v3579, 0.0
        %3583 = vst [vmem:[#allocation3 + $0x78] sm:$0xff] %v3580
        %3584 = vst [vmem:[#allocation3 + $0x80] sm:$0xff] %v3581
        %3585 = vst [vmem:[#allocation3 + $0x88] sm:$0xff] %v3582
        %3586 = vrot.lane.b32.xlu0 %v3520, 124
        %v3587 = vpop.permute.xlu0 %3586
        %3588 = vrot.lane.b32.xlu0 %v3521, 124
        %v3589 = vpop.permute.xlu0 %3588
        %3590 = vrot.lane.b32.xlu0 %v3522, 124
        %v3591 = vpop.permute.xlu0 %3590
        %v3592 = vsel %vm1503, %v3587, 0.0
        %v3593 = vsel %vm1503, %v3589, 0.0
        %v3594 = vsel %vm1503, %v3591, 0.0
        %3595 = vst [vmem:[#allocation3 + $0x90] sm:$0xff] %v3592
        %3596 = vst [vmem:[#allocation3 + $0x98] sm:$0xff] %v3593
        %3597 = vst [vmem:[#allocation3 + $0xa0] sm:$0xff] %v3594
        %3598 = vrot.lane.b32.xlu0 %v3520, 122
        %v3599 = vpop.permute.xlu0 %3598
        %3600 = vrot.lane.b32.xlu0 %v3521, 122
        %v3601 = vpop.permute.xlu0 %3600
        %3602 = vrot.lane.b32.xlu0 %v3522, 122
        %v3603 = vpop.permute.xlu0 %3602
        %v3604 = vsel %vm1892, %v3599, 0.0
        %v3605 = vsel %vm1892, %v3601, 0.0
        %v3606 = vsel %vm1892, %v3603, 0.0
        %3607 = vst [vmem:[#allocation3 + $0xa8] sm:$0xff] %v3604
        %3608 = vst [vmem:[#allocation3 + $0xb0] sm:$0xff] %v3605
        %3609 = vst [vmem:[#allocation3 + $0xb8] sm:$0xff] %v3606
        %3610 = vrot.lane.b32.xlu0 %v3520, 120
        %v3611 = vpop.permute.xlu0 %3610
        %3612 = vrot.lane.b32.xlu0 %v3521, 120
        %v3613 = vpop.permute.xlu0 %3612
        %3614 = vrot.lane.b32.xlu0 %v3522, 120
        %v3615 = vpop.permute.xlu0 %3614
        %v3616 = vsel %vm1905, %v3611, 0.0
        %v3617 = vsel %vm1905, %v3613, 0.0
        %v3618 = vsel %vm1905, %v3615, 0.0
        %3619 = vst [vmem:[#allocation3 + $0xc0] sm:$0xff] %v3616
        %3620 = vst [vmem:[#allocation3 + $0xc8] sm:$0xff] %v3617
        %3621 = vst [vmem:[#allocation3 + $0xd0] sm:$0xff] %v3618
        %v3622 = vld [vmem:[%s53] sm:$0xff]
        %v3623 = vld [vmem:[%s53 + $0x8] sm:$0xff]
        %v3624 = vld [vmem:[%s53 + $0x10] sm:$0xff]
        %v3625 = vld [vmem:[%s53 + $0x18] sm:$0xff]
        %v3626 = vld [vmem:[%s53 + $0x20] sm:$0xff]
        %v3627 = vld [vmem:[%s53 + $0x28] sm:$0xff]
        %v3628 = vld [vmem:[#allocation3] sm:$0xff]
        %v3629 = vld [vmem:[#allocation3 + $0x8] sm:$0xff]
        %v3630 = vld [vmem:[#allocation3 + $0x10] sm:$0xff]
        %v3631 = vld [vmem:[#allocation3 + $0x18] sm:$0xff]
        %v3632 = vld [vmem:[#allocation3 + $0x20] sm:$0xff]
        %v3633 = vld [vmem:[#allocation3 + $0x28] sm:$0xff]
        %v3634 = vld [vmem:[#allocation3 + $0x30] sm:$0xff]
        %v3635 = vld [vmem:[#allocation3 + $0x38] sm:$0xff]
        %v3636 = vld [vmem:[#allocation3 + $0x40] sm:$0xff]
        %v3637 = vld [vmem:[#allocation3 + $0x48] sm:$0xff]
        %v3638 = vld [vmem:[#allocation3 + $0x50] sm:$0xff]
        %v3639 = vld [vmem:[#allocation3 + $0x58] sm:$0xff]
        %v3640 = vld [vmem:[#allocation3 + $0x60] sm:$0xff]
        %v3641 = vld [vmem:[#allocation3 + $0x68] sm:$0xff]
        %v3642 = vld [vmem:[#allocation3 + $0x70] sm:$0xff]
        %v3643 = vld [vmem:[#allocation3 + $0x78] sm:$0xff]
        %v3644 = vld [vmem:[#allocation3 + $0x80] sm:$0xff]
        %v3645 = vld [vmem:[#allocation3 + $0x88] sm:$0xff]
        %v3646 = vld [vmem:[#allocation3 + $0x90] sm:$0xff]
        %v3647 = vld [vmem:[#allocation3 + $0x98] sm:$0xff]
        %v3648 = vld [vmem:[#allocation3 + $0xa0] sm:$0xff]
        %v3649 = vld [vmem:[#allocation3 + $0xa8] sm:$0xff]
        %v3650 = vld [vmem:[#allocation3 + $0xb0] sm:$0xff]
        %v3651 = vld [vmem:[#allocation3 + $0xb8] sm:$0xff]
        %v3652 = vld [vmem:[#allocation3 + $0xc0] sm:$0xff]
        %v3653 = vld [vmem:[#allocation3 + $0xc8] sm:$0xff]
        %v3654 = vld [vmem:[#allocation3 + $0xd0] sm:$0xff]
        %v3655 = vld [vmem:[%s55] sm:$0xff]
        %v3656 = vld [vmem:[%s55 + $0x8] sm:$0xff]
        %v3657 = vld [vmem:[%s55 + $0x10] sm:$0xff]
        %3659 = vset.pattern.permute.xlu0 0
        %3660 = vperm.xlu0 %3659, %v3655
        %v3661 = vpop.permute.xlu0 %3660
        %3664 = vset.pattern.permute.xlu0 0
        %3665 = vperm.xlu0 %3664, %v3656
        %v3666 = vpop.permute.xlu0 %3665
        %3669 = vset.pattern.permute.xlu0 0
        %3670 = vperm.xlu0 %3669, %v3657
        %v3671 = vpop.permute.xlu0 %3670
        %v3674 = vsel %vm1561, %v3623, 0
        %v3677 = vsel %vm1561, %v3625, 0
        %v3680 = vsel %vm1561, %v3627, 0
        %3682 = vmatprep.subr.mxu0 0.0
        %3683 = vmatpush1.msra.mxu0 %v3628
        %3684 = vmatprep.subr.mxu0 0.0
        %3685 = vmatpush1.msra.mxu0 %v3629
        %3686 = vmatprep.subr.mxu0 0.0
        %3687 = vmatpush1.msra.mxu0 %v3630
        %3688 = vmatprep.subr.mxu0 0.0
        %3689 = vmatpush1.msra.mxu0 %v3631
        %3690 = vmatprep.subr.mxu0 0.0
        %3691 = vmatpush1.msra.mxu0 %v3632
        %3692 = vmatprep.subr.mxu0 0.0
        %3693 = vmatpush1.msra.mxu0 %v3633
        %3694 = vmatprep.subr.mxu0 0.0
        %3695 = vmatpush1.msra.mxu0 %v3634
        %3696 = vmatprep.subr.mxu0 0.0
        %3697 = vmatpush1.msra.mxu0 %v3635
        %3698 = vmatprep.subr.mxu0 0.0
        %3699 = vmatpush1.msra.mxu0 %v3636
        %3700 = vmatprep.subr.mxu0 0.0
        %3701 = vmatpush1.msra.mxu0 %v3637
        %3702 = vmatprep.subr.mxu0 0.0
        %3703 = vmatpush1.msra.mxu0 %v3638
        %3704 = vmatprep.subr.mxu0 0.0
        %3705 = vmatpush1.msra.mxu0 %v3639
        %3706 = vmatprep.subr.mxu0 0.0
        %3707 = vmatpush1.msra.mxu0 %v3640
        %3708 = vmatprep.subr.mxu0 0.0
        %3709 = vmatpush1.msra.mxu0 %v3641
        %3710 = vmatprep.subr.mxu0 0.0
        %3711 = vmatpush1.msra.mxu0 %v3642
        %3712 = vmatprep.subr.mxu0 0.0
        %3713 = vmatpush1.msra.mxu0 %v3643
        %3714 = vmatprep.subr.mxu0 0.0
        %3715 = vmatpush1.msra.mxu0 %v3644
        %3716 = vmatprep.subr.mxu0 0.0
        %3717 = vmatpush1.msra.mxu0 %v3645
        %3718 = vmatprep.subr.mxu0 0.0
        %3719 = vmatpush1.msra.mxu0 %v3646
        %3720 = vmatprep.subr.mxu0 0.0
        %3721 = vmatpush1.msra.mxu0 %v3647
        %3722 = vmatprep.subr.mxu0 0.0
        %3723 = vmatpush1.msra.mxu0 %v3648
        %3724 = vmatprep.subr.mxu0 0.0
        %3725 = vmatpush1.msra.mxu0 %v3649
        %3726 = vmatprep.subr.mxu0 0.0
        %3727 = vmatpush1.msra.mxu0 %v3650
        %3728 = vmatprep.subr.mxu0 0.0
        %3729 = vmatpush1.msra.mxu0 %v3651
        %3730 = vmatprep.subr.mxu0 0.0
        %3731 = vmatpush1.msra.mxu0 %v3652
        %3732 = vmatprep.subr.mxu0 0.0
        %3733 = vmatpush1.msra.mxu0 %v3653
        %3734 = vmatprep.subr.mxu0 0.0
        %3735 = vmatpush1.msra.mxu0 %v3654
        %3736 = vmatprep.subr.mxu0 0.0
        %3737 = vmatpush1.msra.mxu0 0.0
        %3738 = vmatprep.subr.mxu0 0.0
        %3739 = vmatpush1.msra.mxu0 0.0
        %3740 = vmatprep.subr.mxu0 0.0
        %3741 = vmatpush1.msra.mxu0 0.0
        %3742 = vmatprep.subr.mxu0 0.0
        %3743 = vmatpush1.msra.mxu0 0.0
        %3744 = vmatprep.subr.mxu0 0.0
        %3745 = vmatpush1.msra.mxu0 0.0
        %3746 = vmatprep.mubr.f32.mxu0 %v3674
        %3747 = vmatmul.mubr.f32.gmra.mrb[0].mxu0 %v3622
        %v3748 = vpop.f32.mrb[0].mxu0
        %v3749 = vadd.f32 %v3661, %v3748
        %v3750 = vpop.f32.mrb[0].mxu0
        %3751 = vmatprep.mubr.f32.mxu0 %v3677
        %3752 = vmatmul.mubr.f32.gmra.mrb[0].mxu0 %v3624
        %v3753 = vpop.f32.mrb[0].mxu0
        %v3754 = vadd.f32 %v3666, %v3753
        %v3755 = vpop.f32.mrb[0].mxu0
        %3756 = vmatprep.mubr.f32.mxu0 %v3680
        %3757 = vmatmul.mubr.f32.gmra.mrb[0].mxu0 %v3626
        %v3758 = vpop.f32.mrb[0].mxu0
        %v3759 = vadd.f32 %v3671, %v3758
        %v3760 = vpop.f32.mrb[0].mxu0
        %3761 = vdwg.mxu0
        %v3762 = vmax.f32 %v3749, 0.0
        %v3763 = vmax.f32 %v3754, 0.0
        %v3764 = vmax.f32 %v3759, 0.0
        %v3765 = vadd.f32 %v3371, %v3762
        %v3766 = vadd.f32 %v3372, %v3763
        %v3767 = vadd.f32 %v3373, %v3764
        %v3768 = vmax.f32 %v3765, 0.0
        %v3769 = vmax.f32 %v3766, 0.0
        %v3770 = vmax.f32 %v3767, 0.0
        %v3771 = vadd.f32 %v3365, %v3762
        %v3772 = vadd.f32 %v3366, %v3763
        %v3773 = vadd.f32 %v3367, %v3764
        %3774 = vrot.lane.b32.xlu0 %v3768, 4
        %v3775 = vpop.permute.xlu0 %3774
        %3776 = vrot.lane.b32.xlu0 %v3769, 4
        %v3777 = vpop.permute.xlu0 %3776
        %3778 = vrot.lane.b32.xlu0 %v3770, 4
        %v3779 = vpop.permute.xlu0 %3778
        %v3780 = vsel %vm1411, %v3775, 0.0
        %v3781 = vsel %vm1411, %v3777, 0.0
        %v3782 = vsel %vm1411, %v3779, 0.0
        %3783 = vst [vmem:[#allocation2] sm:$0xff] %v3780
        %3784 = vst [vmem:[#allocation2 + $0x8] sm:$0xff] %v3781
        %3785 = vst [vmem:[#allocation2 + $0x10] sm:$0xff] %v3782
        %3786 = vst [vmem:[#allocation2 + $0x18] sm:$0xff] %v3768
        %3787 = vst [vmem:[#allocation2 + $0x20] sm:$0xff] %v3769
        %3788 = vst [vmem:[#allocation2 + $0x28] sm:$0xff] %v3770
        %3789 = vrot.lane.b32.xlu0 %v3768, 124
        %v3790 = vpop.permute.xlu0 %3789
        %3791 = vrot.lane.b32.xlu0 %v3769, 124
        %v3792 = vpop.permute.xlu0 %3791
        %3793 = vrot.lane.b32.xlu0 %v3770, 124
        %v3794 = vpop.permute.xlu0 %3793
        %v3795 = vsel %vm1503, %v3790, 0.0
        %v3796 = vsel %vm1503, %v3792, 0.0
        %v3797 = vsel %vm1503, %v3794, 0.0
        %3798 = vst [vmem:[#allocation2 + $0x30] sm:$0xff] %v3795
        %3799 = vst [vmem:[#allocation2 + $0x38] sm:$0xff] %v3796
        %3800 = vst [vmem:[#allocation2 + $0x40] sm:$0xff] %v3797
        %v3801 = vld [vmem:[%s57] sm:$0xff]
        %v3802 = vld [vmem:[%s57 + $0x8] sm:$0xff]
        %v3803 = vld [vmem:[%s57 + $0x10] sm:$0xff]
        %v3804 = vld [vmem:[#allocation2] sm:$0xff]
        %v3805 = vld [vmem:[#allocation2 + $0x8] sm:$0xff]
        %v3806 = vld [vmem:[#allocation2 + $0x10] sm:$0xff]
        %v3807 = vld [vmem:[#allocation2 + $0x18] sm:$0xff]
        %v3808 = vld [vmem:[#allocation2 + $0x20] sm:$0xff]
        %v3809 = vld [vmem:[#allocation2 + $0x28] sm:$0xff]
        %v3810 = vld [vmem:[#allocation2 + $0x30] sm:$0xff]
        %v3811 = vld [vmem:[#allocation2 + $0x38] sm:$0xff]
        %v3812 = vld [vmem:[#allocation2 + $0x40] sm:$0xff]
        %v3813 = vld [vmem:[%s59] sm:$0xff]
        %v3814 = vld [vmem:[%s59 + $0x8] sm:$0xff]
        %v3815 = vld [vmem:[%s59 + $0x10] sm:$0xff]
        %3817 = vset.pattern.permute.xlu0 0
        %3818 = vperm.xlu0 %3817, %v3813
        %v3819 = vpop.permute.xlu0 %3818
        %3822 = vset.pattern.permute.xlu0 0
        %3823 = vperm.xlu0 %3822, %v3814
        %v3824 = vpop.permute.xlu0 %3823
        %3827 = vset.pattern.permute.xlu0 0
        %3828 = vperm.xlu0 %3827, %v3815
        %v3829 = vpop.permute.xlu0 %3828
        %v3832 = vsel %vm1246, %v3801, 0
        %v3835 = vsel %vm1246, %v3802, 0
        %v3838 = vsel %vm1246, %v3803, 0
        %3840 = vmatprep.subr.mxu0 0.0
        %3841 = vmatpush1.msra.mxu0 %v3804
        %3842 = vmatprep.subr.mxu0 0.0
        %3843 = vmatpush1.msra.mxu0 %v3805
        %3844 = vmatprep.subr.mxu0 0.0
        %3845 = vmatpush1.msra.mxu0 %v3806
        %3846 = vmatprep.subr.mxu0 0.0
        %3847 = vmatpush1.msra.mxu0 %v3807
        %3848 = vmatprep.subr.mxu0 0.0
        %3849 = vmatpush1.msra.mxu0 %v3808
        %3850 = vmatprep.subr.mxu0 0.0
        %3851 = vmatpush1.msra.mxu0 %v3809
        %3852 = vmatprep.subr.mxu0 0.0
        %3853 = vmatpush1.msra.mxu0 %v3810
        %3854 = vmatprep.subr.mxu0 0.0
        %3855 = vmatpush1.msra.mxu0 %v3811
        %3856 = vmatprep.subr.mxu0 0.0
        %3857 = vmatpush1.msra.mxu0 %v3812
        %3858 = vmatprep.subr.mxu0 0.0
        %3859 = vmatpush1.msra.mxu0 0.0
        %3860 = vmatprep.subr.mxu0 0.0
        %3861 = vmatpush1.msra.mxu0 0.0
        %3862 = vmatprep.subr.mxu0 0.0
        %3863 = vmatpush1.msra.mxu0 0.0
        %3864 = vmatprep.subr.mxu0 0.0
        %3865 = vmatpush1.msra.mxu0 0.0
        %3866 = vmatprep.subr.mxu0 0.0
        %3867 = vmatpush1.msra.mxu0 0.0
        %3868 = vmatprep.subr.mxu0 0.0
        %3869 = vmatpush1.msra.mxu0 0.0
        %3870 = vmatprep.subr.mxu0 0.0
        %3871 = vmatpush1.msra.mxu0 0.0
        %3872 = vmatprep.subr.mxu0 0.0
        %3873 = vmatpush1.msra.mxu0 0.0
        %3874 = vmatprep.subr.mxu0 0.0
        %3875 = vmatpush1.msra.mxu0 0.0
        %3876 = vmatprep.subr.mxu0 0.0
        %3877 = vmatpush1.msra.mxu0 0.0
        %3878 = vmatprep.subr.mxu0 0.0
        %3879 = vmatpush1.msra.mxu0 0.0
        %3880 = vmatprep.subr.mxu0 0.0
        %3881 = vmatpush1.msra.mxu0 0.0
        %3882 = vmatprep.subr.mxu0 0.0
        %3883 = vmatpush1.msra.mxu0 0.0
        %3884 = vmatprep.subr.mxu0 0.0
        %3885 = vmatpush1.msra.mxu0 0.0
        %3886 = vmatprep.subr.mxu0 0.0
        %3887 = vmatpush1.msra.mxu0 0.0
        %3888 = vmatprep.subr.mxu0 0.0
        %3889 = vmatpush1.msra.mxu0 0.0
        %3890 = vmatprep.subr.mxu0 0.0
        %3891 = vmatpush1.msra.mxu0 0.0
        %3892 = vmatprep.subr.mxu0 0.0
        %3893 = vmatpush1.msra.mxu0 0.0
        %3894 = vmatprep.subr.mxu0 0.0
        %3895 = vmatpush1.msra.mxu0 0.0
        %3896 = vmatprep.subr.mxu0 0.0
        %3897 = vmatpush1.msra.mxu0 0.0
        %3898 = vmatprep.subr.mxu0 0.0
        %3899 = vmatpush1.msra.mxu0 0.0
        %3900 = vmatprep.subr.mxu0 0.0
        %3901 = vmatpush1.msra.mxu0 0.0
        %3902 = vmatprep.subr.mxu0 0.0
        %3903 = vmatpush1.msra.mxu0 0.0
        %3904 = vmatprep.mubr.f32.mxu0 0.0
        %3905 = vmatmul.mubr.f32.gmra.mrb[0].mxu0 %v3832
        %v3906 = vpop.f32.mrb[0].mxu0
        %v3907 = vadd.f32 %v3819, %v3906
        %v3908 = vpop.f32.mrb[0].mxu0
        %3909 = vmatprep.mubr.f32.mxu0 0.0
        %3910 = vmatmul.mubr.f32.gmra.mrb[0].mxu0 %v3835
        %v3911 = vpop.f32.mrb[0].mxu0
        %v3912 = vadd.f32 %v3824, %v3911
        %v3913 = vpop.f32.mrb[0].mxu0
        %3914 = vmatprep.mubr.f32.mxu0 0.0
        %3915 = vmatmul.mubr.f32.gmra.mrb[0].mxu0 %v3838
        %v3916 = vpop.f32.mrb[0].mxu0
        %v3917 = vadd.f32 %v3829, %v3916
        %v3918 = vpop.f32.mrb[0].mxu0
        %3919 = vdwg.mxu0
        %v3920 = vmax.f32 %v3907, 0.0
        %v3921 = vmax.f32 %v3912, 0.0
        %v3922 = vmax.f32 %v3917, 0.0
        %3923 = vrot.lane.b32.xlu0 %v3920, 16
        %v3924 = vpop.permute.xlu0 %3923
        %3925 = vrot.lane.b32.xlu0 %v3921, 16
        %v3926 = vpop.permute.xlu0 %3925
        %3927 = vrot.lane.b32.xlu0 %v3922, 16
        %v3928 = vpop.permute.xlu0 %3927
        %v3929 = vsel %vm2219, %v3924, 0.0
        %v3930 = vsel %vm2219, %v3926, 0.0
        %v3931 = vsel %vm2219, %v3928, 0.0
        %3932 = vst [vmem:[#allocation3] sm:$0xff] %v3929
        %3933 = vst [vmem:[#allocation3 + $0x8] sm:$0xff] %v3930
        %3934 = vst [vmem:[#allocation3 + $0x10] sm:$0xff] %v3931
        %3935 = vrot.lane.b32.xlu0 %v3920, 12
        %v3936 = vpop.permute.xlu0 %3935
        %3937 = vrot.lane.b32.xlu0 %v3921, 12
        %v3938 = vpop.permute.xlu0 %3937
        %3939 = vrot.lane.b32.xlu0 %v3922, 12
        %v3940 = vpop.permute.xlu0 %3939
        %v3941 = vsel %vm2232, %v3936, 0.0
        %v3942 = vsel %vm2232, %v3938, 0.0
        %v3943 = vsel %vm2232, %v3940, 0.0
        %3944 = vst [vmem:[#allocation3 + $0x18] sm:$0xff] %v3941
        %3945 = vst [vmem:[#allocation3 + $0x20] sm:$0xff] %v3942
        %3946 = vst [vmem:[#allocation3 + $0x28] sm:$0xff] %v3943
        %3947 = vrot.lane.b32.xlu0 %v3920, 8
        %v3948 = vpop.permute.xlu0 %3947
        %3949 = vrot.lane.b32.xlu0 %v3921, 8
        %v3950 = vpop.permute.xlu0 %3949
        %3951 = vrot.lane.b32.xlu0 %v3922, 8
        %v3952 = vpop.permute.xlu0 %3951
        %v3953 = vsel %vm1815, %v3948, 0.0
        %v3954 = vsel %vm1815, %v3950, 0.0
        %v3955 = vsel %vm1815, %v3952, 0.0
        %3956 = vst [vmem:[#allocation3 + $0x30] sm:$0xff] %v3953
        %3957 = vst [vmem:[#allocation3 + $0x38] sm:$0xff] %v3954
        %3958 = vst [vmem:[#allocation3 + $0x40] sm:$0xff] %v3955
        %3959 = vrot.lane.b32.xlu0 %v3920, 4
        %v3960 = vpop.permute.xlu0 %3959
        %3961 = vrot.lane.b32.xlu0 %v3921, 4
        %v3962 = vpop.permute.xlu0 %3961
        %3963 = vrot.lane.b32.xlu0 %v3922, 4
        %v3964 = vpop.permute.xlu0 %3963
        %v3965 = vsel %vm1411, %v3960, 0.0
        %v3966 = vsel %vm1411, %v3962, 0.0
        %v3967 = vsel %vm1411, %v3964, 0.0
        %3968 = vst [vmem:[#allocation3 + $0x48] sm:$0xff] %v3965
        %3969 = vst [vmem:[#allocation3 + $0x50] sm:$0xff] %v3966
        %3970 = vst [vmem:[#allocation3 + $0x58] sm:$0xff] %v3967
        %3971 = vst [vmem:[#allocation3 + $0x60] sm:$0xff] %v3920
        %3972 = vst [vmem:[#allocation3 + $0x68] sm:$0xff] %v3921
        %3973 = vst [vmem:[#allocation3 + $0x70] sm:$0xff] %v3922
        %3974 = vrot.lane.b32.xlu0 %v3920, 124
        %v3975 = vpop.permute.xlu0 %3974
        %3976 = vrot.lane.b32.xlu0 %v3921, 124
        %v3977 = vpop.permute.xlu0 %3976
        %3978 = vrot.lane.b32.xlu0 %v3922, 124
        %v3979 = vpop.permute.xlu0 %3978
        %v3980 = vsel %vm1503, %v3975, 0.0
        %v3981 = vsel %vm1503, %v3977, 0.0
        %v3982 = vsel %vm1503, %v3979, 0.0
        %3983 = vst [vmem:[#allocation3 + $0x78] sm:$0xff] %v3980
        %3984 = vst [vmem:[#allocation3 + $0x80] sm:$0xff] %v3981
        %3985 = vst [vmem:[#allocation3 + $0x88] sm:$0xff] %v3982
        %3986 = vrot.lane.b32.xlu0 %v3920, 120
        %v3987 = vpop.permute.xlu0 %3986
        %3988 = vrot.lane.b32.xlu0 %v3921, 120
        %v3989 = vpop.permute.xlu0 %3988
        %3990 = vrot.lane.b32.xlu0 %v3922, 120
        %v3991 = vpop.permute.xlu0 %3990
        %v3992 = vsel %vm1905, %v3987, 0.0
        %v3993 = vsel %vm1905, %v3989, 0.0
        %v3994 = vsel %vm1905, %v3991, 0.0
        %3995 = vst [vmem:[#allocation3 + $0x90] sm:$0xff] %v3992
        %3996 = vst [vmem:[#allocation3 + $0x98] sm:$0xff] %v3993
        %3997 = vst [vmem:[#allocation3 + $0xa0] sm:$0xff] %v3994
        %3998 = vrot.lane.b32.xlu0 %v3920, 116
        %v3999 = vpop.permute.xlu0 %3998
        %4000 = vrot.lane.b32.xlu0 %v3921, 116
        %v4001 = vpop.permute.xlu0 %4000
        %4002 = vrot.lane.b32.xlu0 %v3922, 116
        %v4003 = vpop.permute.xlu0 %4002
        %v4004 = vsel %vm2296, %v3999, 0.0
        %v4005 = vsel %vm2296, %v4001, 0.0
        %v4006 = vsel %vm2296, %v4003, 0.0
        %4007 = vst [vmem:[#allocation3 + $0xa8] sm:$0xff] %v4004
        %4008 = vst [vmem:[#allocation3 + $0xb0] sm:$0xff] %v4005
        %4009 = vst [vmem:[#allocation3 + $0xb8] sm:$0xff] %v4006
        %4010 = vrot.lane.b32.xlu0 %v3920, 112
        %v4011 = vpop.permute.xlu0 %4010
        %4012 = vrot.lane.b32.xlu0 %v3921, 112
        %v4013 = vpop.permute.xlu0 %4012
        %4014 = vrot.lane.b32.xlu0 %v3922, 112
        %v4015 = vpop.permute.xlu0 %4014
        %v4016 = vsel %vm2309, %v4011, 0.0
        %v4017 = vsel %vm2309, %v4013, 0.0
        %v4018 = vsel %vm2309, %v4015, 0.0
        %4019 = vst [vmem:[#allocation3 + $0xc0] sm:$0xff] %v4016
        %4020 = vst [vmem:[#allocation3 + $0xc8] sm:$0xff] %v4017
        %4021 = vst [vmem:[#allocation3 + $0xd0] sm:$0xff] %v4018
        %v4022 = vld [vmem:[%s61] sm:$0xff]
        %v4023 = vld [vmem:[%s61 + $0x8] sm:$0xff]
        %v4024 = vld [vmem:[%s61 + $0x10] sm:$0xff]
        %v4025 = vld [vmem:[%s61 + $0x18] sm:$0xff]
        %v4026 = vld [vmem:[%s61 + $0x20] sm:$0xff]
        %v4027 = vld [vmem:[%s61 + $0x28] sm:$0xff]
        %v4028 = vld [vmem:[#allocation3] sm:$0xff]
        %v4029 = vld [vmem:[#allocation3 + $0x8] sm:$0xff]
        %v4030 = vld [vmem:[#allocation3 + $0x10] sm:$0xff]
        %v4031 = vld [vmem:[#allocation3 + $0x18] sm:$0xff]
        %v4032 = vld [vmem:[#allocation3 + $0x20] sm:$0xff]
        %v4033 = vld [vmem:[#allocation3 + $0x28] sm:$0xff]
        %v4034 = vld [vmem:[#allocation3 + $0x30] sm:$0xff]
        %v4035 = vld [vmem:[#allocation3 + $0x38] sm:$0xff]
        %v4036 = vld [vmem:[#allocation3 + $0x40] sm:$0xff]
        %v4037 = vld [vmem:[#allocation3 + $0x48] sm:$0xff]
        %v4038 = vld [vmem:[#allocation3 + $0x50] sm:$0xff]
        %v4039 = vld [vmem:[#allocation3 + $0x58] sm:$0xff]
        %v4040 = vld [vmem:[#allocation3 + $0x60] sm:$0xff]
        %v4041 = vld [vmem:[#allocation3 + $0x68] sm:$0xff]
        %v4042 = vld [vmem:[#allocation3 + $0x70] sm:$0xff]
        %v4043 = vld [vmem:[#allocation3 + $0x78] sm:$0xff]
        %v4044 = vld [vmem:[#allocation3 + $0x80] sm:$0xff]
        %v4045 = vld [vmem:[#allocation3 + $0x88] sm:$0xff]
        %v4046 = vld [vmem:[#allocation3 + $0x90] sm:$0xff]
        %v4047 = vld [vmem:[#allocation3 + $0x98] sm:$0xff]
        %v4048 = vld [vmem:[#allocation3 + $0xa0] sm:$0xff]
        %v4049 = vld [vmem:[#allocation3 + $0xa8] sm:$0xff]
        %v4050 = vld [vmem:[#allocation3 + $0xb0] sm:$0xff]
        %v4051 = vld [vmem:[#allocation3 + $0xb8] sm:$0xff]
        %v4052 = vld [vmem:[#allocation3 + $0xc0] sm:$0xff]
        %v4053 = vld [vmem:[#allocation3 + $0xc8] sm:$0xff]
        %v4054 = vld [vmem:[#allocation3 + $0xd0] sm:$0xff]
        %v4055 = vld [vmem:[%s63] sm:$0xff]
        %v4056 = vld [vmem:[%s63 + $0x8] sm:$0xff]
        %v4057 = vld [vmem:[%s63 + $0x10] sm:$0xff]
        %4059 = vset.pattern.permute.xlu0 0
        %4060 = vperm.xlu0 %4059, %v4055
        %v4061 = vpop.permute.xlu0 %4060
        %4064 = vset.pattern.permute.xlu0 0
        %4065 = vperm.xlu0 %4064, %v4056
        %v4066 = vpop.permute.xlu0 %4065
        %4069 = vset.pattern.permute.xlu0 0
        %4070 = vperm.xlu0 %4069, %v4057
        %v4071 = vpop.permute.xlu0 %4070
        %v4074 = vsel %vm1561, %v4023, 0
        %v4077 = vsel %vm1561, %v4025, 0
        %v4080 = vsel %vm1561, %v4027, 0
        %4082 = vmatprep.subr.mxu0 0.0
        %4083 = vmatpush1.msra.mxu0 %v4028
        %4084 = vmatprep.subr.mxu0 0.0
        %4085 = vmatpush1.msra.mxu0 %v4029
        %4086 = vmatprep.subr.mxu0 0.0
        %4087 = vmatpush1.msra.mxu0 %v4030
        %4088 = vmatprep.subr.mxu0 0.0
        %4089 = vmatpush1.msra.mxu0 %v4031
        %4090 = vmatprep.subr.mxu0 0.0
        %4091 = vmatpush1.msra.mxu0 %v4032
        %4092 = vmatprep.subr.mxu0 0.0
        %4093 = vmatpush1.msra.mxu0 %v4033
        %4094 = vmatprep.subr.mxu0 0.0
        %4095 = vmatpush1.msra.mxu0 %v4034
        %4096 = vmatprep.subr.mxu0 0.0
        %4097 = vmatpush1.msra.mxu0 %v4035
        %4098 = vmatprep.subr.mxu0 0.0
        %4099 = vmatpush1.msra.mxu0 %v4036
        %4100 = vmatprep.subr.mxu0 0.0
        %4101 = vmatpush1.msra.mxu0 %v4037
        %4102 = vmatprep.subr.mxu0 0.0
        %4103 = vmatpush1.msra.mxu0 %v4038
        %4104 = vmatprep.subr.mxu0 0.0
        %4105 = vmatpush1.msra.mxu0 %v4039
        %4106 = vmatprep.subr.mxu0 0.0
        %4107 = vmatpush1.msra.mxu0 %v4040
        %4108 = vmatprep.subr.mxu0 0.0
        %4109 = vmatpush1.msra.mxu0 %v4041
        %4110 = vmatprep.subr.mxu0 0.0
        %4111 = vmatpush1.msra.mxu0 %v4042
        %4112 = vmatprep.subr.mxu0 0.0
        %4113 = vmatpush1.msra.mxu0 %v4043
        %4114 = vmatprep.subr.mxu0 0.0
        %4115 = vmatpush1.msra.mxu0 %v4044
        %4116 = vmatprep.subr.mxu0 0.0
        %4117 = vmatpush1.msra.mxu0 %v4045
        %4118 = vmatprep.subr.mxu0 0.0
        %4119 = vmatpush1.msra.mxu0 %v4046
        %4120 = vmatprep.subr.mxu0 0.0
        %4121 = vmatpush1.msra.mxu0 %v4047
        %4122 = vmatprep.subr.mxu0 0.0
        %4123 = vmatpush1.msra.mxu0 %v4048
        %4124 = vmatprep.subr.mxu0 0.0
        %4125 = vmatpush1.msra.mxu0 %v4049
        %4126 = vmatprep.subr.mxu0 0.0
        %4127 = vmatpush1.msra.mxu0 %v4050
        %4128 = vmatprep.subr.mxu0 0.0
        %4129 = vmatpush1.msra.mxu0 %v4051
        %4130 = vmatprep.subr.mxu0 0.0
        %4131 = vmatpush1.msra.mxu0 %v4052
        %4132 = vmatprep.subr.mxu0 0.0
        %4133 = vmatpush1.msra.mxu0 %v4053
        %4134 = vmatprep.subr.mxu0 0.0
        %4135 = vmatpush1.msra.mxu0 %v4054
        %4136 = vmatprep.subr.mxu0 0.0
        %4137 = vmatpush1.msra.mxu0 0.0
        %4138 = vmatprep.subr.mxu0 0.0
        %4139 = vmatpush1.msra.mxu0 0.0
        %4140 = vmatprep.subr.mxu0 0.0
        %4141 = vmatpush1.msra.mxu0 0.0
        %4142 = vmatprep.subr.mxu0 0.0
        %4143 = vmatpush1.msra.mxu0 0.0
        %4144 = vmatprep.subr.mxu0 0.0
        %4145 = vmatpush1.msra.mxu0 0.0
        %4146 = vmatprep.mubr.f32.mxu0 %v4074
        %4147 = vmatmul.mubr.f32.gmra.mrb[0].mxu0 %v4022
        %v4148 = vpop.f32.mrb[0].mxu0
        %v4149 = vadd.f32 %v4061, %v4148
        %v4150 = vpop.f32.mrb[0].mxu0
        %4151 = vmatprep.mubr.f32.mxu0 %v4077
        %4152 = vmatmul.mubr.f32.gmra.mrb[0].mxu0 %v4024
        %v4153 = vpop.f32.mrb[0].mxu0
        %v4154 = vadd.f32 %v4066, %v4153
        %v4155 = vpop.f32.mrb[0].mxu0
        %4156 = vmatprep.mubr.f32.mxu0 %v4080
        %4157 = vmatmul.mubr.f32.gmra.mrb[0].mxu0 %v4026
        %v4158 = vpop.f32.mrb[0].mxu0
        %v4159 = vadd.f32 %v4071, %v4158
        %v4160 = vpop.f32.mrb[0].mxu0
        %4161 = vdwg.mxu0
        %v4162 = vmax.f32 %v4149, 0.0
        %v4163 = vmax.f32 %v4154, 0.0
        %v4164 = vmax.f32 %v4159, 0.0
        %v4165 = vadd.f32 %v3768, %v4162
        %v4166 = vadd.f32 %v3769, %v4163
        %v4167 = vadd.f32 %v3770, %v4164
        %v4168 = vmax.f32 %v4165, 0.0
        %v4169 = vmax.f32 %v4166, 0.0
        %v4170 = vmax.f32 %v4167, 0.0
        %v4171 = vadd.f32 %v3771, %v4162
        %v4172 = vadd.f32 %v3772, %v4163
        %v4173 = vadd.f32 %v3773, %v4164
        %4174 = vrot.lane.b32.xlu0 %v4168, 8
        %v4175 = vpop.permute.xlu0 %4174
        %4176 = vrot.lane.b32.xlu0 %v4169, 8
        %v4177 = vpop.permute.xlu0 %4176
        %4178 = vrot.lane.b32.xlu0 %v4170, 8
        %v4179 = vpop.permute.xlu0 %4178
        %v4180 = vsel %vm1815, %v4175, 0.0
        %v4181 = vsel %vm1815, %v4177, 0.0
        %v4182 = vsel %vm1815, %v4179, 0.0
        %4183 = vst [vmem:[#allocation2] sm:$0xff] %v4180
        %4184 = vst [vmem:[#allocation2 + $0x8] sm:$0xff] %v4181
        %4185 = vst [vmem:[#allocation2 + $0x10] sm:$0xff] %v4182
        %4186 = vst [vmem:[#allocation2 + $0x18] sm:$0xff] %v4168
        %4187 = vst [vmem:[#allocation2 + $0x20] sm:$0xff] %v4169
        %4188 = vst [vmem:[#allocation2 + $0x28] sm:$0xff] %v4170
        %4189 = vrot.lane.b32.xlu0 %v4168, 120
        %v4190 = vpop.permute.xlu0 %4189
        %4191 = vrot.lane.b32.xlu0 %v4169, 120
        %v4192 = vpop.permute.xlu0 %4191
        %4193 = vrot.lane.b32.xlu0 %v4170, 120
        %v4194 = vpop.permute.xlu0 %4193
        %v4195 = vsel %vm1905, %v4190, 0.0
        %v4196 = vsel %vm1905, %v4192, 0.0
        %v4197 = vsel %vm1905, %v4194, 0.0
        %4198 = vst [vmem:[#allocation2 + $0x30] sm:$0xff] %v4195
        %4199 = vst [vmem:[#allocation2 + $0x38] sm:$0xff] %v4196
        %4200 = vst [vmem:[#allocation2 + $0x40] sm:$0xff] %v4197
        %v4201 = vld [vmem:[#allocation8] sm:$0xff]
        %v4202 = vld [vmem:[#allocation8 + $0x8] sm:$0xff]
        %v4203 = vld [vmem:[#allocation8 + $0x10] sm:$0xff]
        %v4204 = vld [vmem:[#allocation2] sm:$0xff]
        %v4205 = vld [vmem:[#allocation2 + $0x8] sm:$0xff]
        %v4206 = vld [vmem:[#allocation2 + $0x10] sm:$0xff]
        %v4207 = vld [vmem:[#allocation2 + $0x18] sm:$0xff]
        %v4208 = vld [vmem:[#allocation2 + $0x20] sm:$0xff]
        %v4209 = vld [vmem:[#allocation2 + $0x28] sm:$0xff]
        %v4210 = vld [vmem:[#allocation2 + $0x30] sm:$0xff]
        %v4211 = vld [vmem:[#allocation2 + $0x38] sm:$0xff]
        %v4212 = vld [vmem:[#allocation2 + $0x40] sm:$0xff]
        %v4213 = vld [vmem:[%s67] sm:$0xff]
        %v4214 = vld [vmem:[%s67 + $0x8] sm:$0xff]
        %v4215 = vld [vmem:[%s67 + $0x10] sm:$0xff]
        %4217 = vset.pattern.permute.xlu0 0
        %4218 = vperm.xlu0 %4217, %v4213
        %v4219 = vpop.permute.xlu0 %4218
        %4222 = vset.pattern.permute.xlu0 0
        %4223 = vperm.xlu0 %4222, %v4214
        %v4224 = vpop.permute.xlu0 %4223
        %4227 = vset.pattern.permute.xlu0 0
        %4228 = vperm.xlu0 %4227, %v4215
        %v4229 = vpop.permute.xlu0 %4228
        %v4232 = vsel %vm1246, %v4201, 0
        %v4235 = vsel %vm1246, %v4202, 0
        %v4238 = vsel %vm1246, %v4203, 0
        %4240 = vmatprep.subr.mxu0 0.0
        %4241 = vmatpush1.msra.mxu0 %v4204
        %4242 = vmatprep.subr.mxu0 0.0
        %4243 = vmatpush1.msra.mxu0 %v4205
        %4244 = vmatprep.subr.mxu0 0.0
        %4245 = vmatpush1.msra.mxu0 %v4206
        %4246 = vmatprep.subr.mxu0 0.0
        %4247 = vmatpush1.msra.mxu0 %v4207
        %4248 = vmatprep.subr.mxu0 0.0
        %4249 = vmatpush1.msra.mxu0 %v4208
        %4250 = vmatprep.subr.mxu0 0.0
        %4251 = vmatpush1.msra.mxu0 %v4209
        %4252 = vmatprep.subr.mxu0 0.0
        %4253 = vmatpush1.msra.mxu0 %v4210
        %4254 = vmatprep.subr.mxu0 0.0
        %4255 = vmatpush1.msra.mxu0 %v4211
        %4256 = vmatprep.subr.mxu0 0.0
        %4257 = vmatpush1.msra.mxu0 %v4212
        %4258 = vmatprep.subr.mxu0 0.0
        %4259 = vmatpush1.msra.mxu0 0.0
        %4260 = vmatprep.subr.mxu0 0.0
        %4261 = vmatpush1.msra.mxu0 0.0
        %4262 = vmatprep.subr.mxu0 0.0
        %4263 = vmatpush1.msra.mxu0 0.0
        %4264 = vmatprep.subr.mxu0 0.0
        %4265 = vmatpush1.msra.mxu0 0.0
        %4266 = vmatprep.subr.mxu0 0.0
        %4267 = vmatpush1.msra.mxu0 0.0
        %4268 = vmatprep.subr.mxu0 0.0
        %4269 = vmatpush1.msra.mxu0 0.0
        %4270 = vmatprep.subr.mxu0 0.0
        %4271 = vmatpush1.msra.mxu0 0.0
        %4272 = vmatprep.subr.mxu0 0.0
        %4273 = vmatpush1.msra.mxu0 0.0
        %4274 = vmatprep.subr.mxu0 0.0
        %4275 = vmatpush1.msra.mxu0 0.0
        %4276 = vmatprep.subr.mxu0 0.0
        %4277 = vmatpush1.msra.mxu0 0.0
        %4278 = vmatprep.subr.mxu0 0.0
        %4279 = vmatpush1.msra.mxu0 0.0
        %4280 = vmatprep.subr.mxu0 0.0
        %4281 = vmatpush1.msra.mxu0 0.0
        %4282 = vmatprep.subr.mxu0 0.0
        %4283 = vmatpush1.msra.mxu0 0.0
        %4284 = vmatprep.subr.mxu0 0.0
        %4285 = vmatpush1.msra.mxu0 0.0
        %4286 = vmatprep.subr.mxu0 0.0
        %4287 = vmatpush1.msra.mxu0 0.0
        %4288 = vmatprep.subr.mxu0 0.0
        %4289 = vmatpush1.msra.mxu0 0.0
        %4290 = vmatprep.subr.mxu0 0.0
        %4291 = vmatpush1.msra.mxu0 0.0
        %4292 = vmatprep.subr.mxu0 0.0
        %4293 = vmatpush1.msra.mxu0 0.0
        %4294 = vmatprep.subr.mxu0 0.0
        %4295 = vmatpush1.msra.mxu0 0.0
        %4296 = vmatprep.subr.mxu0 0.0
        %4297 = vmatpush1.msra.mxu0 0.0
        %4298 = vmatprep.subr.mxu0 0.0
        %4299 = vmatpush1.msra.mxu0 0.0
        %4300 = vmatprep.subr.mxu0 0.0
        %4301 = vmatpush1.msra.mxu0 0.0
        %4302 = vmatprep.subr.mxu0 0.0
        %4303 = vmatpush1.msra.mxu0 0.0
        %4304 = vmatprep.mubr.f32.mxu0 0.0
        %4305 = vmatmul.mubr.f32.gmra.mrb[0].mxu0 %v4232
        %v4306 = vpop.f32.mrb[0].mxu0
        %v4307 = vadd.f32 %v4219, %v4306
        %v4308 = vpop.f32.mrb[0].mxu0
        %4309 = vmatprep.mubr.f32.mxu0 0.0
        %4310 = vmatmul.mubr.f32.gmra.mrb[0].mxu0 %v4235
        %v4311 = vpop.f32.mrb[0].mxu0
        %v4312 = vadd.f32 %v4224, %v4311
        %v4313 = vpop.f32.mrb[0].mxu0
        %4314 = vmatprep.mubr.f32.mxu0 0.0
        %4315 = vmatmul.mubr.f32.gmra.mrb[0].mxu0 %v4238
        %v4316 = vpop.f32.mrb[0].mxu0
        %v4317 = vadd.f32 %v4229, %v4316
        %v4318 = vpop.f32.mrb[0].mxu0
        %4319 = vdwg.mxu0
        %v4320 = vmax.f32 %v4307, 0.0
        %v4321 = vmax.f32 %v4312, 0.0
        %v4322 = vmax.f32 %v4317, 0.0
        %4323 = vrot.lane.b32.xlu0 %v4320, 32
        %v4324 = vpop.permute.xlu0 %4323
        %4325 = vrot.lane.b32.xlu0 %v4321, 32
        %v4326 = vpop.permute.xlu0 %4325
        %4327 = vrot.lane.b32.xlu0 %v4322, 32
        %v4328 = vpop.permute.xlu0 %4327
        %v4329 = vsel %vm2623, %v4324, 0.0
        %v4330 = vsel %vm2623, %v4326, 0.0
        %v4331 = vsel %vm2623, %v4328, 0.0
        %4332 = vst [vmem:[#allocation3] sm:$0xff] %v4329
        %4333 = vst [vmem:[#allocation3 + $0x8] sm:$0xff] %v4330
        %4334 = vst [vmem:[#allocation3 + $0x10] sm:$0xff] %v4331
        %4335 = vrot.lane.b32.xlu0 %v4320, 24
        %v4336 = vpop.permute.xlu0 %4335
        %4337 = vrot.lane.b32.xlu0 %v4321, 24
        %v4338 = vpop.permute.xlu0 %4337
        %4339 = vrot.lane.b32.xlu0 %v4322, 24
        %v4340 = vpop.permute.xlu0 %4339
        %v4341 = vsel %vm2636, %v4336, 0.0
        %v4342 = vsel %vm2636, %v4338, 0.0
        %v4343 = vsel %vm2636, %v4340, 0.0
        %4344 = vst [vmem:[#allocation3 + $0x18] sm:$0xff] %v4341
        %4345 = vst [vmem:[#allocation3 + $0x20] sm:$0xff] %v4342
        %4346 = vst [vmem:[#allocation3 + $0x28] sm:$0xff] %v4343
        %4347 = vrot.lane.b32.xlu0 %v4320, 16
        %v4348 = vpop.permute.xlu0 %4347
        %4349 = vrot.lane.b32.xlu0 %v4321, 16
        %v4350 = vpop.permute.xlu0 %4349
        %4351 = vrot.lane.b32.xlu0 %v4322, 16
        %v4352 = vpop.permute.xlu0 %4351
        %v4353 = vsel %vm2219, %v4348, 0.0
        %v4354 = vsel %vm2219, %v4350, 0.0
        %v4355 = vsel %vm2219, %v4352, 0.0
        %4356 = vst [vmem:[#allocation3 + $0x30] sm:$0xff] %v4353
        %4357 = vst [vmem:[#allocation3 + $0x38] sm:$0xff] %v4354
        %4358 = vst [vmem:[#allocation3 + $0x40] sm:$0xff] %v4355
        %4359 = vrot.lane.b32.xlu0 %v4320, 8
        %v4360 = vpop.permute.xlu0 %4359
        %4361 = vrot.lane.b32.xlu0 %v4321, 8
        %v4362 = vpop.permute.xlu0 %4361
        %4363 = vrot.lane.b32.xlu0 %v4322, 8
        %v4364 = vpop.permute.xlu0 %4363
        %v4365 = vsel %vm1815, %v4360, 0.0
        %v4366 = vsel %vm1815, %v4362, 0.0
        %v4367 = vsel %vm1815, %v4364, 0.0
        %4368 = vst [vmem:[#allocation3 + $0x48] sm:$0xff] %v4365
        %4369 = vst [vmem:[#allocation3 + $0x50] sm:$0xff] %v4366
        %4370 = vst [vmem:[#allocation3 + $0x58] sm:$0xff] %v4367
        %4371 = vst [vmem:[#allocation3 + $0x60] sm:$0xff] %v4320
        %4372 = vst [vmem:[#allocation3 + $0x68] sm:$0xff] %v4321
        %4373 = vst [vmem:[#allocation3 + $0x70] sm:$0xff] %v4322
        %4374 = vrot.lane.b32.xlu0 %v4320, 120
        %v4375 = vpop.permute.xlu0 %4374
        %4376 = vrot.lane.b32.xlu0 %v4321, 120
        %v4377 = vpop.permute.xlu0 %4376
        %4378 = vrot.lane.b32.xlu0 %v4322, 120
        %v4379 = vpop.permute.xlu0 %4378
        %v4380 = vsel %vm1905, %v4375, 0.0
        %v4381 = vsel %vm1905, %v4377, 0.0
        %v4382 = vsel %vm1905, %v4379, 0.0
        %4383 = vst [vmem:[#allocation3 + $0x78] sm:$0xff] %v4380
        %4384 = vst [vmem:[#allocation3 + $0x80] sm:$0xff] %v4381
        %4385 = vst [vmem:[#allocation3 + $0x88] sm:$0xff] %v4382
        %4386 = vrot.lane.b32.xlu0 %v4320, 112
        %v4387 = vpop.permute.xlu0 %4386
        %4388 = vrot.lane.b32.xlu0 %v4321, 112
        %v4389 = vpop.permute.xlu0 %4388
        %4390 = vrot.lane.b32.xlu0 %v4322, 112
        %v4391 = vpop.permute.xlu0 %4390
        %v4392 = vsel %vm2309, %v4387, 0.0
        %v4393 = vsel %vm2309, %v4389, 0.0
        %v4394 = vsel %vm2309, %v4391, 0.0
        %4395 = vst [vmem:[#allocation3 + $0x90] sm:$0xff] %v4392
        %4396 = vst [vmem:[#allocation3 + $0x98] sm:$0xff] %v4393
        %4397 = vst [vmem:[#allocation3 + $0xa0] sm:$0xff] %v4394
        %4398 = vrot.lane.b32.xlu0 %v4320, 104
        %v4399 = vpop.permute.xlu0 %4398
        %4400 = vrot.lane.b32.xlu0 %v4321, 104
        %v4401 = vpop.permute.xlu0 %4400
        %4402 = vrot.lane.b32.xlu0 %v4322, 104
        %v4403 = vpop.permute.xlu0 %4402
        %v4404 = vsel %vm2700, %v4399, 0.0
        %v4405 = vsel %vm2700, %v4401, 0.0
        %v4406 = vsel %vm2700, %v4403, 0.0
        %4407 = vst [vmem:[#allocation3 + $0xa8] sm:$0xff] %v4404
        %4408 = vst [vmem:[#allocation3 + $0xb0] sm:$0xff] %v4405
        %4409 = vst [vmem:[#allocation3 + $0xb8] sm:$0xff] %v4406
        %4410 = vrot.lane.b32.xlu0 %v4320, 96
        %v4411 = vpop.permute.xlu0 %4410
        %4412 = vrot.lane.b32.xlu0 %v4321, 96
        %v4413 = vpop.permute.xlu0 %4412
        %4414 = vrot.lane.b32.xlu0 %v4322, 96
        %v4415 = vpop.permute.xlu0 %4414
        %v4416 = vsel %vm2713, %v4411, 0.0
        %v4417 = vsel %vm2713, %v4413, 0.0
        %v4418 = vsel %vm2713, %v4415, 0.0
        %4419 = vst [vmem:[#allocation3 + $0xc0] sm:$0xff] %v4416
        %4420 = vst [vmem:[#allocation3 + $0xc8] sm:$0xff] %v4417
        %4421 = vst [vmem:[#allocation3 + $0xd0] sm:$0xff] %v4418
        %v4422 = vld [vmem:[%s69] sm:$0xff]
        %v4423 = vld [vmem:[%s69 + $0x8] sm:$0xff]
        %v4424 = vld [vmem:[%s69 + $0x10] sm:$0xff]
        %v4425 = vld [vmem:[%s69 + $0x18] sm:$0xff]
        %v4426 = vld [vmem:[%s69 + $0x20] sm:$0xff]
        %v4427 = vld [vmem:[%s69 + $0x28] sm:$0xff]
        %v4428 = vld [vmem:[#allocation3] sm:$0xff]
        %v4429 = vld [vmem:[#allocation3 + $0x8] sm:$0xff]
        %v4430 = vld [vmem:[#allocation3 + $0x10] sm:$0xff]
        %v4431 = vld [vmem:[#allocation3 + $0x18] sm:$0xff]
        %v4432 = vld [vmem:[#allocation3 + $0x20] sm:$0xff]
        %v4433 = vld [vmem:[#allocation3 + $0x28] sm:$0xff]
        %v4434 = vld [vmem:[#allocation3 + $0x30] sm:$0xff]
        %v4435 = vld [vmem:[#allocation3 + $0x38] sm:$0xff]
        %v4436 = vld [vmem:[#allocation3 + $0x40] sm:$0xff]
        %v4437 = vld [vmem:[#allocation3 + $0x48] sm:$0xff]
        %v4438 = vld [vmem:[#allocation3 + $0x50] sm:$0xff]
        %v4439 = vld [vmem:[#allocation3 + $0x58] sm:$0xff]
        %v4440 = vld [vmem:[#allocation3 + $0x60] sm:$0xff]
        %v4441 = vld [vmem:[#allocation3 + $0x68] sm:$0xff]
        %v4442 = vld [vmem:[#allocation3 + $0x70] sm:$0xff]
        %v4443 = vld [vmem:[#allocation3 + $0x78] sm:$0xff]
        %v4444 = vld [vmem:[#allocation3 + $0x80] sm:$0xff]
        %v4445 = vld [vmem:[#allocation3 + $0x88] sm:$0xff]
        %v4446 = vld [vmem:[#allocation3 + $0x90] sm:$0xff]
        %v4447 = vld [vmem:[#allocation3 + $0x98] sm:$0xff]
        %v4448 = vld [vmem:[#allocation3 + $0xa0] sm:$0xff]
        %v4449 = vld [vmem:[#allocation3 + $0xa8] sm:$0xff]
        %v4450 = vld [vmem:[#allocation3 + $0xb0] sm:$0xff]
        %v4451 = vld [vmem:[#allocation3 + $0xb8] sm:$0xff]
        %v4452 = vld [vmem:[#allocation3 + $0xc0] sm:$0xff]
        %v4453 = vld [vmem:[#allocation3 + $0xc8] sm:$0xff]
        %v4454 = vld [vmem:[#allocation3 + $0xd0] sm:$0xff]
        %v4455 = vld [vmem:[%s71] sm:$0xff]
        %v4456 = vld [vmem:[%s71 + $0x8] sm:$0xff]
        %v4457 = vld [vmem:[%s71 + $0x10] sm:$0xff]
        %4459 = vset.pattern.permute.xlu0 0
        %4460 = vperm.xlu0 %4459, %v4455
        %v4461 = vpop.permute.xlu0 %4460
        %4464 = vset.pattern.permute.xlu0 0
        %4465 = vperm.xlu0 %4464, %v4456
        %v4466 = vpop.permute.xlu0 %4465
        %4469 = vset.pattern.permute.xlu0 0
        %4470 = vperm.xlu0 %4469, %v4457
        %v4471 = vpop.permute.xlu0 %4470
        %v4474 = vsel %vm1561, %v4423, 0
        %v4477 = vsel %vm1561, %v4425, 0
        %v4480 = vsel %vm1561, %v4427, 0
        %4482 = vmatprep.subr.mxu0 0.0
        %4483 = vmatpush1.msra.mxu0 %v4428
        %4484 = vmatprep.subr.mxu0 0.0
        %4485 = vmatpush1.msra.mxu0 %v4429
        %4486 = vmatprep.subr.mxu0 0.0
        %4487 = vmatpush1.msra.mxu0 %v4430
        %4488 = vmatprep.subr.mxu0 0.0
        %4489 = vmatpush1.msra.mxu0 %v4431
        %4490 = vmatprep.subr.mxu0 0.0
        %4491 = vmatpush1.msra.mxu0 %v4432
        %4492 = vmatprep.subr.mxu0 0.0
        %4493 = vmatpush1.msra.mxu0 %v4433
        %4494 = vmatprep.subr.mxu0 0.0
        %4495 = vmatpush1.msra.mxu0 %v4434
        %4496 = vmatprep.subr.mxu0 0.0
        %4497 = vmatpush1.msra.mxu0 %v4435
        %4498 = vmatprep.subr.mxu0 0.0
        %4499 = vmatpush1.msra.mxu0 %v4436
        %4500 = vmatprep.subr.mxu0 0.0
        %4501 = vmatpush1.msra.mxu0 %v4437
        %4502 = vmatprep.subr.mxu0 0.0
        %4503 = vmatpush1.msra.mxu0 %v4438
        %4504 = vmatprep.subr.mxu0 0.0
        %4505 = vmatpush1.msra.mxu0 %v4439
        %4506 = vmatprep.subr.mxu0 0.0
        %4507 = vmatpush1.msra.mxu0 %v4440
        %4508 = vmatprep.subr.mxu0 0.0
        %4509 = vmatpush1.msra.mxu0 %v4441
        %4510 = vmatprep.subr.mxu0 0.0
        %4511 = vmatpush1.msra.mxu0 %v4442
        %4512 = vmatprep.subr.mxu0 0.0
        %4513 = vmatpush1.msra.mxu0 %v4443
        %4514 = vmatprep.subr.mxu0 0.0
        %4515 = vmatpush1.msra.mxu0 %v4444
        %4516 = vmatprep.subr.mxu0 0.0
        %4517 = vmatpush1.msra.mxu0 %v4445
        %4518 = vmatprep.subr.mxu0 0.0
        %4519 = vmatpush1.msra.mxu0 %v4446
        %4520 = vmatprep.subr.mxu0 0.0
        %4521 = vmatpush1.msra.mxu0 %v4447
        %4522 = vmatprep.subr.mxu0 0.0
        %4523 = vmatpush1.msra.mxu0 %v4448
        %4524 = vmatprep.subr.mxu0 0.0
        %4525 = vmatpush1.msra.mxu0 %v4449
        %4526 = vmatprep.subr.mxu0 0.0
        %4527 = vmatpush1.msra.mxu0 %v4450
        %4528 = vmatprep.subr.mxu0 0.0
        %4529 = vmatpush1.msra.mxu0 %v4451
        %4530 = vmatprep.subr.mxu0 0.0
        %4531 = vmatpush1.msra.mxu0 %v4452
        %4532 = vmatprep.subr.mxu0 0.0
        %4533 = vmatpush1.msra.mxu0 %v4453
        %4534 = vmatprep.subr.mxu0 0.0
        %4535 = vmatpush1.msra.mxu0 %v4454
        %4536 = vmatprep.subr.mxu0 0.0
        %4537 = vmatpush1.msra.mxu0 0.0
        %4538 = vmatprep.subr.mxu0 0.0
        %4539 = vmatpush1.msra.mxu0 0.0
        %4540 = vmatprep.subr.mxu0 0.0
        %4541 = vmatpush1.msra.mxu0 0.0
        %4542 = vmatprep.subr.mxu0 0.0
        %4543 = vmatpush1.msra.mxu0 0.0
        %4544 = vmatprep.subr.mxu0 0.0
        %4545 = vmatpush1.msra.mxu0 0.0
        %4546 = vmatprep.mubr.f32.mxu0 %v4474
        %4547 = vmatmul.mubr.f32.gmra.mrb[0].mxu0 %v4422
        %v4548 = vpop.f32.mrb[0].mxu0
        %v4549 = vadd.f32 %v4461, %v4548
        %v4550 = vpop.f32.mrb[0].mxu0
        %4551 = vmatprep.mubr.f32.mxu0 %v4477
        %4552 = vmatmul.mubr.f32.gmra.mrb[0].mxu0 %v4424
        %v4553 = vpop.f32.mrb[0].mxu0
        %v4554 = vadd.f32 %v4466, %v4553
        %v4555 = vpop.f32.mrb[0].mxu0
        %4556 = vmatprep.mubr.f32.mxu0 %v4480
        %4557 = vmatmul.mubr.f32.gmra.mrb[0].mxu0 %v4426
        %v4558 = vpop.f32.mrb[0].mxu0
        %v4559 = vadd.f32 %v4471, %v4558
        %v4560 = vpop.f32.mrb[0].mxu0
        %4561 = vdwg.mxu0
        %v4562 = vmax.f32 %v4549, 0.0
        %v4563 = vmax.f32 %v4554, 0.0
        %v4564 = vmax.f32 %v4559, 0.0
        %v4565 = vadd.f32 %v4171, %v4562
        %v4566 = vadd.f32 %v4172, %v4563
        %v4567 = vadd.f32 %v4173, %v4564
        %v4568 = vld [vmem:[%s73] sm:$0xff]
        %v4569 = vld [vmem:[%s75] sm:$0xff]
        %4571 = vset.pattern.permute.xlu0 0
        %4572 = vperm.xlu0 %4571, %v4569
        %v4573 = vpop.permute.xlu0 %4572
        %v4576 = vsel %vm2887, %v4568, 0
        %4578 = vmatprep.subr.mxu0 0.0
        %4579 = vmatpush1.msra.mxu0 %v4565
        %4580 = vmatprep.subr.mxu0 0.0
        %4581 = vmatpush1.msra.mxu0 %v4566
        %4582 = vmatprep.subr.mxu0 0.0
        %4583 = vmatpush1.msra.mxu0 %v4567
        %4584 = vmatprep.subr.mxu0 0.0
        %4585 = vmatpush1.msra.mxu0 0.0
        %4586 = vmatprep.subr.mxu0 0.0
        %4587 = vmatpush1.msra.mxu0 0.0
        %4588 = vmatprep.subr.mxu0 0.0
        %4589 = vmatpush1.msra.mxu0 0.0
        %4590 = vmatprep.subr.mxu0 0.0
        %4591 = vmatpush1.msra.mxu0 0.0
        %4592 = vmatprep.subr.mxu0 0.0
        %4593 = vmatpush1.msra.mxu0 0.0
        %4594 = vmatprep.subr.mxu0 0.0
        %4595 = vmatpush1.msra.mxu0 0.0
        %4596 = vmatprep.subr.mxu0 0.0
        %4597 = vmatpush1.msra.mxu0 0.0
        %4598 = vmatprep.subr.mxu0 0.0
        %4599 = vmatpush1.msra.mxu0 0.0
        %4600 = vmatprep.subr.mxu0 0.0
        %4601 = vmatpush1.msra.mxu0 0.0
        %4602 = vmatprep.subr.mxu0 0.0
        %4603 = vmatpush1.msra.mxu0 0.0
        %4604 = vmatprep.subr.mxu0 0.0
        %4605 = vmatpush1.msra.mxu0 0.0
        %4606 = vmatprep.subr.mxu0 0.0
        %4607 = vmatpush1.msra.mxu0 0.0
        %4608 = vmatprep.subr.mxu0 0.0
        %4609 = vmatpush1.msra.mxu0 0.0
        %4610 = vmatprep.subr.mxu0 0.0
        %4611 = vmatpush1.msra.mxu0 0.0
        %4612 = vmatprep.subr.mxu0 0.0
        %4613 = vmatpush1.msra.mxu0 0.0
        %4614 = vmatprep.subr.mxu0 0.0
        %4615 = vmatpush1.msra.mxu0 0.0
        %4616 = vmatprep.subr.mxu0 0.0
        %4617 = vmatpush1.msra.mxu0 0.0
        %4618 = vmatprep.subr.mxu0 0.0
        %4619 = vmatpush1.msra.mxu0 0.0
        %4620 = vmatprep.subr.mxu0 0.0
        %4621 = vmatpush1.msra.mxu0 0.0
        %4622 = vmatprep.subr.mxu0 0.0
        %4623 = vmatpush1.msra.mxu0 0.0
        %4624 = vmatprep.subr.mxu0 0.0
        %4625 = vmatpush1.msra.mxu0 0.0
        %4626 = vmatprep.subr.mxu0 0.0
        %4627 = vmatpush1.msra.mxu0 0.0
        %4628 = vmatprep.subr.mxu0 0.0
        %4629 = vmatpush1.msra.mxu0 0.0
        %4630 = vmatprep.subr.mxu0 0.0
        %4631 = vmatpush1.msra.mxu0 0.0
        %4632 = vmatprep.subr.mxu0 0.0
        %4633 = vmatpush1.msra.mxu0 0.0
        %4634 = vmatprep.subr.mxu0 0.0
        %4635 = vmatpush1.msra.mxu0 0.0
        %4636 = vmatprep.subr.mxu0 0.0
        %4637 = vmatpush1.msra.mxu0 0.0
        %4638 = vmatprep.subr.mxu0 0.0
        %4639 = vmatpush1.msra.mxu0 0.0
        %4640 = vmatprep.subr.mxu0 0.0
        %4641 = vmatpush1.msra.mxu0 0.0
        %4642 = vmatprep.mubr.f32.mxu0 0.0
        %4643 = vmatmul.mubr.f32.gmra.mrb[0].mxu0 %v4576
        %v4644 = vpop.f32.mrb[0].mxu0
        %v4645 = vadd.f32 %v4573, %v4644
        %v4646 = vpop.f32.mrb[0].mxu0
        %4647 = vdwg.mxu0
        %4648 = vst [vmem:[%s1196] sm:$0xff] %v4645
        %p4649 = scmp.lt.s32.totalorder %s90, 1
        %s4650 = scalar_select %p4649, %s90, 1
        %s4651 = smul.addr %s4650, 8
        %s4652 = scalar_lea.vmem %s77, %s4651
        // Predicated region
        $region185: #{tcn_ae_forward.1} parent=171 // pred_check
          %p4653 = pneg %p911
        $region186: #{tcn_ae_forward.1} parent=171 // pred_check_branch
          %4655 = sbr.rel (%p4653) target = $region188
        $region187: #{tcn_ae_forward.1} parent=171 // pred_region
          _
        $region188: #{tcn_ae_forward.1} parent=171 // pred_fallthru
          _
      $region172: #{tcn_ae_forward.1} parent=5 // pred_fallthru
        _
      %p4656 = scmp.le.s32.totalorder 2, %s85
      // Predicated region
      $region189: #{tcn_ae_forward.1} parent=5 // pred_check
        %p4657 = pneg %p4656
      $region190: #{tcn_ae_forward.1} parent=5 // pred_check_branch
        %4659 = sbr.rel (%p4657) target = $region192
      $region191: #{tcn_ae_forward.1} parent=5 // pred_region
        %s4660 = ssub.s32 %s85, 2
        // Predicated region
        $region193: #{tcn_ae_forward.1} parent=191 // pred_check
          %p4661 = pneg %p917
        $region194: #{tcn_ae_forward.1} parent=191 // pred_check_branch
          %4663 = sbr.rel (%p4661) target = $region196
        $region195: #{tcn_ae_forward.1} parent=191 // pred_region
          %p4664 = scmp.lt.s32.totalorder %s91, 1
          %s4665 = scalar_select %p4664, %s91, 1
          %s4666 = smul.addr %s4665, 8
          %s4667 = scalar_lea.vmem %s77, %s4666
        $region196: #{tcn_ae_forward.1} parent=191 // pred_fallthru
          _
      $region192: #{tcn_ae_forward.1} parent=5 // pred_fallthru
        _
    $region6: #{tcn_ae_forward.1} parent=1 // loop_footer
      %s89 = sadd.s32 1, %s85
    $region7: #{tcn_ae_forward.1} parent=1 // loop_footer_branch
      %84 = sbr.rel target = $region3
    $region8: #{tcn_ae_forward.1} parent=1 // loop_exit
      _
    %4668 = vsyncpa [#allocation5], 1
    %s4669 = scalar_lea.sflag [#allocation5], 1
    %4670 = vsyncpa %s4669, 1
    %4671 = vsyncpa [#allocation7], 1

</llo_original>
